<compile_context>
chip_gen: v7x
topology: tpu7x:2x2x1
jax: 0.10.0
libtpu: 0.0.40
codegen_flags: <defaults>
</compile_context>

<pallas_src>
import jax
import jax.numpy as jnp
from jax.experimental import pallas as pl
from jax.experimental.pallas import tpu as pltpu


# ----------------------------- Pallas kernels ------------------------------ #

def _conv_bn_relu_pool_kernel(p_ref, w_ref, scale_ref, shift_ref, o_ref):
    """Fused conv-as-matmul + BatchNorm(eval) + ReLU + 2x2 max-pool.

    p_ref : [4*tq, K] bf16  im2col patches; rows ordered (pool tap p=0..3, row r)
    w_ref : [K, Cout] bf16  reshaped conv weight (kh, kw, cin) x cout
    scale_ref, shift_ref : [1, Cout] f32 folded conv-bias + BN(eval)
    o_ref : [tq, Cout] f32  pooled rows in (b, h/2, w/2) order
    """
    tq = o_ref.shape[0]
    y = jnp.dot(p_ref[...], w_ref[...], preferred_element_type=jnp.float32)
    y = y * scale_ref[...] + shift_ref[...]            # same affine for all 4 taps
    m = jnp.maximum(jnp.maximum(y[0 * tq:1 * tq], y[1 * tq:2 * tq]),
                    jnp.maximum(y[2 * tq:3 * tq], y[3 * tq:4 * tq]))
    o_ref[...] = jnp.maximum(m, 0.0)                   # relu(max) == max(relu)


def _fc_logsoftmax_kernel(x_ref, w_ref, b_ref, o_ref):
    # Logits padded to 128 lanes; padded columns carry bias -1e30 -> exp() == 0,
    # so max / logsumexp over the full (lane-dense) row are exact.
    logits = jnp.dot(x_ref[...], w_ref[...], preferred_element_type=jnp.float32)
    logits = logits + b_ref[...]
    m = jnp.max(logits, axis=-1, keepdims=True)
    s = logits - m
    lse = jnp.log(jnp.sum(jnp.exp(s), axis=-1, keepdims=True))   # exp/log on EUP
    o_ref[...] = s - lse


# ------------------------------ helpers ------------------------------------ #

def _round_up(x, m):
    return (x + m - 1) // m * m


def _pick_row_tile(q, cap=512):
    """Largest multiple of 8 that divides q and is <= cap (else q itself)."""
    t = min(q, cap)
    t -= t % 8
    while t >= 8 and q % t:
        t -= 8
    return t if t >= 8 else q


_COMPILER_PARAMS = pltpu.CompilerParams(
    dimension_semantics=("parallel",),          # shard grid steps across v7x's 2 TCs
    vmem_limit_bytes=32 * 1024 * 1024,          # ~7 MiB used; headroom below v7x 64 MiB
)


# ------------------------------ conv block --------------------------------- #

def conv_block(x_nhwc, w_oihw, b_conv, gamma, beta, rmean, rvar, eps=1e-5):
    """Conv2d(k=5, pad=2) + BatchNorm2d(eval) + ReLU + MaxPool2d(2) on NHWC input."""
    B, H, W, Cin = x_nhwc.shape
    Cout, _, k, _ = w_oihw.shape
    pad = k // 2
    H2, W2 = H // 2, W // 2
    Q = B * H2 * W2                            # pooled output rows
    K = k * k * Cin
    Kp = _round_up(K, 8)                       # conv1: 25 -> 32, conv2: 400 -> 400

    # ---- im2col in XLA glue (bf16), grouped per 2x2 pooling-window tap ------
    xp = jnp.pad(x_nhwc, ((0, 0), (pad, pad), (pad, pad), (0, 0)))
    taps = [xp[:, dh:dh + H, dw:dw + W, :] for dh in range(k) for dw in range(k)]
    patches = jnp.stack(taps, axis=3).reshape(B, H, W, K)          # (kh, kw, cin)
    p4 = jnp.stack(
        [patches[:, ph::2, pw::2, :].reshape(Q, K)
         for (ph, pw) in ((0, 0), (0, 1), (1, 0), (1, 1))], axis=0)  # [4, Q, K]
    if Kp != K:
        p4 = jnp.pad(p4, ((0, 0), (0, 0), (0, Kp - K)))

    tq = _pick_row_tile(Q)
    nj = Q // tq
    # Reorder rows to (tile, tap, row): each grid step reads ONE contiguous
    # [4*tq, Kp] slab and the kernel pools over contiguous row blocks.
    p2d = (p4.reshape(4, nj, tq, Kp).transpose(1, 0, 2, 3)
              .reshape(nj * 4 * tq, Kp).astype(jnp.bfloat16))

    # ---- fold conv bias + BN(eval); weight as [Kp, Cout] bf16 ----------------
    wm = jnp.transpose(w_oihw, (2, 3, 1, 0)).reshape(K, Cout)
    if Kp != K:
        wm = jnp.pad(wm, ((0, Kp - K), (0, 0)))
    wm = wm.astype(jnp.bfloat16)
    scale = (gamma / jnp.sqrt(rvar + eps)).reshape(1, Cout)
    shift = (beta + (b_conv - rmean) * gamma / jnp.sqrt(rvar + eps)).reshape(1, Cout)

    pooled = pl.pallas_call(
        _conv_bn_relu_pool_kernel,
        out_shape=jax.ShapeDtypeStruct((Q, Cout), jnp.float32),
        grid=(nj,),
        in_specs=[
            pl.BlockSpec((4 * tq, Kp), lambda j: (j, 0)),   # patch slab per tile
            pl.BlockSpec((Kp, Cout), lambda j: (0, 0)),     # weight (resident)
            pl.BlockSpec((1, Cout), lambda j: (0, 0)),
            pl.BlockSpec((1, Cout), lambda j: (0, 0)),
        ],
        out_specs=pl.BlockSpec((tq, Cout), lambda j: (j, 0)),
        compiler_params=_COMPILER_PARAMS,
    )(p2d, wm, scale, shift)
    return pooled.reshape(B, H2, W2, Cout)


# ------------------------------ FC + log_softmax ---------------------------- #

def fc_logsoftmax(flat, wf_nhwc, bias):
    """flat: [B, 1568] f32 (NHWC flatten); wf_nhwc: [1568, 10]; bias: [10]."""
    M, Kf = flat.shape
    N = wf_nhwc.shape[1]
    NP = 128                                            # lane-dense logits
    wf_p = jnp.pad(wf_nhwc, ((0, 0), (0, NP - N))).astype(jnp.float32)
    b_p = jnp.full((1, NP), -1e30, jnp.float32).at[0, :N].set(bias)
    tm = _pick_row_tile(M, cap=256)
    out = pl.pallas_call(
        _fc_logsoftmax_kernel,
        out_shape=jax.ShapeDtypeStruct((M, NP), jnp.float32),
        grid=(M // tm,),
        in_specs=[pl.BlockSpec((tm, Kf), lambda i: (i, 0)),
                  pl.BlockSpec((Kf, NP), lambda i: (0, 0)),
                  pl.BlockSpec((1, NP), lambda i: (0, 0))],
        out_specs=pl.BlockSpec((tm, NP), lambda i: (i, 0)),
        compiler_params=_COMPILER_PARAMS,
    )(flat, wf_p, b_p)
    return out[:, :N]


# ------------------------------- forward ------------------------------------ #

@jax.jit
def cnn_mnist_forward(x_nchw, p):
    # NCHW (PyTorch) -> NHWC (channels on the TPU lane dim)
    x = jnp.transpose(x_nchw, (0, 2, 3, 1)).astype(jnp.float32)
    out = conv_block(x, p["w1"], p["b1"], p["g1"], p["be1"], p["rm1"], p["rv1"])    # [B,14,14,16]
    out = conv_block(out, p["w2"], p["b2"], p["g2"], p["be2"], p["rm2"], p["rv2"])  # [B,7,7,32]
    B = out.shape[0]
    flat = out.reshape(B, 7 * 7 * 32)        # NHWC flatten, no runtime transpose
    # Trace-time row permutation of the FC weight: PyTorch flattens NCHW
    # (c*49 + h*7 + w); our rows are NHWC (h*224 + w*32 + c).
    perm = jnp.transpose(jnp.arange(7 * 7 * 32).reshape(32, 7, 7), (1, 2, 0)).reshape(-1)
    return fc_logsoftmax(flat, p["wf"][perm], p["bf"])


# ------------------------------- params -------------------------------------- #

def init_params(key):
    ks = jax.random.split(key, 12)
    p = {}
    # layer1: Conv2d(1, 16, 5, pad=2) + BatchNorm2d(16)
    p["w1"] = 0.05 * jax.random.normal(ks[0], (16, 1, 5, 5), jnp.float32)
    p["b1"] = 0.05 * jax.random.normal(ks[1], (16,), jnp.float32)
    p["g1"] = 1.0 + 0.1 * jax.random.normal(ks[2], (16,), jnp.float32)
    p["be1"] = 0.1 * jax.random.normal(ks[3], (16,), jnp.float32)
    p["rm1"] = 0.1 * jax.random.normal(ks[4], (16,), jnp.float32)
    p["rv1"] = jax.random.uniform(ks[5], (16,), jnp.float32, 0.5, 1.5)
    # layer2: Conv2d(16, 32, 5, pad=2) + BatchNorm2d(32)
    p["w2"] = 0.05 * jax.random.normal(ks[6], (32, 16, 5, 5), jnp.float32)
    p["b2"] = 0.05 * jax.random.normal(ks[7], (32,), jnp.float32)
    p["g2"] = 1.0 + 0.1 * jax.random.normal(ks[8], (32,), jnp.float32)
    p["be2"] = 0.1 * jax.random.normal(ks[9], (32,), jnp.float32)
    p["rm2"] = 0.1 * jax.random.normal(ks[10], (32,), jnp.float32)
    p["rv2"] = jax.random.uniform(ks[11], (32,), jnp.float32, 0.5, 1.5)
    # fc: Linear(7*7*32, 10)  (stored [in, out], "in" in PyTorch NCHW-flatten order)
    kf1, kf2 = jax.random.split(jax.random.fold_in(key, 99))
    p["wf"] = 0.02 * jax.random.normal(kf1, (7 * 7 * 32, 10), jnp.float32)
    p["bf"] = 0.02 * jax.random.normal(kf2, (10,), jnp.float32)
    return p


# ------------------------------ pure-JAX reference --------------------------- #

def _ref_forward(x_nchw, p, eps=1e-5):
    x = jnp.transpose(x_nchw, (0, 2, 3, 1)).astype(jnp.float32)

    def blk(x, w, b, g, be, rm, rv):
        B, H, W, Cin = x.shape
        Cout = w.shape[0]
        xp = jnp.pad(x, ((0, 0), (2, 2), (2, 2), (0, 0)))
        cols = [xp[:, dh:dh + H, dw:dw + W, :] for dh in range(5) for dw in range(5)]
        patches = jnp.stack(cols, axis=3).reshape(B * H * W, 25 * Cin)
        wm = jnp.transpose(w, (2, 3, 1, 0)).reshape(25 * Cin, Cout)
        y = patches @ wm + b
        y = (y - rm) / jnp.sqrt(rv + eps) * g + be
        y = jnp.maximum(y, 0.0).reshape(B, H, W, Cout)
        return y.reshape(B, H // 2, 2, W // 2, 2, Cout).max(axis=(2, 4))

    out = blk(x, p["w1"], p["b1"], p["g1"], p["be1"], p["rm1"], p["rv1"])
    out = blk(out, p["w2"], p["b2"], p["g2"], p["be2"], p["rm2"], p["rv2"])
    flat = jnp.transpose(out, (0, 3, 1, 2)).reshape(out.shape[0], -1)
    logits = flat @ p["wf"] + p["bf"]
    return jax.nn.log_softmax(logits, axis=1)


if __name__ == "__main__":
    key = jax.random.PRNGKey(0)
    kx, kp = jax.random.split(key)
    # MNIST-shaped input (28x28 required by the fc layer); small batch that still
    # exercises a multi-step parallel grid (layer1 grid=7, layer2 grid=2).
    x = jax.random.normal(kx, (16, 1, 28, 28), jnp.float32)
    params = init_params(kp)

    out = jax.block_until_ready(cnn_mnist_forward(x, params))
    assert out.shape == (16, 10), out.shape

    ref = _ref_forward(x, params)
    # Conv matmuls run with bf16 inputs (f32 accumulation), so compare against the
    # f32 reference with a bf16-appropriate tolerance (~1e-3 observed error).
    err = float(jnp.max(jnp.abs(out - ref)))
    assert jnp.allclose(out, ref, atol=2e-2, rtol=2e-2), err

    print("KERNEL_OK")
</pallas_src>

<mosaic_0001>
module attributes {stable_mosaic.version = 11 : i64} {
  func.func private @main(%arg0: i32) attributes {dimension_semantics = [#tpu.dimension_semantics<core_parallel>], iteration_bounds = array<i64: 2>, tpu.core_type = #tpu.core_type<sc_scalar_subcore>, window_params = []} {
    return
  }
}

module attributes {stable_mosaic.version = 11 : i64} {
  func.func private @main(%arg0: i32) attributes {dimension_semantics = [#tpu.dimension_semantics<core_parallel>], iteration_bounds = array<i64: 2>, tpu.core_type = #tpu.core_type<sc_scalar_subcore>, window_params = []} {
    return
  }
}

module attributes {stable_mosaic.version = 11 : i64} {
  func.func @_conv_bn_relu_pool_kernel(%arg0: i32, %arg1: memref<1792x32xbf16, #tpu.memory_space<vmem>>, %arg2: memref<32x16xbf16, #tpu.memory_space<vmem>>, %arg3: memref<1x16xf32, #tpu.memory_space<vmem>>, %arg4: memref<1x16xf32, #tpu.memory_space<vmem>>, %arg5: memref<448x16xf32, #tpu.memory_space<vmem>>) attributes {dimension_semantics = [#tpu.dimension_semantics<parallel>], iteration_bounds = array<i64: 7>, scalar_prefetch = 0 : i64, scratch_operands = 0 : i64, tpu.core_type = #tpu.core_type<tc>, window_params = [{transform_indices = @transform_0, window_bounds = array<i64: 1792, 32>}, {pipeline_mode = #tpu.pipeline_mode<synchronous>, transform_indices = @transform_1, window_bounds = array<i64: 32, 16>}, {pipeline_mode = #tpu.pipeline_mode<synchronous>, transform_indices = @transform_2, window_bounds = array<i64: 1, 16>}, {pipeline_mode = #tpu.pipeline_mode<synchronous>, transform_indices = @transform_3, window_bounds = array<i64: 1, 16>}, {transform_indices = @transform_4, window_bounds = array<i64: 448, 16>}]} {
    %c0 = arith.constant 0 : index
    %c0_0 = arith.constant 0 : index
    %0 = vector.load %arg1[%c0, %c0_0] : memref<1792x32xbf16, #tpu.memory_space<vmem>>, vector<1792x32xbf16>
    %c0_1 = arith.constant 0 : index
    %c0_2 = arith.constant 0 : index
    %1 = vector.load %arg2[%c0_1, %c0_2] : memref<32x16xbf16, #tpu.memory_space<vmem>>, vector<32x16xbf16>
    %cst = arith.constant dense<0.000000e+00> : vector<1792x16xf32>
    %2 = tpu.matmul %0, %1, %cst {dimension_numbers = #tpu.dot_dimension_numbers<[1], [0], [0], [1], [0, 0, 1, 1], [], []>} : vector<1792x32xbf16>, vector<32x16xbf16>, vector<1792x16xf32> -> vector<1792x16xf32>
    %c0_3 = arith.constant 0 : index
    %c0_4 = arith.constant 0 : index
    %3 = vector.load %arg3[%c0_3, %c0_4] : memref<1x16xf32, #tpu.memory_space<vmem>>, vector<1x16xf32>
    %4 = vector.broadcast %3 : vector<1x16xf32> to vector<1792x16xf32>
    %5 = arith.mulf %2, %4 : vector<1792x16xf32>
    %c0_5 = arith.constant 0 : index
    %c0_6 = arith.constant 0 : index
    %6 = vector.load %arg4[%c0_5, %c0_6] : memref<1x16xf32, #tpu.memory_space<vmem>>, vector<1x16xf32>
    %7 = vector.broadcast %6 : vector<1x16xf32> to vector<1792x16xf32>
    %8 = arith.addf %5, %7 : vector<1792x16xf32>
    %9 = vector.extract_strided_slice %8 {offsets = [0, 0], sizes = [448, 16], strides = [1, 1]} : vector<1792x16xf32> to vector<448x16xf32>
    %10 = vector.extract_strided_slice %8 {offsets = [448, 0], sizes = [448, 16], strides = [1, 1]} : vector<1792x16xf32> to vector<448x16xf32>
    %11 = arith.maximumf %9, %10 : vector<448x16xf32>
    %12 = vector.extract_strided_slice %8 {offsets = [896, 0], sizes = [448, 16], strides = [1, 1]} : vector<1792x16xf32> to vector<448x16xf32>
    %13 = vector.extract_strided_slice %8 {offsets = [1344, 0], sizes = [448, 16], strides = [1, 1]} : vector<1792x16xf32> to vector<448x16xf32>
    %14 = arith.maximumf %12, %13 : vector<448x16xf32>
    %15 = arith.maximumf %11, %14 : vector<448x16xf32>
    %cst_7 = arith.constant 0.000000e+00 : f32
    %16 = vector.broadcast %cst_7 : f32 to vector<448x16xf32>
    %17 = arith.maximumf %15, %16 : vector<448x16xf32>
    %c0_8 = arith.constant 0 : index
    %c0_9 = arith.constant 0 : index
    %18 = vector.load %arg5[%c0_8, %c0_9] : memref<448x16xf32, #tpu.memory_space<vmem>>, vector<448x16xf32>
    tpu.vector_store %arg5[%c0_8, %c0_9], %17 {strides = array<i32>} : memref<448x16xf32, #tpu.memory_space<vmem>>, vector<448x16xf32>,
    return
  }
  func.func @transform_0(%arg0: i32) -> (i32, i32) {
    %c0_i32 = arith.constant 0 : i32
    %c0_i32_0 = arith.constant 0 : i32
    return %arg0, %c0_i32 : i32, i32
  }
  func.func @transform_1(%arg0: i32) -> (i32, i32) {
    %c0_i32 = arith.constant 0 : i32
    %c0_i32_0 = arith.constant 0 : i32
    %c0_i32_1 = arith.constant 0 : i32
    return %c0_i32, %c0_i32_0 : i32, i32
  }
  func.func @transform_2(%arg0: i32) -> (i32, i32) {
    %c0_i32 = arith.constant 0 : i32
    %c0_i32_0 = arith.constant 0 : i32
    %c0_i32_1 = arith.constant 0 : i32
    return %c0_i32, %c0_i32_0 : i32, i32
  }
  func.func @transform_3(%arg0: i32) -> (i32, i32) {
    %c0_i32 = arith.constant 0 : i32
    %c0_i32_0 = arith.constant 0 : i32
    %c0_i32_1 = arith.constant 0 : i32
    return %c0_i32, %c0_i32_0 : i32, i32
  }
  func.func @transform_4(%arg0: i32) -> (i32, i32) {
    %c0_i32 = arith.constant 0 : i32
    %c0_i32_0 = arith.constant 0 : i32
    return %arg0, %c0_i32 : i32, i32
  }
}

module attributes {stable_mosaic.version = 11 : i64} {
  func.func @_conv_bn_relu_pool_kernel(%arg0: i32, %arg1: memref<1568x400xbf16, #tpu.memory_space<vmem>>, %arg2: memref<400x32xbf16, #tpu.memory_space<vmem>>, %arg3: memref<1x32xf32, #tpu.memory_space<vmem>>, %arg4: memref<1x32xf32, #tpu.memory_space<vmem>>, %arg5: memref<392x32xf32, #tpu.memory_space<vmem>>) attributes {dimension_semantics = [#tpu.dimension_semantics<parallel>], iteration_bounds = array<i64: 2>, scalar_prefetch = 0 : i64, scratch_operands = 0 : i64, tpu.core_type = #tpu.core_type<tc>, window_params = [{transform_indices = @transform_0, window_bounds = array<i64: 1568, 400>}, {pipeline_mode = #tpu.pipeline_mode<synchronous>, transform_indices = @transform_1, window_bounds = array<i64: 400, 32>}, {pipeline_mode = #tpu.pipeline_mode<synchronous>, transform_indices = @transform_2, window_bounds = array<i64: 1, 32>}, {pipeline_mode = #tpu.pipeline_mode<synchronous>, transform_indices = @transform_3, window_bounds = array<i64: 1, 32>}, {transform_indices = @transform_4, window_bounds = array<i64: 392, 32>}]} {
    %c0 = arith.constant 0 : index
    %c0_0 = arith.constant 0 : index
    %0 = vector.load %arg1[%c0, %c0_0] : memref<1568x400xbf16, #tpu.memory_space<vmem>>, vector<1568x400xbf16>
    %c0_1 = arith.constant 0 : index
    %c0_2 = arith.constant 0 : index
    %1 = vector.load %arg2[%c0_1, %c0_2] : memref<400x32xbf16, #tpu.memory_space<vmem>>, vector<400x32xbf16>
    %cst = arith.constant dense<0.000000e+00> : vector<1568x32xf32>
    %2 = tpu.matmul %0, %1, %cst {dimension_numbers = #tpu.dot_dimension_numbers<[1], [0], [0], [1], [0, 0, 1, 1], [], []>} : vector<1568x400xbf16>, vector<400x32xbf16>, vector<1568x32xf32> -> vector<1568x32xf32>
    %c0_3 = arith.constant 0 : index
    %c0_4 = arith.constant 0 : index
    %3 = vector.load %arg3[%c0_3, %c0_4] : memref<1x32xf32, #tpu.memory_space<vmem>>, vector<1x32xf32>
    %4 = vector.broadcast %3 : vector<1x32xf32> to vector<1568x32xf32>
    %5 = arith.mulf %2, %4 : vector<1568x32xf32>
    %c0_5 = arith.constant 0 : index
    %c0_6 = arith.constant 0 : index
    %6 = vector.load %arg4[%c0_5, %c0_6] : memref<1x32xf32, #tpu.memory_space<vmem>>, vector<1x32xf32>
    %7 = vector.broadcast %6 : vector<1x32xf32> to vector<1568x32xf32>
    %8 = arith.addf %5, %7 : vector<1568x32xf32>
    %9 = vector.extract_strided_slice %8 {offsets = [0, 0], sizes = [392, 32], strides = [1, 1]} : vector<1568x32xf32> to vector<392x32xf32>
    %10 = vector.extract_strided_slice %8 {offsets = [392, 0], sizes = [392, 32], strides = [1, 1]} : vector<1568x32xf32> to vector<392x32xf32>
    %11 = arith.maximumf %9, %10 : vector<392x32xf32>
    %12 = vector.extract_strided_slice %8 {offsets = [784, 0], sizes = [392, 32], strides = [1, 1]} : vector<1568x32xf32> to vector<392x32xf32>
    %13 = vector.extract_strided_slice %8 {offsets = [1176, 0], sizes = [392, 32], strides = [1, 1]} : vector<1568x32xf32> to vector<392x32xf32>
    %14 = arith.maximumf %12, %13 : vector<392x32xf32>
    %15 = arith.maximumf %11, %14 : vector<392x32xf32>
    %cst_7 = arith.constant 0.000000e+00 : f32
    %16 = vector.broadcast %cst_7 : f32 to vector<392x32xf32>
    %17 = arith.maximumf %15, %16 : vector<392x32xf32>
    %c0_8 = arith.constant 0 : index
    %c0_9 = arith.constant 0 : index
    %18 = vector.load %arg5[%c0_8, %c0_9] : memref<392x32xf32, #tpu.memory_space<vmem>>, vector<392x32xf32>
    tpu.vector_store %arg5[%c0_8, %c0_9], %17 {strides = array<i32>} : memref<392x32xf32, #tpu.memory_space<vmem>>, vector<392x32xf32>,
    return
  }
  func.func @transform_0(%arg0: i32) -> (i32, i32) {
    %c0_i32 = arith.constant 0 : i32
    %c0_i32_0 = arith.constant 0 : i32
    return %arg0, %c0_i32 : i32, i32
  }
  func.func @transform_1(%arg0: i32) -> (i32, i32) {
    %c0_i32 = arith.constant 0 : i32
    %c0_i32_0 = arith.constant 0 : i32
    %c0_i32_1 = arith.constant 0 : i32
    return %c0_i32, %c0_i32_0 : i32, i32
  }
  func.func @transform_2(%arg0: i32) -> (i32, i32) {
    %c0_i32 = arith.constant 0 : i32
    %c0_i32_0 = arith.constant 0 : i32
    %c0_i32_1 = arith.constant 0 : i32
    return %c0_i32, %c0_i32_0 : i32, i32
  }
  func.func @transform_3(%arg0: i32) -> (i32, i32) {
    %c0_i32 = arith.constant 0 : i32
    %c0_i32_0 = arith.constant 0 : i32
    %c0_i32_1 = arith.constant 0 : i32
    return %c0_i32, %c0_i32_0 : i32, i32
  }
  func.func @transform_4(%arg0: i32) -> (i32, i32) {
    %c0_i32 = arith.constant 0 : i32
    %c0_i32_0 = arith.constant 0 : i32
    return %arg0, %c0_i32 : i32, i32
  }
}

module attributes {stable_mosaic.version = 11 : i64} {
  func.func @_fc_logsoftmax_kernel(%arg0: i32, %arg1: memref<16x1568xf32, #tpu.memory_space<vmem>>, %arg2: memref<1568x128xf32, #tpu.memory_space<vmem>>, %arg3: memref<1x128xf32, #tpu.memory_space<vmem>>, %arg4: memref<16x128xf32, #tpu.memory_space<vmem>>) attributes {dimension_semantics = [#tpu.dimension_semantics<parallel>], iteration_bounds = array<i64: 1>, scalar_prefetch = 0 : i64, scratch_operands = 0 : i64, tpu.core_type = #tpu.core_type<tc>, window_params = [{transform_indices = @transform_0, window_bounds = array<i64: 16, 1568>}, {pipeline_mode = #tpu.pipeline_mode<synchronous>, transform_indices = @transform_1, window_bounds = array<i64: 1568, 128>}, {pipeline_mode = #tpu.pipeline_mode<synchronous>, transform_indices = @transform_2, window_bounds = array<i64: 1, 128>}, {transform_indices = @transform_3, window_bounds = array<i64: 16, 128>}]} {
    %c0 = arith.constant 0 : index
    %c0_0 = arith.constant 0 : index
    %0 = vector.load %arg1[%c0, %c0_0] : memref<16x1568xf32, #tpu.memory_space<vmem>>, vector<16x1568xf32>
    %c0_1 = arith.constant 0 : index
    %c0_2 = arith.constant 0 : index
    %1 = vector.load %arg2[%c0_1, %c0_2] : memref<1568x128xf32, #tpu.memory_space<vmem>>, vector<1568x128xf32>
    %cst = arith.constant dense<0.000000e+00> : vector<16x128xf32>
    %2 = tpu.matmul %0, %1, %cst {dimension_numbers = #tpu.dot_dimension_numbers<[1], [0], [0], [1], [0, 0, 1, 1], [], []>} : vector<16x1568xf32>, vector<1568x128xf32>, vector<16x128xf32> -> vector<16x128xf32>
    %c0_3 = arith.constant 0 : index
    %c0_4 = arith.constant 0 : index
    %3 = vector.load %arg3[%c0_3, %c0_4] : memref<1x128xf32, #tpu.memory_space<vmem>>, vector<1x128xf32>
    %4 = vector.broadcast %3 : vector<1x128xf32> to vector<16x128xf32>
    %5 = arith.addf %2, %4 : vector<16x128xf32>
    %cst_5 = arith.constant dense<0xFF800000> : vector<16xf32>
    %6 = vector.multi_reduction <maximumf>, %5, %cst_5 [1] : vector<16x128xf32> to vector<16xf32>
    %7 = vector.shape_cast %6 : vector<16xf32> to vector<16x1xf32>
    %8 = vector.broadcast %7 : vector<16x1xf32> to vector<16x128xf32>
    %9 = arith.subf %5, %8 : vector<16x128xf32>
    %10 = math.exp %9 : vector<16x128xf32>
    %cst_6 = arith.constant dense<0.000000e+00> : vector<16xf32>
    %11 = vector.multi_reduction <add>, %10, %cst_6 [1] : vector<16x128xf32> to vector<16xf32>
    %12 = vector.shape_cast %11 : vector<16xf32> to vector<16x1xf32>
    %13 = math.log %12 : vector<16x1xf32>
    %14 = vector.broadcast %13 : vector<16x1xf32> to vector<16x128xf32>
    %15 = arith.subf %9, %14 : vector<16x128xf32>
    %c0_7 = arith.constant 0 : index
    %c0_8 = arith.constant 0 : index
    %16 = vector.load %arg4[%c0_7, %c0_8] : memref<16x128xf32, #tpu.memory_space<vmem>>, vector<16x128xf32>
    tpu.vector_store %arg4[%c0_7, %c0_8], %15 {strides = array<i32>} : memref<16x128xf32, #tpu.memory_space<vmem>>, vector<16x128xf32>,
    return
  }
  func.func @transform_0(%arg0: i32) -> (i32, i32) {
    %c0_i32 = arith.constant 0 : i32
    %c0_i32_0 = arith.constant 0 : i32
    return %arg0, %c0_i32 : i32, i32
  }
  func.func @transform_1(%arg0: i32) -> (i32, i32) {
    %c0_i32 = arith.constant 0 : i32
    %c0_i32_0 = arith.constant 0 : i32
    %c0_i32_1 = arith.constant 0 : i32
    return %c0_i32, %c0_i32_0 : i32, i32
  }
  func.func @transform_2(%arg0: i32) -> (i32, i32) {
    %c0_i32 = arith.constant 0 : i32
    %c0_i32_0 = arith.constant 0 : i32
    %c0_i32_1 = arith.constant 0 : i32
    return %c0_i32, %c0_i32_0 : i32, i32
  }
  func.func @transform_3(%arg0: i32) -> (i32, i32) {
    %c0_i32 = arith.constant 0 : i32
    %c0_i32_0 = arith.constant 0 : i32
    return %arg0, %c0_i32 : i32, i32
  }
}

</mosaic_0001>

<llo_original>
// kernel: cnn_mnist_forward.3
$region0: #{cnn_mnist_forward.3}
  #allocation0 [shape = 'u32[]', space=smem, size = 0x4, offset = 0x4, fixed_abs, tag = 'smem constant byte address 0x4 - core index']
  #allocation1 [shape = 'u32[144,128]{1,0:T(1,128)}', space=vmem, size = 0x12000, scoped, tag = 'internal scratch']
  %s0 = inlined_call_operand.vmem [shape: bf16[12544,32], index: 0, kind: input, shape index: {}]
  %s1 = inlined_call_operand.vmem [shape: bf16[32,16], index: 1, kind: input, shape index: {}]
  %s2 = inlined_call_operand.vmem [shape: f32[1,16], index: 2, kind: input, shape index: {}]
  %s3 = inlined_call_operand.vmem [shape: f32[1,16], index: 3, kind: input, shape index: {}]
  %s4 = inlined_call_operand.vmem [shape: f32[3136,16], index: 4, kind: output, shape index: {}]
  %s5 = sld [smem:[#allocation0]]
  $region49: #{cnn_mnist_forward.3} parent=0
    _
  %s7 = ssub.s32 1, %s5
  %s8 = scalar_select 0, %s7, %s5
  loop: start=0, step=1, limit=9
  $region2: #{cnn_mnist_forward.3} parent=0 // loop_pre_header
    _
  $region3: #{cnn_mnist_forward.3} parent=0 // loop_header
    %s10 = sphi 0, %s14
    %p11 = scmp.ge.s32.totalorder %s10, 9
    %s20 = sphi 0, %s22
    %s23 = sphi 0, %s20
    %s24 = sphi 0, %s23
    %s40 = sphi 0, %s24
    %s44 = sphi 0, %s44
    %s46 = sphi 0, %s44
    %s47 = sphi 0, %s46
    %s61 = sphi 0, %s47
    %s65 = sphi 0, %s65
    %s67 = sphi 0, %s65
    %s68 = sphi 0, %s67
    %s82 = sphi 0, %s68
    %s86 = sphi 0, %s86
    %s88 = sphi 0, %s86
    %s89 = sphi 0, %s88
    %s103 = sphi 0, %s89
    %s109 = sphi 0, %s111
    %s112 = sphi 0, %s109
    %s113 = sphi 0, %s112
    %s129 = sphi 0, %s113
  $region4: #{cnn_mnist_forward.3} parent=0 // loop_header_branch
    %13 = sbr.rel (%p11) target = $region8
  $region5: #{cnn_mnist_forward.3} parent=0 // loop_body
    %s15 = ssub.s32 %s10, 1
    %s16 = ssub.s32 %s10, 2
    %s17 = sadd.s32 %s10, 1
    %s18 = ssub.s32 %s10, %s17
    %p19 = scmp.eq.s32.totalorder %s18, 0
    %s21 = sadd.s32 %s20, 1
    %s22 = scalar_select %p19, %s20, %s21
    %p25 = pneg %p19
    %p26 = scmp.eq.s32.totalorder %s10, 6
    %p27 = por %p25, %p26
    %p28 = scmp.ne.s32.totalorder %s20, %s23
    %p29 = scmp.eq.s32.totalorder %s10, 0
    %p30 = por %p28, %p29
    %p31 = scmp.ne.s32.totalorder %s20, %s23
    %p32 = scmp.eq.s32.totalorder %s15, 6
    %p33 = por %p31, %p32
    %p34 = scmp.ne.s32.totalorder %s23, %s24
    %p35 = scmp.eq.s32.totalorder %s15, 0
    %p36 = por %p34, %p35
    %p37 = scmp.ne.s32.totalorder %s23, %s24
    %p38 = scmp.eq.s32.totalorder %s16, 6
    %p39 = por %p37, %p38
    %p41 = scmp.ne.s32.totalorder %s24, %s40
    %p42 = scmp.eq.s32.totalorder %s16, 0
    %p43 = por %p41, %p42
    %s45 = sadd.s32 %s44, 1
    %p48 = scmp.eq.s32.totalorder %s10, 6
    %p49 = scmp.ne.s32.totalorder %s44, %s46
    %p50 = scmp.eq.s32.totalorder %s10, 0
    %p51 = por %p49, %p50
    %p52 = scmp.ne.s32.totalorder %s44, %s46
    %p53 = scmp.eq.s32.totalorder %s15, 6
    %p54 = por %p52, %p53
    %p55 = scmp.ne.s32.totalorder %s46, %s47
    %p56 = scmp.eq.s32.totalorder %s15, 0
    %p57 = por %p55, %p56
    %p58 = scmp.ne.s32.totalorder %s46, %s47
    %p59 = scmp.eq.s32.totalorder %s16, 6
    %p60 = por %p58, %p59
    %p62 = scmp.ne.s32.totalorder %s47, %s61
    %p63 = scmp.eq.s32.totalorder %s16, 0
    %p64 = por %p62, %p63
    %s66 = sadd.s32 %s65, 1
    %p69 = scmp.eq.s32.totalorder %s10, 6
    %p70 = scmp.ne.s32.totalorder %s65, %s67
    %p71 = scmp.eq.s32.totalorder %s10, 0
    %p72 = por %p70, %p71
    %p73 = scmp.ne.s32.totalorder %s65, %s67
    %p74 = scmp.eq.s32.totalorder %s15, 6
    %p75 = por %p73, %p74
    %p76 = scmp.ne.s32.totalorder %s67, %s68
    %p77 = scmp.eq.s32.totalorder %s15, 0
    %p78 = por %p76, %p77
    %p79 = scmp.ne.s32.totalorder %s67, %s68
    %p80 = scmp.eq.s32.totalorder %s16, 6
    %p81 = por %p79, %p80
    %p83 = scmp.ne.s32.totalorder %s68, %s82
    %p84 = scmp.eq.s32.totalorder %s16, 0
    %p85 = por %p83, %p84
    %s87 = sadd.s32 %s86, 1
    %p90 = scmp.eq.s32.totalorder %s10, 6
    %p91 = scmp.ne.s32.totalorder %s86, %s88
    %p92 = scmp.eq.s32.totalorder %s10, 0
    %p93 = por %p91, %p92
    %p94 = scmp.ne.s32.totalorder %s86, %s88
    %p95 = scmp.eq.s32.totalorder %s15, 6
    %p96 = por %p94, %p95
    %p97 = scmp.ne.s32.totalorder %s88, %s89
    %p98 = scmp.eq.s32.totalorder %s15, 0
    %p99 = por %p97, %p98
    %p100 = scmp.ne.s32.totalorder %s88, %s89
    %p101 = scmp.eq.s32.totalorder %s16, 6
    %p102 = por %p100, %p101
    %p104 = scmp.ne.s32.totalorder %s89, %s103
    %p105 = scmp.eq.s32.totalorder %s16, 0
    %p106 = por %p104, %p105
    %s107 = ssub.s32 %s10, %s17
    %p108 = scmp.eq.s32.totalorder %s107, 0
    %s110 = sadd.s32 %s109, 1
    %s111 = scalar_select %p108, %s109, %s110
    %p114 = pneg %p108
    %p115 = scmp.eq.s32.totalorder %s10, 6
    %p116 = por %p114, %p115
    %p117 = scmp.ne.s32.totalorder %s109, %s112
    %p118 = scmp.eq.s32.totalorder %s10, 0
    %p119 = por %p117, %p118
    %p120 = scmp.ne.s32.totalorder %s109, %s112
    %p121 = scmp.eq.s32.totalorder %s15, 6
    %p122 = por %p120, %p121
    %p123 = scmp.ne.s32.totalorder %s112, %s113
    %p124 = scmp.eq.s32.totalorder %s15, 0
    %p125 = por %p123, %p124
    %p126 = scmp.ne.s32.totalorder %s112, %s113
    %p127 = scmp.eq.s32.totalorder %s16, 6
    %p128 = por %p126, %p127
    %p130 = scmp.ne.s32.totalorder %s113, %s129
    %p131 = scmp.eq.s32.totalorder %s16, 0
    %p132 = por %p130, %p131
    %p133 = scmp.le.s32.totalorder 1, %s10
    %p134 = scmp.lt.s32.totalorder %s10, 8
    %p135 = pnand %p133, %p134
    %p136 = pneg %p135
    // Predicated region
    $region9: #{cnn_mnist_forward.3} parent=5 // pred_check
      _
    $region10: #{cnn_mnist_forward.3} parent=5 // pred_check_branch
      %138 = sbr.rel (%p135) target = $region12
    $region11: #{cnn_mnist_forward.3} parent=5 // pred_region
      %s139 = ssub.s32 %s10, 1
      // Predicated region
      $region13: #{cnn_mnist_forward.3} parent=11 // pred_check
        %p140 = pneg %p57
      $region14: #{cnn_mnist_forward.3} parent=11 // pred_check_branch
        %142 = sbr.rel (%p140) target = $region16
      $region15: #{cnn_mnist_forward.3} parent=11 // pred_region
        _
      $region16: #{cnn_mnist_forward.3} parent=11 // pred_fallthru
        _
      // Predicated region
      $region17: #{cnn_mnist_forward.3} parent=11 // pred_check
        %p143 = pneg %p78
      $region18: #{cnn_mnist_forward.3} parent=11 // pred_check_branch
        %145 = sbr.rel (%p143) target = $region20
      $region19: #{cnn_mnist_forward.3} parent=11 // pred_region
        _
      $region20: #{cnn_mnist_forward.3} parent=11 // pred_fallthru
        _
      // Predicated region
      $region21: #{cnn_mnist_forward.3} parent=11 // pred_check
        %p146 = pneg %p99
      $region22: #{cnn_mnist_forward.3} parent=11 // pred_check_branch
        %148 = sbr.rel (%p146) target = $region24
      $region23: #{cnn_mnist_forward.3} parent=11 // pred_region
        _
      $region24: #{cnn_mnist_forward.3} parent=11 // pred_fallthru
        _
    $region12: #{cnn_mnist_forward.3} parent=5 // pred_fallthru
      _
    %p149 = scmp.lt.s32.totalorder %s10, 7
    // Predicated region
    $region25: #{cnn_mnist_forward.3} parent=5 // pred_check
      %p150 = pneg %p149
    $region26: #{cnn_mnist_forward.3} parent=5 // pred_check_branch
      %152 = sbr.rel (%p150) target = $region28
    $region27: #{cnn_mnist_forward.3} parent=5 // pred_region
      // Predicated region
      $region29: #{cnn_mnist_forward.3} parent=27 // pred_check
        %p153 = pneg %p30
      $region30: #{cnn_mnist_forward.3} parent=27 // pred_check_branch
        %155 = sbr.rel (%p153) target = $region32
      $region31: #{cnn_mnist_forward.3} parent=27 // pred_region
        %s156 = smul.u32 224, %s10
        %p157 = scmp.lt.s32.totalorder %s156, 1567
        %s158 = scalar_select %p157, %s156, 1567
        %s159 = smul.addr %s158, 4
        %s160 = scalar_lea.vmem %s0, %s159
        %s161 = smul.u32 224, %s10
      $region32: #{cnn_mnist_forward.3} parent=27 // pred_fallthru
        _
    $region28: #{cnn_mnist_forward.3} parent=5 // pred_fallthru
      _
    %p162 = scmp.le.s32.totalorder 1, %s10
    %p163 = scmp.lt.s32.totalorder %s10, 8
    %p164 = pnand %p162, %p163
    %p165 = pneg %p164
    // Predicated region
    $region33: #{cnn_mnist_forward.3} parent=5 // pred_check
      _
    $region34: #{cnn_mnist_forward.3} parent=5 // pred_check_branch
      %167 = sbr.rel (%p164) target = $region36
    $region35: #{cnn_mnist_forward.3} parent=5 // pred_region
      %s168 = ssub.s32 %s10, 1
      %s169 = smul.u32 224, %s15
      %p170 = scmp.lt.s32.totalorder %s169, 1567
      %s171 = scalar_select %p170, %s169, 1567
      %s172 = smul.addr %s171, 4
      %s173 = scalar_lea.vmem %s0, %s172
      %p174 = pneg %p36
      %p175 = pneg %p33
      %p176 = pneg %p57
      %p177 = pneg %p54
      %p178 = pneg %p78
      %p179 = pneg %p75
      %p180 = pneg %p99
      %p181 = pneg %p96
      %p182 = pneg %p125
      %p183 = pneg %p122
      %s184 = smul.u32 56, %s15
      %p185 = scmp.lt.s32.totalorder %s184, 391
      %s186 = scalar_select %p185, %s184, 391
      %s187 = smul.addr %s186, 8
      %s188 = scalar_lea.vmem %s4, %s187
      %s189 = smul.u32 224, %s15
      %p190 = scmp.lt.s32.totalorder %s189, 1567
      %s191 = scalar_select %p190, %s189, 1567
      %s192 = smul.addr %s191, 4
      %s193 = scalar_lea.vmem %s0, %s192
      %s194 = smul.u32 224, %s15
      %s195 = smul.u32 56, %s15
      %p196 = scmp.lt.s32.totalorder %s195, 391
      %s197 = scalar_select %p196, %s195, 391
      %s198 = smul.addr %s197, 8
      %s199 = scalar_lea.vmem %s4, %s198
      %s200 = smul.u32 56, %s15
      %v202 = vld [vmem:[%s193] sm:$0xf]
      %v203 = vld [vmem:[%s193 + $0x4] sm:$0xf]
      %v204 = vld [vmem:[%s193 + $0x8] sm:$0xf]
      %v205 = vld [vmem:[%s193 + $0xc] sm:$0xf]
      %v206 = vld [vmem:[%s193 + $0x10] sm:$0xf]
      %v207 = vld [vmem:[%s193 + $0x14] sm:$0xf]
      %v208 = vld [vmem:[%s193 + $0x18] sm:$0xf]
      %v209 = vld [vmem:[%s193 + $0x1c] sm:$0xf]
      %v210 = vld [vmem:[%s193 + $0x20] sm:$0xf]
      %v211 = vld [vmem:[%s193 + $0x24] sm:$0xf]
      %v212 = vld [vmem:[%s193 + $0x28] sm:$0xf]
      %v213 = vld [vmem:[%s193 + $0x2c] sm:$0xf]
      %v214 = vld [vmem:[%s193 + $0x30] sm:$0xf]
      %v215 = vld [vmem:[%s193 + $0x34] sm:$0xf]
      %v216 = vld [vmem:[%s193 + $0x38] sm:$0xf]
      %v217 = vld [vmem:[%s193 + $0x3c] sm:$0xf]
      %v218 = vld [vmem:[%s193 + $0x40] sm:$0xf]
      %v219 = vld [vmem:[%s193 + $0x44] sm:$0xf]
      %v220 = vld [vmem:[%s193 + $0x48] sm:$0xf]
      %v221 = vld [vmem:[%s193 + $0x4c] sm:$0xf]
      %v222 = vld [vmem:[%s193 + $0x50] sm:$0xf]
      %v223 = vld [vmem:[%s193 + $0x54] sm:$0xf]
      %v224 = vld [vmem:[%s193 + $0x58] sm:$0xf]
      %v225 = vld [vmem:[%s193 + $0x5c] sm:$0xf]
      %v226 = vld [vmem:[%s193 + $0x60] sm:$0xf]
      %v227 = vld [vmem:[%s193 + $0x64] sm:$0xf]
      %v228 = vld [vmem:[%s193 + $0x68] sm:$0xf]
      %v229 = vld [vmem:[%s193 + $0x6c] sm:$0xf]
      %v230 = vld [vmem:[%s193 + $0x70] sm:$0xf]
      %v231 = vld [vmem:[%s193 + $0x74] sm:$0xf]
      %v232 = vld [vmem:[%s193 + $0x78] sm:$0xf]
      %v233 = vld [vmem:[%s193 + $0x7c] sm:$0xf]
      %v234 = vld [vmem:[%s193 + $0x80] sm:$0xf]
      %v235 = vld [vmem:[%s193 + $0x84] sm:$0xf]
      %v236 = vld [vmem:[%s193 + $0x88] sm:$0xf]
      %v237 = vld [vmem:[%s193 + $0x8c] sm:$0xf]
      %v238 = vld [vmem:[%s193 + $0x90] sm:$0xf]
      %v239 = vld [vmem:[%s193 + $0x94] sm:$0xf]
      %v240 = vld [vmem:[%s193 + $0x98] sm:$0xf]
      %v241 = vld [vmem:[%s193 + $0x9c] sm:$0xf]
      %v242 = vld [vmem:[%s193 + $0xa0] sm:$0xf]
      %v243 = vld [vmem:[%s193 + $0xa4] sm:$0xf]
      %v244 = vld [vmem:[%s193 + $0xa8] sm:$0xf]
      %v245 = vld [vmem:[%s193 + $0xac] sm:$0xf]
      %v246 = vld [vmem:[%s193 + $0xb0] sm:$0xf]
      %v247 = vld [vmem:[%s193 + $0xb4] sm:$0xf]
      %v248 = vld [vmem:[%s193 + $0xb8] sm:$0xf]
      %v249 = vld [vmem:[%s193 + $0xbc] sm:$0xf]
      %v250 = vld [vmem:[%s193 + $0xc0] sm:$0xf]
      %v251 = vld [vmem:[%s193 + $0xc4] sm:$0xf]
      %v252 = vld [vmem:[%s193 + $0xc8] sm:$0xf]
      %v253 = vld [vmem:[%s193 + $0xcc] sm:$0xf]
      %v254 = vld [vmem:[%s193 + $0xd0] sm:$0xf]
      %v255 = vld [vmem:[%s193 + $0xd4] sm:$0xf]
      %v256 = vld [vmem:[%s193 + $0xd8] sm:$0xf]
      %v257 = vld [vmem:[%s193 + $0xdc] sm:$0xf]
      %v258 = vld [vmem:[%s193 + $0xe0] sm:$0xf]
      %v259 = vld [vmem:[%s193 + $0xe4] sm:$0xf]
      %v260 = vld [vmem:[%s193 + $0xe8] sm:$0xf]
      %v261 = vld [vmem:[%s193 + $0xec] sm:$0xf]
      %v262 = vld [vmem:[%s193 + $0xf0] sm:$0xf]
      %v263 = vld [vmem:[%s193 + $0xf4] sm:$0xf]
      %v264 = vld [vmem:[%s193 + $0xf8] sm:$0xf]
      %v265 = vld [vmem:[%s193 + $0xfc] sm:$0xf]
      %v266 = vld [vmem:[%s193 + $0x100] sm:$0xf]
      %v267 = vld [vmem:[%s193 + $0x104] sm:$0xf]
      %v268 = vld [vmem:[%s193 + $0x108] sm:$0xf]
      %v269 = vld [vmem:[%s193 + $0x10c] sm:$0xf]
      %v270 = vld [vmem:[%s193 + $0x110] sm:$0xf]
      %v271 = vld [vmem:[%s193 + $0x114] sm:$0xf]
      %v272 = vld [vmem:[%s193 + $0x118] sm:$0xf]
      %v273 = vld [vmem:[%s193 + $0x11c] sm:$0xf]
      %v274 = vld [vmem:[%s193 + $0x120] sm:$0xf]
      %v275 = vld [vmem:[%s193 + $0x124] sm:$0xf]
      %v276 = vld [vmem:[%s193 + $0x128] sm:$0xf]
      %v277 = vld [vmem:[%s193 + $0x12c] sm:$0xf]
      %v278 = vld [vmem:[%s193 + $0x130] sm:$0xf]
      %v279 = vld [vmem:[%s193 + $0x134] sm:$0xf]
      %v280 = vld [vmem:[%s193 + $0x138] sm:$0xf]
      %v281 = vld [vmem:[%s193 + $0x13c] sm:$0xf]
      %v282 = vld [vmem:[%s193 + $0x140] sm:$0xf]
      %v283 = vld [vmem:[%s193 + $0x144] sm:$0xf]
      %v284 = vld [vmem:[%s193 + $0x148] sm:$0xf]
      %v285 = vld [vmem:[%s193 + $0x14c] sm:$0xf]
      %v286 = vld [vmem:[%s193 + $0x150] sm:$0xf]
      %v287 = vld [vmem:[%s193 + $0x154] sm:$0xf]
      %v288 = vld [vmem:[%s193 + $0x158] sm:$0xf]
      %v289 = vld [vmem:[%s193 + $0x15c] sm:$0xf]
      %v290 = vld [vmem:[%s193 + $0x160] sm:$0xf]
      %v291 = vld [vmem:[%s193 + $0x164] sm:$0xf]
      %v292 = vld [vmem:[%s193 + $0x168] sm:$0xf]
      %v293 = vld [vmem:[%s193 + $0x16c] sm:$0xf]
      %v294 = vld [vmem:[%s193 + $0x170] sm:$0xf]
      %v295 = vld [vmem:[%s193 + $0x174] sm:$0xf]
      %v296 = vld [vmem:[%s193 + $0x178] sm:$0xf]
      %v297 = vld [vmem:[%s193 + $0x17c] sm:$0xf]
      %v298 = vld [vmem:[%s193 + $0x180] sm:$0xf]
      %v299 = vld [vmem:[%s193 + $0x184] sm:$0xf]
      %v300 = vld [vmem:[%s193 + $0x188] sm:$0xf]
      %v301 = vld [vmem:[%s193 + $0x18c] sm:$0xf]
      %v302 = vld [vmem:[%s193 + $0x190] sm:$0xf]
      %v303 = vld [vmem:[%s193 + $0x194] sm:$0xf]
      %v304 = vld [vmem:[%s193 + $0x198] sm:$0xf]
      %v305 = vld [vmem:[%s193 + $0x19c] sm:$0xf]
      %v306 = vld [vmem:[%s193 + $0x1a0] sm:$0xf]
      %v307 = vld [vmem:[%s193 + $0x1a4] sm:$0xf]
      %v308 = vld [vmem:[%s193 + $0x1a8] sm:$0xf]
      %v309 = vld [vmem:[%s193 + $0x1ac] sm:$0xf]
      %v310 = vld [vmem:[%s193 + $0x1b0] sm:$0xf]
      %v311 = vld [vmem:[%s193 + $0x1b4] sm:$0xf]
      %v312 = vld [vmem:[%s193 + $0x1b8] sm:$0xf]
      %v313 = vld [vmem:[%s193 + $0x1bc] sm:$0xf]
      %v314 = vld [vmem:[%s193 + $0x1c0] sm:$0xf]
      %v315 = vld [vmem:[%s193 + $0x1c4] sm:$0xf]
      %v316 = vld [vmem:[%s193 + $0x1c8] sm:$0xf]
      %v317 = vld [vmem:[%s193 + $0x1cc] sm:$0xf]
      %v318 = vld [vmem:[%s193 + $0x1d0] sm:$0xf]
      %v319 = vld [vmem:[%s193 + $0x1d4] sm:$0xf]
      %v320 = vld [vmem:[%s193 + $0x1d8] sm:$0xf]
      %v321 = vld [vmem:[%s193 + $0x1dc] sm:$0xf]
      %v322 = vld [vmem:[%s193 + $0x1e0] sm:$0xf]
      %v323 = vld [vmem:[%s193 + $0x1e4] sm:$0xf]
      %v324 = vld [vmem:[%s193 + $0x1e8] sm:$0xf]
      %v325 = vld [vmem:[%s193 + $0x1ec] sm:$0xf]
      %v326 = vld [vmem:[%s193 + $0x1f0] sm:$0xf]
      %v327 = vld [vmem:[%s193 + $0x1f4] sm:$0xf]
      %v328 = vld [vmem:[%s193 + $0x1f8] sm:$0xf]
      %v329 = vld [vmem:[%s193 + $0x1fc] sm:$0xf]
      %v330 = vld [vmem:[%s193 + $0x200] sm:$0xf]
      %v331 = vld [vmem:[%s193 + $0x204] sm:$0xf]
      %v332 = vld [vmem:[%s193 + $0x208] sm:$0xf]
      %v333 = vld [vmem:[%s193 + $0x20c] sm:$0xf]
      %v334 = vld [vmem:[%s193 + $0x210] sm:$0xf]
      %v335 = vld [vmem:[%s193 + $0x214] sm:$0xf]
      %v336 = vld [vmem:[%s193 + $0x218] sm:$0xf]
      %v337 = vld [vmem:[%s193 + $0x21c] sm:$0xf]
      %v338 = vld [vmem:[%s193 + $0x220] sm:$0xf]
      %v339 = vld [vmem:[%s193 + $0x224] sm:$0xf]
      %v340 = vld [vmem:[%s193 + $0x228] sm:$0xf]
      %v341 = vld [vmem:[%s193 + $0x22c] sm:$0xf]
      %v342 = vld [vmem:[%s193 + $0x230] sm:$0xf]
      %v343 = vld [vmem:[%s193 + $0x234] sm:$0xf]
      %v344 = vld [vmem:[%s193 + $0x238] sm:$0xf]
      %v345 = vld [vmem:[%s193 + $0x23c] sm:$0xf]
      %v346 = vld [vmem:[%s193 + $0x240] sm:$0xf]
      %v347 = vld [vmem:[%s193 + $0x244] sm:$0xf]
      %v348 = vld [vmem:[%s193 + $0x248] sm:$0xf]
      %v349 = vld [vmem:[%s193 + $0x24c] sm:$0xf]
      %v350 = vld [vmem:[%s193 + $0x250] sm:$0xf]
      %v351 = vld [vmem:[%s193 + $0x254] sm:$0xf]
      %v352 = vld [vmem:[%s193 + $0x258] sm:$0xf]
      %v353 = vld [vmem:[%s193 + $0x25c] sm:$0xf]
      %v354 = vld [vmem:[%s193 + $0x260] sm:$0xf]
      %v355 = vld [vmem:[%s193 + $0x264] sm:$0xf]
      %v356 = vld [vmem:[%s193 + $0x268] sm:$0xf]
      %v357 = vld [vmem:[%s193 + $0x26c] sm:$0xf]
      %v358 = vld [vmem:[%s193 + $0x270] sm:$0xf]
      %v359 = vld [vmem:[%s193 + $0x274] sm:$0xf]
      %v360 = vld [vmem:[%s193 + $0x278] sm:$0xf]
      %v361 = vld [vmem:[%s193 + $0x27c] sm:$0xf]
      %v362 = vld [vmem:[%s193 + $0x280] sm:$0xf]
      %v363 = vld [vmem:[%s193 + $0x284] sm:$0xf]
      %v364 = vld [vmem:[%s193 + $0x288] sm:$0xf]
      %v365 = vld [vmem:[%s193 + $0x28c] sm:$0xf]
      %v366 = vld [vmem:[%s193 + $0x290] sm:$0xf]
      %v367 = vld [vmem:[%s193 + $0x294] sm:$0xf]
      %v368 = vld [vmem:[%s193 + $0x298] sm:$0xf]
      %v369 = vld [vmem:[%s193 + $0x29c] sm:$0xf]
      %v370 = vld [vmem:[%s193 + $0x2a0] sm:$0xf]
      %v371 = vld [vmem:[%s193 + $0x2a4] sm:$0xf]
      %v372 = vld [vmem:[%s193 + $0x2a8] sm:$0xf]
      %v373 = vld [vmem:[%s193 + $0x2ac] sm:$0xf]
      %v374 = vld [vmem:[%s193 + $0x2b0] sm:$0xf]
      %v375 = vld [vmem:[%s193 + $0x2b4] sm:$0xf]
      %v376 = vld [vmem:[%s193 + $0x2b8] sm:$0xf]
      %v377 = vld [vmem:[%s193 + $0x2bc] sm:$0xf]
      %v378 = vld [vmem:[%s193 + $0x2c0] sm:$0xf]
      %v379 = vld [vmem:[%s193 + $0x2c4] sm:$0xf]
      %v380 = vld [vmem:[%s193 + $0x2c8] sm:$0xf]
      %v381 = vld [vmem:[%s193 + $0x2cc] sm:$0xf]
      %v382 = vld [vmem:[%s193 + $0x2d0] sm:$0xf]
      %v383 = vld [vmem:[%s193 + $0x2d4] sm:$0xf]
      %v384 = vld [vmem:[%s193 + $0x2d8] sm:$0xf]
      %v385 = vld [vmem:[%s193 + $0x2dc] sm:$0xf]
      %v386 = vld [vmem:[%s193 + $0x2e0] sm:$0xf]
      %v387 = vld [vmem:[%s193 + $0x2e4] sm:$0xf]
      %v388 = vld [vmem:[%s193 + $0x2e8] sm:$0xf]
      %v389 = vld [vmem:[%s193 + $0x2ec] sm:$0xf]
      %v390 = vld [vmem:[%s193 + $0x2f0] sm:$0xf]
      %v391 = vld [vmem:[%s193 + $0x2f4] sm:$0xf]
      %v392 = vld [vmem:[%s193 + $0x2f8] sm:$0xf]
      %v393 = vld [vmem:[%s193 + $0x2fc] sm:$0xf]
      %v394 = vld [vmem:[%s193 + $0x300] sm:$0xf]
      %v395 = vld [vmem:[%s193 + $0x304] sm:$0xf]
      %v396 = vld [vmem:[%s193 + $0x308] sm:$0xf]
      %v397 = vld [vmem:[%s193 + $0x30c] sm:$0xf]
      %v398 = vld [vmem:[%s193 + $0x310] sm:$0xf]
      %v399 = vld [vmem:[%s193 + $0x314] sm:$0xf]
      %v400 = vld [vmem:[%s193 + $0x318] sm:$0xf]
      %v401 = vld [vmem:[%s193 + $0x31c] sm:$0xf]
      %v402 = vld [vmem:[%s193 + $0x320] sm:$0xf]
      %v403 = vld [vmem:[%s193 + $0x324] sm:$0xf]
      %v404 = vld [vmem:[%s193 + $0x328] sm:$0xf]
      %v405 = vld [vmem:[%s193 + $0x32c] sm:$0xf]
      %v406 = vld [vmem:[%s193 + $0x330] sm:$0xf]
      %v407 = vld [vmem:[%s193 + $0x334] sm:$0xf]
      %v408 = vld [vmem:[%s193 + $0x338] sm:$0xf]
      %v409 = vld [vmem:[%s193 + $0x33c] sm:$0xf]
      %v410 = vld [vmem:[%s193 + $0x340] sm:$0xf]
      %v411 = vld [vmem:[%s193 + $0x344] sm:$0xf]
      %v412 = vld [vmem:[%s193 + $0x348] sm:$0xf]
      %v413 = vld [vmem:[%s193 + $0x34c] sm:$0xf]
      %v414 = vld [vmem:[%s193 + $0x350] sm:$0xf]
      %v415 = vld [vmem:[%s193 + $0x354] sm:$0xf]
      %v416 = vld [vmem:[%s193 + $0x358] sm:$0xf]
      %v417 = vld [vmem:[%s193 + $0x35c] sm:$0xf]
      %v418 = vld [vmem:[%s193 + $0x360] sm:$0xf]
      %v419 = vld [vmem:[%s193 + $0x364] sm:$0xf]
      %v420 = vld [vmem:[%s193 + $0x368] sm:$0xf]
      %v421 = vld [vmem:[%s193 + $0x36c] sm:$0xf]
      %v422 = vld [vmem:[%s193 + $0x370] sm:$0xf]
      %v423 = vld [vmem:[%s193 + $0x374] sm:$0xf]
      %v424 = vld [vmem:[%s193 + $0x378] sm:$0xf]
      %v425 = vld [vmem:[%s193 + $0x37c] sm:$0xf]
      %v426 = vld [vmem:[%s1] sm:$0xf]
      %v427 = vld [vmem:[%s1 + $0x4] sm:$0xf]
      %v428 = vld [vmem:[%s1 + $0x8] sm:$0xf]
      %v429 = vld [vmem:[%s1 + $0xc] sm:$0xf]
      %v654 = vunpack.c.l.b16 %v202
      %v655 = vunpack.c.l.b16 %v203
      %v656 = vunpack.c.l.b16 %v204
      %v657 = vunpack.c.l.b16 %v205
      %v658 = vunpack.c.l.b16 %v206
      %v659 = vunpack.c.l.b16 %v207
      %v660 = vunpack.c.l.b16 %v208
      %v661 = vunpack.c.l.b16 %v209
      %v662 = vunpack.c.l.b16 %v210
      %v663 = vunpack.c.l.b16 %v211
      %v664 = vunpack.c.l.b16 %v212
      %v665 = vunpack.c.l.b16 %v213
      %v666 = vunpack.c.l.b16 %v214
      %v667 = vunpack.c.l.b16 %v215
      %v668 = vunpack.c.l.b16 %v216
      %v669 = vunpack.c.l.b16 %v217
      %v670 = vunpack.c.l.b16 %v218
      %v671 = vunpack.c.l.b16 %v219
      %v672 = vunpack.c.l.b16 %v220
      %v673 = vunpack.c.l.b16 %v221
      %v674 = vunpack.c.l.b16 %v222
      %v675 = vunpack.c.l.b16 %v223
      %v676 = vunpack.c.l.b16 %v224
      %v677 = vunpack.c.l.b16 %v225
      %v678 = vunpack.c.l.b16 %v226
      %v679 = vunpack.c.l.b16 %v227
      %v680 = vunpack.c.l.b16 %v228
      %v681 = vunpack.c.l.b16 %v229
      %v682 = vunpack.c.l.b16 %v230
      %v683 = vunpack.c.l.b16 %v231
      %v684 = vunpack.c.l.b16 %v232
      %v685 = vunpack.c.l.b16 %v233
      %v686 = vunpack.c.l.b16 %v234
      %v687 = vunpack.c.l.b16 %v235
      %v688 = vunpack.c.l.b16 %v236
      %v689 = vunpack.c.l.b16 %v237
      %v690 = vunpack.c.l.b16 %v238
      %v691 = vunpack.c.l.b16 %v239
      %v692 = vunpack.c.l.b16 %v240
      %v693 = vunpack.c.l.b16 %v241
      %v694 = vunpack.c.l.b16 %v242
      %v695 = vunpack.c.l.b16 %v243
      %v696 = vunpack.c.l.b16 %v244
      %v697 = vunpack.c.l.b16 %v245
      %v698 = vunpack.c.l.b16 %v246
      %v699 = vunpack.c.l.b16 %v247
      %v700 = vunpack.c.l.b16 %v248
      %v701 = vunpack.c.l.b16 %v249
      %v702 = vunpack.c.l.b16 %v250
      %v703 = vunpack.c.l.b16 %v251
      %v704 = vunpack.c.l.b16 %v252
      %v705 = vunpack.c.l.b16 %v253
      %v706 = vunpack.c.l.b16 %v254
      %v707 = vunpack.c.l.b16 %v255
      %v708 = vunpack.c.l.b16 %v256
      %v709 = vunpack.c.l.b16 %v257
      %v710 = vunpack.c.l.b16 %v258
      %v711 = vunpack.c.l.b16 %v259
      %v712 = vunpack.c.l.b16 %v260
      %v713 = vunpack.c.l.b16 %v261
      %v714 = vunpack.c.l.b16 %v262
      %v715 = vunpack.c.l.b16 %v263
      %v716 = vunpack.c.l.b16 %v264
      %v717 = vunpack.c.l.b16 %v265
      %v718 = vunpack.c.l.b16 %v266
      %v719 = vunpack.c.l.b16 %v267
      %v720 = vunpack.c.l.b16 %v268
      %v721 = vunpack.c.l.b16 %v269
      %v722 = vunpack.c.l.b16 %v270
      %v723 = vunpack.c.l.b16 %v271
      %v724 = vunpack.c.l.b16 %v272
      %v725 = vunpack.c.l.b16 %v273
      %v726 = vunpack.c.l.b16 %v274
      %v727 = vunpack.c.l.b16 %v275
      %v728 = vunpack.c.l.b16 %v276
      %v729 = vunpack.c.l.b16 %v277
      %v730 = vunpack.c.l.b16 %v278
      %v731 = vunpack.c.l.b16 %v279
      %v732 = vunpack.c.l.b16 %v280
      %v733 = vunpack.c.l.b16 %v281
      %v734 = vunpack.c.l.b16 %v282
      %v735 = vunpack.c.l.b16 %v283
      %v736 = vunpack.c.l.b16 %v284
      %v737 = vunpack.c.l.b16 %v285
      %v738 = vunpack.c.l.b16 %v286
      %v739 = vunpack.c.l.b16 %v287
      %v740 = vunpack.c.l.b16 %v288
      %v741 = vunpack.c.l.b16 %v289
      %v742 = vunpack.c.l.b16 %v290
      %v743 = vunpack.c.l.b16 %v291
      %v744 = vunpack.c.l.b16 %v292
      %v745 = vunpack.c.l.b16 %v293
      %v746 = vunpack.c.l.b16 %v294
      %v747 = vunpack.c.l.b16 %v295
      %v748 = vunpack.c.l.b16 %v296
      %v749 = vunpack.c.l.b16 %v297
      %v750 = vunpack.c.l.b16 %v298
      %v751 = vunpack.c.l.b16 %v299
      %v752 = vunpack.c.l.b16 %v300
      %v753 = vunpack.c.l.b16 %v301
      %v754 = vunpack.c.l.b16 %v302
      %v755 = vunpack.c.l.b16 %v303
      %v756 = vunpack.c.l.b16 %v304
      %v757 = vunpack.c.l.b16 %v305
      %v758 = vunpack.c.l.b16 %v306
      %v759 = vunpack.c.l.b16 %v307
      %v760 = vunpack.c.l.b16 %v308
      %v761 = vunpack.c.l.b16 %v309
      %v762 = vunpack.c.l.b16 %v310
      %v763 = vunpack.c.l.b16 %v311
      %v764 = vunpack.c.l.b16 %v312
      %v765 = vunpack.c.l.b16 %v313
      %v766 = vunpack.c.l.b16 %v314
      %v767 = vunpack.c.l.b16 %v315
      %v768 = vunpack.c.l.b16 %v316
      %v769 = vunpack.c.l.b16 %v317
      %v770 = vunpack.c.l.b16 %v318
      %v771 = vunpack.c.l.b16 %v319
      %v772 = vunpack.c.l.b16 %v320
      %v773 = vunpack.c.l.b16 %v321
      %v774 = vunpack.c.l.b16 %v322
      %v775 = vunpack.c.l.b16 %v323
      %v776 = vunpack.c.l.b16 %v324
      %v777 = vunpack.c.l.b16 %v325
      %v778 = vunpack.c.l.b16 %v326
      %v779 = vunpack.c.l.b16 %v327
      %v780 = vunpack.c.l.b16 %v328
      %v781 = vunpack.c.l.b16 %v329
      %v782 = vunpack.c.l.b16 %v330
      %v783 = vunpack.c.l.b16 %v331
      %v784 = vunpack.c.l.b16 %v332
      %v785 = vunpack.c.l.b16 %v333
      %v786 = vunpack.c.l.b16 %v334
      %v787 = vunpack.c.l.b16 %v335
      %v788 = vunpack.c.l.b16 %v336
      %v789 = vunpack.c.l.b16 %v337
      %v790 = vunpack.c.l.b16 %v338
      %v791 = vunpack.c.l.b16 %v339
      %v792 = vunpack.c.l.b16 %v340
      %v793 = vunpack.c.l.b16 %v341
      %v794 = vunpack.c.l.b16 %v342
      %v795 = vunpack.c.l.b16 %v343
      %v796 = vunpack.c.l.b16 %v344
      %v797 = vunpack.c.l.b16 %v345
      %v798 = vunpack.c.l.b16 %v346
      %v799 = vunpack.c.l.b16 %v347
      %v800 = vunpack.c.l.b16 %v348
      %v801 = vunpack.c.l.b16 %v349
      %v802 = vunpack.c.l.b16 %v350
      %v803 = vunpack.c.l.b16 %v351
      %v804 = vunpack.c.l.b16 %v352
      %v805 = vunpack.c.l.b16 %v353
      %v806 = vunpack.c.l.b16 %v354
      %v807 = vunpack.c.l.b16 %v355
      %v808 = vunpack.c.l.b16 %v356
      %v809 = vunpack.c.l.b16 %v357
      %v810 = vunpack.c.l.b16 %v358
      %v811 = vunpack.c.l.b16 %v359
      %v812 = vunpack.c.l.b16 %v360
      %v813 = vunpack.c.l.b16 %v361
      %v814 = vunpack.c.l.b16 %v362
      %v815 = vunpack.c.l.b16 %v363
      %v816 = vunpack.c.l.b16 %v364
      %v817 = vunpack.c.l.b16 %v365
      %v818 = vunpack.c.l.b16 %v366
      %v819 = vunpack.c.l.b16 %v367
      %v820 = vunpack.c.l.b16 %v368
      %v821 = vunpack.c.l.b16 %v369
      %v822 = vunpack.c.l.b16 %v370
      %v823 = vunpack.c.l.b16 %v371
      %v824 = vunpack.c.l.b16 %v372
      %v825 = vunpack.c.l.b16 %v373
      %v826 = vunpack.c.l.b16 %v374
      %v827 = vunpack.c.l.b16 %v375
      %v828 = vunpack.c.l.b16 %v376
      %v829 = vunpack.c.l.b16 %v377
      %v830 = vunpack.c.l.b16 %v378
      %v831 = vunpack.c.l.b16 %v379
      %v832 = vunpack.c.l.b16 %v380
      %v833 = vunpack.c.l.b16 %v381
      %v834 = vunpack.c.l.b16 %v382
      %v835 = vunpack.c.l.b16 %v383
      %v836 = vunpack.c.l.b16 %v384
      %v837 = vunpack.c.l.b16 %v385
      %v838 = vunpack.c.l.b16 %v386
      %v839 = vunpack.c.l.b16 %v387
      %v840 = vunpack.c.l.b16 %v388
      %v841 = vunpack.c.l.b16 %v389
      %v842 = vunpack.c.l.b16 %v390
      %v843 = vunpack.c.l.b16 %v391
      %v844 = vunpack.c.l.b16 %v392
      %v845 = vunpack.c.l.b16 %v393
      %v846 = vunpack.c.l.b16 %v394
      %v847 = vunpack.c.l.b16 %v395
      %v848 = vunpack.c.l.b16 %v396
      %v849 = vunpack.c.l.b16 %v397
      %v850 = vunpack.c.l.b16 %v398
      %v851 = vunpack.c.l.b16 %v399
      %v852 = vunpack.c.l.b16 %v400
      %v853 = vunpack.c.l.b16 %v401
      %v854 = vunpack.c.l.b16 %v402
      %v855 = vunpack.c.l.b16 %v403
      %v856 = vunpack.c.l.b16 %v404
      %v857 = vunpack.c.l.b16 %v405
      %v858 = vunpack.c.l.b16 %v406
      %v859 = vunpack.c.l.b16 %v407
      %v860 = vunpack.c.l.b16 %v408
      %v861 = vunpack.c.l.b16 %v409
      %v862 = vunpack.c.l.b16 %v410
      %v863 = vunpack.c.l.b16 %v411
      %v864 = vunpack.c.l.b16 %v412
      %v865 = vunpack.c.l.b16 %v413
      %v866 = vunpack.c.l.b16 %v414
      %v867 = vunpack.c.l.b16 %v415
      %v868 = vunpack.c.l.b16 %v416
      %v869 = vunpack.c.l.b16 %v417
      %v870 = vunpack.c.l.b16 %v418
      %v871 = vunpack.c.l.b16 %v419
      %v872 = vunpack.c.l.b16 %v420
      %v873 = vunpack.c.l.b16 %v421
      %v874 = vunpack.c.l.b16 %v422
      %v875 = vunpack.c.l.b16 %v423
      %v876 = vunpack.c.l.b16 %v424
      %v877 = vunpack.c.l.b16 %v425
      %v878 = vpack.c.b16 %v655, %v654
      %v879 = vpack.c.b16 %v657, %v656
      %v880 = vpack.c.b16 %v659, %v658
      %v881 = vpack.c.b16 %v661, %v660
      %v882 = vpack.c.b16 %v663, %v662
      %v883 = vpack.c.b16 %v665, %v664
      %v884 = vpack.c.b16 %v667, %v666
      %v885 = vpack.c.b16 %v669, %v668
      %v886 = vpack.c.b16 %v671, %v670
      %v887 = vpack.c.b16 %v673, %v672
      %v888 = vpack.c.b16 %v675, %v674
      %v889 = vpack.c.b16 %v677, %v676
      %v890 = vpack.c.b16 %v679, %v678
      %v891 = vpack.c.b16 %v681, %v680
      %v892 = vpack.c.b16 %v683, %v682
      %v893 = vpack.c.b16 %v685, %v684
      %v894 = vpack.c.b16 %v687, %v686
      %v895 = vpack.c.b16 %v689, %v688
      %v896 = vpack.c.b16 %v691, %v690
      %v897 = vpack.c.b16 %v693, %v692
      %v898 = vpack.c.b16 %v695, %v694
      %v899 = vpack.c.b16 %v697, %v696
      %v900 = vpack.c.b16 %v699, %v698
      %v901 = vpack.c.b16 %v701, %v700
      %v902 = vpack.c.b16 %v703, %v702
      %v903 = vpack.c.b16 %v705, %v704
      %v904 = vpack.c.b16 %v707, %v706
      %v905 = vpack.c.b16 %v709, %v708
      %v906 = vpack.c.b16 %v711, %v710
      %v907 = vpack.c.b16 %v713, %v712
      %v908 = vpack.c.b16 %v715, %v714
      %v909 = vpack.c.b16 %v717, %v716
      %v910 = vpack.c.b16 %v719, %v718
      %v911 = vpack.c.b16 %v721, %v720
      %v912 = vpack.c.b16 %v723, %v722
      %v913 = vpack.c.b16 %v725, %v724
      %v914 = vpack.c.b16 %v727, %v726
      %v915 = vpack.c.b16 %v729, %v728
      %v916 = vpack.c.b16 %v731, %v730
      %v917 = vpack.c.b16 %v733, %v732
      %v918 = vpack.c.b16 %v735, %v734
      %v919 = vpack.c.b16 %v737, %v736
      %v920 = vpack.c.b16 %v739, %v738
      %v921 = vpack.c.b16 %v741, %v740
      %v922 = vpack.c.b16 %v743, %v742
      %v923 = vpack.c.b16 %v745, %v744
      %v924 = vpack.c.b16 %v747, %v746
      %v925 = vpack.c.b16 %v749, %v748
      %v926 = vpack.c.b16 %v751, %v750
      %v927 = vpack.c.b16 %v753, %v752
      %v928 = vpack.c.b16 %v755, %v754
      %v929 = vpack.c.b16 %v757, %v756
      %v930 = vpack.c.b16 %v759, %v758
      %v931 = vpack.c.b16 %v761, %v760
      %v932 = vpack.c.b16 %v763, %v762
      %v933 = vpack.c.b16 %v765, %v764
      %v934 = vpack.c.b16 %v767, %v766
      %v935 = vpack.c.b16 %v769, %v768
      %v936 = vpack.c.b16 %v771, %v770
      %v937 = vpack.c.b16 %v773, %v772
      %v938 = vpack.c.b16 %v775, %v774
      %v939 = vpack.c.b16 %v777, %v776
      %v940 = vpack.c.b16 %v779, %v778
      %v941 = vpack.c.b16 %v781, %v780
      %v942 = vpack.c.b16 %v783, %v782
      %v943 = vpack.c.b16 %v785, %v784
      %v944 = vpack.c.b16 %v787, %v786
      %v945 = vpack.c.b16 %v789, %v788
      %v946 = vpack.c.b16 %v791, %v790
      %v947 = vpack.c.b16 %v793, %v792
      %v948 = vpack.c.b16 %v795, %v794
      %v949 = vpack.c.b16 %v797, %v796
      %v950 = vpack.c.b16 %v799, %v798
      %v951 = vpack.c.b16 %v801, %v800
      %v952 = vpack.c.b16 %v803, %v802
      %v953 = vpack.c.b16 %v805, %v804
      %v954 = vpack.c.b16 %v807, %v806
      %v955 = vpack.c.b16 %v809, %v808
      %v956 = vpack.c.b16 %v811, %v810
      %v957 = vpack.c.b16 %v813, %v812
      %v958 = vpack.c.b16 %v815, %v814
      %v959 = vpack.c.b16 %v817, %v816
      %v960 = vpack.c.b16 %v819, %v818
      %v961 = vpack.c.b16 %v821, %v820
      %v962 = vpack.c.b16 %v823, %v822
      %v963 = vpack.c.b16 %v825, %v824
      %v964 = vpack.c.b16 %v827, %v826
      %v965 = vpack.c.b16 %v829, %v828
      %v966 = vpack.c.b16 %v831, %v830
      %v967 = vpack.c.b16 %v833, %v832
      %v968 = vpack.c.b16 %v835, %v834
      %v969 = vpack.c.b16 %v837, %v836
      %v970 = vpack.c.b16 %v839, %v838
      %v971 = vpack.c.b16 %v841, %v840
      %v972 = vpack.c.b16 %v843, %v842
      %v973 = vpack.c.b16 %v845, %v844
      %v974 = vpack.c.b16 %v847, %v846
      %v975 = vpack.c.b16 %v849, %v848
      %v976 = vpack.c.b16 %v851, %v850
      %v977 = vpack.c.b16 %v853, %v852
      %v978 = vpack.c.b16 %v855, %v854
      %v979 = vpack.c.b16 %v857, %v856
      %v980 = vpack.c.b16 %v859, %v858
      %v981 = vpack.c.b16 %v861, %v860
      %v982 = vpack.c.b16 %v863, %v862
      %v983 = vpack.c.b16 %v865, %v864
      %v984 = vpack.c.b16 %v867, %v866
      %v985 = vpack.c.b16 %v869, %v868
      %v986 = vpack.c.b16 %v871, %v870
      %v987 = vpack.c.b16 %v873, %v872
      %v988 = vpack.c.b16 %v875, %v874
      %v989 = vpack.c.b16 %v877, %v876
      %v994 = vunpack.c.l.b16 %v426
      %v995 = vunpack.c.l.b16 %v427
      %v996 = vunpack.c.l.b16 %v428
      %v997 = vunpack.c.l.b16 %v429
      %v998 = vpack.c.b16 %v995, %v994
      %v999 = vpack.c.b16 %v997, %v996
      %vm1002 = vcmask 261120
      %v1004 = vsel %vm1002, %v878, 0
      %v1007 = vsel %vm1002, %v879, 0
      %v1010 = vsel %vm1002, %v880, 0
      %v1013 = vsel %vm1002, %v881, 0
      %v1016 = vsel %vm1002, %v882, 0
      %v1019 = vsel %vm1002, %v883, 0
      %v1022 = vsel %vm1002, %v884, 0
      %v1025 = vsel %vm1002, %v885, 0
      %v1028 = vsel %vm1002, %v886, 0
      %v1031 = vsel %vm1002, %v887, 0
      %v1034 = vsel %vm1002, %v888, 0
      %v1037 = vsel %vm1002, %v889, 0
      %v1040 = vsel %vm1002, %v890, 0
      %v1043 = vsel %vm1002, %v891, 0
      %v1046 = vsel %vm1002, %v892, 0
      %v1049 = vsel %vm1002, %v893, 0
      %v1052 = vsel %vm1002, %v894, 0
      %v1055 = vsel %vm1002, %v895, 0
      %v1058 = vsel %vm1002, %v896, 0
      %v1061 = vsel %vm1002, %v897, 0
      %v1064 = vsel %vm1002, %v898, 0
      %v1067 = vsel %vm1002, %v899, 0
      %v1070 = vsel %vm1002, %v900, 0
      %v1073 = vsel %vm1002, %v901, 0
      %v1076 = vsel %vm1002, %v902, 0
      %v1079 = vsel %vm1002, %v903, 0
      %v1082 = vsel %vm1002, %v904, 0
      %v1085 = vsel %vm1002, %v905, 0
      %v1088 = vsel %vm1002, %v906, 0
      %v1091 = vsel %vm1002, %v907, 0
      %v1094 = vsel %vm1002, %v908, 0
      %v1097 = vsel %vm1002, %v909, 0
      %v1100 = vsel %vm1002, %v910, 0
      %v1103 = vsel %vm1002, %v911, 0
      %v1106 = vsel %vm1002, %v912, 0
      %v1109 = vsel %vm1002, %v913, 0
      %v1112 = vsel %vm1002, %v914, 0
      %v1115 = vsel %vm1002, %v915, 0
      %v1118 = vsel %vm1002, %v916, 0
      %v1121 = vsel %vm1002, %v917, 0
      %v1124 = vsel %vm1002, %v918, 0
      %v1127 = vsel %vm1002, %v919, 0
      %v1130 = vsel %vm1002, %v920, 0
      %v1133 = vsel %vm1002, %v921, 0
      %v1136 = vsel %vm1002, %v922, 0
      %v1139 = vsel %vm1002, %v923, 0
      %v1142 = vsel %vm1002, %v924, 0
      %v1145 = vsel %vm1002, %v925, 0
      %v1148 = vsel %vm1002, %v926, 0
      %v1151 = vsel %vm1002, %v927, 0
      %v1154 = vsel %vm1002, %v928, 0
      %v1157 = vsel %vm1002, %v929, 0
      %v1160 = vsel %vm1002, %v930, 0
      %v1163 = vsel %vm1002, %v931, 0
      %v1166 = vsel %vm1002, %v932, 0
      %v1169 = vsel %vm1002, %v933, 0
      %v1172 = vsel %vm1002, %v934, 0
      %v1175 = vsel %vm1002, %v935, 0
      %v1178 = vsel %vm1002, %v936, 0
      %v1181 = vsel %vm1002, %v937, 0
      %v1184 = vsel %vm1002, %v938, 0
      %v1187 = vsel %vm1002, %v939, 0
      %v1190 = vsel %vm1002, %v940, 0
      %v1193 = vsel %vm1002, %v941, 0
      %v1196 = vsel %vm1002, %v942, 0
      %v1199 = vsel %vm1002, %v943, 0
      %v1202 = vsel %vm1002, %v944, 0
      %v1205 = vsel %vm1002, %v945, 0
      %v1208 = vsel %vm1002, %v946, 0
      %v1211 = vsel %vm1002, %v947, 0
      %v1214 = vsel %vm1002, %v948, 0
      %v1217 = vsel %vm1002, %v949, 0
      %v1220 = vsel %vm1002, %v950, 0
      %v1223 = vsel %vm1002, %v951, 0
      %v1226 = vsel %vm1002, %v952, 0
      %v1229 = vsel %vm1002, %v953, 0
      %v1232 = vsel %vm1002, %v954, 0
      %v1235 = vsel %vm1002, %v955, 0
      %v1238 = vsel %vm1002, %v956, 0
      %v1241 = vsel %vm1002, %v957, 0
      %v1244 = vsel %vm1002, %v958, 0
      %v1247 = vsel %vm1002, %v959, 0
      %v1250 = vsel %vm1002, %v960, 0
      %v1253 = vsel %vm1002, %v961, 0
      %v1256 = vsel %vm1002, %v962, 0
      %v1259 = vsel %vm1002, %v963, 0
      %v1262 = vsel %vm1002, %v964, 0
      %v1265 = vsel %vm1002, %v965, 0
      %v1268 = vsel %vm1002, %v966, 0
      %v1271 = vsel %vm1002, %v967, 0
      %v1274 = vsel %vm1002, %v968, 0
      %v1277 = vsel %vm1002, %v969, 0
      %v1280 = vsel %vm1002, %v970, 0
      %v1283 = vsel %vm1002, %v971, 0
      %v1286 = vsel %vm1002, %v972, 0
      %v1289 = vsel %vm1002, %v973, 0
      %v1292 = vsel %vm1002, %v974, 0
      %v1295 = vsel %vm1002, %v975, 0
      %v1298 = vsel %vm1002, %v976, 0
      %v1301 = vsel %vm1002, %v977, 0
      %v1304 = vsel %vm1002, %v978, 0
      %v1307 = vsel %vm1002, %v979, 0
      %v1310 = vsel %vm1002, %v980, 0
      %v1313 = vsel %vm1002, %v981, 0
      %v1316 = vsel %vm1002, %v982, 0
      %v1319 = vsel %vm1002, %v983, 0
      %v1322 = vsel %vm1002, %v984, 0
      %v1325 = vsel %vm1002, %v985, 0
      %v1328 = vsel %vm1002, %v986, 0
      %v1331 = vsel %vm1002, %v987, 0
      %v1334 = vsel %vm1002, %v988, 0
      %v1337 = vsel %vm1002, %v989, 0
      %1339 = vmatprep.subr.bf16.mxu0 0
      %1340 = vmatpush1.bf16.msra.mxu0 %v998
      %1341 = vmatprep.subr.bf16.mxu0 0
      %1342 = vmatpush1.bf16.msra.mxu0 %v999
      %1343 = vmatprep.subr.bf16.mxu0 0
      %1344 = vmatpush1.bf16.msra.mxu0 0
      %1345 = vmatprep.subr.bf16.mxu0 0
      %1346 = vmatpush1.bf16.msra.mxu0 0
      %1347 = vmatprep.subr.bf16.mxu0 0
      %1348 = vmatpush1.bf16.msra.mxu0 0
      %1349 = vmatprep.subr.bf16.mxu0 0
      %1350 = vmatpush1.bf16.msra.mxu0 0
      %1351 = vmatprep.subr.bf16.mxu0 0
      %1352 = vmatpush1.bf16.msra.mxu0 0
      %1353 = vmatprep.subr.bf16.mxu0 0
      %1354 = vmatpush1.bf16.msra.mxu0 0
      %1355 = vmatprep.subr.bf16.mxu0 0
      %1356 = vmatpush1.bf16.msra.mxu0 0
      %1357 = vmatprep.subr.bf16.mxu0 0
      %1358 = vmatpush1.bf16.msra.mxu0 0
      %1359 = vmatprep.subr.bf16.mxu0 0
      %1360 = vmatpush1.bf16.msra.mxu0 0
      %1361 = vmatprep.subr.bf16.mxu0 0
      %1362 = vmatpush1.bf16.msra.mxu0 0
      %1363 = vmatprep.subr.bf16.mxu0 0
      %1364 = vmatpush1.bf16.msra.mxu0 0
      %1365 = vmatprep.subr.bf16.mxu0 0
      %1366 = vmatpush1.bf16.msra.mxu0 0
      %1367 = vmatprep.subr.bf16.mxu0 0
      %1368 = vmatpush1.bf16.msra.mxu0 0
      %1369 = vmatprep.subr.bf16.mxu0 0
      %1370 = vmatpush1.bf16.msra.mxu0 0
      %1371 = vmatprep.mubr.bf16.mxu0 0
      %1372 = vmatmul.mubr.bf16.gmra.mrb[0].mxu0 %v1004
      %v1373 = vpop.f32.mrb[0].mxu0
      %v1374 = vadd.f32 0.0, %v1373
      %v1375 = vpop.f32.mrb[0].mxu0
      %v1376 = vpop.f32.mrb[0].mxu0
      %v1377 = vadd.f32 0.0, %v1376
      %v1378 = vpop.f32.mrb[0].mxu0
      %1379 = vmatprep.mubr.bf16.mxu0 0
      %1380 = vmatmul.mubr.bf16.gmra.mrb[0].mxu0 %v1007
      %v1381 = vpop.f32.mrb[0].mxu0
      %v1382 = vadd.f32 0.0, %v1381
      %v1383 = vpop.f32.mrb[0].mxu0
      %v1384 = vpop.f32.mrb[0].mxu0
      %v1385 = vadd.f32 0.0, %v1384
      %v1386 = vpop.f32.mrb[0].mxu0
      %1387 = vmatprep.mubr.bf16.mxu0 0
      %1388 = vmatmul.mubr.bf16.gmra.mrb[0].mxu0 %v1010
      %v1389 = vpop.f32.mrb[0].mxu0
      %v1390 = vadd.f32 0.0, %v1389
      %v1391 = vpop.f32.mrb[0].mxu0
      %v1392 = vpop.f32.mrb[0].mxu0
      %v1393 = vadd.f32 0.0, %v1392
      %v1394 = vpop.f32.mrb[0].mxu0
      %1395 = vmatprep.mubr.bf16.mxu0 0
      %1396 = vmatmul.mubr.bf16.gmra.mrb[0].mxu0 %v1013
      %v1397 = vpop.f32.mrb[0].mxu0
      %v1398 = vadd.f32 0.0, %v1397
      %v1399 = vpop.f32.mrb[0].mxu0
      %v1400 = vpop.f32.mrb[0].mxu0
      %v1401 = vadd.f32 0.0, %v1400
      %v1402 = vpop.f32.mrb[0].mxu0
      %1403 = vmatprep.mubr.bf16.mxu0 0
      %1404 = vmatmul.mubr.bf16.gmra.mrb[0].mxu0 %v1016
      %v1405 = vpop.f32.mrb[0].mxu0
      %v1406 = vadd.f32 0.0, %v1405
      %v1407 = vpop.f32.mrb[0].mxu0
      %v1408 = vpop.f32.mrb[0].mxu0
      %v1409 = vadd.f32 0.0, %v1408
      %v1410 = vpop.f32.mrb[0].mxu0
      %1411 = vmatprep.mubr.bf16.mxu0 0
      %1412 = vmatmul.mubr.bf16.gmra.mrb[0].mxu0 %v1019
      %v1413 = vpop.f32.mrb[0].mxu0
      %v1414 = vadd.f32 0.0, %v1413
      %v1415 = vpop.f32.mrb[0].mxu0
      %v1416 = vpop.f32.mrb[0].mxu0
      %v1417 = vadd.f32 0.0, %v1416
      %v1418 = vpop.f32.mrb[0].mxu0
      %1419 = vmatprep.mubr.bf16.mxu0 0
      %1420 = vmatmul.mubr.bf16.gmra.mrb[0].mxu0 %v1022
      %v1421 = vpop.f32.mrb[0].mxu0
      %v1422 = vadd.f32 0.0, %v1421
      %v1423 = vpop.f32.mrb[0].mxu0
      %v1424 = vpop.f32.mrb[0].mxu0
      %v1425 = vadd.f32 0.0, %v1424
      %v1426 = vpop.f32.mrb[0].mxu0
      %1427 = vmatprep.mubr.bf16.mxu0 0
      %1428 = vmatmul.mubr.bf16.gmra.mrb[0].mxu0 %v1025
      %v1429 = vpop.f32.mrb[0].mxu0
      %v1430 = vadd.f32 0.0, %v1429
      %v1431 = vpop.f32.mrb[0].mxu0
      %v1432 = vpop.f32.mrb[0].mxu0
      %v1433 = vadd.f32 0.0, %v1432
      %v1434 = vpop.f32.mrb[0].mxu0
      %1435 = vmatprep.mubr.bf16.mxu0 0
      %1436 = vmatmul.mubr.bf16.gmra.mrb[0].mxu0 %v1028
      %v1437 = vpop.f32.mrb[0].mxu0
      %v1438 = vadd.f32 0.0, %v1437
      %v1439 = vpop.f32.mrb[0].mxu0
      %v1440 = vpop.f32.mrb[0].mxu0
      %v1441 = vadd.f32 0.0, %v1440
      %v1442 = vpop.f32.mrb[0].mxu0
      %1443 = vmatprep.mubr.bf16.mxu0 0
      %1444 = vmatmul.mubr.bf16.gmra.mrb[0].mxu0 %v1031
      %v1445 = vpop.f32.mrb[0].mxu0
      %v1446 = vadd.f32 0.0, %v1445
      %v1447 = vpop.f32.mrb[0].mxu0
      %v1448 = vpop.f32.mrb[0].mxu0
      %v1449 = vadd.f32 0.0, %v1448
      %v1450 = vpop.f32.mrb[0].mxu0
      %1451 = vmatprep.mubr.bf16.mxu0 0
      %1452 = vmatmul.mubr.bf16.gmra.mrb[0].mxu0 %v1034
      %v1453 = vpop.f32.mrb[0].mxu0
      %v1454 = vadd.f32 0.0, %v1453
      %v1455 = vpop.f32.mrb[0].mxu0
      %v1456 = vpop.f32.mrb[0].mxu0
      %v1457 = vadd.f32 0.0, %v1456
      %v1458 = vpop.f32.mrb[0].mxu0
      %1459 = vmatprep.mubr.bf16.mxu0 0
      %1460 = vmatmul.mubr.bf16.gmra.mrb[0].mxu0 %v1037
      %v1461 = vpop.f32.mrb[0].mxu0
      %v1462 = vadd.f32 0.0, %v1461
      %v1463 = vpop.f32.mrb[0].mxu0
      %v1464 = vpop.f32.mrb[0].mxu0
      %v1465 = vadd.f32 0.0, %v1464
      %v1466 = vpop.f32.mrb[0].mxu0
      %1467 = vmatprep.mubr.bf16.mxu0 0
      %1468 = vmatmul.mubr.bf16.gmra.mrb[0].mxu0 %v1040
      %v1469 = vpop.f32.mrb[0].mxu0
      %v1470 = vadd.f32 0.0, %v1469
      %v1471 = vpop.f32.mrb[0].mxu0
      %v1472 = vpop.f32.mrb[0].mxu0
      %v1473 = vadd.f32 0.0, %v1472
      %v1474 = vpop.f32.mrb[0].mxu0
      %1475 = vmatprep.mubr.bf16.mxu0 0
      %1476 = vmatmul.mubr.bf16.gmra.mrb[0].mxu0 %v1043
      %v1477 = vpop.f32.mrb[0].mxu0
      %v1478 = vadd.f32 0.0, %v1477
      %v1479 = vpop.f32.mrb[0].mxu0
      %v1480 = vpop.f32.mrb[0].mxu0
      %v1481 = vadd.f32 0.0, %v1480
      %v1482 = vpop.f32.mrb[0].mxu0
      %1483 = vmatprep.mubr.bf16.mxu0 0
      %1484 = vmatmul.mubr.bf16.gmra.mrb[0].mxu0 %v1046
      %v1485 = vpop.f32.mrb[0].mxu0
      %v1486 = vadd.f32 0.0, %v1485
      %v1487 = vpop.f32.mrb[0].mxu0
      %v1488 = vpop.f32.mrb[0].mxu0
      %v1489 = vadd.f32 0.0, %v1488
      %v1490 = vpop.f32.mrb[0].mxu0
      %1491 = vmatprep.mubr.bf16.mxu0 0
      %1492 = vmatmul.mubr.bf16.gmra.mrb[0].mxu0 %v1049
      %v1493 = vpop.f32.mrb[0].mxu0
      %v1494 = vadd.f32 0.0, %v1493
      %v1495 = vpop.f32.mrb[0].mxu0
      %v1496 = vpop.f32.mrb[0].mxu0
      %v1497 = vadd.f32 0.0, %v1496
      %v1498 = vpop.f32.mrb[0].mxu0
      %1499 = vmatprep.mubr.bf16.mxu0 0
      %1500 = vmatmul.mubr.bf16.gmra.mrb[0].mxu0 %v1052
      %v1501 = vpop.f32.mrb[0].mxu0
      %v1502 = vadd.f32 0.0, %v1501
      %v1503 = vpop.f32.mrb[0].mxu0
      %v1504 = vpop.f32.mrb[0].mxu0
      %v1505 = vadd.f32 0.0, %v1504
      %v1506 = vpop.f32.mrb[0].mxu0
      %1507 = vmatprep.mubr.bf16.mxu0 0
      %1508 = vmatmul.mubr.bf16.gmra.mrb[0].mxu0 %v1055
      %v1509 = vpop.f32.mrb[0].mxu0
      %v1510 = vadd.f32 0.0, %v1509
      %v1511 = vpop.f32.mrb[0].mxu0
      %v1512 = vpop.f32.mrb[0].mxu0
      %v1513 = vadd.f32 0.0, %v1512
      %v1514 = vpop.f32.mrb[0].mxu0
      %1515 = vmatprep.mubr.bf16.mxu0 0
      %1516 = vmatmul.mubr.bf16.gmra.mrb[0].mxu0 %v1058
      %v1517 = vpop.f32.mrb[0].mxu0
      %v1518 = vadd.f32 0.0, %v1517
      %v1519 = vpop.f32.mrb[0].mxu0
      %v1520 = vpop.f32.mrb[0].mxu0
      %v1521 = vadd.f32 0.0, %v1520
      %v1522 = vpop.f32.mrb[0].mxu0
      %1523 = vmatprep.mubr.bf16.mxu0 0
      %1524 = vmatmul.mubr.bf16.gmra.mrb[0].mxu0 %v1061
      %v1525 = vpop.f32.mrb[0].mxu0
      %v1526 = vadd.f32 0.0, %v1525
      %v1527 = vpop.f32.mrb[0].mxu0
      %v1528 = vpop.f32.mrb[0].mxu0
      %v1529 = vadd.f32 0.0, %v1528
      %v1530 = vpop.f32.mrb[0].mxu0
      %1531 = vmatprep.mubr.bf16.mxu0 0
      %1532 = vmatmul.mubr.bf16.gmra.mrb[0].mxu0 %v1064
      %v1533 = vpop.f32.mrb[0].mxu0
      %v1534 = vadd.f32 0.0, %v1533
      %v1535 = vpop.f32.mrb[0].mxu0
      %v1536 = vpop.f32.mrb[0].mxu0
      %v1537 = vadd.f32 0.0, %v1536
      %v1538 = vpop.f32.mrb[0].mxu0
      %1539 = vmatprep.mubr.bf16.mxu0 0
      %1540 = vmatmul.mubr.bf16.gmra.mrb[0].mxu0 %v1067
      %v1541 = vpop.f32.mrb[0].mxu0
      %v1542 = vadd.f32 0.0, %v1541
      %v1543 = vpop.f32.mrb[0].mxu0
      %v1544 = vpop.f32.mrb[0].mxu0
      %v1545 = vadd.f32 0.0, %v1544
      %v1546 = vpop.f32.mrb[0].mxu0
      %1547 = vmatprep.mubr.bf16.mxu0 0
      %1548 = vmatmul.mubr.bf16.gmra.mrb[0].mxu0 %v1070
      %v1549 = vpop.f32.mrb[0].mxu0
      %v1550 = vadd.f32 0.0, %v1549
      %v1551 = vpop.f32.mrb[0].mxu0
      %v1552 = vpop.f32.mrb[0].mxu0
      %v1553 = vadd.f32 0.0, %v1552
      %v1554 = vpop.f32.mrb[0].mxu0
      %1555 = vmatprep.mubr.bf16.mxu0 0
      %1556 = vmatmul.mubr.bf16.gmra.mrb[0].mxu0 %v1073
      %v1557 = vpop.f32.mrb[0].mxu0
      %v1558 = vadd.f32 0.0, %v1557
      %v1559 = vpop.f32.mrb[0].mxu0
      %v1560 = vpop.f32.mrb[0].mxu0
      %v1561 = vadd.f32 0.0, %v1560
      %v1562 = vpop.f32.mrb[0].mxu0
      %1563 = vmatprep.mubr.bf16.mxu0 0
      %1564 = vmatmul.mubr.bf16.gmra.mrb[0].mxu0 %v1076
      %v1565 = vpop.f32.mrb[0].mxu0
      %v1566 = vadd.f32 0.0, %v1565
      %v1567 = vpop.f32.mrb[0].mxu0
      %v1568 = vpop.f32.mrb[0].mxu0
      %v1569 = vadd.f32 0.0, %v1568
      %v1570 = vpop.f32.mrb[0].mxu0
      %1571 = vmatprep.mubr.bf16.mxu0 0
      %1572 = vmatmul.mubr.bf16.gmra.mrb[0].mxu0 %v1079
      %v1573 = vpop.f32.mrb[0].mxu0
      %v1574 = vadd.f32 0.0, %v1573
      %v1575 = vpop.f32.mrb[0].mxu0
      %v1576 = vpop.f32.mrb[0].mxu0
      %v1577 = vadd.f32 0.0, %v1576
      %v1578 = vpop.f32.mrb[0].mxu0
      %1579 = vmatprep.mubr.bf16.mxu0 0
      %1580 = vmatmul.mubr.bf16.gmra.mrb[0].mxu0 %v1082
      %v1581 = vpop.f32.mrb[0].mxu0
      %v1582 = vadd.f32 0.0, %v1581
      %v1583 = vpop.f32.mrb[0].mxu0
      %v1584 = vpop.f32.mrb[0].mxu0
      %v1585 = vadd.f32 0.0, %v1584
      %v1586 = vpop.f32.mrb[0].mxu0
      %1587 = vmatprep.mubr.bf16.mxu0 0
      %1588 = vmatmul.mubr.bf16.gmra.mrb[0].mxu0 %v1085
      %v1589 = vpop.f32.mrb[0].mxu0
      %v1590 = vadd.f32 0.0, %v1589
      %v1591 = vpop.f32.mrb[0].mxu0
      %v1592 = vpop.f32.mrb[0].mxu0
      %v1593 = vadd.f32 0.0, %v1592
      %v1594 = vpop.f32.mrb[0].mxu0
      %1595 = vmatprep.mubr.bf16.mxu0 0
      %1596 = vmatmul.mubr.bf16.gmra.mrb[0].mxu0 %v1088
      %v1597 = vpop.f32.mrb[0].mxu0
      %v1598 = vadd.f32 0.0, %v1597
      %v1599 = vpop.f32.mrb[0].mxu0
      %v1600 = vpop.f32.mrb[0].mxu0
      %v1601 = vadd.f32 0.0, %v1600
      %v1602 = vpop.f32.mrb[0].mxu0
      %1603 = vmatprep.mubr.bf16.mxu0 0
      %1604 = vmatmul.mubr.bf16.gmra.mrb[0].mxu0 %v1091
      %v1605 = vpop.f32.mrb[0].mxu0
      %v1606 = vadd.f32 0.0, %v1605
      %v1607 = vpop.f32.mrb[0].mxu0
      %v1608 = vpop.f32.mrb[0].mxu0
      %v1609 = vadd.f32 0.0, %v1608
      %v1610 = vpop.f32.mrb[0].mxu0
      %1611 = vmatprep.mubr.bf16.mxu0 0
      %1612 = vmatmul.mubr.bf16.gmra.mrb[0].mxu0 %v1094
      %v1613 = vpop.f32.mrb[0].mxu0
      %v1614 = vadd.f32 0.0, %v1613
      %v1615 = vpop.f32.mrb[0].mxu0
      %v1616 = vpop.f32.mrb[0].mxu0
      %v1617 = vadd.f32 0.0, %v1616
      %v1618 = vpop.f32.mrb[0].mxu0
      %1619 = vmatprep.mubr.bf16.mxu0 0
      %1620 = vmatmul.mubr.bf16.gmra.mrb[0].mxu0 %v1097
      %v1621 = vpop.f32.mrb[0].mxu0
      %v1622 = vadd.f32 0.0, %v1621
      %v1623 = vpop.f32.mrb[0].mxu0
      %v1624 = vpop.f32.mrb[0].mxu0
      %v1625 = vadd.f32 0.0, %v1624
      %v1626 = vpop.f32.mrb[0].mxu0
      %1627 = vmatprep.mubr.bf16.mxu0 0
      %1628 = vmatmul.mubr.bf16.gmra.mrb[0].mxu0 %v1100
      %v1629 = vpop.f32.mrb[0].mxu0
      %v1630 = vadd.f32 0.0, %v1629
      %v1631 = vpop.f32.mrb[0].mxu0
      %v1632 = vpop.f32.mrb[0].mxu0
      %v1633 = vadd.f32 0.0, %v1632
      %v1634 = vpop.f32.mrb[0].mxu0
      %1635 = vmatprep.mubr.bf16.mxu0 0
      %1636 = vmatmul.mubr.bf16.gmra.mrb[0].mxu0 %v1103
      %v1637 = vpop.f32.mrb[0].mxu0
      %v1638 = vadd.f32 0.0, %v1637
      %v1639 = vpop.f32.mrb[0].mxu0
      %v1640 = vpop.f32.mrb[0].mxu0
      %v1641 = vadd.f32 0.0, %v1640
      %v1642 = vpop.f32.mrb[0].mxu0
      %1643 = vmatprep.mubr.bf16.mxu0 0
      %1644 = vmatmul.mubr.bf16.gmra.mrb[0].mxu0 %v1106
      %v1645 = vpop.f32.mrb[0].mxu0
      %v1646 = vadd.f32 0.0, %v1645
      %v1647 = vpop.f32.mrb[0].mxu0
      %v1648 = vpop.f32.mrb[0].mxu0
      %v1649 = vadd.f32 0.0, %v1648
      %v1650 = vpop.f32.mrb[0].mxu0
      %1651 = vmatprep.mubr.bf16.mxu0 0
      %1652 = vmatmul.mubr.bf16.gmra.mrb[0].mxu0 %v1109
      %v1653 = vpop.f32.mrb[0].mxu0
      %v1654 = vadd.f32 0.0, %v1653
      %v1655 = vpop.f32.mrb[0].mxu0
      %v1656 = vpop.f32.mrb[0].mxu0
      %v1657 = vadd.f32 0.0, %v1656
      %v1658 = vpop.f32.mrb[0].mxu0
      %1659 = vmatprep.mubr.bf16.mxu0 0
      %1660 = vmatmul.mubr.bf16.gmra.mrb[0].mxu0 %v1112
      %v1661 = vpop.f32.mrb[0].mxu0
      %v1662 = vadd.f32 0.0, %v1661
      %v1663 = vpop.f32.mrb[0].mxu0
      %v1664 = vpop.f32.mrb[0].mxu0
      %v1665 = vadd.f32 0.0, %v1664
      %v1666 = vpop.f32.mrb[0].mxu0
      %1667 = vmatprep.mubr.bf16.mxu0 0
      %1668 = vmatmul.mubr.bf16.gmra.mrb[0].mxu0 %v1115
      %v1669 = vpop.f32.mrb[0].mxu0
      %v1670 = vadd.f32 0.0, %v1669
      %v1671 = vpop.f32.mrb[0].mxu0
      %v1672 = vpop.f32.mrb[0].mxu0
      %v1673 = vadd.f32 0.0, %v1672
      %v1674 = vpop.f32.mrb[0].mxu0
      %1675 = vmatprep.mubr.bf16.mxu0 0
      %1676 = vmatmul.mubr.bf16.gmra.mrb[0].mxu0 %v1118
      %v1677 = vpop.f32.mrb[0].mxu0
      %v1678 = vadd.f32 0.0, %v1677
      %v1679 = vpop.f32.mrb[0].mxu0
      %v1680 = vpop.f32.mrb[0].mxu0
      %v1681 = vadd.f32 0.0, %v1680
      %v1682 = vpop.f32.mrb[0].mxu0
      %1683 = vmatprep.mubr.bf16.mxu0 0
      %1684 = vmatmul.mubr.bf16.gmra.mrb[0].mxu0 %v1121
      %v1685 = vpop.f32.mrb[0].mxu0
      %v1686 = vadd.f32 0.0, %v1685
      %v1687 = vpop.f32.mrb[0].mxu0
      %v1688 = vpop.f32.mrb[0].mxu0
      %v1689 = vadd.f32 0.0, %v1688
      %v1690 = vpop.f32.mrb[0].mxu0
      %1691 = vmatprep.mubr.bf16.mxu0 0
      %1692 = vmatmul.mubr.bf16.gmra.mrb[0].mxu0 %v1124
      %v1693 = vpop.f32.mrb[0].mxu0
      %v1694 = vadd.f32 0.0, %v1693
      %v1695 = vpop.f32.mrb[0].mxu0
      %v1696 = vpop.f32.mrb[0].mxu0
      %v1697 = vadd.f32 0.0, %v1696
      %v1698 = vpop.f32.mrb[0].mxu0
      %1699 = vmatprep.mubr.bf16.mxu0 0
      %1700 = vmatmul.mubr.bf16.gmra.mrb[0].mxu0 %v1127
      %v1701 = vpop.f32.mrb[0].mxu0
      %v1702 = vadd.f32 0.0, %v1701
      %v1703 = vpop.f32.mrb[0].mxu0
      %v1704 = vpop.f32.mrb[0].mxu0
      %v1705 = vadd.f32 0.0, %v1704
      %v1706 = vpop.f32.mrb[0].mxu0
      %1707 = vmatprep.mubr.bf16.mxu0 0
      %1708 = vmatmul.mubr.bf16.gmra.mrb[0].mxu0 %v1130
      %v1709 = vpop.f32.mrb[0].mxu0
      %v1710 = vadd.f32 0.0, %v1709
      %v1711 = vpop.f32.mrb[0].mxu0
      %v1712 = vpop.f32.mrb[0].mxu0
      %v1713 = vadd.f32 0.0, %v1712
      %v1714 = vpop.f32.mrb[0].mxu0
      %1715 = vmatprep.mubr.bf16.mxu0 0
      %1716 = vmatmul.mubr.bf16.gmra.mrb[0].mxu0 %v1133
      %v1717 = vpop.f32.mrb[0].mxu0
      %v1718 = vadd.f32 0.0, %v1717
      %v1719 = vpop.f32.mrb[0].mxu0
      %v1720 = vpop.f32.mrb[0].mxu0
      %v1721 = vadd.f32 0.0, %v1720
      %v1722 = vpop.f32.mrb[0].mxu0
      %1723 = vmatprep.mubr.bf16.mxu0 0
      %1724 = vmatmul.mubr.bf16.gmra.mrb[0].mxu0 %v1136
      %v1725 = vpop.f32.mrb[0].mxu0
      %v1726 = vadd.f32 0.0, %v1725
      %v1727 = vpop.f32.mrb[0].mxu0
      %v1728 = vpop.f32.mrb[0].mxu0
      %v1729 = vadd.f32 0.0, %v1728
      %v1730 = vpop.f32.mrb[0].mxu0
      %1731 = vmatprep.mubr.bf16.mxu0 0
      %1732 = vmatmul.mubr.bf16.gmra.mrb[0].mxu0 %v1139
      %v1733 = vpop.f32.mrb[0].mxu0
      %v1734 = vadd.f32 0.0, %v1733
      %v1735 = vpop.f32.mrb[0].mxu0
      %v1736 = vpop.f32.mrb[0].mxu0
      %v1737 = vadd.f32 0.0, %v1736
      %v1738 = vpop.f32.mrb[0].mxu0
      %1739 = vmatprep.mubr.bf16.mxu0 0
      %1740 = vmatmul.mubr.bf16.gmra.mrb[0].mxu0 %v1142
      %v1741 = vpop.f32.mrb[0].mxu0
      %v1742 = vadd.f32 0.0, %v1741
      %v1743 = vpop.f32.mrb[0].mxu0
      %v1744 = vpop.f32.mrb[0].mxu0
      %v1745 = vadd.f32 0.0, %v1744
      %v1746 = vpop.f32.mrb[0].mxu0
      %1747 = vmatprep.mubr.bf16.mxu0 0
      %1748 = vmatmul.mubr.bf16.gmra.mrb[0].mxu0 %v1145
      %v1749 = vpop.f32.mrb[0].mxu0
      %v1750 = vadd.f32 0.0, %v1749
      %v1751 = vpop.f32.mrb[0].mxu0
      %v1752 = vpop.f32.mrb[0].mxu0
      %v1753 = vadd.f32 0.0, %v1752
      %v1754 = vpop.f32.mrb[0].mxu0
      %1755 = vmatprep.mubr.bf16.mxu0 0
      %1756 = vmatmul.mubr.bf16.gmra.mrb[0].mxu0 %v1148
      %v1757 = vpop.f32.mrb[0].mxu0
      %v1758 = vadd.f32 0.0, %v1757
      %v1759 = vpop.f32.mrb[0].mxu0
      %v1760 = vpop.f32.mrb[0].mxu0
      %v1761 = vadd.f32 0.0, %v1760
      %v1762 = vpop.f32.mrb[0].mxu0
      %1763 = vmatprep.mubr.bf16.mxu0 0
      %1764 = vmatmul.mubr.bf16.gmra.mrb[0].mxu0 %v1151
      %v1765 = vpop.f32.mrb[0].mxu0
      %v1766 = vadd.f32 0.0, %v1765
      %v1767 = vpop.f32.mrb[0].mxu0
      %v1768 = vpop.f32.mrb[0].mxu0
      %v1769 = vadd.f32 0.0, %v1768
      %v1770 = vpop.f32.mrb[0].mxu0
      %1771 = vmatprep.mubr.bf16.mxu0 0
      %1772 = vmatmul.mubr.bf16.gmra.mrb[0].mxu0 %v1154
      %v1773 = vpop.f32.mrb[0].mxu0
      %v1774 = vadd.f32 0.0, %v1773
      %v1775 = vpop.f32.mrb[0].mxu0
      %v1776 = vpop.f32.mrb[0].mxu0
      %v1777 = vadd.f32 0.0, %v1776
      %v1778 = vpop.f32.mrb[0].mxu0
      %1779 = vmatprep.mubr.bf16.mxu0 0
      %1780 = vmatmul.mubr.bf16.gmra.mrb[0].mxu0 %v1157
      %v1781 = vpop.f32.mrb[0].mxu0
      %v1782 = vadd.f32 0.0, %v1781
      %v1783 = vpop.f32.mrb[0].mxu0
      %v1784 = vpop.f32.mrb[0].mxu0
      %v1785 = vadd.f32 0.0, %v1784
      %v1786 = vpop.f32.mrb[0].mxu0
      %1787 = vmatprep.mubr.bf16.mxu0 0
      %1788 = vmatmul.mubr.bf16.gmra.mrb[0].mxu0 %v1160
      %v1789 = vpop.f32.mrb[0].mxu0
      %v1790 = vadd.f32 0.0, %v1789
      %v1791 = vpop.f32.mrb[0].mxu0
      %v1792 = vpop.f32.mrb[0].mxu0
      %v1793 = vadd.f32 0.0, %v1792
      %v1794 = vpop.f32.mrb[0].mxu0
      %1795 = vmatprep.mubr.bf16.mxu0 0
      %1796 = vmatmul.mubr.bf16.gmra.mrb[0].mxu0 %v1163
      %v1797 = vpop.f32.mrb[0].mxu0
      %v1798 = vadd.f32 0.0, %v1797
      %v1799 = vpop.f32.mrb[0].mxu0
      %v1800 = vpop.f32.mrb[0].mxu0
      %v1801 = vadd.f32 0.0, %v1800
      %v1802 = vpop.f32.mrb[0].mxu0
      %1803 = vmatprep.mubr.bf16.mxu0 0
      %1804 = vmatmul.mubr.bf16.gmra.mrb[0].mxu0 %v1166
      %v1805 = vpop.f32.mrb[0].mxu0
      %v1806 = vadd.f32 0.0, %v1805
      %v1807 = vpop.f32.mrb[0].mxu0
      %v1808 = vpop.f32.mrb[0].mxu0
      %v1809 = vadd.f32 0.0, %v1808
      %v1810 = vpop.f32.mrb[0].mxu0
      %1811 = vmatprep.mubr.bf16.mxu0 0
      %1812 = vmatmul.mubr.bf16.gmra.mrb[0].mxu0 %v1169
      %v1813 = vpop.f32.mrb[0].mxu0
      %v1814 = vadd.f32 0.0, %v1813
      %v1815 = vpop.f32.mrb[0].mxu0
      %v1816 = vpop.f32.mrb[0].mxu0
      %v1817 = vadd.f32 0.0, %v1816
      %v1818 = vpop.f32.mrb[0].mxu0
      %1819 = vmatprep.mubr.bf16.mxu0 0
      %1820 = vmatmul.mubr.bf16.gmra.mrb[0].mxu0 %v1172
      %v1821 = vpop.f32.mrb[0].mxu0
      %v1822 = vadd.f32 0.0, %v1821
      %v1823 = vpop.f32.mrb[0].mxu0
      %v1824 = vpop.f32.mrb[0].mxu0
      %v1825 = vadd.f32 0.0, %v1824
      %v1826 = vpop.f32.mrb[0].mxu0
      %1827 = vmatprep.mubr.bf16.mxu0 0
      %1828 = vmatmul.mubr.bf16.gmra.mrb[0].mxu0 %v1175
      %v1829 = vpop.f32.mrb[0].mxu0
      %v1830 = vadd.f32 0.0, %v1829
      %v1831 = vpop.f32.mrb[0].mxu0
      %v1832 = vpop.f32.mrb[0].mxu0
      %v1833 = vadd.f32 0.0, %v1832
      %v1834 = vpop.f32.mrb[0].mxu0
      %1835 = vmatprep.mubr.bf16.mxu0 0
      %1836 = vmatmul.mubr.bf16.gmra.mrb[0].mxu0 %v1178
      %v1837 = vpop.f32.mrb[0].mxu0
      %v1838 = vadd.f32 0.0, %v1837
      %v1839 = vpop.f32.mrb[0].mxu0
      %v1840 = vpop.f32.mrb[0].mxu0
      %v1841 = vadd.f32 0.0, %v1840
      %v1842 = vpop.f32.mrb[0].mxu0
      %1843 = vmatprep.mubr.bf16.mxu0 0
      %1844 = vmatmul.mubr.bf16.gmra.mrb[0].mxu0 %v1181
      %v1845 = vpop.f32.mrb[0].mxu0
      %v1846 = vadd.f32 0.0, %v1845
      %v1847 = vpop.f32.mrb[0].mxu0
      %v1848 = vpop.f32.mrb[0].mxu0
      %v1849 = vadd.f32 0.0, %v1848
      %v1850 = vpop.f32.mrb[0].mxu0
      %1851 = vmatprep.mubr.bf16.mxu0 0
      %1852 = vmatmul.mubr.bf16.gmra.mrb[0].mxu0 %v1184
      %v1853 = vpop.f32.mrb[0].mxu0
      %v1854 = vadd.f32 0.0, %v1853
      %v1855 = vpop.f32.mrb[0].mxu0
      %v1856 = vpop.f32.mrb[0].mxu0
      %v1857 = vadd.f32 0.0, %v1856
      %v1858 = vpop.f32.mrb[0].mxu0
      %1859 = vmatprep.mubr.bf16.mxu0 0
      %1860 = vmatmul.mubr.bf16.gmra.mrb[0].mxu0 %v1187
      %v1861 = vpop.f32.mrb[0].mxu0
      %v1862 = vadd.f32 0.0, %v1861
      %v1863 = vpop.f32.mrb[0].mxu0
      %v1864 = vpop.f32.mrb[0].mxu0
      %v1865 = vadd.f32 0.0, %v1864
      %v1866 = vpop.f32.mrb[0].mxu0
      %1867 = vmatprep.mubr.bf16.mxu0 0
      %1868 = vmatmul.mubr.bf16.gmra.mrb[0].mxu0 %v1190
      %v1869 = vpop.f32.mrb[0].mxu0
      %v1870 = vadd.f32 0.0, %v1869
      %v1871 = vpop.f32.mrb[0].mxu0
      %v1872 = vpop.f32.mrb[0].mxu0
      %v1873 = vadd.f32 0.0, %v1872
      %v1874 = vpop.f32.mrb[0].mxu0
      %1875 = vmatprep.mubr.bf16.mxu0 0
      %1876 = vmatmul.mubr.bf16.gmra.mrb[0].mxu0 %v1193
      %v1877 = vpop.f32.mrb[0].mxu0
      %v1878 = vadd.f32 0.0, %v1877
      %v1879 = vpop.f32.mrb[0].mxu0
      %v1880 = vpop.f32.mrb[0].mxu0
      %v1881 = vadd.f32 0.0, %v1880
      %v1882 = vpop.f32.mrb[0].mxu0
      %1883 = vmatprep.mubr.bf16.mxu0 0
      %1884 = vmatmul.mubr.bf16.gmra.mrb[0].mxu0 %v1196
      %v1885 = vpop.f32.mrb[0].mxu0
      %v1886 = vadd.f32 0.0, %v1885
      %v1887 = vpop.f32.mrb[0].mxu0
      %v1888 = vpop.f32.mrb[0].mxu0
      %v1889 = vadd.f32 0.0, %v1888
      %v1890 = vpop.f32.mrb[0].mxu0
      %1891 = vmatprep.mubr.bf16.mxu0 0
      %1892 = vmatmul.mubr.bf16.gmra.mrb[0].mxu0 %v1199
      %v1893 = vpop.f32.mrb[0].mxu0
      %v1894 = vadd.f32 0.0, %v1893
      %v1895 = vpop.f32.mrb[0].mxu0
      %v1896 = vpop.f32.mrb[0].mxu0
      %v1897 = vadd.f32 0.0, %v1896
      %v1898 = vpop.f32.mrb[0].mxu0
      %1899 = vmatprep.mubr.bf16.mxu0 0
      %1900 = vmatmul.mubr.bf16.gmra.mrb[0].mxu0 %v1202
      %v1901 = vpop.f32.mrb[0].mxu0
      %v1902 = vadd.f32 0.0, %v1901
      %v1903 = vpop.f32.mrb[0].mxu0
      %v1904 = vpop.f32.mrb[0].mxu0
      %v1905 = vadd.f32 0.0, %v1904
      %v1906 = vpop.f32.mrb[0].mxu0
      %1907 = vmatprep.mubr.bf16.mxu0 0
      %1908 = vmatmul.mubr.bf16.gmra.mrb[0].mxu0 %v1205
      %v1909 = vpop.f32.mrb[0].mxu0
      %v1910 = vadd.f32 0.0, %v1909
      %v1911 = vpop.f32.mrb[0].mxu0
      %v1912 = vpop.f32.mrb[0].mxu0
      %v1913 = vadd.f32 0.0, %v1912
      %v1914 = vpop.f32.mrb[0].mxu0
      %1915 = vmatprep.mubr.bf16.mxu0 0
      %1916 = vmatmul.mubr.bf16.gmra.mrb[0].mxu0 %v1208
      %v1917 = vpop.f32.mrb[0].mxu0
      %v1918 = vadd.f32 0.0, %v1917
      %v1919 = vpop.f32.mrb[0].mxu0
      %v1920 = vpop.f32.mrb[0].mxu0
      %v1921 = vadd.f32 0.0, %v1920
      %v1922 = vpop.f32.mrb[0].mxu0
      %1923 = vmatprep.mubr.bf16.mxu0 0
      %1924 = vmatmul.mubr.bf16.gmra.mrb[0].mxu0 %v1211
      %v1925 = vpop.f32.mrb[0].mxu0
      %v1926 = vadd.f32 0.0, %v1925
      %v1927 = vpop.f32.mrb[0].mxu0
      %v1928 = vpop.f32.mrb[0].mxu0
      %v1929 = vadd.f32 0.0, %v1928
      %v1930 = vpop.f32.mrb[0].mxu0
      %1931 = vmatprep.mubr.bf16.mxu0 0
      %1932 = vmatmul.mubr.bf16.gmra.mrb[0].mxu0 %v1214
      %v1933 = vpop.f32.mrb[0].mxu0
      %v1934 = vadd.f32 0.0, %v1933
      %v1935 = vpop.f32.mrb[0].mxu0
      %v1936 = vpop.f32.mrb[0].mxu0
      %v1937 = vadd.f32 0.0, %v1936
      %v1938 = vpop.f32.mrb[0].mxu0
      %1939 = vmatprep.mubr.bf16.mxu0 0
      %1940 = vmatmul.mubr.bf16.gmra.mrb[0].mxu0 %v1217
      %v1941 = vpop.f32.mrb[0].mxu0
      %v1942 = vadd.f32 0.0, %v1941
      %v1943 = vpop.f32.mrb[0].mxu0
      %v1944 = vpop.f32.mrb[0].mxu0
      %v1945 = vadd.f32 0.0, %v1944
      %v1946 = vpop.f32.mrb[0].mxu0
      %1947 = vmatprep.mubr.bf16.mxu0 0
      %1948 = vmatmul.mubr.bf16.gmra.mrb[0].mxu0 %v1220
      %v1949 = vpop.f32.mrb[0].mxu0
      %v1950 = vadd.f32 0.0, %v1949
      %v1951 = vpop.f32.mrb[0].mxu0
      %v1952 = vpop.f32.mrb[0].mxu0
      %v1953 = vadd.f32 0.0, %v1952
      %v1954 = vpop.f32.mrb[0].mxu0
      %1955 = vmatprep.mubr.bf16.mxu0 0
      %1956 = vmatmul.mubr.bf16.gmra.mrb[0].mxu0 %v1223
      %v1957 = vpop.f32.mrb[0].mxu0
      %v1958 = vadd.f32 0.0, %v1957
      %v1959 = vpop.f32.mrb[0].mxu0
      %v1960 = vpop.f32.mrb[0].mxu0
      %v1961 = vadd.f32 0.0, %v1960
      %v1962 = vpop.f32.mrb[0].mxu0
      %1963 = vmatprep.mubr.bf16.mxu0 0
      %1964 = vmatmul.mubr.bf16.gmra.mrb[0].mxu0 %v1226
      %v1965 = vpop.f32.mrb[0].mxu0
      %v1966 = vadd.f32 0.0, %v1965
      %v1967 = vpop.f32.mrb[0].mxu0
      %v1968 = vpop.f32.mrb[0].mxu0
      %v1969 = vadd.f32 0.0, %v1968
      %v1970 = vpop.f32.mrb[0].mxu0
      %1971 = vmatprep.mubr.bf16.mxu0 0
      %1972 = vmatmul.mubr.bf16.gmra.mrb[0].mxu0 %v1229
      %v1973 = vpop.f32.mrb[0].mxu0
      %v1974 = vadd.f32 0.0, %v1973
      %v1975 = vpop.f32.mrb[0].mxu0
      %v1976 = vpop.f32.mrb[0].mxu0
      %v1977 = vadd.f32 0.0, %v1976
      %v1978 = vpop.f32.mrb[0].mxu0
      %1979 = vmatprep.mubr.bf16.mxu0 0
      %1980 = vmatmul.mubr.bf16.gmra.mrb[0].mxu0 %v1232
      %v1981 = vpop.f32.mrb[0].mxu0
      %v1982 = vadd.f32 0.0, %v1981
      %v1983 = vpop.f32.mrb[0].mxu0
      %v1984 = vpop.f32.mrb[0].mxu0
      %v1985 = vadd.f32 0.0, %v1984
      %v1986 = vpop.f32.mrb[0].mxu0
      %1987 = vmatprep.mubr.bf16.mxu0 0
      %1988 = vmatmul.mubr.bf16.gmra.mrb[0].mxu0 %v1235
      %v1989 = vpop.f32.mrb[0].mxu0
      %v1990 = vadd.f32 0.0, %v1989
      %v1991 = vpop.f32.mrb[0].mxu0
      %v1992 = vpop.f32.mrb[0].mxu0
      %v1993 = vadd.f32 0.0, %v1992
      %v1994 = vpop.f32.mrb[0].mxu0
      %1995 = vmatprep.mubr.bf16.mxu0 0
      %1996 = vmatmul.mubr.bf16.gmra.mrb[0].mxu0 %v1238
      %v1997 = vpop.f32.mrb[0].mxu0
      %v1998 = vadd.f32 0.0, %v1997
      %v1999 = vpop.f32.mrb[0].mxu0
      %v2000 = vpop.f32.mrb[0].mxu0
      %v2001 = vadd.f32 0.0, %v2000
      %v2002 = vpop.f32.mrb[0].mxu0
      %2003 = vmatprep.mubr.bf16.mxu0 0
      %2004 = vmatmul.mubr.bf16.gmra.mrb[0].mxu0 %v1241
      %v2005 = vpop.f32.mrb[0].mxu0
      %v2006 = vadd.f32 0.0, %v2005
      %v2007 = vpop.f32.mrb[0].mxu0
      %v2008 = vpop.f32.mrb[0].mxu0
      %v2009 = vadd.f32 0.0, %v2008
      %v2010 = vpop.f32.mrb[0].mxu0
      %2011 = vmatprep.mubr.bf16.mxu0 0
      %2012 = vmatmul.mubr.bf16.gmra.mrb[0].mxu0 %v1244
      %v2013 = vpop.f32.mrb[0].mxu0
      %v2014 = vadd.f32 0.0, %v2013
      %v2015 = vpop.f32.mrb[0].mxu0
      %v2016 = vpop.f32.mrb[0].mxu0
      %v2017 = vadd.f32 0.0, %v2016
      %v2018 = vpop.f32.mrb[0].mxu0
      %2019 = vmatprep.mubr.bf16.mxu0 0
      %2020 = vmatmul.mubr.bf16.gmra.mrb[0].mxu0 %v1247
      %v2021 = vpop.f32.mrb[0].mxu0
      %v2022 = vadd.f32 0.0, %v2021
      %v2023 = vpop.f32.mrb[0].mxu0
      %v2024 = vpop.f32.mrb[0].mxu0
      %v2025 = vadd.f32 0.0, %v2024
      %v2026 = vpop.f32.mrb[0].mxu0
      %2027 = vmatprep.mubr.bf16.mxu0 0
      %2028 = vmatmul.mubr.bf16.gmra.mrb[0].mxu0 %v1250
      %v2029 = vpop.f32.mrb[0].mxu0
      %v2030 = vadd.f32 0.0, %v2029
      %v2031 = vpop.f32.mrb[0].mxu0
      %v2032 = vpop.f32.mrb[0].mxu0
      %v2033 = vadd.f32 0.0, %v2032
      %v2034 = vpop.f32.mrb[0].mxu0
      %2035 = vmatprep.mubr.bf16.mxu0 0
      %2036 = vmatmul.mubr.bf16.gmra.mrb[0].mxu0 %v1253
      %v2037 = vpop.f32.mrb[0].mxu0
      %v2038 = vadd.f32 0.0, %v2037
      %v2039 = vpop.f32.mrb[0].mxu0
      %v2040 = vpop.f32.mrb[0].mxu0
      %v2041 = vadd.f32 0.0, %v2040
      %v2042 = vpop.f32.mrb[0].mxu0
      %2043 = vmatprep.mubr.bf16.mxu0 0
      %2044 = vmatmul.mubr.bf16.gmra.mrb[0].mxu0 %v1256
      %v2045 = vpop.f32.mrb[0].mxu0
      %v2046 = vadd.f32 0.0, %v2045
      %v2047 = vpop.f32.mrb[0].mxu0
      %v2048 = vpop.f32.mrb[0].mxu0
      %v2049 = vadd.f32 0.0, %v2048
      %v2050 = vpop.f32.mrb[0].mxu0
      %2051 = vmatprep.mubr.bf16.mxu0 0
      %2052 = vmatmul.mubr.bf16.gmra.mrb[0].mxu0 %v1259
      %v2053 = vpop.f32.mrb[0].mxu0
      %v2054 = vadd.f32 0.0, %v2053
      %v2055 = vpop.f32.mrb[0].mxu0
      %v2056 = vpop.f32.mrb[0].mxu0
      %v2057 = vadd.f32 0.0, %v2056
      %v2058 = vpop.f32.mrb[0].mxu0
      %2059 = vmatprep.mubr.bf16.mxu0 0
      %2060 = vmatmul.mubr.bf16.gmra.mrb[0].mxu0 %v1262
      %v2061 = vpop.f32.mrb[0].mxu0
      %v2062 = vadd.f32 0.0, %v2061
      %v2063 = vpop.f32.mrb[0].mxu0
      %v2064 = vpop.f32.mrb[0].mxu0
      %v2065 = vadd.f32 0.0, %v2064
      %v2066 = vpop.f32.mrb[0].mxu0
      %2067 = vmatprep.mubr.bf16.mxu0 0
      %2068 = vmatmul.mubr.bf16.gmra.mrb[0].mxu0 %v1265
      %v2069 = vpop.f32.mrb[0].mxu0
      %v2070 = vadd.f32 0.0, %v2069
      %v2071 = vpop.f32.mrb[0].mxu0
      %v2072 = vpop.f32.mrb[0].mxu0
      %v2073 = vadd.f32 0.0, %v2072
      %v2074 = vpop.f32.mrb[0].mxu0
      %2075 = vmatprep.mubr.bf16.mxu0 0
      %2076 = vmatmul.mubr.bf16.gmra.mrb[0].mxu0 %v1268
      %v2077 = vpop.f32.mrb[0].mxu0
      %v2078 = vadd.f32 0.0, %v2077
      %v2079 = vpop.f32.mrb[0].mxu0
      %v2080 = vpop.f32.mrb[0].mxu0
      %v2081 = vadd.f32 0.0, %v2080
      %v2082 = vpop.f32.mrb[0].mxu0
      %2083 = vmatprep.mubr.bf16.mxu0 0
      %2084 = vmatmul.mubr.bf16.gmra.mrb[0].mxu0 %v1271
      %v2085 = vpop.f32.mrb[0].mxu0
      %v2086 = vadd.f32 0.0, %v2085
      %v2087 = vpop.f32.mrb[0].mxu0
      %v2088 = vpop.f32.mrb[0].mxu0
      %v2089 = vadd.f32 0.0, %v2088
      %v2090 = vpop.f32.mrb[0].mxu0
      %2091 = vmatprep.mubr.bf16.mxu0 0
      %2092 = vmatmul.mubr.bf16.gmra.mrb[0].mxu0 %v1274
      %v2093 = vpop.f32.mrb[0].mxu0
      %v2094 = vadd.f32 0.0, %v2093
      %v2095 = vpop.f32.mrb[0].mxu0
      %v2096 = vpop.f32.mrb[0].mxu0
      %v2097 = vadd.f32 0.0, %v2096
      %v2098 = vpop.f32.mrb[0].mxu0
      %2099 = vmatprep.mubr.bf16.mxu0 0
      %2100 = vmatmul.mubr.bf16.gmra.mrb[0].mxu0 %v1277
      %v2101 = vpop.f32.mrb[0].mxu0
      %v2102 = vadd.f32 0.0, %v2101
      %v2103 = vpop.f32.mrb[0].mxu0
      %v2104 = vpop.f32.mrb[0].mxu0
      %v2105 = vadd.f32 0.0, %v2104
      %v2106 = vpop.f32.mrb[0].mxu0
      %2107 = vmatprep.mubr.bf16.mxu0 0
      %2108 = vmatmul.mubr.bf16.gmra.mrb[0].mxu0 %v1280
      %v2109 = vpop.f32.mrb[0].mxu0
      %v2110 = vadd.f32 0.0, %v2109
      %v2111 = vpop.f32.mrb[0].mxu0
      %v2112 = vpop.f32.mrb[0].mxu0
      %v2113 = vadd.f32 0.0, %v2112
      %v2114 = vpop.f32.mrb[0].mxu0
      %2115 = vmatprep.mubr.bf16.mxu0 0
      %2116 = vmatmul.mubr.bf16.gmra.mrb[0].mxu0 %v1283
      %v2117 = vpop.f32.mrb[0].mxu0
      %v2118 = vadd.f32 0.0, %v2117
      %v2119 = vpop.f32.mrb[0].mxu0
      %v2120 = vpop.f32.mrb[0].mxu0
      %v2121 = vadd.f32 0.0, %v2120
      %v2122 = vpop.f32.mrb[0].mxu0
      %2123 = vmatprep.mubr.bf16.mxu0 0
      %2124 = vmatmul.mubr.bf16.gmra.mrb[0].mxu0 %v1286
      %v2125 = vpop.f32.mrb[0].mxu0
      %v2126 = vadd.f32 0.0, %v2125
      %v2127 = vpop.f32.mrb[0].mxu0
      %v2128 = vpop.f32.mrb[0].mxu0
      %v2129 = vadd.f32 0.0, %v2128
      %v2130 = vpop.f32.mrb[0].mxu0
      %2131 = vmatprep.mubr.bf16.mxu0 0
      %2132 = vmatmul.mubr.bf16.gmra.mrb[0].mxu0 %v1289
      %v2133 = vpop.f32.mrb[0].mxu0
      %v2134 = vadd.f32 0.0, %v2133
      %v2135 = vpop.f32.mrb[0].mxu0
      %v2136 = vpop.f32.mrb[0].mxu0
      %v2137 = vadd.f32 0.0, %v2136
      %v2138 = vpop.f32.mrb[0].mxu0
      %2139 = vmatprep.mubr.bf16.mxu0 0
      %2140 = vmatmul.mubr.bf16.gmra.mrb[0].mxu0 %v1292
      %v2141 = vpop.f32.mrb[0].mxu0
      %v2142 = vadd.f32 0.0, %v2141
      %v2143 = vpop.f32.mrb[0].mxu0
      %v2144 = vpop.f32.mrb[0].mxu0
      %v2145 = vadd.f32 0.0, %v2144
      %v2146 = vpop.f32.mrb[0].mxu0
      %2147 = vmatprep.mubr.bf16.mxu0 0
      %2148 = vmatmul.mubr.bf16.gmra.mrb[0].mxu0 %v1295
      %v2149 = vpop.f32.mrb[0].mxu0
      %v2150 = vadd.f32 0.0, %v2149
      %v2151 = vpop.f32.mrb[0].mxu0
      %v2152 = vpop.f32.mrb[0].mxu0
      %v2153 = vadd.f32 0.0, %v2152
      %v2154 = vpop.f32.mrb[0].mxu0
      %2155 = vmatprep.mubr.bf16.mxu0 0
      %2156 = vmatmul.mubr.bf16.gmra.mrb[0].mxu0 %v1298
      %v2157 = vpop.f32.mrb[0].mxu0
      %v2158 = vadd.f32 0.0, %v2157
      %v2159 = vpop.f32.mrb[0].mxu0
      %v2160 = vpop.f32.mrb[0].mxu0
      %v2161 = vadd.f32 0.0, %v2160
      %v2162 = vpop.f32.mrb[0].mxu0
      %2163 = vmatprep.mubr.bf16.mxu0 0
      %2164 = vmatmul.mubr.bf16.gmra.mrb[0].mxu0 %v1301
      %v2165 = vpop.f32.mrb[0].mxu0
      %v2166 = vadd.f32 0.0, %v2165
      %v2167 = vpop.f32.mrb[0].mxu0
      %v2168 = vpop.f32.mrb[0].mxu0
      %v2169 = vadd.f32 0.0, %v2168
      %v2170 = vpop.f32.mrb[0].mxu0
      %2171 = vmatprep.mubr.bf16.mxu0 0
      %2172 = vmatmul.mubr.bf16.gmra.mrb[0].mxu0 %v1304
      %v2173 = vpop.f32.mrb[0].mxu0
      %v2174 = vadd.f32 0.0, %v2173
      %v2175 = vpop.f32.mrb[0].mxu0
      %v2176 = vpop.f32.mrb[0].mxu0
      %v2177 = vadd.f32 0.0, %v2176
      %v2178 = vpop.f32.mrb[0].mxu0
      %2179 = vmatprep.mubr.bf16.mxu0 0
      %2180 = vmatmul.mubr.bf16.gmra.mrb[0].mxu0 %v1307
      %v2181 = vpop.f32.mrb[0].mxu0
      %v2182 = vadd.f32 0.0, %v2181
      %v2183 = vpop.f32.mrb[0].mxu0
      %v2184 = vpop.f32.mrb[0].mxu0
      %v2185 = vadd.f32 0.0, %v2184
      %v2186 = vpop.f32.mrb[0].mxu0
      %2187 = vmatprep.mubr.bf16.mxu0 0
      %2188 = vmatmul.mubr.bf16.gmra.mrb[0].mxu0 %v1310
      %v2189 = vpop.f32.mrb[0].mxu0
      %v2190 = vadd.f32 0.0, %v2189
      %v2191 = vpop.f32.mrb[0].mxu0
      %v2192 = vpop.f32.mrb[0].mxu0
      %v2193 = vadd.f32 0.0, %v2192
      %v2194 = vpop.f32.mrb[0].mxu0
      %2195 = vmatprep.mubr.bf16.mxu0 0
      %2196 = vmatmul.mubr.bf16.gmra.mrb[0].mxu0 %v1313
      %v2197 = vpop.f32.mrb[0].mxu0
      %v2198 = vadd.f32 0.0, %v2197
      %v2199 = vpop.f32.mrb[0].mxu0
      %v2200 = vpop.f32.mrb[0].mxu0
      %v2201 = vadd.f32 0.0, %v2200
      %v2202 = vpop.f32.mrb[0].mxu0
      %2203 = vmatprep.mubr.bf16.mxu0 0
      %2204 = vmatmul.mubr.bf16.gmra.mrb[0].mxu0 %v1316
      %v2205 = vpop.f32.mrb[0].mxu0
      %v2206 = vadd.f32 0.0, %v2205
      %v2207 = vpop.f32.mrb[0].mxu0
      %v2208 = vpop.f32.mrb[0].mxu0
      %v2209 = vadd.f32 0.0, %v2208
      %v2210 = vpop.f32.mrb[0].mxu0
      %2211 = vmatprep.mubr.bf16.mxu0 0
      %2212 = vmatmul.mubr.bf16.gmra.mrb[0].mxu0 %v1319
      %v2213 = vpop.f32.mrb[0].mxu0
      %v2214 = vadd.f32 0.0, %v2213
      %v2215 = vpop.f32.mrb[0].mxu0
      %v2216 = vpop.f32.mrb[0].mxu0
      %v2217 = vadd.f32 0.0, %v2216
      %v2218 = vpop.f32.mrb[0].mxu0
      %2219 = vmatprep.mubr.bf16.mxu0 0
      %2220 = vmatmul.mubr.bf16.gmra.mrb[0].mxu0 %v1322
      %v2221 = vpop.f32.mrb[0].mxu0
      %v2222 = vadd.f32 0.0, %v2221
      %v2223 = vpop.f32.mrb[0].mxu0
      %v2224 = vpop.f32.mrb[0].mxu0
      %v2225 = vadd.f32 0.0, %v2224
      %v2226 = vpop.f32.mrb[0].mxu0
      %2227 = vmatprep.mubr.bf16.mxu0 0
      %2228 = vmatmul.mubr.bf16.gmra.mrb[0].mxu0 %v1325
      %v2229 = vpop.f32.mrb[0].mxu0
      %v2230 = vadd.f32 0.0, %v2229
      %v2231 = vpop.f32.mrb[0].mxu0
      %v2232 = vpop.f32.mrb[0].mxu0
      %v2233 = vadd.f32 0.0, %v2232
      %v2234 = vpop.f32.mrb[0].mxu0
      %2235 = vmatprep.mubr.bf16.mxu0 0
      %2236 = vmatmul.mubr.bf16.gmra.mrb[0].mxu0 %v1328
      %v2237 = vpop.f32.mrb[0].mxu0
      %v2238 = vadd.f32 0.0, %v2237
      %v2239 = vpop.f32.mrb[0].mxu0
      %v2240 = vpop.f32.mrb[0].mxu0
      %v2241 = vadd.f32 0.0, %v2240
      %v2242 = vpop.f32.mrb[0].mxu0
      %2243 = vmatprep.mubr.bf16.mxu0 0
      %2244 = vmatmul.mubr.bf16.gmra.mrb[0].mxu0 %v1331
      %v2245 = vpop.f32.mrb[0].mxu0
      %v2246 = vadd.f32 0.0, %v2245
      %v2247 = vpop.f32.mrb[0].mxu0
      %v2248 = vpop.f32.mrb[0].mxu0
      %v2249 = vadd.f32 0.0, %v2248
      %v2250 = vpop.f32.mrb[0].mxu0
      %2251 = vmatprep.mubr.bf16.mxu0 0
      %2252 = vmatmul.mubr.bf16.gmra.mrb[0].mxu0 %v1334
      %v2253 = vpop.f32.mrb[0].mxu0
      %v2254 = vadd.f32 0.0, %v2253
      %v2255 = vpop.f32.mrb[0].mxu0
      %v2256 = vpop.f32.mrb[0].mxu0
      %v2257 = vadd.f32 0.0, %v2256
      %v2258 = vpop.f32.mrb[0].mxu0
      %2259 = vmatprep.mubr.bf16.mxu0 0
      %2260 = vmatmul.mubr.bf16.gmra.mrb[0].mxu0 %v1337
      %v2261 = vpop.f32.mrb[0].mxu0
      %v2262 = vadd.f32 0.0, %v2261
      %v2263 = vpop.f32.mrb[0].mxu0
      %v2264 = vpop.f32.mrb[0].mxu0
      %v2265 = vadd.f32 0.0, %v2264
      %v2266 = vpop.f32.mrb[0].mxu0
      %2267 = vdwg.mxu0
      %v2268 = vld [vmem:[%s2] sm:$0x1]
      %v2270 = vlaneseq
      %v2271 = vshrl.u32 %v2270, 7
      %v2272 = vsub.s32 0, %v2271
      %v2273 = vrot.slane %v2268, %v2272
      %v2275 = vmul.f32 %v1374, %v2273
      %v2276 = vmul.f32 %v1377, %v2273
      %v2277 = vmul.f32 %v1382, %v2273
      %v2278 = vmul.f32 %v1385, %v2273
      %v2279 = vmul.f32 %v1390, %v2273
      %v2280 = vmul.f32 %v1393, %v2273
      %v2281 = vmul.f32 %v1398, %v2273
      %v2282 = vmul.f32 %v1401, %v2273
      %v2283 = vmul.f32 %v1406, %v2273
      %v2284 = vmul.f32 %v1409, %v2273
      %v2285 = vmul.f32 %v1414, %v2273
      %v2286 = vmul.f32 %v1417, %v2273
      %v2287 = vmul.f32 %v1422, %v2273
      %v2288 = vmul.f32 %v1425, %v2273
      %v2289 = vmul.f32 %v1430, %v2273
      %v2290 = vmul.f32 %v1433, %v2273
      %v2291 = vmul.f32 %v1438, %v2273
      %v2292 = vmul.f32 %v1441, %v2273
      %v2293 = vmul.f32 %v1446, %v2273
      %v2294 = vmul.f32 %v1449, %v2273
      %v2295 = vmul.f32 %v1454, %v2273
      %v2296 = vmul.f32 %v1457, %v2273
      %v2297 = vmul.f32 %v1462, %v2273
      %v2298 = vmul.f32 %v1465, %v2273
      %v2299 = vmul.f32 %v1470, %v2273
      %v2300 = vmul.f32 %v1473, %v2273
      %v2301 = vmul.f32 %v1478, %v2273
      %v2302 = vmul.f32 %v1481, %v2273
      %v2303 = vmul.f32 %v1486, %v2273
      %v2304 = vmul.f32 %v1489, %v2273
      %v2305 = vmul.f32 %v1494, %v2273
      %v2306 = vmul.f32 %v1497, %v2273
      %v2307 = vmul.f32 %v1502, %v2273
      %v2308 = vmul.f32 %v1505, %v2273
      %v2309 = vmul.f32 %v1510, %v2273
      %v2310 = vmul.f32 %v1513, %v2273
      %v2311 = vmul.f32 %v1518, %v2273
      %v2312 = vmul.f32 %v1521, %v2273
      %v2313 = vmul.f32 %v1526, %v2273
      %v2314 = vmul.f32 %v1529, %v2273
      %v2315 = vmul.f32 %v1534, %v2273
      %v2316 = vmul.f32 %v1537, %v2273
      %v2317 = vmul.f32 %v1542, %v2273
      %v2318 = vmul.f32 %v1545, %v2273
      %v2319 = vmul.f32 %v1550, %v2273
      %v2320 = vmul.f32 %v1553, %v2273
      %v2321 = vmul.f32 %v1558, %v2273
      %v2322 = vmul.f32 %v1561, %v2273
      %v2323 = vmul.f32 %v1566, %v2273
      %v2324 = vmul.f32 %v1569, %v2273
      %v2325 = vmul.f32 %v1574, %v2273
      %v2326 = vmul.f32 %v1577, %v2273
      %v2327 = vmul.f32 %v1582, %v2273
      %v2328 = vmul.f32 %v1585, %v2273
      %v2329 = vmul.f32 %v1590, %v2273
      %v2330 = vmul.f32 %v1593, %v2273
      %v2331 = vmul.f32 %v1598, %v2273
      %v2332 = vmul.f32 %v1601, %v2273
      %v2333 = vmul.f32 %v1606, %v2273
      %v2334 = vmul.f32 %v1609, %v2273
      %v2335 = vmul.f32 %v1614, %v2273
      %v2336 = vmul.f32 %v1617, %v2273
      %v2337 = vmul.f32 %v1622, %v2273
      %v2338 = vmul.f32 %v1625, %v2273
      %v2339 = vmul.f32 %v1630, %v2273
      %v2340 = vmul.f32 %v1633, %v2273
      %v2341 = vmul.f32 %v1638, %v2273
      %v2342 = vmul.f32 %v1641, %v2273
      %v2343 = vmul.f32 %v1646, %v2273
      %v2344 = vmul.f32 %v1649, %v2273
      %v2345 = vmul.f32 %v1654, %v2273
      %v2346 = vmul.f32 %v1657, %v2273
      %v2347 = vmul.f32 %v1662, %v2273
      %v2348 = vmul.f32 %v1665, %v2273
      %v2349 = vmul.f32 %v1670, %v2273
      %v2350 = vmul.f32 %v1673, %v2273
      %v2351 = vmul.f32 %v1678, %v2273
      %v2352 = vmul.f32 %v1681, %v2273
      %v2353 = vmul.f32 %v1686, %v2273
      %v2354 = vmul.f32 %v1689, %v2273
      %v2355 = vmul.f32 %v1694, %v2273
      %v2356 = vmul.f32 %v1697, %v2273
      %v2357 = vmul.f32 %v1702, %v2273
      %v2358 = vmul.f32 %v1705, %v2273
      %v2359 = vmul.f32 %v1710, %v2273
      %v2360 = vmul.f32 %v1713, %v2273
      %v2361 = vmul.f32 %v1718, %v2273
      %v2362 = vmul.f32 %v1721, %v2273
      %v2363 = vmul.f32 %v1726, %v2273
      %v2364 = vmul.f32 %v1729, %v2273
      %v2365 = vmul.f32 %v1734, %v2273
      %v2366 = vmul.f32 %v1737, %v2273
      %v2367 = vmul.f32 %v1742, %v2273
      %v2368 = vmul.f32 %v1745, %v2273
      %v2369 = vmul.f32 %v1750, %v2273
      %v2370 = vmul.f32 %v1753, %v2273
      %v2371 = vmul.f32 %v1758, %v2273
      %v2372 = vmul.f32 %v1761, %v2273
      %v2373 = vmul.f32 %v1766, %v2273
      %v2374 = vmul.f32 %v1769, %v2273
      %v2375 = vmul.f32 %v1774, %v2273
      %v2376 = vmul.f32 %v1777, %v2273
      %v2377 = vmul.f32 %v1782, %v2273
      %v2378 = vmul.f32 %v1785, %v2273
      %v2379 = vmul.f32 %v1790, %v2273
      %v2380 = vmul.f32 %v1793, %v2273
      %v2381 = vmul.f32 %v1798, %v2273
      %v2382 = vmul.f32 %v1801, %v2273
      %v2383 = vmul.f32 %v1806, %v2273
      %v2384 = vmul.f32 %v1809, %v2273
      %v2385 = vmul.f32 %v1814, %v2273
      %v2386 = vmul.f32 %v1817, %v2273
      %v2387 = vmul.f32 %v1822, %v2273
      %v2388 = vmul.f32 %v1825, %v2273
      %v2389 = vmul.f32 %v1830, %v2273
      %v2390 = vmul.f32 %v1833, %v2273
      %v2391 = vmul.f32 %v1838, %v2273
      %v2392 = vmul.f32 %v1841, %v2273
      %v2393 = vmul.f32 %v1846, %v2273
      %v2394 = vmul.f32 %v1849, %v2273
      %v2395 = vmul.f32 %v1854, %v2273
      %v2396 = vmul.f32 %v1857, %v2273
      %v2397 = vmul.f32 %v1862, %v2273
      %v2398 = vmul.f32 %v1865, %v2273
      %v2399 = vmul.f32 %v1870, %v2273
      %v2400 = vmul.f32 %v1873, %v2273
      %v2401 = vmul.f32 %v1878, %v2273
      %v2402 = vmul.f32 %v1881, %v2273
      %v2403 = vmul.f32 %v1886, %v2273
      %v2404 = vmul.f32 %v1889, %v2273
      %v2405 = vmul.f32 %v1894, %v2273
      %v2406 = vmul.f32 %v1897, %v2273
      %v2407 = vmul.f32 %v1902, %v2273
      %v2408 = vmul.f32 %v1905, %v2273
      %v2409 = vmul.f32 %v1910, %v2273
      %v2410 = vmul.f32 %v1913, %v2273
      %v2411 = vmul.f32 %v1918, %v2273
      %v2412 = vmul.f32 %v1921, %v2273
      %v2413 = vmul.f32 %v1926, %v2273
      %v2414 = vmul.f32 %v1929, %v2273
      %v2415 = vmul.f32 %v1934, %v2273
      %v2416 = vmul.f32 %v1937, %v2273
      %v2417 = vmul.f32 %v1942, %v2273
      %v2418 = vmul.f32 %v1945, %v2273
      %v2419 = vmul.f32 %v1950, %v2273
      %v2420 = vmul.f32 %v1953, %v2273
      %v2421 = vmul.f32 %v1958, %v2273
      %v2422 = vmul.f32 %v1961, %v2273
      %v2423 = vmul.f32 %v1966, %v2273
      %v2424 = vmul.f32 %v1969, %v2273
      %v2425 = vmul.f32 %v1974, %v2273
      %v2426 = vmul.f32 %v1977, %v2273
      %v2427 = vmul.f32 %v1982, %v2273
      %v2428 = vmul.f32 %v1985, %v2273
      %v2429 = vmul.f32 %v1990, %v2273
      %v2430 = vmul.f32 %v1993, %v2273
      %v2431 = vmul.f32 %v1998, %v2273
      %v2432 = vmul.f32 %v2001, %v2273
      %v2433 = vmul.f32 %v2006, %v2273
      %v2434 = vmul.f32 %v2009, %v2273
      %v2435 = vmul.f32 %v2014, %v2273
      %v2436 = vmul.f32 %v2017, %v2273
      %v2437 = vmul.f32 %v2022, %v2273
      %v2438 = vmul.f32 %v2025, %v2273
      %v2439 = vmul.f32 %v2030, %v2273
      %v2440 = vmul.f32 %v2033, %v2273
      %v2441 = vmul.f32 %v2038, %v2273
      %v2442 = vmul.f32 %v2041, %v2273
      %v2443 = vmul.f32 %v2046, %v2273
      %v2444 = vmul.f32 %v2049, %v2273
      %v2445 = vmul.f32 %v2054, %v2273
      %v2446 = vmul.f32 %v2057, %v2273
      %v2447 = vmul.f32 %v2062, %v2273
      %v2448 = vmul.f32 %v2065, %v2273
      %v2449 = vmul.f32 %v2070, %v2273
      %v2450 = vmul.f32 %v2073, %v2273
      %v2451 = vmul.f32 %v2078, %v2273
      %v2452 = vmul.f32 %v2081, %v2273
      %v2453 = vmul.f32 %v2086, %v2273
      %v2454 = vmul.f32 %v2089, %v2273
      %v2455 = vmul.f32 %v2094, %v2273
      %v2456 = vmul.f32 %v2097, %v2273
      %v2457 = vmul.f32 %v2102, %v2273
      %v2458 = vmul.f32 %v2105, %v2273
      %v2459 = vmul.f32 %v2110, %v2273
      %v2460 = vmul.f32 %v2113, %v2273
      %v2461 = vmul.f32 %v2118, %v2273
      %v2462 = vmul.f32 %v2121, %v2273
      %v2463 = vmul.f32 %v2126, %v2273
      %v2464 = vmul.f32 %v2129, %v2273
      %v2465 = vmul.f32 %v2134, %v2273
      %v2466 = vmul.f32 %v2137, %v2273
      %v2467 = vmul.f32 %v2142, %v2273
      %v2468 = vmul.f32 %v2145, %v2273
      %v2469 = vmul.f32 %v2150, %v2273
      %v2470 = vmul.f32 %v2153, %v2273
      %v2471 = vmul.f32 %v2158, %v2273
      %v2472 = vmul.f32 %v2161, %v2273
      %v2473 = vmul.f32 %v2166, %v2273
      %v2474 = vmul.f32 %v2169, %v2273
      %v2475 = vmul.f32 %v2174, %v2273
      %v2476 = vmul.f32 %v2177, %v2273
      %v2477 = vmul.f32 %v2182, %v2273
      %v2478 = vmul.f32 %v2185, %v2273
      %v2479 = vmul.f32 %v2190, %v2273
      %v2480 = vmul.f32 %v2193, %v2273
      %v2481 = vmul.f32 %v2198, %v2273
      %v2482 = vmul.f32 %v2201, %v2273
      %v2483 = vmul.f32 %v2206, %v2273
      %v2484 = vmul.f32 %v2209, %v2273
      %v2485 = vmul.f32 %v2214, %v2273
      %v2486 = vmul.f32 %v2217, %v2273
      %v2487 = vmul.f32 %v2222, %v2273
      %v2488 = vmul.f32 %v2225, %v2273
      %v2489 = vmul.f32 %v2230, %v2273
      %v2490 = vmul.f32 %v2233, %v2273
      %v2491 = vmul.f32 %v2238, %v2273
      %v2492 = vmul.f32 %v2241, %v2273
      %v2493 = vmul.f32 %v2246, %v2273
      %v2494 = vmul.f32 %v2249, %v2273
      %v2495 = vmul.f32 %v2254, %v2273
      %v2496 = vmul.f32 %v2257, %v2273
      %v2497 = vmul.f32 %v2262, %v2273
      %v2498 = vmul.f32 %v2265, %v2273
      %v2499 = vld [vmem:[%s3] sm:$0x1]
      %v2501 = vlaneseq
      %v2502 = vshrl.u32 %v2501, 7
      %v2503 = vsub.s32 0, %v2502
      %v2504 = vrot.slane %v2499, %v2503
      %v2506 = vadd.f32 %v2275, %v2504
      %v2507 = vadd.f32 %v2276, %v2504
      %v2508 = vadd.f32 %v2277, %v2504
      %v2509 = vadd.f32 %v2278, %v2504
      %v2510 = vadd.f32 %v2279, %v2504
      %v2511 = vadd.f32 %v2280, %v2504
      %v2512 = vadd.f32 %v2281, %v2504
      %v2513 = vadd.f32 %v2282, %v2504
      %v2514 = vadd.f32 %v2283, %v2504
      %v2515 = vadd.f32 %v2284, %v2504
      %v2516 = vadd.f32 %v2285, %v2504
      %v2517 = vadd.f32 %v2286, %v2504
      %v2518 = vadd.f32 %v2287, %v2504
      %v2519 = vadd.f32 %v2288, %v2504
      %v2520 = vadd.f32 %v2289, %v2504
      %v2521 = vadd.f32 %v2290, %v2504
      %v2522 = vadd.f32 %v2291, %v2504
      %v2523 = vadd.f32 %v2292, %v2504
      %v2524 = vadd.f32 %v2293, %v2504
      %v2525 = vadd.f32 %v2294, %v2504
      %v2526 = vadd.f32 %v2295, %v2504
      %v2527 = vadd.f32 %v2296, %v2504
      %v2528 = vadd.f32 %v2297, %v2504
      %v2529 = vadd.f32 %v2298, %v2504
      %v2530 = vadd.f32 %v2299, %v2504
      %v2531 = vadd.f32 %v2300, %v2504
      %v2532 = vadd.f32 %v2301, %v2504
      %v2533 = vadd.f32 %v2302, %v2504
      %v2534 = vadd.f32 %v2303, %v2504
      %v2535 = vadd.f32 %v2304, %v2504
      %v2536 = vadd.f32 %v2305, %v2504
      %v2537 = vadd.f32 %v2306, %v2504
      %v2538 = vadd.f32 %v2307, %v2504
      %v2539 = vadd.f32 %v2308, %v2504
      %v2540 = vadd.f32 %v2309, %v2504
      %v2541 = vadd.f32 %v2310, %v2504
      %v2542 = vadd.f32 %v2311, %v2504
      %v2543 = vadd.f32 %v2312, %v2504
      %v2544 = vadd.f32 %v2313, %v2504
      %v2545 = vadd.f32 %v2314, %v2504
      %v2546 = vadd.f32 %v2315, %v2504
      %v2547 = vadd.f32 %v2316, %v2504
      %v2548 = vadd.f32 %v2317, %v2504
      %v2549 = vadd.f32 %v2318, %v2504
      %v2550 = vadd.f32 %v2319, %v2504
      %v2551 = vadd.f32 %v2320, %v2504
      %v2552 = vadd.f32 %v2321, %v2504
      %v2553 = vadd.f32 %v2322, %v2504
      %v2554 = vadd.f32 %v2323, %v2504
      %v2555 = vadd.f32 %v2324, %v2504
      %v2556 = vadd.f32 %v2325, %v2504
      %v2557 = vadd.f32 %v2326, %v2504
      %v2558 = vadd.f32 %v2327, %v2504
      %v2559 = vadd.f32 %v2328, %v2504
      %v2560 = vadd.f32 %v2329, %v2504
      %v2561 = vadd.f32 %v2330, %v2504
      %v2562 = vadd.f32 %v2331, %v2504
      %v2563 = vadd.f32 %v2332, %v2504
      %v2564 = vadd.f32 %v2333, %v2504
      %v2565 = vadd.f32 %v2334, %v2504
      %v2566 = vadd.f32 %v2335, %v2504
      %v2567 = vadd.f32 %v2336, %v2504
      %v2568 = vadd.f32 %v2337, %v2504
      %v2569 = vadd.f32 %v2338, %v2504
      %v2570 = vadd.f32 %v2339, %v2504
      %v2571 = vadd.f32 %v2340, %v2504
      %v2572 = vadd.f32 %v2341, %v2504
      %v2573 = vadd.f32 %v2342, %v2504
      %v2574 = vadd.f32 %v2343, %v2504
      %v2575 = vadd.f32 %v2344, %v2504
      %v2576 = vadd.f32 %v2345, %v2504
      %v2577 = vadd.f32 %v2346, %v2504
      %v2578 = vadd.f32 %v2347, %v2504
      %v2579 = vadd.f32 %v2348, %v2504
      %v2580 = vadd.f32 %v2349, %v2504
      %v2581 = vadd.f32 %v2350, %v2504
      %v2582 = vadd.f32 %v2351, %v2504
      %v2583 = vadd.f32 %v2352, %v2504
      %v2584 = vadd.f32 %v2353, %v2504
      %v2585 = vadd.f32 %v2354, %v2504
      %v2586 = vadd.f32 %v2355, %v2504
      %v2587 = vadd.f32 %v2356, %v2504
      %v2588 = vadd.f32 %v2357, %v2504
      %v2589 = vadd.f32 %v2358, %v2504
      %v2590 = vadd.f32 %v2359, %v2504
      %v2591 = vadd.f32 %v2360, %v2504
      %v2592 = vadd.f32 %v2361, %v2504
      %v2593 = vadd.f32 %v2362, %v2504
      %v2594 = vadd.f32 %v2363, %v2504
      %v2595 = vadd.f32 %v2364, %v2504
      %v2596 = vadd.f32 %v2365, %v2504
      %v2597 = vadd.f32 %v2366, %v2504
      %v2598 = vadd.f32 %v2367, %v2504
      %v2599 = vadd.f32 %v2368, %v2504
      %v2600 = vadd.f32 %v2369, %v2504
      %v2601 = vadd.f32 %v2370, %v2504
      %v2602 = vadd.f32 %v2371, %v2504
      %v2603 = vadd.f32 %v2372, %v2504
      %v2604 = vadd.f32 %v2373, %v2504
      %v2605 = vadd.f32 %v2374, %v2504
      %v2606 = vadd.f32 %v2375, %v2504
      %v2607 = vadd.f32 %v2376, %v2504
      %v2608 = vadd.f32 %v2377, %v2504
      %v2609 = vadd.f32 %v2378, %v2504
      %v2610 = vadd.f32 %v2379, %v2504
      %v2611 = vadd.f32 %v2380, %v2504
      %v2612 = vadd.f32 %v2381, %v2504
      %v2613 = vadd.f32 %v2382, %v2504
      %v2614 = vadd.f32 %v2383, %v2504
      %v2615 = vadd.f32 %v2384, %v2504
      %v2616 = vadd.f32 %v2385, %v2504
      %v2617 = vadd.f32 %v2386, %v2504
      %v2618 = vadd.f32 %v2387, %v2504
      %v2619 = vadd.f32 %v2388, %v2504
      %v2620 = vadd.f32 %v2389, %v2504
      %v2621 = vadd.f32 %v2390, %v2504
      %v2622 = vadd.f32 %v2391, %v2504
      %v2623 = vadd.f32 %v2392, %v2504
      %v2624 = vadd.f32 %v2393, %v2504
      %v2625 = vadd.f32 %v2394, %v2504
      %v2626 = vadd.f32 %v2395, %v2504
      %v2627 = vadd.f32 %v2396, %v2504
      %v2628 = vadd.f32 %v2397, %v2504
      %v2629 = vadd.f32 %v2398, %v2504
      %v2630 = vadd.f32 %v2399, %v2504
      %v2631 = vadd.f32 %v2400, %v2504
      %v2632 = vadd.f32 %v2401, %v2504
      %v2633 = vadd.f32 %v2402, %v2504
      %v2634 = vadd.f32 %v2403, %v2504
      %v2635 = vadd.f32 %v2404, %v2504
      %v2636 = vadd.f32 %v2405, %v2504
      %v2637 = vadd.f32 %v2406, %v2504
      %v2638 = vadd.f32 %v2407, %v2504
      %v2639 = vadd.f32 %v2408, %v2504
      %v2640 = vadd.f32 %v2409, %v2504
      %v2641 = vadd.f32 %v2410, %v2504
      %v2642 = vadd.f32 %v2411, %v2504
      %v2643 = vadd.f32 %v2412, %v2504
      %v2644 = vadd.f32 %v2413, %v2504
      %v2645 = vadd.f32 %v2414, %v2504
      %v2646 = vadd.f32 %v2415, %v2504
      %v2647 = vadd.f32 %v2416, %v2504
      %v2648 = vadd.f32 %v2417, %v2504
      %v2649 = vadd.f32 %v2418, %v2504
      %v2650 = vadd.f32 %v2419, %v2504
      %v2651 = vadd.f32 %v2420, %v2504
      %v2652 = vadd.f32 %v2421, %v2504
      %v2653 = vadd.f32 %v2422, %v2504
      %v2654 = vadd.f32 %v2423, %v2504
      %v2655 = vadd.f32 %v2424, %v2504
      %v2656 = vadd.f32 %v2425, %v2504
      %v2657 = vadd.f32 %v2426, %v2504
      %v2658 = vadd.f32 %v2427, %v2504
      %v2659 = vadd.f32 %v2428, %v2504
      %v2660 = vadd.f32 %v2429, %v2504
      %v2661 = vadd.f32 %v2430, %v2504
      %v2662 = vadd.f32 %v2431, %v2504
      %v2663 = vadd.f32 %v2432, %v2504
      %v2664 = vadd.f32 %v2433, %v2504
      %v2665 = vadd.f32 %v2434, %v2504
      %v2666 = vadd.f32 %v2435, %v2504
      %v2667 = vadd.f32 %v2436, %v2504
      %v2668 = vadd.f32 %v2437, %v2504
      %v2669 = vadd.f32 %v2438, %v2504
      %v2670 = vadd.f32 %v2439, %v2504
      %v2671 = vadd.f32 %v2440, %v2504
      %v2672 = vadd.f32 %v2441, %v2504
      %v2673 = vadd.f32 %v2442, %v2504
      %v2674 = vadd.f32 %v2443, %v2504
      %v2675 = vadd.f32 %v2444, %v2504
      %v2676 = vadd.f32 %v2445, %v2504
      %v2677 = vadd.f32 %v2446, %v2504
      %v2678 = vadd.f32 %v2447, %v2504
      %v2679 = vadd.f32 %v2448, %v2504
      %v2680 = vadd.f32 %v2449, %v2504
      %v2681 = vadd.f32 %v2450, %v2504
      %v2682 = vadd.f32 %v2451, %v2504
      %v2683 = vadd.f32 %v2452, %v2504
      %v2684 = vadd.f32 %v2453, %v2504
      %v2685 = vadd.f32 %v2454, %v2504
      %v2686 = vadd.f32 %v2455, %v2504
      %v2687 = vadd.f32 %v2456, %v2504
      %v2688 = vadd.f32 %v2457, %v2504
      %v2689 = vadd.f32 %v2458, %v2504
      %v2690 = vadd.f32 %v2459, %v2504
      %v2691 = vadd.f32 %v2460, %v2504
      %v2692 = vadd.f32 %v2461, %v2504
      %v2693 = vadd.f32 %v2462, %v2504
      %v2694 = vadd.f32 %v2463, %v2504
      %v2695 = vadd.f32 %v2464, %v2504
      %v2696 = vadd.f32 %v2465, %v2504
      %v2697 = vadd.f32 %v2466, %v2504
      %v2698 = vadd.f32 %v2467, %v2504
      %v2699 = vadd.f32 %v2468, %v2504
      %v2700 = vadd.f32 %v2469, %v2504
      %v2701 = vadd.f32 %v2470, %v2504
      %v2702 = vadd.f32 %v2471, %v2504
      %v2703 = vadd.f32 %v2472, %v2504
      %v2704 = vadd.f32 %v2473, %v2504
      %v2705 = vadd.f32 %v2474, %v2504
      %v2706 = vadd.f32 %v2475, %v2504
      %v2707 = vadd.f32 %v2476, %v2504
      %v2708 = vadd.f32 %v2477, %v2504
      %v2709 = vadd.f32 %v2478, %v2504
      %v2710 = vadd.f32 %v2479, %v2504
      %v2711 = vadd.f32 %v2480, %v2504
      %v2712 = vadd.f32 %v2481, %v2504
      %v2713 = vadd.f32 %v2482, %v2504
      %v2714 = vadd.f32 %v2483, %v2504
      %v2715 = vadd.f32 %v2484, %v2504
      %v2716 = vadd.f32 %v2485, %v2504
      %v2717 = vadd.f32 %v2486, %v2504
      %v2718 = vadd.f32 %v2487, %v2504
      %v2719 = vadd.f32 %v2488, %v2504
      %v2720 = vadd.f32 %v2489, %v2504
      %v2721 = vadd.f32 %v2490, %v2504
      %v2722 = vadd.f32 %v2491, %v2504
      %v2723 = vadd.f32 %v2492, %v2504
      %v2724 = vadd.f32 %v2493, %v2504
      %v2725 = vadd.f32 %v2494, %v2504
      %v2726 = vadd.f32 %v2495, %v2504
      %v2727 = vadd.f32 %v2496, %v2504
      %v2728 = vadd.f32 %v2497, %v2504
      %v2729 = vadd.f32 %v2498, %v2504
      %v2730 = vmax.f32 %v2506, %v2562
      %v2731 = vmax.f32 %v2507, %v2563
      %v2732 = vmax.f32 %v2508, %v2564
      %v2733 = vmax.f32 %v2509, %v2565
      %v2734 = vmax.f32 %v2510, %v2566
      %v2735 = vmax.f32 %v2511, %v2567
      %v2736 = vmax.f32 %v2512, %v2568
      %v2737 = vmax.f32 %v2513, %v2569
      %v2738 = vmax.f32 %v2514, %v2570
      %v2739 = vmax.f32 %v2515, %v2571
      %v2740 = vmax.f32 %v2516, %v2572
      %v2741 = vmax.f32 %v2517, %v2573
      %v2742 = vmax.f32 %v2518, %v2574
      %v2743 = vmax.f32 %v2519, %v2575
      %v2744 = vmax.f32 %v2520, %v2576
      %v2745 = vmax.f32 %v2521, %v2577
      %v2746 = vmax.f32 %v2522, %v2578
      %v2747 = vmax.f32 %v2523, %v2579
      %v2748 = vmax.f32 %v2524, %v2580
      %v2749 = vmax.f32 %v2525, %v2581
      %v2750 = vmax.f32 %v2526, %v2582
      %v2751 = vmax.f32 %v2527, %v2583
      %v2752 = vmax.f32 %v2528, %v2584
      %v2753 = vmax.f32 %v2529, %v2585
      %v2754 = vmax.f32 %v2530, %v2586
      %v2755 = vmax.f32 %v2531, %v2587
      %v2756 = vmax.f32 %v2532, %v2588
      %v2757 = vmax.f32 %v2533, %v2589
      %v2758 = vmax.f32 %v2534, %v2590
      %v2759 = vmax.f32 %v2535, %v2591
      %v2760 = vmax.f32 %v2536, %v2592
      %v2761 = vmax.f32 %v2537, %v2593
      %v2762 = vmax.f32 %v2538, %v2594
      %v2763 = vmax.f32 %v2539, %v2595
      %v2764 = vmax.f32 %v2540, %v2596
      %v2765 = vmax.f32 %v2541, %v2597
      %v2766 = vmax.f32 %v2542, %v2598
      %v2767 = vmax.f32 %v2543, %v2599
      %v2768 = vmax.f32 %v2544, %v2600
      %v2769 = vmax.f32 %v2545, %v2601
      %v2770 = vmax.f32 %v2546, %v2602
      %v2771 = vmax.f32 %v2547, %v2603
      %v2772 = vmax.f32 %v2548, %v2604
      %v2773 = vmax.f32 %v2549, %v2605
      %v2774 = vmax.f32 %v2550, %v2606
      %v2775 = vmax.f32 %v2551, %v2607
      %v2776 = vmax.f32 %v2552, %v2608
      %v2777 = vmax.f32 %v2553, %v2609
      %v2778 = vmax.f32 %v2554, %v2610
      %v2779 = vmax.f32 %v2555, %v2611
      %v2780 = vmax.f32 %v2556, %v2612
      %v2781 = vmax.f32 %v2557, %v2613
      %v2782 = vmax.f32 %v2558, %v2614
      %v2783 = vmax.f32 %v2559, %v2615
      %v2784 = vmax.f32 %v2560, %v2616
      %v2785 = vmax.f32 %v2561, %v2617
      %v2786 = vmax.f32 %v2618, %v2674
      %v2787 = vmax.f32 %v2619, %v2675
      %v2788 = vmax.f32 %v2620, %v2676
      %v2789 = vmax.f32 %v2621, %v2677
      %v2790 = vmax.f32 %v2622, %v2678
      %v2791 = vmax.f32 %v2623, %v2679
      %v2792 = vmax.f32 %v2624, %v2680
      %v2793 = vmax.f32 %v2625, %v2681
      %v2794 = vmax.f32 %v2626, %v2682
      %v2795 = vmax.f32 %v2627, %v2683
      %v2796 = vmax.f32 %v2628, %v2684
      %v2797 = vmax.f32 %v2629, %v2685
      %v2798 = vmax.f32 %v2630, %v2686
      %v2799 = vmax.f32 %v2631, %v2687
      %v2800 = vmax.f32 %v2632, %v2688
      %v2801 = vmax.f32 %v2633, %v2689
      %v2802 = vmax.f32 %v2634, %v2690
      %v2803 = vmax.f32 %v2635, %v2691
      %v2804 = vmax.f32 %v2636, %v2692
      %v2805 = vmax.f32 %v2637, %v2693
      %v2806 = vmax.f32 %v2638, %v2694
      %v2807 = vmax.f32 %v2639, %v2695
      %v2808 = vmax.f32 %v2640, %v2696
      %v2809 = vmax.f32 %v2641, %v2697
      %v2810 = vmax.f32 %v2642, %v2698
      %v2811 = vmax.f32 %v2643, %v2699
      %v2812 = vmax.f32 %v2644, %v2700
      %v2813 = vmax.f32 %v2645, %v2701
      %v2814 = vmax.f32 %v2646, %v2702
      %v2815 = vmax.f32 %v2647, %v2703
      %v2816 = vmax.f32 %v2648, %v2704
      %v2817 = vmax.f32 %v2649, %v2705
      %v2818 = vmax.f32 %v2650, %v2706
      %v2819 = vmax.f32 %v2651, %v2707
      %v2820 = vmax.f32 %v2652, %v2708
      %v2821 = vmax.f32 %v2653, %v2709
      %v2822 = vmax.f32 %v2654, %v2710
      %v2823 = vmax.f32 %v2655, %v2711
      %v2824 = vmax.f32 %v2656, %v2712
      %v2825 = vmax.f32 %v2657, %v2713
      %v2826 = vmax.f32 %v2658, %v2714
      %v2827 = vmax.f32 %v2659, %v2715
      %v2828 = vmax.f32 %v2660, %v2716
      %v2829 = vmax.f32 %v2661, %v2717
      %v2830 = vmax.f32 %v2662, %v2718
      %v2831 = vmax.f32 %v2663, %v2719
      %v2832 = vmax.f32 %v2664, %v2720
      %v2833 = vmax.f32 %v2665, %v2721
      %v2834 = vmax.f32 %v2666, %v2722
      %v2835 = vmax.f32 %v2667, %v2723
      %v2836 = vmax.f32 %v2668, %v2724
      %v2837 = vmax.f32 %v2669, %v2725
      %v2838 = vmax.f32 %v2670, %v2726
      %v2839 = vmax.f32 %v2671, %v2727
      %v2840 = vmax.f32 %v2672, %v2728
      %v2841 = vmax.f32 %v2673, %v2729
      %v2842 = vmax.f32 %v2730, %v2786
      %v2843 = vmax.f32 %v2731, %v2787
      %v2844 = vmax.f32 %v2732, %v2788
      %v2845 = vmax.f32 %v2733, %v2789
      %v2846 = vmax.f32 %v2734, %v2790
      %v2847 = vmax.f32 %v2735, %v2791
      %v2848 = vmax.f32 %v2736, %v2792
      %v2849 = vmax.f32 %v2737, %v2793
      %v2850 = vmax.f32 %v2738, %v2794
      %v2851 = vmax.f32 %v2739, %v2795
      %v2852 = vmax.f32 %v2740, %v2796
      %v2853 = vmax.f32 %v2741, %v2797
      %v2854 = vmax.f32 %v2742, %v2798
      %v2855 = vmax.f32 %v2743, %v2799
      %v2856 = vmax.f32 %v2744, %v2800
      %v2857 = vmax.f32 %v2745, %v2801
      %v2858 = vmax.f32 %v2746, %v2802
      %v2859 = vmax.f32 %v2747, %v2803
      %v2860 = vmax.f32 %v2748, %v2804
      %v2861 = vmax.f32 %v2749, %v2805
      %v2862 = vmax.f32 %v2750, %v2806
      %v2863 = vmax.f32 %v2751, %v2807
      %v2864 = vmax.f32 %v2752, %v2808
      %v2865 = vmax.f32 %v2753, %v2809
      %v2866 = vmax.f32 %v2754, %v2810
      %v2867 = vmax.f32 %v2755, %v2811
      %v2868 = vmax.f32 %v2756, %v2812
      %v2869 = vmax.f32 %v2757, %v2813
      %v2870 = vmax.f32 %v2758, %v2814
      %v2871 = vmax.f32 %v2759, %v2815
      %v2872 = vmax.f32 %v2760, %v2816
      %v2873 = vmax.f32 %v2761, %v2817
      %v2874 = vmax.f32 %v2762, %v2818
      %v2875 = vmax.f32 %v2763, %v2819
      %v2876 = vmax.f32 %v2764, %v2820
      %v2877 = vmax.f32 %v2765, %v2821
      %v2878 = vmax.f32 %v2766, %v2822
      %v2879 = vmax.f32 %v2767, %v2823
      %v2880 = vmax.f32 %v2768, %v2824
      %v2881 = vmax.f32 %v2769, %v2825
      %v2882 = vmax.f32 %v2770, %v2826
      %v2883 = vmax.f32 %v2771, %v2827
      %v2884 = vmax.f32 %v2772, %v2828
      %v2885 = vmax.f32 %v2773, %v2829
      %v2886 = vmax.f32 %v2774, %v2830
      %v2887 = vmax.f32 %v2775, %v2831
      %v2888 = vmax.f32 %v2776, %v2832
      %v2889 = vmax.f32 %v2777, %v2833
      %v2890 = vmax.f32 %v2778, %v2834
      %v2891 = vmax.f32 %v2779, %v2835
      %v2892 = vmax.f32 %v2780, %v2836
      %v2893 = vmax.f32 %v2781, %v2837
      %v2894 = vmax.f32 %v2782, %v2838
      %v2895 = vmax.f32 %v2783, %v2839
      %v2896 = vmax.f32 %v2784, %v2840
      %v2897 = vmax.f32 %v2785, %v2841
      %v2898 = vmax.f32 %v2842, 0.0
      %v2899 = vmax.f32 %v2843, 0.0
      %v2900 = vmax.f32 %v2844, 0.0
      %v2901 = vmax.f32 %v2845, 0.0
      %v2902 = vmax.f32 %v2846, 0.0
      %v2903 = vmax.f32 %v2847, 0.0
      %v2904 = vmax.f32 %v2848, 0.0
      %v2905 = vmax.f32 %v2849, 0.0
      %v2906 = vmax.f32 %v2850, 0.0
      %v2907 = vmax.f32 %v2851, 0.0
      %v2908 = vmax.f32 %v2852, 0.0
      %v2909 = vmax.f32 %v2853, 0.0
      %v2910 = vmax.f32 %v2854, 0.0
      %v2911 = vmax.f32 %v2855, 0.0
      %v2912 = vmax.f32 %v2856, 0.0
      %v2913 = vmax.f32 %v2857, 0.0
      %v2914 = vmax.f32 %v2858, 0.0
      %v2915 = vmax.f32 %v2859, 0.0
      %v2916 = vmax.f32 %v2860, 0.0
      %v2917 = vmax.f32 %v2861, 0.0
      %v2918 = vmax.f32 %v2862, 0.0
      %v2919 = vmax.f32 %v2863, 0.0
      %v2920 = vmax.f32 %v2864, 0.0
      %v2921 = vmax.f32 %v2865, 0.0
      %v2922 = vmax.f32 %v2866, 0.0
      %v2923 = vmax.f32 %v2867, 0.0
      %v2924 = vmax.f32 %v2868, 0.0
      %v2925 = vmax.f32 %v2869, 0.0
      %v2926 = vmax.f32 %v2870, 0.0
      %v2927 = vmax.f32 %v2871, 0.0
      %v2928 = vmax.f32 %v2872, 0.0
      %v2929 = vmax.f32 %v2873, 0.0
      %v2930 = vmax.f32 %v2874, 0.0
      %v2931 = vmax.f32 %v2875, 0.0
      %v2932 = vmax.f32 %v2876, 0.0
      %v2933 = vmax.f32 %v2877, 0.0
      %v2934 = vmax.f32 %v2878, 0.0
      %v2935 = vmax.f32 %v2879, 0.0
      %v2936 = vmax.f32 %v2880, 0.0
      %v2937 = vmax.f32 %v2881, 0.0
      %v2938 = vmax.f32 %v2882, 0.0
      %v2939 = vmax.f32 %v2883, 0.0
      %v2940 = vmax.f32 %v2884, 0.0
      %v2941 = vmax.f32 %v2885, 0.0
      %v2942 = vmax.f32 %v2886, 0.0
      %v2943 = vmax.f32 %v2887, 0.0
      %v2944 = vmax.f32 %v2888, 0.0
      %v2945 = vmax.f32 %v2889, 0.0
      %v2946 = vmax.f32 %v2890, 0.0
      %v2947 = vmax.f32 %v2891, 0.0
      %v2948 = vmax.f32 %v2892, 0.0
      %v2949 = vmax.f32 %v2893, 0.0
      %v2950 = vmax.f32 %v2894, 0.0
      %v2951 = vmax.f32 %v2895, 0.0
      %v2952 = vmax.f32 %v2896, 0.0
      %v2953 = vmax.f32 %v2897, 0.0
      %vm2954 = vcmask 130048
      %2955 = vst.msk [vmem:[%s199] sm:$0xff] %vm2954, %v2898
      %2956 = vst.msk [vmem:[%s199 + $0x8] sm:$0xff] %vm2954, %v2899
      %2957 = vst.msk [vmem:[%s199 + $0x10] sm:$0xff] %vm2954, %v2900
      %2958 = vst.msk [vmem:[%s199 + $0x18] sm:$0xff] %vm2954, %v2901
      %2959 = vst.msk [vmem:[%s199 + $0x20] sm:$0xff] %vm2954, %v2902
      %2960 = vst.msk [vmem:[%s199 + $0x28] sm:$0xff] %vm2954, %v2903
      %2961 = vst.msk [vmem:[%s199 + $0x30] sm:$0xff] %vm2954, %v2904
      %2962 = vst.msk [vmem:[%s199 + $0x38] sm:$0xff] %vm2954, %v2905
      %2963 = vst.msk [vmem:[%s199 + $0x40] sm:$0xff] %vm2954, %v2906
      %2964 = vst.msk [vmem:[%s199 + $0x48] sm:$0xff] %vm2954, %v2907
      %2965 = vst.msk [vmem:[%s199 + $0x50] sm:$0xff] %vm2954, %v2908
      %2966 = vst.msk [vmem:[%s199 + $0x58] sm:$0xff] %vm2954, %v2909
      %2967 = vst.msk [vmem:[%s199 + $0x60] sm:$0xff] %vm2954, %v2910
      %2968 = vst.msk [vmem:[%s199 + $0x68] sm:$0xff] %vm2954, %v2911
      %2969 = vst.msk [vmem:[%s199 + $0x70] sm:$0xff] %vm2954, %v2912
      %2970 = vst.msk [vmem:[%s199 + $0x78] sm:$0xff] %vm2954, %v2913
      %2971 = vst.msk [vmem:[%s199 + $0x80] sm:$0xff] %vm2954, %v2914
      %2972 = vst.msk [vmem:[%s199 + $0x88] sm:$0xff] %vm2954, %v2915
      %2973 = vst.msk [vmem:[%s199 + $0x90] sm:$0xff] %vm2954, %v2916
      %2974 = vst.msk [vmem:[%s199 + $0x98] sm:$0xff] %vm2954, %v2917
      %2975 = vst.msk [vmem:[%s199 + $0xa0] sm:$0xff] %vm2954, %v2918
      %2976 = vst.msk [vmem:[%s199 + $0xa8] sm:$0xff] %vm2954, %v2919
      %2977 = vst.msk [vmem:[%s199 + $0xb0] sm:$0xff] %vm2954, %v2920
      %2978 = vst.msk [vmem:[%s199 + $0xb8] sm:$0xff] %vm2954, %v2921
      %2979 = vst.msk [vmem:[%s199 + $0xc0] sm:$0xff] %vm2954, %v2922
      %2980 = vst.msk [vmem:[%s199 + $0xc8] sm:$0xff] %vm2954, %v2923
      %2981 = vst.msk [vmem:[%s199 + $0xd0] sm:$0xff] %vm2954, %v2924
      %2982 = vst.msk [vmem:[%s199 + $0xd8] sm:$0xff] %vm2954, %v2925
      %2983 = vst.msk [vmem:[%s199 + $0xe0] sm:$0xff] %vm2954, %v2926
      %2984 = vst.msk [vmem:[%s199 + $0xe8] sm:$0xff] %vm2954, %v2927
      %2985 = vst.msk [vmem:[%s199 + $0xf0] sm:$0xff] %vm2954, %v2928
      %2986 = vst.msk [vmem:[%s199 + $0xf8] sm:$0xff] %vm2954, %v2929
      %2987 = vst.msk [vmem:[%s199 + $0x100] sm:$0xff] %vm2954, %v2930
      %2988 = vst.msk [vmem:[%s199 + $0x108] sm:$0xff] %vm2954, %v2931
      %2989 = vst.msk [vmem:[%s199 + $0x110] sm:$0xff] %vm2954, %v2932
      %2990 = vst.msk [vmem:[%s199 + $0x118] sm:$0xff] %vm2954, %v2933
      %2991 = vst.msk [vmem:[%s199 + $0x120] sm:$0xff] %vm2954, %v2934
      %2992 = vst.msk [vmem:[%s199 + $0x128] sm:$0xff] %vm2954, %v2935
      %2993 = vst.msk [vmem:[%s199 + $0x130] sm:$0xff] %vm2954, %v2936
      %2994 = vst.msk [vmem:[%s199 + $0x138] sm:$0xff] %vm2954, %v2937
      %2995 = vst.msk [vmem:[%s199 + $0x140] sm:$0xff] %vm2954, %v2938
      %2996 = vst.msk [vmem:[%s199 + $0x148] sm:$0xff] %vm2954, %v2939
      %2997 = vst.msk [vmem:[%s199 + $0x150] sm:$0xff] %vm2954, %v2940
      %2998 = vst.msk [vmem:[%s199 + $0x158] sm:$0xff] %vm2954, %v2941
      %2999 = vst.msk [vmem:[%s199 + $0x160] sm:$0xff] %vm2954, %v2942
      %3000 = vst.msk [vmem:[%s199 + $0x168] sm:$0xff] %vm2954, %v2943
      %3001 = vst.msk [vmem:[%s199 + $0x170] sm:$0xff] %vm2954, %v2944
      %3002 = vst.msk [vmem:[%s199 + $0x178] sm:$0xff] %vm2954, %v2945
      %3003 = vst.msk [vmem:[%s199 + $0x180] sm:$0xff] %vm2954, %v2946
      %3004 = vst.msk [vmem:[%s199 + $0x188] sm:$0xff] %vm2954, %v2947
      %3005 = vst.msk [vmem:[%s199 + $0x190] sm:$0xff] %vm2954, %v2948
      %3006 = vst.msk [vmem:[%s199 + $0x198] sm:$0xff] %vm2954, %v2949
      %3007 = vst.msk [vmem:[%s199 + $0x1a0] sm:$0xff] %vm2954, %v2950
      %3008 = vst.msk [vmem:[%s199 + $0x1a8] sm:$0xff] %vm2954, %v2951
      %3009 = vst.msk [vmem:[%s199 + $0x1b0] sm:$0xff] %vm2954, %v2952
      %3010 = vst.msk [vmem:[%s199 + $0x1b8] sm:$0xff] %vm2954, %v2953
      %s3011 = smul.u32 56, %s15
      %p3012 = scmp.lt.s32.totalorder %s3011, 391
      %s3013 = scalar_select %p3012, %s3011, 391
      %s3014 = smul.addr %s3013, 8
      %s3015 = scalar_lea.vmem %s4, %s3014
      // Predicated region
      $region37: #{cnn_mnist_forward.3} parent=35 // pred_check
        %p3016 = pneg %p122
      $region38: #{cnn_mnist_forward.3} parent=35 // pred_check_branch
        %3018 = sbr.rel (%p3016) target = $region40
      $region39: #{cnn_mnist_forward.3} parent=35 // pred_region
        %s3019 = smul.u32 56, %s15
      $region40: #{cnn_mnist_forward.3} parent=35 // pred_fallthru
        _
    $region36: #{cnn_mnist_forward.3} parent=5 // pred_fallthru
      _
    %p3020 = scmp.le.s32.totalorder 2, %s10
    // Predicated region
    $region41: #{cnn_mnist_forward.3} parent=5 // pred_check
      %p3021 = pneg %p3020
    $region42: #{cnn_mnist_forward.3} parent=5 // pred_check_branch
      %3023 = sbr.rel (%p3021) target = $region44
    $region43: #{cnn_mnist_forward.3} parent=5 // pred_region
      %s3024 = ssub.s32 %s10, 2
      // Predicated region
      $region45: #{cnn_mnist_forward.3} parent=43 // pred_check
        %p3025 = pneg %p128
      $region46: #{cnn_mnist_forward.3} parent=43 // pred_check_branch
        %3027 = sbr.rel (%p3025) target = $region48
      $region47: #{cnn_mnist_forward.3} parent=43 // pred_region
        %s3028 = smul.u32 56, %s16
        %p3029 = scmp.lt.s32.totalorder %s3028, 391
        %s3030 = scalar_select %p3029, %s3028, 391
        %s3031 = smul.addr %s3030, 8
        %s3032 = scalar_lea.vmem %s4, %s3031
      $region48: #{cnn_mnist_forward.3} parent=43 // pred_fallthru
        _
    $region44: #{cnn_mnist_forward.3} parent=5 // pred_fallthru
      _
  $region6: #{cnn_mnist_forward.3} parent=0 // loop_footer
    %s14 = sadd.s32 1, %s10
  $region7: #{cnn_mnist_forward.3} parent=0 // loop_footer_branch
    %9 = sbr.rel target = $region3
  $region8: #{cnn_mnist_forward.3} parent=0 // loop_exit
    _

// kernel: cnn_mnist_forward.4
$region0: #{cnn_mnist_forward.4}
  #allocation0 [shape = 'u32[]', space=smem, size = 0x4, offset = 0x4, fixed_abs, tag = 'smem constant byte address 0x4 - core index']
  #allocation1 [shape = 'u32[144,128]{1,0:T(1,128)}', space=vmem, size = 0x12000, scoped, tag = 'internal scratch']
  %s0 = inlined_call_operand.vmem [shape: bf16[3136,400], index: 0, kind: input, shape index: {}]
  %s1 = inlined_call_operand.vmem [shape: bf16[400,32], index: 1, kind: input, shape index: {}]
  %s2 = inlined_call_operand.vmem [shape: f32[1,32], index: 2, kind: input, shape index: {}]
  %s3 = inlined_call_operand.vmem [shape: f32[1,32], index: 3, kind: input, shape index: {}]
  %s4 = inlined_call_operand.vmem [shape: f32[784,32], index: 4, kind: output, shape index: {}]
  %s5 = sld [smem:[#allocation0]]
  $region49: #{cnn_mnist_forward.4} parent=0
    _
  %s7 = ssub.s32 1, %s5
  %s8 = scalar_select 0, %s7, %s5
  loop: start=0, step=1, limit=4
  $region2: #{cnn_mnist_forward.4} parent=0 // loop_pre_header
    _
  $region3: #{cnn_mnist_forward.4} parent=0 // loop_header
    %s10 = sphi 0, %s14
    %p11 = scmp.ge.s32.totalorder %s10, 4
    %s20 = sphi 0, %s22
    %s23 = sphi 0, %s20
    %s24 = sphi 0, %s23
    %s40 = sphi 0, %s24
    %s44 = sphi 0, %s44
    %s46 = sphi 0, %s44
    %s47 = sphi 0, %s46
    %s61 = sphi 0, %s47
    %s65 = sphi 0, %s65
    %s67 = sphi 0, %s65
    %s68 = sphi 0, %s67
    %s82 = sphi 0, %s68
    %s86 = sphi 0, %s86
    %s88 = sphi 0, %s86
    %s89 = sphi 0, %s88
    %s103 = sphi 0, %s89
    %s109 = sphi 0, %s111
    %s112 = sphi 0, %s109
    %s113 = sphi 0, %s112
    %s129 = sphi 0, %s113
  $region4: #{cnn_mnist_forward.4} parent=0 // loop_header_branch
    %13 = sbr.rel (%p11) target = $region8
  $region5: #{cnn_mnist_forward.4} parent=0 // loop_body
    %s15 = ssub.s32 %s10, 1
    %s16 = ssub.s32 %s10, 2
    %s17 = sadd.s32 %s10, 1
    %s18 = ssub.s32 %s10, %s17
    %p19 = scmp.eq.s32.totalorder %s18, 0
    %s21 = sadd.s32 %s20, 1
    %s22 = scalar_select %p19, %s20, %s21
    %p25 = pneg %p19
    %p26 = scmp.eq.s32.totalorder %s10, 1
    %p27 = por %p25, %p26
    %p28 = scmp.ne.s32.totalorder %s20, %s23
    %p29 = scmp.eq.s32.totalorder %s10, 0
    %p30 = por %p28, %p29
    %p31 = scmp.ne.s32.totalorder %s20, %s23
    %p32 = scmp.eq.s32.totalorder %s15, 1
    %p33 = por %p31, %p32
    %p34 = scmp.ne.s32.totalorder %s23, %s24
    %p35 = scmp.eq.s32.totalorder %s15, 0
    %p36 = por %p34, %p35
    %p37 = scmp.ne.s32.totalorder %s23, %s24
    %p38 = scmp.eq.s32.totalorder %s16, 1
    %p39 = por %p37, %p38
    %p41 = scmp.ne.s32.totalorder %s24, %s40
    %p42 = scmp.eq.s32.totalorder %s16, 0
    %p43 = por %p41, %p42
    %s45 = sadd.s32 %s44, 1
    %p48 = scmp.eq.s32.totalorder %s10, 1
    %p49 = scmp.ne.s32.totalorder %s44, %s46
    %p50 = scmp.eq.s32.totalorder %s10, 0
    %p51 = por %p49, %p50
    %p52 = scmp.ne.s32.totalorder %s44, %s46
    %p53 = scmp.eq.s32.totalorder %s15, 1
    %p54 = por %p52, %p53
    %p55 = scmp.ne.s32.totalorder %s46, %s47
    %p56 = scmp.eq.s32.totalorder %s15, 0
    %p57 = por %p55, %p56
    %p58 = scmp.ne.s32.totalorder %s46, %s47
    %p59 = scmp.eq.s32.totalorder %s16, 1
    %p60 = por %p58, %p59
    %p62 = scmp.ne.s32.totalorder %s47, %s61
    %p63 = scmp.eq.s32.totalorder %s16, 0
    %p64 = por %p62, %p63
    %s66 = sadd.s32 %s65, 1
    %p69 = scmp.eq.s32.totalorder %s10, 1
    %p70 = scmp.ne.s32.totalorder %s65, %s67
    %p71 = scmp.eq.s32.totalorder %s10, 0
    %p72 = por %p70, %p71
    %p73 = scmp.ne.s32.totalorder %s65, %s67
    %p74 = scmp.eq.s32.totalorder %s15, 1
    %p75 = por %p73, %p74
    %p76 = scmp.ne.s32.totalorder %s67, %s68
    %p77 = scmp.eq.s32.totalorder %s15, 0
    %p78 = por %p76, %p77
    %p79 = scmp.ne.s32.totalorder %s67, %s68
    %p80 = scmp.eq.s32.totalorder %s16, 1
    %p81 = por %p79, %p80
    %p83 = scmp.ne.s32.totalorder %s68, %s82
    %p84 = scmp.eq.s32.totalorder %s16, 0
    %p85 = por %p83, %p84
    %s87 = sadd.s32 %s86, 1
    %p90 = scmp.eq.s32.totalorder %s10, 1
    %p91 = scmp.ne.s32.totalorder %s86, %s88
    %p92 = scmp.eq.s32.totalorder %s10, 0
    %p93 = por %p91, %p92
    %p94 = scmp.ne.s32.totalorder %s86, %s88
    %p95 = scmp.eq.s32.totalorder %s15, 1
    %p96 = por %p94, %p95
    %p97 = scmp.ne.s32.totalorder %s88, %s89
    %p98 = scmp.eq.s32.totalorder %s15, 0
    %p99 = por %p97, %p98
    %p100 = scmp.ne.s32.totalorder %s88, %s89
    %p101 = scmp.eq.s32.totalorder %s16, 1
    %p102 = por %p100, %p101
    %p104 = scmp.ne.s32.totalorder %s89, %s103
    %p105 = scmp.eq.s32.totalorder %s16, 0
    %p106 = por %p104, %p105
    %s107 = ssub.s32 %s10, %s17
    %p108 = scmp.eq.s32.totalorder %s107, 0
    %s110 = sadd.s32 %s109, 1
    %s111 = scalar_select %p108, %s109, %s110
    %p114 = pneg %p108
    %p115 = scmp.eq.s32.totalorder %s10, 1
    %p116 = por %p114, %p115
    %p117 = scmp.ne.s32.totalorder %s109, %s112
    %p118 = scmp.eq.s32.totalorder %s10, 0
    %p119 = por %p117, %p118
    %p120 = scmp.ne.s32.totalorder %s109, %s112
    %p121 = scmp.eq.s32.totalorder %s15, 1
    %p122 = por %p120, %p121
    %p123 = scmp.ne.s32.totalorder %s112, %s113
    %p124 = scmp.eq.s32.totalorder %s15, 0
    %p125 = por %p123, %p124
    %p126 = scmp.ne.s32.totalorder %s112, %s113
    %p127 = scmp.eq.s32.totalorder %s16, 1
    %p128 = por %p126, %p127
    %p130 = scmp.ne.s32.totalorder %s113, %s129
    %p131 = scmp.eq.s32.totalorder %s16, 0
    %p132 = por %p130, %p131
    %p133 = scmp.le.s32.totalorder 1, %s10
    %p134 = scmp.lt.s32.totalorder %s10, 3
    %p135 = pnand %p133, %p134
    %p136 = pneg %p135
    // Predicated region
    $region9: #{cnn_mnist_forward.4} parent=5 // pred_check
      _
    $region10: #{cnn_mnist_forward.4} parent=5 // pred_check_branch
      %138 = sbr.rel (%p135) target = $region12
    $region11: #{cnn_mnist_forward.4} parent=5 // pred_region
      %s139 = ssub.s32 %s10, 1
      // Predicated region
      $region13: #{cnn_mnist_forward.4} parent=11 // pred_check
        %p140 = pneg %p57
      $region14: #{cnn_mnist_forward.4} parent=11 // pred_check_branch
        %142 = sbr.rel (%p140) target = $region16
      $region15: #{cnn_mnist_forward.4} parent=11 // pred_region
        _
      $region16: #{cnn_mnist_forward.4} parent=11 // pred_fallthru
        _
      // Predicated region
      $region17: #{cnn_mnist_forward.4} parent=11 // pred_check
        %p143 = pneg %p78
      $region18: #{cnn_mnist_forward.4} parent=11 // pred_check_branch
        %145 = sbr.rel (%p143) target = $region20
      $region19: #{cnn_mnist_forward.4} parent=11 // pred_region
        _
      $region20: #{cnn_mnist_forward.4} parent=11 // pred_fallthru
        _
      // Predicated region
      $region21: #{cnn_mnist_forward.4} parent=11 // pred_check
        %p146 = pneg %p99
      $region22: #{cnn_mnist_forward.4} parent=11 // pred_check_branch
        %148 = sbr.rel (%p146) target = $region24
      $region23: #{cnn_mnist_forward.4} parent=11 // pred_region
        _
      $region24: #{cnn_mnist_forward.4} parent=11 // pred_fallthru
        _
    $region12: #{cnn_mnist_forward.4} parent=5 // pred_fallthru
      _
    %p149 = scmp.lt.s32.totalorder %s10, 2
    // Predicated region
    $region25: #{cnn_mnist_forward.4} parent=5 // pred_check
      %p150 = pneg %p149
    $region26: #{cnn_mnist_forward.4} parent=5 // pred_check_branch
      %152 = sbr.rel (%p150) target = $region28
    $region27: #{cnn_mnist_forward.4} parent=5 // pred_region
      // Predicated region
      $region29: #{cnn_mnist_forward.4} parent=27 // pred_check
        %p153 = pneg %p30
      $region30: #{cnn_mnist_forward.4} parent=27 // pred_check_branch
        %155 = sbr.rel (%p153) target = $region32
      $region31: #{cnn_mnist_forward.4} parent=27 // pred_region
        %s156 = smul.u32 196, %s10
        %p157 = scmp.lt.s32.totalorder %s156, 391
        %s158 = scalar_select %p157, %s156, 391
        %s159 = smul.addr %s158, 4
        %s160 = smul.addr %s159, 4
        %s161 = scalar_lea.vmem %s0, %s160
        %s162 = smul.u32 196, %s10
      $region32: #{cnn_mnist_forward.4} parent=27 // pred_fallthru
        _
    $region28: #{cnn_mnist_forward.4} parent=5 // pred_fallthru
      _
    %p163 = scmp.le.s32.totalorder 1, %s10
    %p164 = scmp.lt.s32.totalorder %s10, 3
    %p165 = pnand %p163, %p164
    %p166 = pneg %p165
    // Predicated region
    $region33: #{cnn_mnist_forward.4} parent=5 // pred_check
      _
    $region34: #{cnn_mnist_forward.4} parent=5 // pred_check_branch
      %168 = sbr.rel (%p165) target = $region36
    $region35: #{cnn_mnist_forward.4} parent=5 // pred_region
      %s169 = ssub.s32 %s10, 1
      %s170 = smul.u32 196, %s15
      %p171 = scmp.lt.s32.totalorder %s170, 391
      %s172 = scalar_select %p171, %s170, 391
      %s173 = smul.addr %s172, 4
      %s174 = smul.addr %s173, 4
      %s175 = scalar_lea.vmem %s0, %s174
      %p176 = pneg %p36
      %p177 = pneg %p33
      %p178 = pneg %p57
      %p179 = pneg %p54
      %p180 = pneg %p78
      %p181 = pneg %p75
      %p182 = pneg %p99
      %p183 = pneg %p96
      %p184 = pneg %p125
      %p185 = pneg %p122
      %s186 = smul.u32 49, %s15
      %p187 = scmp.lt.s32.totalorder %s186, 97
      %s188 = scalar_select %p187, %s186, 97
      %s189 = smul.addr %s188, 8
      %s190 = scalar_lea.vmem %s4, %s189
      %s191 = smul.u32 196, %s15
      %p192 = scmp.lt.s32.totalorder %s191, 391
      %s193 = scalar_select %p192, %s191, 391
      %s194 = smul.addr %s193, 4
      %s195 = smul.addr %s194, 4
      %s196 = scalar_lea.vmem %s0, %s195
      %s197 = smul.u32 196, %s15
      %s198 = smul.u32 49, %s15
      %p199 = scmp.lt.s32.totalorder %s198, 97
      %s200 = scalar_select %p199, %s198, 97
      %s201 = smul.addr %s200, 8
      %s202 = scalar_lea.vmem %s4, %s201
      %s203 = smul.u32 49, %s15
      %v205 = vld [vmem:[%s196] sm:$0xff]
      %v206 = vld [vmem:[%s196 + $0x8] sm:$0xff]
      %v207 = vld [vmem:[%s196 + $0x10] sm:$0xff]
      %v208 = vld [vmem:[%s196 + $0x18] sm:$0xff]
      %v209 = vld [vmem:[%s196 + $0x20] sm:$0xff]
      %v210 = vld [vmem:[%s196 + $0x28] sm:$0xff]
      %v211 = vld [vmem:[%s196 + $0x30] sm:$0xff]
      %v212 = vld [vmem:[%s196 + $0x38] sm:$0xff]
      %v213 = vld [vmem:[%s196 + $0x40] sm:$0xff]
      %v214 = vld [vmem:[%s196 + $0x48] sm:$0xff]
      %v215 = vld [vmem:[%s196 + $0x50] sm:$0xff]
      %v216 = vld [vmem:[%s196 + $0x58] sm:$0xff]
      %v217 = vld [vmem:[%s196 + $0x60] sm:$0xff]
      %v218 = vld [vmem:[%s196 + $0x68] sm:$0xff]
      %v219 = vld [vmem:[%s196 + $0x70] sm:$0xff]
      %v220 = vld [vmem:[%s196 + $0x78] sm:$0xff]
      %v221 = vld [vmem:[%s196 + $0x80] sm:$0xff]
      %v222 = vld [vmem:[%s196 + $0x88] sm:$0xff]
      %v223 = vld [vmem:[%s196 + $0x90] sm:$0xff]
      %v224 = vld [vmem:[%s196 + $0x98] sm:$0xff]
      %v225 = vld [vmem:[%s196 + $0xa0] sm:$0xff]
      %v226 = vld [vmem:[%s196 + $0xa8] sm:$0xff]
      %v227 = vld [vmem:[%s196 + $0xb0] sm:$0xff]
      %v228 = vld [vmem:[%s196 + $0xb8] sm:$0xff]
      %v229 = vld [vmem:[%s196 + $0xc0] sm:$0xff]
      %v230 = vld [vmem:[%s196 + $0xc8] sm:$0xff]
      %v231 = vld [vmem:[%s196 + $0xd0] sm:$0xff]
      %v232 = vld [vmem:[%s196 + $0xd8] sm:$0xff]
      %v233 = vld [vmem:[%s196 + $0xe0] sm:$0xff]
      %v234 = vld [vmem:[%s196 + $0xe8] sm:$0xff]
      %v235 = vld [vmem:[%s196 + $0xf0] sm:$0xff]
      %v236 = vld [vmem:[%s196 + $0xf8] sm:$0xff]
      %v237 = vld [vmem:[%s196 + $0x100] sm:$0xff]
      %v238 = vld [vmem:[%s196 + $0x108] sm:$0xff]
      %v239 = vld [vmem:[%s196 + $0x110] sm:$0xff]
      %v240 = vld [vmem:[%s196 + $0x118] sm:$0xff]
      %v241 = vld [vmem:[%s196 + $0x120] sm:$0xff]
      %v242 = vld [vmem:[%s196 + $0x128] sm:$0xff]
      %v243 = vld [vmem:[%s196 + $0x130] sm:$0xff]
      %v244 = vld [vmem:[%s196 + $0x138] sm:$0xff]
      %v245 = vld [vmem:[%s196 + $0x140] sm:$0xff]
      %v246 = vld [vmem:[%s196 + $0x148] sm:$0xff]
      %v247 = vld [vmem:[%s196 + $0x150] sm:$0xff]
      %v248 = vld [vmem:[%s196 + $0x158] sm:$0xff]
      %v249 = vld [vmem:[%s196 + $0x160] sm:$0xff]
      %v250 = vld [vmem:[%s196 + $0x168] sm:$0xff]
      %v251 = vld [vmem:[%s196 + $0x170] sm:$0xff]
      %v252 = vld [vmem:[%s196 + $0x178] sm:$0xff]
      %v253 = vld [vmem:[%s196 + $0x180] sm:$0xff]
      %v254 = vld [vmem:[%s196 + $0x188] sm:$0xff]
      %v255 = vld [vmem:[%s196 + $0x190] sm:$0xff]
      %v256 = vld [vmem:[%s196 + $0x198] sm:$0xff]
      %v257 = vld [vmem:[%s196 + $0x1a0] sm:$0xff]
      %v258 = vld [vmem:[%s196 + $0x1a8] sm:$0xff]
      %v259 = vld [vmem:[%s196 + $0x1b0] sm:$0xff]
      %v260 = vld [vmem:[%s196 + $0x1b8] sm:$0xff]
      %v261 = vld [vmem:[%s196 + $0x1c0] sm:$0xff]
      %v262 = vld [vmem:[%s196 + $0x1c8] sm:$0xff]
      %v263 = vld [vmem:[%s196 + $0x1d0] sm:$0xff]
      %v264 = vld [vmem:[%s196 + $0x1d8] sm:$0xff]
      %v265 = vld [vmem:[%s196 + $0x1e0] sm:$0xff]
      %v266 = vld [vmem:[%s196 + $0x1e8] sm:$0xff]
      %v267 = vld [vmem:[%s196 + $0x1f0] sm:$0xff]
      %v268 = vld [vmem:[%s196 + $0x1f8] sm:$0xff]
      %v269 = vld [vmem:[%s196 + $0x200] sm:$0xff]
      %v270 = vld [vmem:[%s196 + $0x208] sm:$0xff]
      %v271 = vld [vmem:[%s196 + $0x210] sm:$0xff]
      %v272 = vld [vmem:[%s196 + $0x218] sm:$0xff]
      %v273 = vld [vmem:[%s196 + $0x220] sm:$0xff]
      %v274 = vld [vmem:[%s196 + $0x228] sm:$0xff]
      %v275 = vld [vmem:[%s196 + $0x230] sm:$0xff]
      %v276 = vld [vmem:[%s196 + $0x238] sm:$0xff]
      %v277 = vld [vmem:[%s196 + $0x240] sm:$0xff]
      %v278 = vld [vmem:[%s196 + $0x248] sm:$0xff]
      %v279 = vld [vmem:[%s196 + $0x250] sm:$0xff]
      %v280 = vld [vmem:[%s196 + $0x258] sm:$0xff]
      %v281 = vld [vmem:[%s196 + $0x260] sm:$0xff]
      %v282 = vld [vmem:[%s196 + $0x268] sm:$0xff]
      %v283 = vld [vmem:[%s196 + $0x270] sm:$0xff]
      %v284 = vld [vmem:[%s196 + $0x278] sm:$0xff]
      %v285 = vld [vmem:[%s196 + $0x280] sm:$0xff]
      %v286 = vld [vmem:[%s196 + $0x288] sm:$0xff]
      %v287 = vld [vmem:[%s196 + $0x290] sm:$0xff]
      %v288 = vld [vmem:[%s196 + $0x298] sm:$0xff]
      %v289 = vld [vmem:[%s196 + $0x2a0] sm:$0xff]
      %v290 = vld [vmem:[%s196 + $0x2a8] sm:$0xff]
      %v291 = vld [vmem:[%s196 + $0x2b0] sm:$0xff]
      %v292 = vld [vmem:[%s196 + $0x2b8] sm:$0xff]
      %v293 = vld [vmem:[%s196 + $0x2c0] sm:$0xff]
      %v294 = vld [vmem:[%s196 + $0x2c8] sm:$0xff]
      %v295 = vld [vmem:[%s196 + $0x2d0] sm:$0xff]
      %v296 = vld [vmem:[%s196 + $0x2d8] sm:$0xff]
      %v297 = vld [vmem:[%s196 + $0x2e0] sm:$0xff]
      %v298 = vld [vmem:[%s196 + $0x2e8] sm:$0xff]
      %v299 = vld [vmem:[%s196 + $0x2f0] sm:$0xff]
      %v300 = vld [vmem:[%s196 + $0x2f8] sm:$0xff]
      %v301 = vld [vmem:[%s196 + $0x300] sm:$0xff]
      %v302 = vld [vmem:[%s196 + $0x308] sm:$0xff]
      %v303 = vld [vmem:[%s196 + $0x310] sm:$0xff]
      %v304 = vld [vmem:[%s196 + $0x318] sm:$0xff]
      %v305 = vld [vmem:[%s196 + $0x320] sm:$0xff]
      %v306 = vld [vmem:[%s196 + $0x328] sm:$0xff]
      %v307 = vld [vmem:[%s196 + $0x330] sm:$0xff]
      %v308 = vld [vmem:[%s196 + $0x338] sm:$0xff]
      %v309 = vld [vmem:[%s196 + $0x340] sm:$0xff]
      %v310 = vld [vmem:[%s196 + $0x348] sm:$0xff]
      %v311 = vld [vmem:[%s196 + $0x350] sm:$0xff]
      %v312 = vld [vmem:[%s196 + $0x358] sm:$0xff]
      %v313 = vld [vmem:[%s196 + $0x360] sm:$0xff]
      %v314 = vld [vmem:[%s196 + $0x368] sm:$0xff]
      %v315 = vld [vmem:[%s196 + $0x370] sm:$0xff]
      %v316 = vld [vmem:[%s196 + $0x378] sm:$0xff]
      %v317 = vld [vmem:[%s196 + $0x380] sm:$0xff]
      %v318 = vld [vmem:[%s196 + $0x388] sm:$0xff]
      %v319 = vld [vmem:[%s196 + $0x390] sm:$0xff]
      %v320 = vld [vmem:[%s196 + $0x398] sm:$0xff]
      %v321 = vld [vmem:[%s196 + $0x3a0] sm:$0xff]
      %v322 = vld [vmem:[%s196 + $0x3a8] sm:$0xff]
      %v323 = vld [vmem:[%s196 + $0x3b0] sm:$0xff]
      %v324 = vld [vmem:[%s196 + $0x3b8] sm:$0xff]
      %v325 = vld [vmem:[%s196 + $0x3c0] sm:$0xff]
      %v326 = vld [vmem:[%s196 + $0x3c8] sm:$0xff]
      %v327 = vld [vmem:[%s196 + $0x3d0] sm:$0xff]
      %v328 = vld [vmem:[%s196 + $0x3d8] sm:$0xff]
      %v329 = vld [vmem:[%s196 + $0x3e0] sm:$0xff]
      %v330 = vld [vmem:[%s196 + $0x3e8] sm:$0xff]
      %v331 = vld [vmem:[%s196 + $0x3f0] sm:$0xff]
      %v332 = vld [vmem:[%s196 + $0x3f8] sm:$0xff]
      %v333 = vld [vmem:[%s196 + $0x400] sm:$0xff]
      %v334 = vld [vmem:[%s196 + $0x408] sm:$0xff]
      %v335 = vld [vmem:[%s196 + $0x410] sm:$0xff]
      %v336 = vld [vmem:[%s196 + $0x418] sm:$0xff]
      %v337 = vld [vmem:[%s196 + $0x420] sm:$0xff]
      %v338 = vld [vmem:[%s196 + $0x428] sm:$0xff]
      %v339 = vld [vmem:[%s196 + $0x430] sm:$0xff]
      %v340 = vld [vmem:[%s196 + $0x438] sm:$0xff]
      %v341 = vld [vmem:[%s196 + $0x440] sm:$0xff]
      %v342 = vld [vmem:[%s196 + $0x448] sm:$0xff]
      %v343 = vld [vmem:[%s196 + $0x450] sm:$0xff]
      %v344 = vld [vmem:[%s196 + $0x458] sm:$0xff]
      %v345 = vld [vmem:[%s196 + $0x460] sm:$0xff]
      %v346 = vld [vmem:[%s196 + $0x468] sm:$0xff]
      %v347 = vld [vmem:[%s196 + $0x470] sm:$0xff]
      %v348 = vld [vmem:[%s196 + $0x478] sm:$0xff]
      %v349 = vld [vmem:[%s196 + $0x480] sm:$0xff]
      %v350 = vld [vmem:[%s196 + $0x488] sm:$0xff]
      %v351 = vld [vmem:[%s196 + $0x490] sm:$0xff]
      %v352 = vld [vmem:[%s196 + $0x498] sm:$0xff]
      %v353 = vld [vmem:[%s196 + $0x4a0] sm:$0xff]
      %v354 = vld [vmem:[%s196 + $0x4a8] sm:$0xff]
      %v355 = vld [vmem:[%s196 + $0x4b0] sm:$0xff]
      %v356 = vld [vmem:[%s196 + $0x4b8] sm:$0xff]
      %v357 = vld [vmem:[%s196 + $0x4c0] sm:$0xff]
      %v358 = vld [vmem:[%s196 + $0x4c8] sm:$0xff]
      %v359 = vld [vmem:[%s196 + $0x4d0] sm:$0xff]
      %v360 = vld [vmem:[%s196 + $0x4d8] sm:$0xff]
      %v361 = vld [vmem:[%s196 + $0x4e0] sm:$0xff]
      %v362 = vld [vmem:[%s196 + $0x4e8] sm:$0xff]
      %v363 = vld [vmem:[%s196 + $0x4f0] sm:$0xff]
      %v364 = vld [vmem:[%s196 + $0x4f8] sm:$0xff]
      %v365 = vld [vmem:[%s196 + $0x500] sm:$0xff]
      %v366 = vld [vmem:[%s196 + $0x508] sm:$0xff]
      %v367 = vld [vmem:[%s196 + $0x510] sm:$0xff]
      %v368 = vld [vmem:[%s196 + $0x518] sm:$0xff]
      %v369 = vld [vmem:[%s196 + $0x520] sm:$0xff]
      %v370 = vld [vmem:[%s196 + $0x528] sm:$0xff]
      %v371 = vld [vmem:[%s196 + $0x530] sm:$0xff]
      %v372 = vld [vmem:[%s196 + $0x538] sm:$0xff]
      %v373 = vld [vmem:[%s196 + $0x540] sm:$0xff]
      %v374 = vld [vmem:[%s196 + $0x548] sm:$0xff]
      %v375 = vld [vmem:[%s196 + $0x550] sm:$0xff]
      %v376 = vld [vmem:[%s196 + $0x558] sm:$0xff]
      %v377 = vld [vmem:[%s196 + $0x560] sm:$0xff]
      %v378 = vld [vmem:[%s196 + $0x568] sm:$0xff]
      %v379 = vld [vmem:[%s196 + $0x570] sm:$0xff]
      %v380 = vld [vmem:[%s196 + $0x578] sm:$0xff]
      %v381 = vld [vmem:[%s196 + $0x580] sm:$0xff]
      %v382 = vld [vmem:[%s196 + $0x588] sm:$0xff]
      %v383 = vld [vmem:[%s196 + $0x590] sm:$0xff]
      %v384 = vld [vmem:[%s196 + $0x598] sm:$0xff]
      %v385 = vld [vmem:[%s196 + $0x5a0] sm:$0xff]
      %v386 = vld [vmem:[%s196 + $0x5a8] sm:$0xff]
      %v387 = vld [vmem:[%s196 + $0x5b0] sm:$0xff]
      %v388 = vld [vmem:[%s196 + $0x5b8] sm:$0xff]
      %v389 = vld [vmem:[%s196 + $0x5c0] sm:$0xff]
      %v390 = vld [vmem:[%s196 + $0x5c8] sm:$0xff]
      %v391 = vld [vmem:[%s196 + $0x5d0] sm:$0xff]
      %v392 = vld [vmem:[%s196 + $0x5d8] sm:$0xff]
      %v393 = vld [vmem:[%s196 + $0x5e0] sm:$0xff]
      %v394 = vld [vmem:[%s196 + $0x5e8] sm:$0xff]
      %v395 = vld [vmem:[%s196 + $0x5f0] sm:$0xff]
      %v396 = vld [vmem:[%s196 + $0x5f8] sm:$0xff]
      %v397 = vld [vmem:[%s196 + $0x600] sm:$0xff]
      %v398 = vld [vmem:[%s196 + $0x608] sm:$0xff]
      %v399 = vld [vmem:[%s196 + $0x610] sm:$0xff]
      %v400 = vld [vmem:[%s196 + $0x618] sm:$0xff]
      %v401 = vld [vmem:[%s196 + $0x620] sm:$0xff]
      %v402 = vld [vmem:[%s196 + $0x628] sm:$0xff]
      %v403 = vld [vmem:[%s196 + $0x630] sm:$0xff]
      %v404 = vld [vmem:[%s196 + $0x638] sm:$0xff]
      %v405 = vld [vmem:[%s196 + $0x640] sm:$0xff]
      %v406 = vld [vmem:[%s196 + $0x648] sm:$0xff]
      %v407 = vld [vmem:[%s196 + $0x650] sm:$0xff]
      %v408 = vld [vmem:[%s196 + $0x658] sm:$0xff]
      %v409 = vld [vmem:[%s196 + $0x660] sm:$0xff]
      %v410 = vld [vmem:[%s196 + $0x668] sm:$0xff]
      %v411 = vld [vmem:[%s196 + $0x670] sm:$0xff]
      %v412 = vld [vmem:[%s196 + $0x678] sm:$0xff]
      %v413 = vld [vmem:[%s196 + $0x680] sm:$0xff]
      %v414 = vld [vmem:[%s196 + $0x688] sm:$0xff]
      %v415 = vld [vmem:[%s196 + $0x690] sm:$0xff]
      %v416 = vld [vmem:[%s196 + $0x698] sm:$0xff]
      %v417 = vld [vmem:[%s196 + $0x6a0] sm:$0xff]
      %v418 = vld [vmem:[%s196 + $0x6a8] sm:$0xff]
      %v419 = vld [vmem:[%s196 + $0x6b0] sm:$0xff]
      %v420 = vld [vmem:[%s196 + $0x6b8] sm:$0xff]
      %v421 = vld [vmem:[%s196 + $0x6c0] sm:$0xff]
      %v422 = vld [vmem:[%s196 + $0x6c8] sm:$0xff]
      %v423 = vld [vmem:[%s196 + $0x6d0] sm:$0xff]
      %v424 = vld [vmem:[%s196 + $0x6d8] sm:$0xff]
      %v425 = vld [vmem:[%s196 + $0x6e0] sm:$0xff]
      %v426 = vld [vmem:[%s196 + $0x6e8] sm:$0xff]
      %v427 = vld [vmem:[%s196 + $0x6f0] sm:$0xff]
      %v428 = vld [vmem:[%s196 + $0x6f8] sm:$0xff]
      %v429 = vld [vmem:[%s196 + $0x700] sm:$0xff]
      %v430 = vld [vmem:[%s196 + $0x708] sm:$0xff]
      %v431 = vld [vmem:[%s196 + $0x710] sm:$0xff]
      %v432 = vld [vmem:[%s196 + $0x718] sm:$0xff]
      %v433 = vld [vmem:[%s196 + $0x720] sm:$0xff]
      %v434 = vld [vmem:[%s196 + $0x728] sm:$0xff]
      %v435 = vld [vmem:[%s196 + $0x730] sm:$0xff]
      %v436 = vld [vmem:[%s196 + $0x738] sm:$0xff]
      %v437 = vld [vmem:[%s196 + $0x740] sm:$0xff]
      %v438 = vld [vmem:[%s196 + $0x748] sm:$0xff]
      %v439 = vld [vmem:[%s196 + $0x750] sm:$0xff]
      %v440 = vld [vmem:[%s196 + $0x758] sm:$0xff]
      %v441 = vld [vmem:[%s196 + $0x760] sm:$0xff]
      %v442 = vld [vmem:[%s196 + $0x768] sm:$0xff]
      %v443 = vld [vmem:[%s196 + $0x770] sm:$0xff]
      %v444 = vld [vmem:[%s196 + $0x778] sm:$0xff]
      %v445 = vld [vmem:[%s196 + $0x780] sm:$0xff]
      %v446 = vld [vmem:[%s196 + $0x788] sm:$0xff]
      %v447 = vld [vmem:[%s196 + $0x790] sm:$0xff]
      %v448 = vld [vmem:[%s196 + $0x798] sm:$0xff]
      %v449 = vld [vmem:[%s196 + $0x7a0] sm:$0xff]
      %v450 = vld [vmem:[%s196 + $0x7a8] sm:$0xff]
      %v451 = vld [vmem:[%s196 + $0x7b0] sm:$0xff]
      %v452 = vld [vmem:[%s196 + $0x7b8] sm:$0xff]
      %v453 = vld [vmem:[%s196 + $0x7c0] sm:$0xff]
      %v454 = vld [vmem:[%s196 + $0x7c8] sm:$0xff]
      %v455 = vld [vmem:[%s196 + $0x7d0] sm:$0xff]
      %v456 = vld [vmem:[%s196 + $0x7d8] sm:$0xff]
      %v457 = vld [vmem:[%s196 + $0x7e0] sm:$0xff]
      %v458 = vld [vmem:[%s196 + $0x7e8] sm:$0xff]
      %v459 = vld [vmem:[%s196 + $0x7f0] sm:$0xff]
      %v460 = vld [vmem:[%s196 + $0x7f8] sm:$0xff]
      %v461 = vld [vmem:[%s196 + $0x800] sm:$0xff]
      %v462 = vld [vmem:[%s196 + $0x808] sm:$0xff]
      %v463 = vld [vmem:[%s196 + $0x810] sm:$0xff]
      %v464 = vld [vmem:[%s196 + $0x818] sm:$0xff]
      %v465 = vld [vmem:[%s196 + $0x820] sm:$0xff]
      %v466 = vld [vmem:[%s196 + $0x828] sm:$0xff]
      %v467 = vld [vmem:[%s196 + $0x830] sm:$0xff]
      %v468 = vld [vmem:[%s196 + $0x838] sm:$0xff]
      %v469 = vld [vmem:[%s196 + $0x840] sm:$0xff]
      %v470 = vld [vmem:[%s196 + $0x848] sm:$0xff]
      %v471 = vld [vmem:[%s196 + $0x850] sm:$0xff]
      %v472 = vld [vmem:[%s196 + $0x858] sm:$0xff]
      %v473 = vld [vmem:[%s196 + $0x860] sm:$0xff]
      %v474 = vld [vmem:[%s196 + $0x868] sm:$0xff]
      %v475 = vld [vmem:[%s196 + $0x870] sm:$0xff]
      %v476 = vld [vmem:[%s196 + $0x878] sm:$0xff]
      %v477 = vld [vmem:[%s196 + $0x880] sm:$0xff]
      %v478 = vld [vmem:[%s196 + $0x888] sm:$0xff]
      %v479 = vld [vmem:[%s196 + $0x890] sm:$0xff]
      %v480 = vld [vmem:[%s196 + $0x898] sm:$0xff]
      %v481 = vld [vmem:[%s196 + $0x8a0] sm:$0xff]
      %v482 = vld [vmem:[%s196 + $0x8a8] sm:$0xff]
      %v483 = vld [vmem:[%s196 + $0x8b0] sm:$0xff]
      %v484 = vld [vmem:[%s196 + $0x8b8] sm:$0xff]
      %v485 = vld [vmem:[%s196 + $0x8c0] sm:$0xff]
      %v486 = vld [vmem:[%s196 + $0x8c8] sm:$0xff]
      %v487 = vld [vmem:[%s196 + $0x8d0] sm:$0xff]
      %v488 = vld [vmem:[%s196 + $0x8d8] sm:$0xff]
      %v489 = vld [vmem:[%s196 + $0x8e0] sm:$0xff]
      %v490 = vld [vmem:[%s196 + $0x8e8] sm:$0xff]
      %v491 = vld [vmem:[%s196 + $0x8f0] sm:$0xff]
      %v492 = vld [vmem:[%s196 + $0x8f8] sm:$0xff]
      %v493 = vld [vmem:[%s196 + $0x900] sm:$0xff]
      %v494 = vld [vmem:[%s196 + $0x908] sm:$0xff]
      %v495 = vld [vmem:[%s196 + $0x910] sm:$0xff]
      %v496 = vld [vmem:[%s196 + $0x918] sm:$0xff]
      %v497 = vld [vmem:[%s196 + $0x920] sm:$0xff]
      %v498 = vld [vmem:[%s196 + $0x928] sm:$0xff]
      %v499 = vld [vmem:[%s196 + $0x930] sm:$0xff]
      %v500 = vld [vmem:[%s196 + $0x938] sm:$0xff]
      %v501 = vld [vmem:[%s196 + $0x940] sm:$0xff]
      %v502 = vld [vmem:[%s196 + $0x948] sm:$0xff]
      %v503 = vld [vmem:[%s196 + $0x950] sm:$0xff]
      %v504 = vld [vmem:[%s196 + $0x958] sm:$0xff]
      %v505 = vld [vmem:[%s196 + $0x960] sm:$0xff]
      %v506 = vld [vmem:[%s196 + $0x968] sm:$0xff]
      %v507 = vld [vmem:[%s196 + $0x970] sm:$0xff]
      %v508 = vld [vmem:[%s196 + $0x978] sm:$0xff]
      %v509 = vld [vmem:[%s196 + $0x980] sm:$0xff]
      %v510 = vld [vmem:[%s196 + $0x988] sm:$0xff]
      %v511 = vld [vmem:[%s196 + $0x990] sm:$0xff]
      %v512 = vld [vmem:[%s196 + $0x998] sm:$0xff]
      %v513 = vld [vmem:[%s196 + $0x9a0] sm:$0xff]
      %v514 = vld [vmem:[%s196 + $0x9a8] sm:$0xff]
      %v515 = vld [vmem:[%s196 + $0x9b0] sm:$0xff]
      %v516 = vld [vmem:[%s196 + $0x9b8] sm:$0xff]
      %v517 = vld [vmem:[%s196 + $0x9c0] sm:$0xff]
      %v518 = vld [vmem:[%s196 + $0x9c8] sm:$0xff]
      %v519 = vld [vmem:[%s196 + $0x9d0] sm:$0xff]
      %v520 = vld [vmem:[%s196 + $0x9d8] sm:$0xff]
      %v521 = vld [vmem:[%s196 + $0x9e0] sm:$0xff]
      %v522 = vld [vmem:[%s196 + $0x9e8] sm:$0xff]
      %v523 = vld [vmem:[%s196 + $0x9f0] sm:$0xff]
      %v524 = vld [vmem:[%s196 + $0x9f8] sm:$0xff]
      %v525 = vld [vmem:[%s196 + $0xa00] sm:$0xff]
      %v526 = vld [vmem:[%s196 + $0xa08] sm:$0xff]
      %v527 = vld [vmem:[%s196 + $0xa10] sm:$0xff]
      %v528 = vld [vmem:[%s196 + $0xa18] sm:$0xff]
      %v529 = vld [vmem:[%s196 + $0xa20] sm:$0xff]
      %v530 = vld [vmem:[%s196 + $0xa28] sm:$0xff]
      %v531 = vld [vmem:[%s196 + $0xa30] sm:$0xff]
      %v532 = vld [vmem:[%s196 + $0xa38] sm:$0xff]
      %v533 = vld [vmem:[%s196 + $0xa40] sm:$0xff]
      %v534 = vld [vmem:[%s196 + $0xa48] sm:$0xff]
      %v535 = vld [vmem:[%s196 + $0xa50] sm:$0xff]
      %v536 = vld [vmem:[%s196 + $0xa58] sm:$0xff]
      %v537 = vld [vmem:[%s196 + $0xa60] sm:$0xff]
      %v538 = vld [vmem:[%s196 + $0xa68] sm:$0xff]
      %v539 = vld [vmem:[%s196 + $0xa70] sm:$0xff]
      %v540 = vld [vmem:[%s196 + $0xa78] sm:$0xff]
      %v541 = vld [vmem:[%s196 + $0xa80] sm:$0xff]
      %v542 = vld [vmem:[%s196 + $0xa88] sm:$0xff]
      %v543 = vld [vmem:[%s196 + $0xa90] sm:$0xff]
      %v544 = vld [vmem:[%s196 + $0xa98] sm:$0xff]
      %v545 = vld [vmem:[%s196 + $0xaa0] sm:$0xff]
      %v546 = vld [vmem:[%s196 + $0xaa8] sm:$0xff]
      %v547 = vld [vmem:[%s196 + $0xab0] sm:$0xff]
      %v548 = vld [vmem:[%s196 + $0xab8] sm:$0xff]
      %v549 = vld [vmem:[%s196 + $0xac0] sm:$0xff]
      %v550 = vld [vmem:[%s196 + $0xac8] sm:$0xff]
      %v551 = vld [vmem:[%s196 + $0xad0] sm:$0xff]
      %v552 = vld [vmem:[%s196 + $0xad8] sm:$0xff]
      %v553 = vld [vmem:[%s196 + $0xae0] sm:$0xff]
      %v554 = vld [vmem:[%s196 + $0xae8] sm:$0xff]
      %v555 = vld [vmem:[%s196 + $0xaf0] sm:$0xff]
      %v556 = vld [vmem:[%s196 + $0xaf8] sm:$0xff]
      %v557 = vld [vmem:[%s196 + $0xb00] sm:$0xff]
      %v558 = vld [vmem:[%s196 + $0xb08] sm:$0xff]
      %v559 = vld [vmem:[%s196 + $0xb10] sm:$0xff]
      %v560 = vld [vmem:[%s196 + $0xb18] sm:$0xff]
      %v561 = vld [vmem:[%s196 + $0xb20] sm:$0xff]
      %v562 = vld [vmem:[%s196 + $0xb28] sm:$0xff]
      %v563 = vld [vmem:[%s196 + $0xb30] sm:$0xff]
      %v564 = vld [vmem:[%s196 + $0xb38] sm:$0xff]
      %v565 = vld [vmem:[%s196 + $0xb40] sm:$0xff]
      %v566 = vld [vmem:[%s196 + $0xb48] sm:$0xff]
      %v567 = vld [vmem:[%s196 + $0xb50] sm:$0xff]
      %v568 = vld [vmem:[%s196 + $0xb58] sm:$0xff]
      %v569 = vld [vmem:[%s196 + $0xb60] sm:$0xff]
      %v570 = vld [vmem:[%s196 + $0xb68] sm:$0xff]
      %v571 = vld [vmem:[%s196 + $0xb70] sm:$0xff]
      %v572 = vld [vmem:[%s196 + $0xb78] sm:$0xff]
      %v573 = vld [vmem:[%s196 + $0xb80] sm:$0xff]
      %v574 = vld [vmem:[%s196 + $0xb88] sm:$0xff]
      %v575 = vld [vmem:[%s196 + $0xb90] sm:$0xff]
      %v576 = vld [vmem:[%s196 + $0xb98] sm:$0xff]
      %v577 = vld [vmem:[%s196 + $0xba0] sm:$0xff]
      %v578 = vld [vmem:[%s196 + $0xba8] sm:$0xff]
      %v579 = vld [vmem:[%s196 + $0xbb0] sm:$0xff]
      %v580 = vld [vmem:[%s196 + $0xbb8] sm:$0xff]
      %v581 = vld [vmem:[%s196 + $0xbc0] sm:$0xff]
      %v582 = vld [vmem:[%s196 + $0xbc8] sm:$0xff]
      %v583 = vld [vmem:[%s196 + $0xbd0] sm:$0xff]
      %v584 = vld [vmem:[%s196 + $0xbd8] sm:$0xff]
      %v585 = vld [vmem:[%s196 + $0xbe0] sm:$0xff]
      %v586 = vld [vmem:[%s196 + $0xbe8] sm:$0xff]
      %v587 = vld [vmem:[%s196 + $0xbf0] sm:$0xff]
      %v588 = vld [vmem:[%s196 + $0xbf8] sm:$0xff]
      %v589 = vld [vmem:[%s196 + $0xc00] sm:$0xff]
      %v590 = vld [vmem:[%s196 + $0xc08] sm:$0xff]
      %v591 = vld [vmem:[%s196 + $0xc10] sm:$0xff]
      %v592 = vld [vmem:[%s196 + $0xc18] sm:$0xff]
      %v593 = vld [vmem:[%s196 + $0xc20] sm:$0xff]
      %v594 = vld [vmem:[%s196 + $0xc28] sm:$0xff]
      %v595 = vld [vmem:[%s196 + $0xc30] sm:$0xff]
      %v596 = vld [vmem:[%s196 + $0xc38] sm:$0xff]
      %v597 = vld [vmem:[%s1] sm:$0xf]
      %v598 = vld [vmem:[%s1 + $0x4] sm:$0xf]
      %v599 = vld [vmem:[%s1 + $0x8] sm:$0xf]
      %v600 = vld [vmem:[%s1 + $0xc] sm:$0xf]
      %v601 = vld [vmem:[%s1 + $0x10] sm:$0xf]
      %v602 = vld [vmem:[%s1 + $0x14] sm:$0xf]
      %v603 = vld [vmem:[%s1 + $0x18] sm:$0xf]
      %v604 = vld [vmem:[%s1 + $0x1c] sm:$0xf]
      %v605 = vld [vmem:[%s1 + $0x20] sm:$0xf]
      %v606 = vld [vmem:[%s1 + $0x24] sm:$0xf]
      %v607 = vld [vmem:[%s1 + $0x28] sm:$0xf]
      %v608 = vld [vmem:[%s1 + $0x2c] sm:$0xf]
      %v609 = vld [vmem:[%s1 + $0x30] sm:$0xf]
      %v610 = vld [vmem:[%s1 + $0x34] sm:$0xf]
      %v611 = vld [vmem:[%s1 + $0x38] sm:$0xf]
      %v612 = vld [vmem:[%s1 + $0x3c] sm:$0xf]
      %v613 = vld [vmem:[%s1 + $0x40] sm:$0xf]
      %v614 = vld [vmem:[%s1 + $0x44] sm:$0xf]
      %v615 = vld [vmem:[%s1 + $0x48] sm:$0xf]
      %v616 = vld [vmem:[%s1 + $0x4c] sm:$0xf]
      %v617 = vld [vmem:[%s1 + $0x50] sm:$0xf]
      %v618 = vld [vmem:[%s1 + $0x54] sm:$0xf]
      %v619 = vld [vmem:[%s1 + $0x58] sm:$0xf]
      %v620 = vld [vmem:[%s1 + $0x5c] sm:$0xf]
      %v621 = vld [vmem:[%s1 + $0x60] sm:$0xf]
      %v622 = vld [vmem:[%s1 + $0x64] sm:$0xf]
      %v623 = vld [vmem:[%s1 + $0x68] sm:$0xf]
      %v624 = vld [vmem:[%s1 + $0x6c] sm:$0xf]
      %v625 = vld [vmem:[%s1 + $0x70] sm:$0xf]
      %v626 = vld [vmem:[%s1 + $0x74] sm:$0xf]
      %v627 = vld [vmem:[%s1 + $0x78] sm:$0xf]
      %v628 = vld [vmem:[%s1 + $0x7c] sm:$0xf]
      %v629 = vld [vmem:[%s1 + $0x80] sm:$0xf]
      %v630 = vld [vmem:[%s1 + $0x84] sm:$0xf]
      %v631 = vld [vmem:[%s1 + $0x88] sm:$0xf]
      %v632 = vld [vmem:[%s1 + $0x8c] sm:$0xf]
      %v633 = vld [vmem:[%s1 + $0x90] sm:$0xf]
      %v634 = vld [vmem:[%s1 + $0x94] sm:$0xf]
      %v635 = vld [vmem:[%s1 + $0x98] sm:$0xf]
      %v636 = vld [vmem:[%s1 + $0x9c] sm:$0xf]
      %v637 = vld [vmem:[%s1 + $0xa0] sm:$0xf]
      %v638 = vld [vmem:[%s1 + $0xa4] sm:$0xf]
      %v639 = vld [vmem:[%s1 + $0xa8] sm:$0xf]
      %v640 = vld [vmem:[%s1 + $0xac] sm:$0xf]
      %v641 = vld [vmem:[%s1 + $0xb0] sm:$0xf]
      %v642 = vld [vmem:[%s1 + $0xb4] sm:$0xf]
      %v643 = vld [vmem:[%s1 + $0xb8] sm:$0xf]
      %v644 = vld [vmem:[%s1 + $0xbc] sm:$0xf]
      %v645 = vld [vmem:[%s1 + $0xc0] sm:$0xf]
      %v646 = vld [vmem:[%s1 + $0xc4] sm:$0xf]
      %v1039 = vunpack.c.l.b16 %v205
      %v1040 = vunpack.c.h.b16 %v205
      %v1041 = vunpack.c.l.b16 %v206
      %v1042 = vunpack.c.h.b16 %v206
      %v1043 = vunpack.c.l.b16 %v207
      %v1044 = vunpack.c.h.b16 %v207
      %v1045 = vunpack.c.l.b16 %v208
      %v1046 = vunpack.c.h.b16 %v208
      %v1047 = vunpack.c.l.b16 %v209
      %v1048 = vunpack.c.h.b16 %v209
      %v1049 = vunpack.c.l.b16 %v210
      %v1050 = vunpack.c.h.b16 %v210
      %v1051 = vunpack.c.l.b16 %v211
      %v1052 = vunpack.c.h.b16 %v211
      %v1053 = vunpack.c.l.b16 %v212
      %v1054 = vunpack.c.h.b16 %v212
      %v1055 = vunpack.c.l.b16 %v213
      %v1056 = vunpack.c.h.b16 %v213
      %v1057 = vunpack.c.l.b16 %v214
      %v1058 = vunpack.c.h.b16 %v214
      %v1059 = vunpack.c.l.b16 %v215
      %v1060 = vunpack.c.h.b16 %v215
      %v1061 = vunpack.c.l.b16 %v216
      %v1062 = vunpack.c.h.b16 %v216
      %v1063 = vunpack.c.l.b16 %v217
      %v1064 = vunpack.c.h.b16 %v217
      %v1065 = vunpack.c.l.b16 %v218
      %v1066 = vunpack.c.h.b16 %v218
      %v1067 = vunpack.c.l.b16 %v219
      %v1068 = vunpack.c.h.b16 %v219
      %v1069 = vunpack.c.l.b16 %v220
      %v1070 = vunpack.c.h.b16 %v220
      %v1071 = vunpack.c.l.b16 %v221
      %v1072 = vunpack.c.h.b16 %v221
      %v1073 = vunpack.c.l.b16 %v222
      %v1074 = vunpack.c.h.b16 %v222
      %v1075 = vunpack.c.l.b16 %v223
      %v1076 = vunpack.c.h.b16 %v223
      %v1077 = vunpack.c.l.b16 %v224
      %v1078 = vunpack.c.h.b16 %v224
      %v1079 = vunpack.c.l.b16 %v225
      %v1080 = vunpack.c.h.b16 %v225
      %v1081 = vunpack.c.l.b16 %v226
      %v1082 = vunpack.c.h.b16 %v226
      %v1083 = vunpack.c.l.b16 %v227
      %v1084 = vunpack.c.h.b16 %v227
      %v1085 = vunpack.c.l.b16 %v228
      %v1086 = vunpack.c.h.b16 %v228
      %v1087 = vunpack.c.l.b16 %v229
      %v1088 = vunpack.c.h.b16 %v229
      %v1089 = vunpack.c.l.b16 %v230
      %v1090 = vunpack.c.h.b16 %v230
      %v1091 = vunpack.c.l.b16 %v231
      %v1092 = vunpack.c.h.b16 %v231
      %v1093 = vunpack.c.l.b16 %v232
      %v1094 = vunpack.c.h.b16 %v232
      %v1095 = vunpack.c.l.b16 %v233
      %v1096 = vunpack.c.h.b16 %v233
      %v1097 = vunpack.c.l.b16 %v234
      %v1098 = vunpack.c.h.b16 %v234
      %v1099 = vunpack.c.l.b16 %v235
      %v1100 = vunpack.c.h.b16 %v235
      %v1101 = vunpack.c.l.b16 %v236
      %v1102 = vunpack.c.h.b16 %v236
      %v1103 = vunpack.c.l.b16 %v237
      %v1104 = vunpack.c.h.b16 %v237
      %v1105 = vunpack.c.l.b16 %v238
      %v1106 = vunpack.c.h.b16 %v238
      %v1107 = vunpack.c.l.b16 %v239
      %v1108 = vunpack.c.h.b16 %v239
      %v1109 = vunpack.c.l.b16 %v240
      %v1110 = vunpack.c.h.b16 %v240
      %v1111 = vunpack.c.l.b16 %v241
      %v1112 = vunpack.c.h.b16 %v241
      %v1113 = vunpack.c.l.b16 %v242
      %v1114 = vunpack.c.h.b16 %v242
      %v1115 = vunpack.c.l.b16 %v243
      %v1116 = vunpack.c.h.b16 %v243
      %v1117 = vunpack.c.l.b16 %v244
      %v1118 = vunpack.c.h.b16 %v244
      %v1119 = vunpack.c.l.b16 %v245
      %v1120 = vunpack.c.h.b16 %v245
      %v1121 = vunpack.c.l.b16 %v246
      %v1122 = vunpack.c.h.b16 %v246
      %v1123 = vunpack.c.l.b16 %v247
      %v1124 = vunpack.c.h.b16 %v247
      %v1125 = vunpack.c.l.b16 %v248
      %v1126 = vunpack.c.h.b16 %v248
      %v1127 = vunpack.c.l.b16 %v249
      %v1128 = vunpack.c.h.b16 %v249
      %v1129 = vunpack.c.l.b16 %v250
      %v1130 = vunpack.c.h.b16 %v250
      %v1131 = vunpack.c.l.b16 %v251
      %v1132 = vunpack.c.h.b16 %v251
      %v1133 = vunpack.c.l.b16 %v252
      %v1134 = vunpack.c.h.b16 %v252
      %v1135 = vunpack.c.l.b16 %v253
      %v1136 = vunpack.c.h.b16 %v253
      %v1137 = vunpack.c.l.b16 %v254
      %v1138 = vunpack.c.h.b16 %v254
      %v1139 = vunpack.c.l.b16 %v255
      %v1140 = vunpack.c.h.b16 %v255
      %v1141 = vunpack.c.l.b16 %v256
      %v1142 = vunpack.c.h.b16 %v256
      %v1143 = vunpack.c.l.b16 %v257
      %v1144 = vunpack.c.h.b16 %v257
      %v1145 = vunpack.c.l.b16 %v258
      %v1146 = vunpack.c.h.b16 %v258
      %v1147 = vunpack.c.l.b16 %v259
      %v1148 = vunpack.c.h.b16 %v259
      %v1149 = vunpack.c.l.b16 %v260
      %v1150 = vunpack.c.h.b16 %v260
      %v1151 = vunpack.c.l.b16 %v261
      %v1152 = vunpack.c.h.b16 %v261
      %v1153 = vunpack.c.l.b16 %v262
      %v1154 = vunpack.c.h.b16 %v262
      %v1155 = vunpack.c.l.b16 %v263
      %v1156 = vunpack.c.h.b16 %v263
      %v1157 = vunpack.c.l.b16 %v264
      %v1158 = vunpack.c.h.b16 %v264
      %v1159 = vunpack.c.l.b16 %v265
      %v1160 = vunpack.c.h.b16 %v265
      %v1161 = vunpack.c.l.b16 %v266
      %v1162 = vunpack.c.h.b16 %v266
      %v1163 = vunpack.c.l.b16 %v267
      %v1164 = vunpack.c.h.b16 %v267
      %v1165 = vunpack.c.l.b16 %v268
      %v1166 = vunpack.c.h.b16 %v268
      %v1167 = vunpack.c.l.b16 %v269
      %v1168 = vunpack.c.h.b16 %v269
      %v1169 = vunpack.c.l.b16 %v270
      %v1170 = vunpack.c.h.b16 %v270
      %v1171 = vunpack.c.l.b16 %v271
      %v1172 = vunpack.c.h.b16 %v271
      %v1173 = vunpack.c.l.b16 %v272
      %v1174 = vunpack.c.h.b16 %v272
      %v1175 = vunpack.c.l.b16 %v273
      %v1176 = vunpack.c.h.b16 %v273
      %v1177 = vunpack.c.l.b16 %v274
      %v1178 = vunpack.c.h.b16 %v274
      %v1179 = vunpack.c.l.b16 %v275
      %v1180 = vunpack.c.h.b16 %v275
      %v1181 = vunpack.c.l.b16 %v276
      %v1182 = vunpack.c.h.b16 %v276
      %v1183 = vunpack.c.l.b16 %v277
      %v1184 = vunpack.c.h.b16 %v277
      %v1185 = vunpack.c.l.b16 %v278
      %v1186 = vunpack.c.h.b16 %v278
      %v1187 = vunpack.c.l.b16 %v279
      %v1188 = vunpack.c.h.b16 %v279
      %v1189 = vunpack.c.l.b16 %v280
      %v1190 = vunpack.c.h.b16 %v280
      %v1191 = vunpack.c.l.b16 %v281
      %v1192 = vunpack.c.h.b16 %v281
      %v1193 = vunpack.c.l.b16 %v282
      %v1194 = vunpack.c.h.b16 %v282
      %v1195 = vunpack.c.l.b16 %v283
      %v1196 = vunpack.c.h.b16 %v283
      %v1197 = vunpack.c.l.b16 %v284
      %v1198 = vunpack.c.h.b16 %v284
      %v1199 = vunpack.c.l.b16 %v285
      %v1200 = vunpack.c.h.b16 %v285
      %v1201 = vunpack.c.l.b16 %v286
      %v1202 = vunpack.c.h.b16 %v286
      %v1203 = vunpack.c.l.b16 %v287
      %v1204 = vunpack.c.h.b16 %v287
      %v1205 = vunpack.c.l.b16 %v288
      %v1206 = vunpack.c.h.b16 %v288
      %v1207 = vunpack.c.l.b16 %v289
      %v1208 = vunpack.c.h.b16 %v289
      %v1209 = vunpack.c.l.b16 %v290
      %v1210 = vunpack.c.h.b16 %v290
      %v1211 = vunpack.c.l.b16 %v291
      %v1212 = vunpack.c.h.b16 %v291
      %v1213 = vunpack.c.l.b16 %v292
      %v1214 = vunpack.c.h.b16 %v292
      %v1215 = vunpack.c.l.b16 %v293
      %v1216 = vunpack.c.h.b16 %v293
      %v1217 = vunpack.c.l.b16 %v294
      %v1218 = vunpack.c.h.b16 %v294
      %v1219 = vunpack.c.l.b16 %v295
      %v1220 = vunpack.c.h.b16 %v295
      %v1221 = vunpack.c.l.b16 %v296
      %v1222 = vunpack.c.h.b16 %v296
      %v1223 = vunpack.c.l.b16 %v297
      %v1224 = vunpack.c.h.b16 %v297
      %v1225 = vunpack.c.l.b16 %v298
      %v1226 = vunpack.c.h.b16 %v298
      %v1227 = vunpack.c.l.b16 %v299
      %v1228 = vunpack.c.h.b16 %v299
      %v1229 = vunpack.c.l.b16 %v300
      %v1230 = vunpack.c.h.b16 %v300
      %v1231 = vunpack.c.l.b16 %v301
      %v1232 = vunpack.c.h.b16 %v301
      %v1233 = vunpack.c.l.b16 %v302
      %v1234 = vunpack.c.h.b16 %v302
      %v1235 = vunpack.c.l.b16 %v303
      %v1236 = vunpack.c.h.b16 %v303
      %v1237 = vunpack.c.l.b16 %v304
      %v1238 = vunpack.c.h.b16 %v304
      %v1239 = vunpack.c.l.b16 %v305
      %v1240 = vunpack.c.h.b16 %v305
      %v1241 = vunpack.c.l.b16 %v306
      %v1242 = vunpack.c.h.b16 %v306
      %v1243 = vunpack.c.l.b16 %v307
      %v1244 = vunpack.c.h.b16 %v307
      %v1245 = vunpack.c.l.b16 %v308
      %v1246 = vunpack.c.h.b16 %v308
      %v1247 = vunpack.c.l.b16 %v309
      %v1248 = vunpack.c.h.b16 %v309
      %v1249 = vunpack.c.l.b16 %v310
      %v1250 = vunpack.c.h.b16 %v310
      %v1251 = vunpack.c.l.b16 %v311
      %v1252 = vunpack.c.h.b16 %v311
      %v1253 = vunpack.c.l.b16 %v312
      %v1254 = vunpack.c.h.b16 %v312
      %v1255 = vunpack.c.l.b16 %v313
      %v1256 = vunpack.c.h.b16 %v313
      %v1257 = vunpack.c.l.b16 %v314
      %v1258 = vunpack.c.h.b16 %v314
      %v1259 = vunpack.c.l.b16 %v315
      %v1260 = vunpack.c.h.b16 %v315
      %v1261 = vunpack.c.l.b16 %v316
      %v1262 = vunpack.c.h.b16 %v316
      %v1263 = vunpack.c.l.b16 %v317
      %v1264 = vunpack.c.h.b16 %v317
      %v1265 = vunpack.c.l.b16 %v318
      %v1266 = vunpack.c.h.b16 %v318
      %v1267 = vunpack.c.l.b16 %v319
      %v1268 = vunpack.c.h.b16 %v319
      %v1269 = vunpack.c.l.b16 %v320
      %v1270 = vunpack.c.h.b16 %v320
      %v1271 = vunpack.c.l.b16 %v321
      %v1272 = vunpack.c.h.b16 %v321
      %v1273 = vunpack.c.l.b16 %v322
      %v1274 = vunpack.c.h.b16 %v322
      %v1275 = vunpack.c.l.b16 %v323
      %v1276 = vunpack.c.h.b16 %v323
      %v1277 = vunpack.c.l.b16 %v324
      %v1278 = vunpack.c.h.b16 %v324
      %v1279 = vunpack.c.l.b16 %v325
      %v1280 = vunpack.c.h.b16 %v325
      %v1281 = vunpack.c.l.b16 %v326
      %v1282 = vunpack.c.h.b16 %v326
      %v1283 = vunpack.c.l.b16 %v327
      %v1284 = vunpack.c.h.b16 %v327
      %v1285 = vunpack.c.l.b16 %v328
      %v1286 = vunpack.c.h.b16 %v328
      %v1287 = vunpack.c.l.b16 %v329
      %v1288 = vunpack.c.h.b16 %v329
      %v1289 = vunpack.c.l.b16 %v330
      %v1290 = vunpack.c.h.b16 %v330
      %v1291 = vunpack.c.l.b16 %v331
      %v1292 = vunpack.c.h.b16 %v331
      %v1293 = vunpack.c.l.b16 %v332
      %v1294 = vunpack.c.h.b16 %v332
      %v1295 = vunpack.c.l.b16 %v333
      %v1296 = vunpack.c.h.b16 %v333
      %v1297 = vunpack.c.l.b16 %v334
      %v1298 = vunpack.c.h.b16 %v334
      %v1299 = vunpack.c.l.b16 %v335
      %v1300 = vunpack.c.h.b16 %v335
      %v1301 = vunpack.c.l.b16 %v336
      %v1302 = vunpack.c.h.b16 %v336
      %v1303 = vunpack.c.l.b16 %v337
      %v1304 = vunpack.c.h.b16 %v337
      %v1305 = vunpack.c.l.b16 %v338
      %v1306 = vunpack.c.h.b16 %v338
      %v1307 = vunpack.c.l.b16 %v339
      %v1308 = vunpack.c.h.b16 %v339
      %v1309 = vunpack.c.l.b16 %v340
      %v1310 = vunpack.c.h.b16 %v340
      %v1311 = vunpack.c.l.b16 %v341
      %v1312 = vunpack.c.h.b16 %v341
      %v1313 = vunpack.c.l.b16 %v342
      %v1314 = vunpack.c.h.b16 %v342
      %v1315 = vunpack.c.l.b16 %v343
      %v1316 = vunpack.c.h.b16 %v343
      %v1317 = vunpack.c.l.b16 %v344
      %v1318 = vunpack.c.h.b16 %v344
      %v1319 = vunpack.c.l.b16 %v345
      %v1320 = vunpack.c.h.b16 %v345
      %v1321 = vunpack.c.l.b16 %v346
      %v1322 = vunpack.c.h.b16 %v346
      %v1323 = vunpack.c.l.b16 %v347
      %v1324 = vunpack.c.h.b16 %v347
      %v1325 = vunpack.c.l.b16 %v348
      %v1326 = vunpack.c.h.b16 %v348
      %v1327 = vunpack.c.l.b16 %v349
      %v1328 = vunpack.c.h.b16 %v349
      %v1329 = vunpack.c.l.b16 %v350
      %v1330 = vunpack.c.h.b16 %v350
      %v1331 = vunpack.c.l.b16 %v351
      %v1332 = vunpack.c.h.b16 %v351
      %v1333 = vunpack.c.l.b16 %v352
      %v1334 = vunpack.c.h.b16 %v352
      %v1335 = vunpack.c.l.b16 %v353
      %v1336 = vunpack.c.h.b16 %v353
      %v1337 = vunpack.c.l.b16 %v354
      %v1338 = vunpack.c.h.b16 %v354
      %v1339 = vunpack.c.l.b16 %v355
      %v1340 = vunpack.c.h.b16 %v355
      %v1341 = vunpack.c.l.b16 %v356
      %v1342 = vunpack.c.h.b16 %v356
      %v1343 = vunpack.c.l.b16 %v357
      %v1344 = vunpack.c.h.b16 %v357
      %v1345 = vunpack.c.l.b16 %v358
      %v1346 = vunpack.c.h.b16 %v358
      %v1347 = vunpack.c.l.b16 %v359
      %v1348 = vunpack.c.h.b16 %v359
      %v1349 = vunpack.c.l.b16 %v360
      %v1350 = vunpack.c.h.b16 %v360
      %v1351 = vunpack.c.l.b16 %v361
      %v1352 = vunpack.c.h.b16 %v361
      %v1353 = vunpack.c.l.b16 %v362
      %v1354 = vunpack.c.h.b16 %v362
      %v1355 = vunpack.c.l.b16 %v363
      %v1356 = vunpack.c.h.b16 %v363
      %v1357 = vunpack.c.l.b16 %v364
      %v1358 = vunpack.c.h.b16 %v364
      %v1359 = vunpack.c.l.b16 %v365
      %v1360 = vunpack.c.h.b16 %v365
      %v1361 = vunpack.c.l.b16 %v366
      %v1362 = vunpack.c.h.b16 %v366
      %v1363 = vunpack.c.l.b16 %v367
      %v1364 = vunpack.c.h.b16 %v367
      %v1365 = vunpack.c.l.b16 %v368
      %v1366 = vunpack.c.h.b16 %v368
      %v1367 = vunpack.c.l.b16 %v369
      %v1368 = vunpack.c.h.b16 %v369
      %v1369 = vunpack.c.l.b16 %v370
      %v1370 = vunpack.c.h.b16 %v370
      %v1371 = vunpack.c.l.b16 %v371
      %v1372 = vunpack.c.h.b16 %v371
      %v1373 = vunpack.c.l.b16 %v372
      %v1374 = vunpack.c.h.b16 %v372
      %v1375 = vunpack.c.l.b16 %v373
      %v1376 = vunpack.c.h.b16 %v373
      %v1377 = vunpack.c.l.b16 %v374
      %v1378 = vunpack.c.h.b16 %v374
      %v1379 = vunpack.c.l.b16 %v375
      %v1380 = vunpack.c.h.b16 %v375
      %v1381 = vunpack.c.l.b16 %v376
      %v1382 = vunpack.c.h.b16 %v376
      %v1383 = vunpack.c.l.b16 %v377
      %v1384 = vunpack.c.h.b16 %v377
      %v1385 = vunpack.c.l.b16 %v378
      %v1386 = vunpack.c.h.b16 %v378
      %v1387 = vunpack.c.l.b16 %v379
      %v1388 = vunpack.c.h.b16 %v379
      %v1389 = vunpack.c.l.b16 %v380
      %v1390 = vunpack.c.h.b16 %v380
      %v1391 = vunpack.c.l.b16 %v381
      %v1392 = vunpack.c.h.b16 %v381
      %v1393 = vunpack.c.l.b16 %v382
      %v1394 = vunpack.c.h.b16 %v382
      %v1395 = vunpack.c.l.b16 %v383
      %v1396 = vunpack.c.h.b16 %v383
      %v1397 = vunpack.c.l.b16 %v384
      %v1398 = vunpack.c.h.b16 %v384
      %v1399 = vunpack.c.l.b16 %v385
      %v1400 = vunpack.c.h.b16 %v385
      %v1401 = vunpack.c.l.b16 %v386
      %v1402 = vunpack.c.h.b16 %v386
      %v1403 = vunpack.c.l.b16 %v387
      %v1404 = vunpack.c.h.b16 %v387
      %v1405 = vunpack.c.l.b16 %v388
      %v1406 = vunpack.c.h.b16 %v388
      %v1407 = vunpack.c.l.b16 %v389
      %v1408 = vunpack.c.h.b16 %v389
      %v1409 = vunpack.c.l.b16 %v390
      %v1410 = vunpack.c.h.b16 %v390
      %v1411 = vunpack.c.l.b16 %v391
      %v1412 = vunpack.c.h.b16 %v391
      %v1413 = vunpack.c.l.b16 %v392
      %v1414 = vunpack.c.h.b16 %v392
      %v1415 = vunpack.c.l.b16 %v393
      %v1416 = vunpack.c.h.b16 %v393
      %v1417 = vunpack.c.l.b16 %v394
      %v1418 = vunpack.c.h.b16 %v394
      %v1419 = vunpack.c.l.b16 %v395
      %v1420 = vunpack.c.h.b16 %v395
      %v1421 = vunpack.c.l.b16 %v396
      %v1422 = vunpack.c.h.b16 %v396
      %v1423 = vunpack.c.l.b16 %v397
      %v1424 = vunpack.c.h.b16 %v397
      %v1425 = vunpack.c.l.b16 %v398
      %v1426 = vunpack.c.h.b16 %v398
      %v1427 = vunpack.c.l.b16 %v399
      %v1428 = vunpack.c.h.b16 %v399
      %v1429 = vunpack.c.l.b16 %v400
      %v1430 = vunpack.c.h.b16 %v400
      %v1431 = vunpack.c.l.b16 %v401
      %v1432 = vunpack.c.h.b16 %v401
      %v1433 = vunpack.c.l.b16 %v402
      %v1434 = vunpack.c.h.b16 %v402
      %v1435 = vunpack.c.l.b16 %v403
      %v1436 = vunpack.c.h.b16 %v403
      %v1437 = vunpack.c.l.b16 %v404
      %v1438 = vunpack.c.h.b16 %v404
      %v1439 = vunpack.c.l.b16 %v405
      %v1440 = vunpack.c.h.b16 %v405
      %v1441 = vunpack.c.l.b16 %v406
      %v1442 = vunpack.c.h.b16 %v406
      %v1443 = vunpack.c.l.b16 %v407
      %v1444 = vunpack.c.h.b16 %v407
      %v1445 = vunpack.c.l.b16 %v408
      %v1446 = vunpack.c.h.b16 %v408
      %v1447 = vunpack.c.l.b16 %v409
      %v1448 = vunpack.c.h.b16 %v409
      %v1449 = vunpack.c.l.b16 %v410
      %v1450 = vunpack.c.h.b16 %v410
      %v1451 = vunpack.c.l.b16 %v411
      %v1452 = vunpack.c.h.b16 %v411
      %v1453 = vunpack.c.l.b16 %v412
      %v1454 = vunpack.c.h.b16 %v412
      %v1455 = vunpack.c.l.b16 %v413
      %v1456 = vunpack.c.h.b16 %v413
      %v1457 = vunpack.c.l.b16 %v414
      %v1458 = vunpack.c.h.b16 %v414
      %v1459 = vunpack.c.l.b16 %v415
      %v1460 = vunpack.c.h.b16 %v415
      %v1461 = vunpack.c.l.b16 %v416
      %v1462 = vunpack.c.h.b16 %v416
      %v1463 = vunpack.c.l.b16 %v417
      %v1464 = vunpack.c.h.b16 %v417
      %v1465 = vunpack.c.l.b16 %v418
      %v1466 = vunpack.c.h.b16 %v418
      %v1467 = vunpack.c.l.b16 %v419
      %v1468 = vunpack.c.h.b16 %v419
      %v1469 = vunpack.c.l.b16 %v420
      %v1470 = vunpack.c.h.b16 %v420
      %v1471 = vunpack.c.l.b16 %v421
      %v1472 = vunpack.c.h.b16 %v421
      %v1473 = vunpack.c.l.b16 %v422
      %v1474 = vunpack.c.h.b16 %v422
      %v1475 = vunpack.c.l.b16 %v423
      %v1476 = vunpack.c.h.b16 %v423
      %v1477 = vunpack.c.l.b16 %v424
      %v1478 = vunpack.c.h.b16 %v424
      %v1479 = vunpack.c.l.b16 %v425
      %v1480 = vunpack.c.h.b16 %v425
      %v1481 = vunpack.c.l.b16 %v426
      %v1482 = vunpack.c.h.b16 %v426
      %v1483 = vunpack.c.l.b16 %v427
      %v1484 = vunpack.c.h.b16 %v427
      %v1485 = vunpack.c.l.b16 %v428
      %v1486 = vunpack.c.h.b16 %v428
      %v1487 = vunpack.c.l.b16 %v429
      %v1488 = vunpack.c.h.b16 %v429
      %v1489 = vunpack.c.l.b16 %v430
      %v1490 = vunpack.c.h.b16 %v430
      %v1491 = vunpack.c.l.b16 %v431
      %v1492 = vunpack.c.h.b16 %v431
      %v1493 = vunpack.c.l.b16 %v432
      %v1494 = vunpack.c.h.b16 %v432
      %v1495 = vunpack.c.l.b16 %v433
      %v1496 = vunpack.c.h.b16 %v433
      %v1497 = vunpack.c.l.b16 %v434
      %v1498 = vunpack.c.h.b16 %v434
      %v1499 = vunpack.c.l.b16 %v435
      %v1500 = vunpack.c.h.b16 %v435
      %v1501 = vunpack.c.l.b16 %v436
      %v1502 = vunpack.c.h.b16 %v436
      %v1503 = vunpack.c.l.b16 %v437
      %v1504 = vunpack.c.h.b16 %v437
      %v1505 = vunpack.c.l.b16 %v438
      %v1506 = vunpack.c.h.b16 %v438
      %v1507 = vunpack.c.l.b16 %v439
      %v1508 = vunpack.c.h.b16 %v439
      %v1509 = vunpack.c.l.b16 %v440
      %v1510 = vunpack.c.h.b16 %v440
      %v1511 = vunpack.c.l.b16 %v441
      %v1512 = vunpack.c.h.b16 %v441
      %v1513 = vunpack.c.l.b16 %v442
      %v1514 = vunpack.c.h.b16 %v442
      %v1515 = vunpack.c.l.b16 %v443
      %v1516 = vunpack.c.h.b16 %v443
      %v1517 = vunpack.c.l.b16 %v444
      %v1518 = vunpack.c.h.b16 %v444
      %v1519 = vunpack.c.l.b16 %v445
      %v1520 = vunpack.c.h.b16 %v445
      %v1521 = vunpack.c.l.b16 %v446
      %v1522 = vunpack.c.h.b16 %v446
      %v1523 = vunpack.c.l.b16 %v447
      %v1524 = vunpack.c.h.b16 %v447
      %v1525 = vunpack.c.l.b16 %v448
      %v1526 = vunpack.c.h.b16 %v448
      %v1527 = vunpack.c.l.b16 %v449
      %v1528 = vunpack.c.h.b16 %v449
      %v1529 = vunpack.c.l.b16 %v450
      %v1530 = vunpack.c.h.b16 %v450
      %v1531 = vunpack.c.l.b16 %v451
      %v1532 = vunpack.c.h.b16 %v451
      %v1533 = vunpack.c.l.b16 %v452
      %v1534 = vunpack.c.h.b16 %v452
      %v1535 = vunpack.c.l.b16 %v453
      %v1536 = vunpack.c.h.b16 %v453
      %v1537 = vunpack.c.l.b16 %v454
      %v1538 = vunpack.c.h.b16 %v454
      %v1539 = vunpack.c.l.b16 %v455
      %v1540 = vunpack.c.h.b16 %v455
      %v1541 = vunpack.c.l.b16 %v456
      %v1542 = vunpack.c.h.b16 %v456
      %v1543 = vunpack.c.l.b16 %v457
      %v1544 = vunpack.c.h.b16 %v457
      %v1545 = vunpack.c.l.b16 %v458
      %v1546 = vunpack.c.h.b16 %v458
      %v1547 = vunpack.c.l.b16 %v459
      %v1548 = vunpack.c.h.b16 %v459
      %v1549 = vunpack.c.l.b16 %v460
      %v1550 = vunpack.c.h.b16 %v460
      %v1551 = vunpack.c.l.b16 %v461
      %v1552 = vunpack.c.h.b16 %v461
      %v1553 = vunpack.c.l.b16 %v462
      %v1554 = vunpack.c.h.b16 %v462
      %v1555 = vunpack.c.l.b16 %v463
      %v1556 = vunpack.c.h.b16 %v463
      %v1557 = vunpack.c.l.b16 %v464
      %v1558 = vunpack.c.h.b16 %v464
      %v1559 = vunpack.c.l.b16 %v465
      %v1560 = vunpack.c.h.b16 %v465
      %v1561 = vunpack.c.l.b16 %v466
      %v1562 = vunpack.c.h.b16 %v466
      %v1563 = vunpack.c.l.b16 %v467
      %v1564 = vunpack.c.h.b16 %v467
      %v1565 = vunpack.c.l.b16 %v468
      %v1566 = vunpack.c.h.b16 %v468
      %v1567 = vunpack.c.l.b16 %v469
      %v1568 = vunpack.c.h.b16 %v469
      %v1569 = vunpack.c.l.b16 %v470
      %v1570 = vunpack.c.h.b16 %v470
      %v1571 = vunpack.c.l.b16 %v471
      %v1572 = vunpack.c.h.b16 %v471
      %v1573 = vunpack.c.l.b16 %v472
      %v1574 = vunpack.c.h.b16 %v472
      %v1575 = vunpack.c.l.b16 %v473
      %v1576 = vunpack.c.h.b16 %v473
      %v1577 = vunpack.c.l.b16 %v474
      %v1578 = vunpack.c.h.b16 %v474
      %v1579 = vunpack.c.l.b16 %v475
      %v1580 = vunpack.c.h.b16 %v475
      %v1581 = vunpack.c.l.b16 %v476
      %v1582 = vunpack.c.h.b16 %v476
      %v1583 = vunpack.c.l.b16 %v477
      %v1584 = vunpack.c.h.b16 %v477
      %v1585 = vunpack.c.l.b16 %v478
      %v1586 = vunpack.c.h.b16 %v478
      %v1587 = vunpack.c.l.b16 %v479
      %v1588 = vunpack.c.h.b16 %v479
      %v1589 = vunpack.c.l.b16 %v480
      %v1590 = vunpack.c.h.b16 %v480
      %v1591 = vunpack.c.l.b16 %v481
      %v1592 = vunpack.c.h.b16 %v481
      %v1593 = vunpack.c.l.b16 %v482
      %v1594 = vunpack.c.h.b16 %v482
      %v1595 = vunpack.c.l.b16 %v483
      %v1596 = vunpack.c.h.b16 %v483
      %v1597 = vunpack.c.l.b16 %v484
      %v1598 = vunpack.c.h.b16 %v484
      %v1599 = vunpack.c.l.b16 %v485
      %v1600 = vunpack.c.h.b16 %v485
      %v1601 = vunpack.c.l.b16 %v486
      %v1602 = vunpack.c.h.b16 %v486
      %v1603 = vunpack.c.l.b16 %v487
      %v1604 = vunpack.c.h.b16 %v487
      %v1605 = vunpack.c.l.b16 %v488
      %v1606 = vunpack.c.h.b16 %v488
      %v1607 = vunpack.c.l.b16 %v489
      %v1608 = vunpack.c.h.b16 %v489
      %v1609 = vunpack.c.l.b16 %v490
      %v1610 = vunpack.c.h.b16 %v490
      %v1611 = vunpack.c.l.b16 %v491
      %v1612 = vunpack.c.h.b16 %v491
      %v1613 = vunpack.c.l.b16 %v492
      %v1614 = vunpack.c.h.b16 %v492
      %v1615 = vunpack.c.l.b16 %v493
      %v1616 = vunpack.c.h.b16 %v493
      %v1617 = vunpack.c.l.b16 %v494
      %v1618 = vunpack.c.h.b16 %v494
      %v1619 = vunpack.c.l.b16 %v495
      %v1620 = vunpack.c.h.b16 %v495
      %v1621 = vunpack.c.l.b16 %v496
      %v1622 = vunpack.c.h.b16 %v496
      %v1623 = vunpack.c.l.b16 %v497
      %v1624 = vunpack.c.h.b16 %v497
      %v1625 = vunpack.c.l.b16 %v498
      %v1626 = vunpack.c.h.b16 %v498
      %v1627 = vunpack.c.l.b16 %v499
      %v1628 = vunpack.c.h.b16 %v499
      %v1629 = vunpack.c.l.b16 %v500
      %v1630 = vunpack.c.h.b16 %v500
      %v1631 = vunpack.c.l.b16 %v501
      %v1632 = vunpack.c.h.b16 %v501
      %v1633 = vunpack.c.l.b16 %v502
      %v1634 = vunpack.c.h.b16 %v502
      %v1635 = vunpack.c.l.b16 %v503
      %v1636 = vunpack.c.h.b16 %v503
      %v1637 = vunpack.c.l.b16 %v504
      %v1638 = vunpack.c.h.b16 %v504
      %v1639 = vunpack.c.l.b16 %v505
      %v1640 = vunpack.c.h.b16 %v505
      %v1641 = vunpack.c.l.b16 %v506
      %v1642 = vunpack.c.h.b16 %v506
      %v1643 = vunpack.c.l.b16 %v507
      %v1644 = vunpack.c.h.b16 %v507
      %v1645 = vunpack.c.l.b16 %v508
      %v1646 = vunpack.c.h.b16 %v508
      %v1647 = vunpack.c.l.b16 %v509
      %v1648 = vunpack.c.h.b16 %v509
      %v1649 = vunpack.c.l.b16 %v510
      %v1650 = vunpack.c.h.b16 %v510
      %v1651 = vunpack.c.l.b16 %v511
      %v1652 = vunpack.c.h.b16 %v511
      %v1653 = vunpack.c.l.b16 %v512
      %v1654 = vunpack.c.h.b16 %v512
      %v1655 = vunpack.c.l.b16 %v513
      %v1656 = vunpack.c.h.b16 %v513
      %v1657 = vunpack.c.l.b16 %v514
      %v1658 = vunpack.c.h.b16 %v514
      %v1659 = vunpack.c.l.b16 %v515
      %v1660 = vunpack.c.h.b16 %v515
      %v1661 = vunpack.c.l.b16 %v516
      %v1662 = vunpack.c.h.b16 %v516
      %v1663 = vunpack.c.l.b16 %v517
      %v1664 = vunpack.c.h.b16 %v517
      %v1665 = vunpack.c.l.b16 %v518
      %v1666 = vunpack.c.h.b16 %v518
      %v1667 = vunpack.c.l.b16 %v519
      %v1668 = vunpack.c.h.b16 %v519
      %v1669 = vunpack.c.l.b16 %v520
      %v1670 = vunpack.c.h.b16 %v520
      %v1671 = vunpack.c.l.b16 %v521
      %v1672 = vunpack.c.h.b16 %v521
      %v1673 = vunpack.c.l.b16 %v522
      %v1674 = vunpack.c.h.b16 %v522
      %v1675 = vunpack.c.l.b16 %v523
      %v1676 = vunpack.c.h.b16 %v523
      %v1677 = vunpack.c.l.b16 %v524
      %v1678 = vunpack.c.h.b16 %v524
      %v1679 = vunpack.c.l.b16 %v525
      %v1680 = vunpack.c.h.b16 %v525
      %v1681 = vunpack.c.l.b16 %v526
      %v1682 = vunpack.c.h.b16 %v526
      %v1683 = vunpack.c.l.b16 %v527
      %v1684 = vunpack.c.h.b16 %v527
      %v1685 = vunpack.c.l.b16 %v528
      %v1686 = vunpack.c.h.b16 %v528
      %v1687 = vunpack.c.l.b16 %v529
      %v1688 = vunpack.c.h.b16 %v529
      %v1689 = vunpack.c.l.b16 %v530
      %v1690 = vunpack.c.h.b16 %v530
      %v1691 = vunpack.c.l.b16 %v531
      %v1692 = vunpack.c.h.b16 %v531
      %v1693 = vunpack.c.l.b16 %v532
      %v1694 = vunpack.c.h.b16 %v532
      %v1695 = vunpack.c.l.b16 %v533
      %v1696 = vunpack.c.h.b16 %v533
      %v1697 = vunpack.c.l.b16 %v534
      %v1698 = vunpack.c.h.b16 %v534
      %v1699 = vunpack.c.l.b16 %v535
      %v1700 = vunpack.c.h.b16 %v535
      %v1701 = vunpack.c.l.b16 %v536
      %v1702 = vunpack.c.h.b16 %v536
      %v1703 = vunpack.c.l.b16 %v537
      %v1704 = vunpack.c.h.b16 %v537
      %v1705 = vunpack.c.l.b16 %v538
      %v1706 = vunpack.c.h.b16 %v538
      %v1707 = vunpack.c.l.b16 %v539
      %v1708 = vunpack.c.h.b16 %v539
      %v1709 = vunpack.c.l.b16 %v540
      %v1710 = vunpack.c.h.b16 %v540
      %v1711 = vunpack.c.l.b16 %v541
      %v1712 = vunpack.c.h.b16 %v541
      %v1713 = vunpack.c.l.b16 %v542
      %v1714 = vunpack.c.h.b16 %v542
      %v1715 = vunpack.c.l.b16 %v543
      %v1716 = vunpack.c.h.b16 %v543
      %v1717 = vunpack.c.l.b16 %v544
      %v1718 = vunpack.c.h.b16 %v544
      %v1719 = vunpack.c.l.b16 %v545
      %v1720 = vunpack.c.h.b16 %v545
      %v1721 = vunpack.c.l.b16 %v546
      %v1722 = vunpack.c.h.b16 %v546
      %v1723 = vunpack.c.l.b16 %v547
      %v1724 = vunpack.c.h.b16 %v547
      %v1725 = vunpack.c.l.b16 %v548
      %v1726 = vunpack.c.h.b16 %v548
      %v1727 = vunpack.c.l.b16 %v549
      %v1728 = vunpack.c.h.b16 %v549
      %v1729 = vunpack.c.l.b16 %v550
      %v1730 = vunpack.c.h.b16 %v550
      %v1731 = vunpack.c.l.b16 %v551
      %v1732 = vunpack.c.h.b16 %v551
      %v1733 = vunpack.c.l.b16 %v552
      %v1734 = vunpack.c.h.b16 %v552
      %v1735 = vunpack.c.l.b16 %v553
      %v1736 = vunpack.c.h.b16 %v553
      %v1737 = vunpack.c.l.b16 %v554
      %v1738 = vunpack.c.h.b16 %v554
      %v1739 = vunpack.c.l.b16 %v555
      %v1740 = vunpack.c.h.b16 %v555
      %v1741 = vunpack.c.l.b16 %v556
      %v1742 = vunpack.c.h.b16 %v556
      %v1743 = vunpack.c.l.b16 %v557
      %v1744 = vunpack.c.h.b16 %v557
      %v1745 = vunpack.c.l.b16 %v558
      %v1746 = vunpack.c.h.b16 %v558
      %v1747 = vunpack.c.l.b16 %v559
      %v1748 = vunpack.c.h.b16 %v559
      %v1749 = vunpack.c.l.b16 %v560
      %v1750 = vunpack.c.h.b16 %v560
      %v1751 = vunpack.c.l.b16 %v561
      %v1752 = vunpack.c.h.b16 %v561
      %v1753 = vunpack.c.l.b16 %v562
      %v1754 = vunpack.c.h.b16 %v562
      %v1755 = vunpack.c.l.b16 %v563
      %v1756 = vunpack.c.h.b16 %v563
      %v1757 = vunpack.c.l.b16 %v564
      %v1758 = vunpack.c.h.b16 %v564
      %v1759 = vunpack.c.l.b16 %v565
      %v1760 = vunpack.c.h.b16 %v565
      %v1761 = vunpack.c.l.b16 %v566
      %v1762 = vunpack.c.h.b16 %v566
      %v1763 = vunpack.c.l.b16 %v567
      %v1764 = vunpack.c.h.b16 %v567
      %v1765 = vunpack.c.l.b16 %v568
      %v1766 = vunpack.c.h.b16 %v568
      %v1767 = vunpack.c.l.b16 %v569
      %v1768 = vunpack.c.h.b16 %v569
      %v1769 = vunpack.c.l.b16 %v570
      %v1770 = vunpack.c.h.b16 %v570
      %v1771 = vunpack.c.l.b16 %v571
      %v1772 = vunpack.c.h.b16 %v571
      %v1773 = vunpack.c.l.b16 %v572
      %v1774 = vunpack.c.h.b16 %v572
      %v1775 = vunpack.c.l.b16 %v573
      %v1776 = vunpack.c.h.b16 %v573
      %v1777 = vunpack.c.l.b16 %v574
      %v1778 = vunpack.c.h.b16 %v574
      %v1779 = vunpack.c.l.b16 %v575
      %v1780 = vunpack.c.h.b16 %v575
      %v1781 = vunpack.c.l.b16 %v576
      %v1782 = vunpack.c.h.b16 %v576
      %v1783 = vunpack.c.l.b16 %v577
      %v1784 = vunpack.c.h.b16 %v577
      %v1785 = vunpack.c.l.b16 %v578
      %v1786 = vunpack.c.h.b16 %v578
      %v1787 = vunpack.c.l.b16 %v579
      %v1788 = vunpack.c.h.b16 %v579
      %v1789 = vunpack.c.l.b16 %v580
      %v1790 = vunpack.c.h.b16 %v580
      %v1791 = vunpack.c.l.b16 %v581
      %v1792 = vunpack.c.h.b16 %v581
      %v1793 = vunpack.c.l.b16 %v582
      %v1794 = vunpack.c.h.b16 %v582
      %v1795 = vunpack.c.l.b16 %v583
      %v1796 = vunpack.c.h.b16 %v583
      %v1797 = vunpack.c.l.b16 %v584
      %v1798 = vunpack.c.h.b16 %v584
      %v1799 = vunpack.c.l.b16 %v585
      %v1800 = vunpack.c.h.b16 %v585
      %v1801 = vunpack.c.l.b16 %v586
      %v1802 = vunpack.c.h.b16 %v586
      %v1803 = vunpack.c.l.b16 %v587
      %v1804 = vunpack.c.h.b16 %v587
      %v1805 = vunpack.c.l.b16 %v588
      %v1806 = vunpack.c.h.b16 %v588
      %v1807 = vunpack.c.l.b16 %v589
      %v1808 = vunpack.c.h.b16 %v589
      %v1809 = vunpack.c.l.b16 %v590
      %v1810 = vunpack.c.h.b16 %v590
      %v1811 = vunpack.c.l.b16 %v591
      %v1812 = vunpack.c.h.b16 %v591
      %v1813 = vunpack.c.l.b16 %v592
      %v1814 = vunpack.c.h.b16 %v592
      %v1815 = vunpack.c.l.b16 %v593
      %v1816 = vunpack.c.h.b16 %v593
      %v1817 = vunpack.c.l.b16 %v594
      %v1818 = vunpack.c.h.b16 %v594
      %v1819 = vunpack.c.l.b16 %v595
      %v1820 = vunpack.c.h.b16 %v595
      %v1821 = vunpack.c.l.b16 %v596
      %v1822 = vunpack.c.h.b16 %v596
      %v1823 = vpack.c.b16 %v1043, %v1039
      %v1824 = vpack.c.b16 %v1044, %v1040
      %v1825 = vpack.c.b16 %v1045, %v1041
      %v1826 = vpack.c.b16 %v1046, %v1042
      %v1827 = vpack.c.b16 %v1051, %v1047
      %v1828 = vpack.c.b16 %v1052, %v1048
      %v1829 = vpack.c.b16 %v1053, %v1049
      %v1830 = vpack.c.b16 %v1054, %v1050
      %v1831 = vpack.c.b16 %v1059, %v1055
      %v1832 = vpack.c.b16 %v1060, %v1056
      %v1833 = vpack.c.b16 %v1061, %v1057
      %v1834 = vpack.c.b16 %v1062, %v1058
      %v1835 = vpack.c.b16 %v1067, %v1063
      %v1836 = vpack.c.b16 %v1068, %v1064
      %v1837 = vpack.c.b16 %v1069, %v1065
      %v1838 = vpack.c.b16 %v1070, %v1066
      %v1839 = vpack.c.b16 %v1075, %v1071
      %v1840 = vpack.c.b16 %v1076, %v1072
      %v1841 = vpack.c.b16 %v1077, %v1073
      %v1842 = vpack.c.b16 %v1078, %v1074
      %v1843 = vpack.c.b16 %v1083, %v1079
      %v1844 = vpack.c.b16 %v1084, %v1080
      %v1845 = vpack.c.b16 %v1085, %v1081
      %v1846 = vpack.c.b16 %v1086, %v1082
      %v1847 = vpack.c.b16 %v1091, %v1087
      %v1848 = vpack.c.b16 %v1092, %v1088
      %v1849 = vpack.c.b16 %v1093, %v1089
      %v1850 = vpack.c.b16 %v1094, %v1090
      %v1851 = vpack.c.b16 %v1099, %v1095
      %v1852 = vpack.c.b16 %v1100, %v1096
      %v1853 = vpack.c.b16 %v1101, %v1097
      %v1854 = vpack.c.b16 %v1102, %v1098
      %v1855 = vpack.c.b16 %v1107, %v1103
      %v1856 = vpack.c.b16 %v1108, %v1104
      %v1857 = vpack.c.b16 %v1109, %v1105
      %v1858 = vpack.c.b16 %v1110, %v1106
      %v1859 = vpack.c.b16 %v1115, %v1111
      %v1860 = vpack.c.b16 %v1116, %v1112
      %v1861 = vpack.c.b16 %v1117, %v1113
      %v1862 = vpack.c.b16 %v1118, %v1114
      %v1863 = vpack.c.b16 %v1123, %v1119
      %v1864 = vpack.c.b16 %v1124, %v1120
      %v1865 = vpack.c.b16 %v1125, %v1121
      %v1866 = vpack.c.b16 %v1126, %v1122
      %v1867 = vpack.c.b16 %v1131, %v1127
      %v1868 = vpack.c.b16 %v1132, %v1128
      %v1869 = vpack.c.b16 %v1133, %v1129
      %v1870 = vpack.c.b16 %v1134, %v1130
      %v1871 = vpack.c.b16 %v1139, %v1135
      %v1872 = vpack.c.b16 %v1140, %v1136
      %v1873 = vpack.c.b16 %v1141, %v1137
      %v1874 = vpack.c.b16 %v1142, %v1138
      %v1875 = vpack.c.b16 %v1147, %v1143
      %v1876 = vpack.c.b16 %v1148, %v1144
      %v1877 = vpack.c.b16 %v1149, %v1145
      %v1878 = vpack.c.b16 %v1150, %v1146
      %v1879 = vpack.c.b16 %v1155, %v1151
      %v1880 = vpack.c.b16 %v1156, %v1152
      %v1881 = vpack.c.b16 %v1157, %v1153
      %v1882 = vpack.c.b16 %v1158, %v1154
      %v1883 = vpack.c.b16 %v1163, %v1159
      %v1884 = vpack.c.b16 %v1164, %v1160
      %v1885 = vpack.c.b16 %v1165, %v1161
      %v1886 = vpack.c.b16 %v1166, %v1162
      %v1887 = vpack.c.b16 %v1171, %v1167
      %v1888 = vpack.c.b16 %v1172, %v1168
      %v1889 = vpack.c.b16 %v1173, %v1169
      %v1890 = vpack.c.b16 %v1174, %v1170
      %v1891 = vpack.c.b16 %v1179, %v1175
      %v1892 = vpack.c.b16 %v1180, %v1176
      %v1893 = vpack.c.b16 %v1181, %v1177
      %v1894 = vpack.c.b16 %v1182, %v1178
      %v1895 = vpack.c.b16 %v1187, %v1183
      %v1896 = vpack.c.b16 %v1188, %v1184
      %v1897 = vpack.c.b16 %v1189, %v1185
      %v1898 = vpack.c.b16 %v1190, %v1186
      %v1899 = vpack.c.b16 %v1195, %v1191
      %v1900 = vpack.c.b16 %v1196, %v1192
      %v1901 = vpack.c.b16 %v1197, %v1193
      %v1902 = vpack.c.b16 %v1198, %v1194
      %v1903 = vpack.c.b16 %v1203, %v1199
      %v1904 = vpack.c.b16 %v1204, %v1200
      %v1905 = vpack.c.b16 %v1205, %v1201
      %v1906 = vpack.c.b16 %v1206, %v1202
      %v1907 = vpack.c.b16 %v1211, %v1207
      %v1908 = vpack.c.b16 %v1212, %v1208
      %v1909 = vpack.c.b16 %v1213, %v1209
      %v1910 = vpack.c.b16 %v1214, %v1210
      %v1911 = vpack.c.b16 %v1219, %v1215
      %v1912 = vpack.c.b16 %v1220, %v1216
      %v1913 = vpack.c.b16 %v1221, %v1217
      %v1914 = vpack.c.b16 %v1222, %v1218
      %v1915 = vpack.c.b16 %v1227, %v1223
      %v1916 = vpack.c.b16 %v1228, %v1224
      %v1917 = vpack.c.b16 %v1229, %v1225
      %v1918 = vpack.c.b16 %v1230, %v1226
      %v1919 = vpack.c.b16 %v1235, %v1231
      %v1920 = vpack.c.b16 %v1236, %v1232
      %v1921 = vpack.c.b16 %v1237, %v1233
      %v1922 = vpack.c.b16 %v1238, %v1234
      %v1923 = vpack.c.b16 %v1243, %v1239
      %v1924 = vpack.c.b16 %v1244, %v1240
      %v1925 = vpack.c.b16 %v1245, %v1241
      %v1926 = vpack.c.b16 %v1246, %v1242
      %v1927 = vpack.c.b16 %v1251, %v1247
      %v1928 = vpack.c.b16 %v1252, %v1248
      %v1929 = vpack.c.b16 %v1253, %v1249
      %v1930 = vpack.c.b16 %v1254, %v1250
      %v1931 = vpack.c.b16 %v1259, %v1255
      %v1932 = vpack.c.b16 %v1260, %v1256
      %v1933 = vpack.c.b16 %v1261, %v1257
      %v1934 = vpack.c.b16 %v1262, %v1258
      %v1935 = vpack.c.b16 %v1267, %v1263
      %v1936 = vpack.c.b16 %v1268, %v1264
      %v1937 = vpack.c.b16 %v1269, %v1265
      %v1938 = vpack.c.b16 %v1270, %v1266
      %v1939 = vpack.c.b16 %v1275, %v1271
      %v1940 = vpack.c.b16 %v1276, %v1272
      %v1941 = vpack.c.b16 %v1277, %v1273
      %v1942 = vpack.c.b16 %v1278, %v1274
      %v1943 = vpack.c.b16 %v1283, %v1279
      %v1944 = vpack.c.b16 %v1284, %v1280
      %v1945 = vpack.c.b16 %v1285, %v1281
      %v1946 = vpack.c.b16 %v1286, %v1282
      %v1947 = vpack.c.b16 %v1291, %v1287
      %v1948 = vpack.c.b16 %v1292, %v1288
      %v1949 = vpack.c.b16 %v1293, %v1289
      %v1950 = vpack.c.b16 %v1294, %v1290
      %v1951 = vpack.c.b16 %v1299, %v1295
      %v1952 = vpack.c.b16 %v1300, %v1296
      %v1953 = vpack.c.b16 %v1301, %v1297
      %v1954 = vpack.c.b16 %v1302, %v1298
      %v1955 = vpack.c.b16 %v1307, %v1303
      %v1956 = vpack.c.b16 %v1308, %v1304
      %v1957 = vpack.c.b16 %v1309, %v1305
      %v1958 = vpack.c.b16 %v1310, %v1306
      %v1959 = vpack.c.b16 %v1315, %v1311
      %v1960 = vpack.c.b16 %v1316, %v1312
      %v1961 = vpack.c.b16 %v1317, %v1313
      %v1962 = vpack.c.b16 %v1318, %v1314
      %v1963 = vpack.c.b16 %v1323, %v1319
      %v1964 = vpack.c.b16 %v1324, %v1320
      %v1965 = vpack.c.b16 %v1325, %v1321
      %v1966 = vpack.c.b16 %v1326, %v1322
      %v1967 = vpack.c.b16 %v1331, %v1327
      %v1968 = vpack.c.b16 %v1332, %v1328
      %v1969 = vpack.c.b16 %v1333, %v1329
      %v1970 = vpack.c.b16 %v1334, %v1330
      %v1971 = vpack.c.b16 %v1339, %v1335
      %v1972 = vpack.c.b16 %v1340, %v1336
      %v1973 = vpack.c.b16 %v1341, %v1337
      %v1974 = vpack.c.b16 %v1342, %v1338
      %v1975 = vpack.c.b16 %v1347, %v1343
      %v1976 = vpack.c.b16 %v1348, %v1344
      %v1977 = vpack.c.b16 %v1349, %v1345
      %v1978 = vpack.c.b16 %v1350, %v1346
      %v1979 = vpack.c.b16 %v1355, %v1351
      %v1980 = vpack.c.b16 %v1356, %v1352
      %v1981 = vpack.c.b16 %v1357, %v1353
      %v1982 = vpack.c.b16 %v1358, %v1354
      %v1983 = vpack.c.b16 %v1363, %v1359
      %v1984 = vpack.c.b16 %v1364, %v1360
      %v1985 = vpack.c.b16 %v1365, %v1361
      %v1986 = vpack.c.b16 %v1366, %v1362
      %v1987 = vpack.c.b16 %v1371, %v1367
      %v1988 = vpack.c.b16 %v1372, %v1368
      %v1989 = vpack.c.b16 %v1373, %v1369
      %v1990 = vpack.c.b16 %v1374, %v1370
      %v1991 = vpack.c.b16 %v1379, %v1375
      %v1992 = vpack.c.b16 %v1380, %v1376
      %v1993 = vpack.c.b16 %v1381, %v1377
      %v1994 = vpack.c.b16 %v1382, %v1378
      %v1995 = vpack.c.b16 %v1387, %v1383
      %v1996 = vpack.c.b16 %v1388, %v1384
      %v1997 = vpack.c.b16 %v1389, %v1385
      %v1998 = vpack.c.b16 %v1390, %v1386
      %v1999 = vpack.c.b16 %v1395, %v1391
      %v2000 = vpack.c.b16 %v1396, %v1392
      %v2001 = vpack.c.b16 %v1397, %v1393
      %v2002 = vpack.c.b16 %v1398, %v1394
      %v2003 = vpack.c.b16 %v1403, %v1399
      %v2004 = vpack.c.b16 %v1404, %v1400
      %v2005 = vpack.c.b16 %v1405, %v1401
      %v2006 = vpack.c.b16 %v1406, %v1402
      %v2007 = vpack.c.b16 %v1411, %v1407
      %v2008 = vpack.c.b16 %v1412, %v1408
      %v2009 = vpack.c.b16 %v1413, %v1409
      %v2010 = vpack.c.b16 %v1414, %v1410
      %v2011 = vpack.c.b16 %v1419, %v1415
      %v2012 = vpack.c.b16 %v1420, %v1416
      %v2013 = vpack.c.b16 %v1421, %v1417
      %v2014 = vpack.c.b16 %v1422, %v1418
      %v2015 = vpack.c.b16 %v1427, %v1423
      %v2016 = vpack.c.b16 %v1428, %v1424
      %v2017 = vpack.c.b16 %v1429, %v1425
      %v2018 = vpack.c.b16 %v1430, %v1426
      %v2019 = vpack.c.b16 %v1435, %v1431
      %v2020 = vpack.c.b16 %v1436, %v1432
      %v2021 = vpack.c.b16 %v1437, %v1433
      %v2022 = vpack.c.b16 %v1438, %v1434
      %v2023 = vpack.c.b16 %v1443, %v1439
      %v2024 = vpack.c.b16 %v1444, %v1440
      %v2025 = vpack.c.b16 %v1445, %v1441
      %v2026 = vpack.c.b16 %v1446, %v1442
      %v2027 = vpack.c.b16 %v1451, %v1447
      %v2028 = vpack.c.b16 %v1452, %v1448
      %v2029 = vpack.c.b16 %v1453, %v1449
      %v2030 = vpack.c.b16 %v1454, %v1450
      %v2031 = vpack.c.b16 %v1459, %v1455
      %v2032 = vpack.c.b16 %v1460, %v1456
      %v2033 = vpack.c.b16 %v1461, %v1457
      %v2034 = vpack.c.b16 %v1462, %v1458
      %v2035 = vpack.c.b16 %v1467, %v1463
      %v2036 = vpack.c.b16 %v1468, %v1464
      %v2037 = vpack.c.b16 %v1469, %v1465
      %v2038 = vpack.c.b16 %v1470, %v1466
      %v2039 = vpack.c.b16 %v1475, %v1471
      %v2040 = vpack.c.b16 %v1476, %v1472
      %v2041 = vpack.c.b16 %v1477, %v1473
      %v2042 = vpack.c.b16 %v1478, %v1474
      %v2043 = vpack.c.b16 %v1483, %v1479
      %v2044 = vpack.c.b16 %v1484, %v1480
      %v2045 = vpack.c.b16 %v1485, %v1481
      %v2046 = vpack.c.b16 %v1486, %v1482
      %v2047 = vpack.c.b16 %v1491, %v1487
      %v2048 = vpack.c.b16 %v1492, %v1488
      %v2049 = vpack.c.b16 %v1493, %v1489
      %v2050 = vpack.c.b16 %v1494, %v1490
      %v2051 = vpack.c.b16 %v1499, %v1495
      %v2052 = vpack.c.b16 %v1500, %v1496
      %v2053 = vpack.c.b16 %v1501, %v1497
      %v2054 = vpack.c.b16 %v1502, %v1498
      %v2055 = vpack.c.b16 %v1507, %v1503
      %v2056 = vpack.c.b16 %v1508, %v1504
      %v2057 = vpack.c.b16 %v1509, %v1505
      %v2058 = vpack.c.b16 %v1510, %v1506
      %v2059 = vpack.c.b16 %v1515, %v1511
      %v2060 = vpack.c.b16 %v1516, %v1512
      %v2061 = vpack.c.b16 %v1517, %v1513
      %v2062 = vpack.c.b16 %v1518, %v1514
      %v2063 = vpack.c.b16 %v1523, %v1519
      %v2064 = vpack.c.b16 %v1524, %v1520
      %v2065 = vpack.c.b16 %v1525, %v1521
      %v2066 = vpack.c.b16 %v1526, %v1522
      %v2067 = vpack.c.b16 %v1531, %v1527
      %v2068 = vpack.c.b16 %v1532, %v1528
      %v2069 = vpack.c.b16 %v1533, %v1529
      %v2070 = vpack.c.b16 %v1534, %v1530
      %v2071 = vpack.c.b16 %v1539, %v1535
      %v2072 = vpack.c.b16 %v1540, %v1536
      %v2073 = vpack.c.b16 %v1541, %v1537
      %v2074 = vpack.c.b16 %v1542, %v1538
      %v2075 = vpack.c.b16 %v1547, %v1543
      %v2076 = vpack.c.b16 %v1548, %v1544
      %v2077 = vpack.c.b16 %v1549, %v1545
      %v2078 = vpack.c.b16 %v1550, %v1546
      %v2079 = vpack.c.b16 %v1555, %v1551
      %v2080 = vpack.c.b16 %v1556, %v1552
      %v2081 = vpack.c.b16 %v1557, %v1553
      %v2082 = vpack.c.b16 %v1558, %v1554
      %v2083 = vpack.c.b16 %v1563, %v1559
      %v2084 = vpack.c.b16 %v1564, %v1560
      %v2085 = vpack.c.b16 %v1565, %v1561
      %v2086 = vpack.c.b16 %v1566, %v1562
      %v2087 = vpack.c.b16 %v1571, %v1567
      %v2088 = vpack.c.b16 %v1572, %v1568
      %v2089 = vpack.c.b16 %v1573, %v1569
      %v2090 = vpack.c.b16 %v1574, %v1570
      %v2091 = vpack.c.b16 %v1579, %v1575
      %v2092 = vpack.c.b16 %v1580, %v1576
      %v2093 = vpack.c.b16 %v1581, %v1577
      %v2094 = vpack.c.b16 %v1582, %v1578
      %v2095 = vpack.c.b16 %v1587, %v1583
      %v2096 = vpack.c.b16 %v1588, %v1584
      %v2097 = vpack.c.b16 %v1589, %v1585
      %v2098 = vpack.c.b16 %v1590, %v1586
      %v2099 = vpack.c.b16 %v1595, %v1591
      %v2100 = vpack.c.b16 %v1596, %v1592
      %v2101 = vpack.c.b16 %v1597, %v1593
      %v2102 = vpack.c.b16 %v1598, %v1594
      %v2103 = vpack.c.b16 %v1603, %v1599
      %v2104 = vpack.c.b16 %v1604, %v1600
      %v2105 = vpack.c.b16 %v1605, %v1601
      %v2106 = vpack.c.b16 %v1606, %v1602
      %v2107 = vpack.c.b16 %v1611, %v1607
      %v2108 = vpack.c.b16 %v1612, %v1608
      %v2109 = vpack.c.b16 %v1613, %v1609
      %v2110 = vpack.c.b16 %v1614, %v1610
      %v2111 = vpack.c.b16 %v1619, %v1615
      %v2112 = vpack.c.b16 %v1620, %v1616
      %v2113 = vpack.c.b16 %v1621, %v1617
      %v2114 = vpack.c.b16 %v1622, %v1618
      %v2115 = vpack.c.b16 %v1627, %v1623
      %v2116 = vpack.c.b16 %v1628, %v1624
      %v2117 = vpack.c.b16 %v1629, %v1625
      %v2118 = vpack.c.b16 %v1630, %v1626
      %v2119 = vpack.c.b16 %v1635, %v1631
      %v2120 = vpack.c.b16 %v1636, %v1632
      %v2121 = vpack.c.b16 %v1637, %v1633
      %v2122 = vpack.c.b16 %v1638, %v1634
      %v2123 = vpack.c.b16 %v1643, %v1639
      %v2124 = vpack.c.b16 %v1644, %v1640
      %v2125 = vpack.c.b16 %v1645, %v1641
      %v2126 = vpack.c.b16 %v1646, %v1642
      %v2127 = vpack.c.b16 %v1651, %v1647
      %v2128 = vpack.c.b16 %v1652, %v1648
      %v2129 = vpack.c.b16 %v1653, %v1649
      %v2130 = vpack.c.b16 %v1654, %v1650
      %v2131 = vpack.c.b16 %v1659, %v1655
      %v2132 = vpack.c.b16 %v1660, %v1656
      %v2133 = vpack.c.b16 %v1661, %v1657
      %v2134 = vpack.c.b16 %v1662, %v1658
      %v2135 = vpack.c.b16 %v1667, %v1663
      %v2136 = vpack.c.b16 %v1668, %v1664
      %v2137 = vpack.c.b16 %v1669, %v1665
      %v2138 = vpack.c.b16 %v1670, %v1666
      %v2139 = vpack.c.b16 %v1675, %v1671
      %v2140 = vpack.c.b16 %v1676, %v1672
      %v2141 = vpack.c.b16 %v1677, %v1673
      %v2142 = vpack.c.b16 %v1678, %v1674
      %v2143 = vpack.c.b16 %v1683, %v1679
      %v2144 = vpack.c.b16 %v1684, %v1680
      %v2145 = vpack.c.b16 %v1685, %v1681
      %v2146 = vpack.c.b16 %v1686, %v1682
      %v2147 = vpack.c.b16 %v1691, %v1687
      %v2148 = vpack.c.b16 %v1692, %v1688
      %v2149 = vpack.c.b16 %v1693, %v1689
      %v2150 = vpack.c.b16 %v1694, %v1690
      %v2151 = vpack.c.b16 %v1699, %v1695
      %v2152 = vpack.c.b16 %v1700, %v1696
      %v2153 = vpack.c.b16 %v1701, %v1697
      %v2154 = vpack.c.b16 %v1702, %v1698
      %v2155 = vpack.c.b16 %v1707, %v1703
      %v2156 = vpack.c.b16 %v1708, %v1704
      %v2157 = vpack.c.b16 %v1709, %v1705
      %v2158 = vpack.c.b16 %v1710, %v1706
      %v2159 = vpack.c.b16 %v1715, %v1711
      %v2160 = vpack.c.b16 %v1716, %v1712
      %v2161 = vpack.c.b16 %v1717, %v1713
      %v2162 = vpack.c.b16 %v1718, %v1714
      %v2163 = vpack.c.b16 %v1723, %v1719
      %v2164 = vpack.c.b16 %v1724, %v1720
      %v2165 = vpack.c.b16 %v1725, %v1721
      %v2166 = vpack.c.b16 %v1726, %v1722
      %v2167 = vpack.c.b16 %v1731, %v1727
      %v2168 = vpack.c.b16 %v1732, %v1728
      %v2169 = vpack.c.b16 %v1733, %v1729
      %v2170 = vpack.c.b16 %v1734, %v1730
      %v2171 = vpack.c.b16 %v1739, %v1735
      %v2172 = vpack.c.b16 %v1740, %v1736
      %v2173 = vpack.c.b16 %v1741, %v1737
      %v2174 = vpack.c.b16 %v1742, %v1738
      %v2175 = vpack.c.b16 %v1747, %v1743
      %v2176 = vpack.c.b16 %v1748, %v1744
      %v2177 = vpack.c.b16 %v1749, %v1745
      %v2178 = vpack.c.b16 %v1750, %v1746
      %v2179 = vpack.c.b16 %v1755, %v1751
      %v2180 = vpack.c.b16 %v1756, %v1752
      %v2181 = vpack.c.b16 %v1757, %v1753
      %v2182 = vpack.c.b16 %v1758, %v1754
      %v2183 = vpack.c.b16 %v1763, %v1759
      %v2184 = vpack.c.b16 %v1764, %v1760
      %v2185 = vpack.c.b16 %v1765, %v1761
      %v2186 = vpack.c.b16 %v1766, %v1762
      %v2187 = vpack.c.b16 %v1771, %v1767
      %v2188 = vpack.c.b16 %v1772, %v1768
      %v2189 = vpack.c.b16 %v1773, %v1769
      %v2190 = vpack.c.b16 %v1774, %v1770
      %v2191 = vpack.c.b16 %v1779, %v1775
      %v2192 = vpack.c.b16 %v1780, %v1776
      %v2193 = vpack.c.b16 %v1781, %v1777
      %v2194 = vpack.c.b16 %v1782, %v1778
      %v2195 = vpack.c.b16 %v1787, %v1783
      %v2196 = vpack.c.b16 %v1788, %v1784
      %v2197 = vpack.c.b16 %v1789, %v1785
      %v2198 = vpack.c.b16 %v1790, %v1786
      %v2199 = vpack.c.b16 %v1795, %v1791
      %v2200 = vpack.c.b16 %v1796, %v1792
      %v2201 = vpack.c.b16 %v1797, %v1793
      %v2202 = vpack.c.b16 %v1798, %v1794
      %v2203 = vpack.c.b16 %v1803, %v1799
      %v2204 = vpack.c.b16 %v1804, %v1800
      %v2205 = vpack.c.b16 %v1805, %v1801
      %v2206 = vpack.c.b16 %v1806, %v1802
      %v2207 = vpack.c.b16 %v1811, %v1807
      %v2208 = vpack.c.b16 %v1812, %v1808
      %v2209 = vpack.c.b16 %v1813, %v1809
      %v2210 = vpack.c.b16 %v1814, %v1810
      %v2211 = vpack.c.b16 %v1819, %v1815
      %v2212 = vpack.c.b16 %v1820, %v1816
      %v2213 = vpack.c.b16 %v1821, %v1817
      %v2214 = vpack.c.b16 %v1822, %v1818
      %v2559 = vunpack.c.l.b16 %v597
      %v2560 = vunpack.c.l.b16 %v598
      %v2561 = vunpack.c.l.b16 %v599
      %v2562 = vunpack.c.l.b16 %v600
      %v2563 = vunpack.c.l.b16 %v601
      %v2564 = vunpack.c.l.b16 %v602
      %v2565 = vunpack.c.l.b16 %v603
      %v2566 = vunpack.c.l.b16 %v604
      %v2567 = vunpack.c.l.b16 %v605
      %v2568 = vunpack.c.l.b16 %v606
      %v2569 = vunpack.c.l.b16 %v607
      %v2570 = vunpack.c.l.b16 %v608
      %v2571 = vunpack.c.l.b16 %v609
      %v2572 = vunpack.c.l.b16 %v610
      %v2573 = vunpack.c.l.b16 %v611
      %v2574 = vunpack.c.l.b16 %v612
      %v2575 = vunpack.c.l.b16 %v613
      %v2576 = vunpack.c.l.b16 %v614
      %v2577 = vunpack.c.l.b16 %v615
      %v2578 = vunpack.c.l.b16 %v616
      %v2579 = vunpack.c.l.b16 %v617
      %v2580 = vunpack.c.l.b16 %v618
      %v2581 = vunpack.c.l.b16 %v619
      %v2582 = vunpack.c.l.b16 %v620
      %v2583 = vunpack.c.l.b16 %v621
      %v2584 = vunpack.c.l.b16 %v622
      %v2585 = vunpack.c.l.b16 %v623
      %v2586 = vunpack.c.l.b16 %v624
      %v2587 = vunpack.c.l.b16 %v625
      %v2588 = vunpack.c.l.b16 %v626
      %v2589 = vunpack.c.l.b16 %v627
      %v2590 = vunpack.c.l.b16 %v628
      %v2591 = vunpack.c.l.b16 %v629
      %v2592 = vunpack.c.l.b16 %v630
      %v2593 = vunpack.c.l.b16 %v631
      %v2594 = vunpack.c.l.b16 %v632
      %v2595 = vunpack.c.l.b16 %v633
      %v2596 = vunpack.c.l.b16 %v634
      %v2597 = vunpack.c.l.b16 %v635
      %v2598 = vunpack.c.l.b16 %v636
      %v2599 = vunpack.c.l.b16 %v637
      %v2600 = vunpack.c.l.b16 %v638
      %v2601 = vunpack.c.l.b16 %v639
      %v2602 = vunpack.c.l.b16 %v640
      %v2603 = vunpack.c.l.b16 %v641
      %v2604 = vunpack.c.l.b16 %v642
      %v2605 = vunpack.c.l.b16 %v643
      %v2606 = vunpack.c.l.b16 %v644
      %v2607 = vunpack.c.l.b16 %v645
      %v2608 = vunpack.c.l.b16 %v646
      %v2609 = vpack.c.b16 %v2560, %v2559
      %v2610 = vpack.c.b16 %v2562, %v2561
      %v2611 = vpack.c.b16 %v2564, %v2563
      %v2612 = vpack.c.b16 %v2566, %v2565
      %v2613 = vpack.c.b16 %v2568, %v2567
      %v2614 = vpack.c.b16 %v2570, %v2569
      %v2615 = vpack.c.b16 %v2572, %v2571
      %v2616 = vpack.c.b16 %v2574, %v2573
      %v2617 = vpack.c.b16 %v2576, %v2575
      %v2618 = vpack.c.b16 %v2578, %v2577
      %v2619 = vpack.c.b16 %v2580, %v2579
      %v2620 = vpack.c.b16 %v2582, %v2581
      %v2621 = vpack.c.b16 %v2584, %v2583
      %v2622 = vpack.c.b16 %v2586, %v2585
      %v2623 = vpack.c.b16 %v2588, %v2587
      %v2624 = vpack.c.b16 %v2590, %v2589
      %v2625 = vpack.c.b16 %v2592, %v2591
      %v2626 = vpack.c.b16 %v2594, %v2593
      %v2627 = vpack.c.b16 %v2596, %v2595
      %v2628 = vpack.c.b16 %v2598, %v2597
      %v2629 = vpack.c.b16 %v2600, %v2599
      %v2630 = vpack.c.b16 %v2602, %v2601
      %v2631 = vpack.c.b16 %v2604, %v2603
      %v2632 = vpack.c.b16 %v2606, %v2605
      %v2633 = vpack.c.b16 %v2608, %v2607
      %vm2659 = vcmask 130048
      %v2661 = vsel %vm2659, %v1826, 0
      %v2664 = vsel %vm2659, %v1830, 0
      %v2667 = vsel %vm2659, %v1834, 0
      %v2670 = vsel %vm2659, %v1838, 0
      %v2673 = vsel %vm2659, %v1842, 0
      %v2676 = vsel %vm2659, %v1846, 0
      %v2679 = vsel %vm2659, %v1850, 0
      %v2682 = vsel %vm2659, %v1854, 0
      %v2685 = vsel %vm2659, %v1858, 0
      %v2688 = vsel %vm2659, %v1862, 0
      %v2691 = vsel %vm2659, %v1866, 0
      %v2694 = vsel %vm2659, %v1870, 0
      %v2697 = vsel %vm2659, %v1874, 0
      %v2700 = vsel %vm2659, %v1878, 0
      %v2703 = vsel %vm2659, %v1882, 0
      %v2706 = vsel %vm2659, %v1886, 0
      %v2709 = vsel %vm2659, %v1890, 0
      %v2712 = vsel %vm2659, %v1894, 0
      %v2715 = vsel %vm2659, %v1898, 0
      %v2718 = vsel %vm2659, %v1902, 0
      %v2721 = vsel %vm2659, %v1906, 0
      %v2724 = vsel %vm2659, %v1910, 0
      %v2727 = vsel %vm2659, %v1914, 0
      %v2730 = vsel %vm2659, %v1918, 0
      %v2733 = vsel %vm2659, %v1922, 0
      %v2736 = vsel %vm2659, %v1926, 0
      %v2739 = vsel %vm2659, %v1930, 0
      %v2742 = vsel %vm2659, %v1934, 0
      %v2745 = vsel %vm2659, %v1938, 0
      %v2748 = vsel %vm2659, %v1942, 0
      %v2751 = vsel %vm2659, %v1946, 0
      %v2754 = vsel %vm2659, %v1950, 0
      %v2757 = vsel %vm2659, %v1954, 0
      %v2760 = vsel %vm2659, %v1958, 0
      %v2763 = vsel %vm2659, %v1962, 0
      %v2766 = vsel %vm2659, %v1966, 0
      %v2769 = vsel %vm2659, %v1970, 0
      %v2772 = vsel %vm2659, %v1974, 0
      %v2775 = vsel %vm2659, %v1978, 0
      %v2778 = vsel %vm2659, %v1982, 0
      %v2781 = vsel %vm2659, %v1986, 0
      %v2784 = vsel %vm2659, %v1990, 0
      %v2787 = vsel %vm2659, %v1994, 0
      %v2790 = vsel %vm2659, %v1998, 0
      %v2793 = vsel %vm2659, %v2002, 0
      %v2796 = vsel %vm2659, %v2006, 0
      %v2799 = vsel %vm2659, %v2010, 0
      %v2802 = vsel %vm2659, %v2014, 0
      %v2805 = vsel %vm2659, %v2018, 0
      %v2808 = vsel %vm2659, %v2022, 0
      %v2811 = vsel %vm2659, %v2026, 0
      %v2814 = vsel %vm2659, %v2030, 0
      %v2817 = vsel %vm2659, %v2034, 0
      %v2820 = vsel %vm2659, %v2038, 0
      %v2823 = vsel %vm2659, %v2042, 0
      %v2826 = vsel %vm2659, %v2046, 0
      %v2829 = vsel %vm2659, %v2050, 0
      %v2832 = vsel %vm2659, %v2054, 0
      %v2835 = vsel %vm2659, %v2058, 0
      %v2838 = vsel %vm2659, %v2062, 0
      %v2841 = vsel %vm2659, %v2066, 0
      %v2844 = vsel %vm2659, %v2070, 0
      %v2847 = vsel %vm2659, %v2074, 0
      %v2850 = vsel %vm2659, %v2078, 0
      %v2853 = vsel %vm2659, %v2082, 0
      %v2856 = vsel %vm2659, %v2086, 0
      %v2859 = vsel %vm2659, %v2090, 0
      %v2862 = vsel %vm2659, %v2094, 0
      %v2865 = vsel %vm2659, %v2098, 0
      %v2868 = vsel %vm2659, %v2102, 0
      %v2871 = vsel %vm2659, %v2106, 0
      %v2874 = vsel %vm2659, %v2110, 0
      %v2877 = vsel %vm2659, %v2114, 0
      %v2880 = vsel %vm2659, %v2118, 0
      %v2883 = vsel %vm2659, %v2122, 0
      %v2886 = vsel %vm2659, %v2126, 0
      %v2889 = vsel %vm2659, %v2130, 0
      %v2892 = vsel %vm2659, %v2134, 0
      %v2895 = vsel %vm2659, %v2138, 0
      %v2898 = vsel %vm2659, %v2142, 0
      %v2901 = vsel %vm2659, %v2146, 0
      %v2904 = vsel %vm2659, %v2150, 0
      %v2907 = vsel %vm2659, %v2154, 0
      %v2910 = vsel %vm2659, %v2158, 0
      %v2913 = vsel %vm2659, %v2162, 0
      %v2916 = vsel %vm2659, %v2166, 0
      %v2919 = vsel %vm2659, %v2170, 0
      %v2922 = vsel %vm2659, %v2174, 0
      %v2925 = vsel %vm2659, %v2178, 0
      %v2928 = vsel %vm2659, %v2182, 0
      %v2931 = vsel %vm2659, %v2186, 0
      %v2934 = vsel %vm2659, %v2190, 0
      %v2937 = vsel %vm2659, %v2194, 0
      %v2940 = vsel %vm2659, %v2198, 0
      %v2943 = vsel %vm2659, %v2202, 0
      %v2946 = vsel %vm2659, %v2206, 0
      %v2949 = vsel %vm2659, %v2210, 0
      %v2952 = vsel %vm2659, %v2214, 0
      %2954 = vmatprep.subr.bf16.mxu0 0
      %2955 = vmatpush1.bf16.msra.mxu0 %v2609
      %2956 = vmatprep.subr.bf16.mxu0 0
      %2957 = vmatpush1.bf16.msra.mxu0 %v2610
      %2958 = vmatprep.subr.bf16.mxu0 0
      %2959 = vmatpush1.bf16.msra.mxu0 %v2611
      %2960 = vmatprep.subr.bf16.mxu0 0
      %2961 = vmatpush1.bf16.msra.mxu0 %v2612
      %2962 = vmatprep.subr.bf16.mxu0 0
      %2963 = vmatpush1.bf16.msra.mxu0 %v2613
      %2964 = vmatprep.subr.bf16.mxu0 0
      %2965 = vmatpush1.bf16.msra.mxu0 %v2614
      %2966 = vmatprep.subr.bf16.mxu0 0
      %2967 = vmatpush1.bf16.msra.mxu0 %v2615
      %2968 = vmatprep.subr.bf16.mxu0 0
      %2969 = vmatpush1.bf16.msra.mxu0 %v2616
      %2970 = vmatprep.subr.bf16.mxu0 0
      %2971 = vmatpush1.bf16.msra.mxu0 %v2617
      %2972 = vmatprep.subr.bf16.mxu0 0
      %2973 = vmatpush1.bf16.msra.mxu0 %v2618
      %2974 = vmatprep.subr.bf16.mxu0 0
      %2975 = vmatpush1.bf16.msra.mxu0 %v2619
      %2976 = vmatprep.subr.bf16.mxu0 0
      %2977 = vmatpush1.bf16.msra.mxu0 %v2620
      %2978 = vmatprep.subr.bf16.mxu0 0
      %2979 = vmatpush1.bf16.msra.mxu0 %v2621
      %2980 = vmatprep.subr.bf16.mxu0 0
      %2981 = vmatpush1.bf16.msra.mxu0 %v2622
      %2982 = vmatprep.subr.bf16.mxu0 0
      %2983 = vmatpush1.bf16.msra.mxu0 %v2623
      %2984 = vmatprep.subr.bf16.mxu0 0
      %2985 = vmatpush1.bf16.msra.mxu0 %v2624
      %2986 = vmatprep.mubr.bf16.mxu0 %v1824
      %2987 = vmatmul.mubr.bf16.gmra.mrb[0].mxu0 %v1823
      %v2988 = vpop.f32.mrb[0].mxu0
      %v2989 = vadd.f32 0.0, %v2988
      %v2990 = vpop.f32.mrb[0].mxu0
      %v2991 = vpop.f32.mrb[0].mxu0
      %v2992 = vadd.f32 0.0, %v2991
      %v2993 = vpop.f32.mrb[0].mxu0
      %2994 = vmatprep.mubr.bf16.mxu0 %v1828
      %2995 = vmatmul.mubr.bf16.gmra.mrb[0].mxu0 %v1827
      %v2996 = vpop.f32.mrb[0].mxu0
      %v2997 = vadd.f32 0.0, %v2996
      %v2998 = vpop.f32.mrb[0].mxu0
      %v2999 = vpop.f32.mrb[0].mxu0
      %v3000 = vadd.f32 0.0, %v2999
      %v3001 = vpop.f32.mrb[0].mxu0
      %3002 = vmatprep.mubr.bf16.mxu0 %v1832
      %3003 = vmatmul.mubr.bf16.gmra.mrb[0].mxu0 %v1831
      %v3004 = vpop.f32.mrb[0].mxu0
      %v3005 = vadd.f32 0.0, %v3004
      %v3006 = vpop.f32.mrb[0].mxu0
      %v3007 = vpop.f32.mrb[0].mxu0
      %v3008 = vadd.f32 0.0, %v3007
      %v3009 = vpop.f32.mrb[0].mxu0
      %3010 = vmatprep.mubr.bf16.mxu0 %v1836
      %3011 = vmatmul.mubr.bf16.gmra.mrb[0].mxu0 %v1835
      %v3012 = vpop.f32.mrb[0].mxu0
      %v3013 = vadd.f32 0.0, %v3012
      %v3014 = vpop.f32.mrb[0].mxu0
      %v3015 = vpop.f32.mrb[0].mxu0
      %v3016 = vadd.f32 0.0, %v3015
      %v3017 = vpop.f32.mrb[0].mxu0
      %3018 = vmatprep.mubr.bf16.mxu0 %v1840
      %3019 = vmatmul.mubr.bf16.gmra.mrb[0].mxu0 %v1839
      %v3020 = vpop.f32.mrb[0].mxu0
      %v3021 = vadd.f32 0.0, %v3020
      %v3022 = vpop.f32.mrb[0].mxu0
      %v3023 = vpop.f32.mrb[0].mxu0
      %v3024 = vadd.f32 0.0, %v3023
      %v3025 = vpop.f32.mrb[0].mxu0
      %3026 = vmatprep.mubr.bf16.mxu0 %v1844
      %3027 = vmatmul.mubr.bf16.gmra.mrb[0].mxu0 %v1843
      %v3028 = vpop.f32.mrb[0].mxu0
      %v3029 = vadd.f32 0.0, %v3028
      %v3030 = vpop.f32.mrb[0].mxu0
      %v3031 = vpop.f32.mrb[0].mxu0
      %v3032 = vadd.f32 0.0, %v3031
      %v3033 = vpop.f32.mrb[0].mxu0
      %3034 = vmatprep.mubr.bf16.mxu0 %v1848
      %3035 = vmatmul.mubr.bf16.gmra.mrb[0].mxu0 %v1847
      %v3036 = vpop.f32.mrb[0].mxu0
      %v3037 = vadd.f32 0.0, %v3036
      %v3038 = vpop.f32.mrb[0].mxu0
      %v3039 = vpop.f32.mrb[0].mxu0
      %v3040 = vadd.f32 0.0, %v3039
      %v3041 = vpop.f32.mrb[0].mxu0
      %3042 = vmatprep.mubr.bf16.mxu0 %v1852
      %3043 = vmatmul.mubr.bf16.gmra.mrb[0].mxu0 %v1851
      %v3044 = vpop.f32.mrb[0].mxu0
      %v3045 = vadd.f32 0.0, %v3044
      %v3046 = vpop.f32.mrb[0].mxu0
      %v3047 = vpop.f32.mrb[0].mxu0
      %v3048 = vadd.f32 0.0, %v3047
      %v3049 = vpop.f32.mrb[0].mxu0
      %3050 = vmatprep.mubr.bf16.mxu0 %v1856
      %3051 = vmatmul.mubr.bf16.gmra.mrb[0].mxu0 %v1855
      %v3052 = vpop.f32.mrb[0].mxu0
      %v3053 = vadd.f32 0.0, %v3052
      %v3054 = vpop.f32.mrb[0].mxu0
      %v3055 = vpop.f32.mrb[0].mxu0
      %v3056 = vadd.f32 0.0, %v3055
      %v3057 = vpop.f32.mrb[0].mxu0
      %3058 = vmatprep.mubr.bf16.mxu0 %v1860
      %3059 = vmatmul.mubr.bf16.gmra.mrb[0].mxu0 %v1859
      %v3060 = vpop.f32.mrb[0].mxu0
      %v3061 = vadd.f32 0.0, %v3060
      %v3062 = vpop.f32.mrb[0].mxu0
      %v3063 = vpop.f32.mrb[0].mxu0
      %v3064 = vadd.f32 0.0, %v3063
      %v3065 = vpop.f32.mrb[0].mxu0
      %3066 = vmatprep.mubr.bf16.mxu0 %v1864
      %3067 = vmatmul.mubr.bf16.gmra.mrb[0].mxu0 %v1863
      %v3068 = vpop.f32.mrb[0].mxu0
      %v3069 = vadd.f32 0.0, %v3068
      %v3070 = vpop.f32.mrb[0].mxu0
      %v3071 = vpop.f32.mrb[0].mxu0
      %v3072 = vadd.f32 0.0, %v3071
      %v3073 = vpop.f32.mrb[0].mxu0
      %3074 = vmatprep.mubr.bf16.mxu0 %v1868
      %3075 = vmatmul.mubr.bf16.gmra.mrb[0].mxu0 %v1867
      %v3076 = vpop.f32.mrb[0].mxu0
      %v3077 = vadd.f32 0.0, %v3076
      %v3078 = vpop.f32.mrb[0].mxu0
      %v3079 = vpop.f32.mrb[0].mxu0
      %v3080 = vadd.f32 0.0, %v3079
      %v3081 = vpop.f32.mrb[0].mxu0
      %3082 = vmatprep.mubr.bf16.mxu0 %v1872
      %3083 = vmatmul.mubr.bf16.gmra.mrb[0].mxu0 %v1871
      %v3084 = vpop.f32.mrb[0].mxu0
      %v3085 = vadd.f32 0.0, %v3084
      %v3086 = vpop.f32.mrb[0].mxu0
      %v3087 = vpop.f32.mrb[0].mxu0
      %v3088 = vadd.f32 0.0, %v3087
      %v3089 = vpop.f32.mrb[0].mxu0
      %3090 = vmatprep.mubr.bf16.mxu0 %v1876
      %3091 = vmatmul.mubr.bf16.gmra.mrb[0].mxu0 %v1875
      %v3092 = vpop.f32.mrb[0].mxu0
      %v3093 = vadd.f32 0.0, %v3092
      %v3094 = vpop.f32.mrb[0].mxu0
      %v3095 = vpop.f32.mrb[0].mxu0
      %v3096 = vadd.f32 0.0, %v3095
      %v3097 = vpop.f32.mrb[0].mxu0
      %3098 = vmatprep.mubr.bf16.mxu0 %v1880
      %3099 = vmatmul.mubr.bf16.gmra.mrb[0].mxu0 %v1879
      %v3100 = vpop.f32.mrb[0].mxu0
      %v3101 = vadd.f32 0.0, %v3100
      %v3102 = vpop.f32.mrb[0].mxu0
      %v3103 = vpop.f32.mrb[0].mxu0
      %v3104 = vadd.f32 0.0, %v3103
      %v3105 = vpop.f32.mrb[0].mxu0
      %3106 = vmatprep.mubr.bf16.mxu0 %v1884
      %3107 = vmatmul.mubr.bf16.gmra.mrb[0].mxu0 %v1883
      %v3108 = vpop.f32.mrb[0].mxu0
      %v3109 = vadd.f32 0.0, %v3108
      %v3110 = vpop.f32.mrb[0].mxu0
      %v3111 = vpop.f32.mrb[0].mxu0
      %v3112 = vadd.f32 0.0, %v3111
      %v3113 = vpop.f32.mrb[0].mxu0
      %3114 = vmatprep.mubr.bf16.mxu0 %v1888
      %3115 = vmatmul.mubr.bf16.gmra.mrb[0].mxu0 %v1887
      %v3116 = vpop.f32.mrb[0].mxu0
      %v3117 = vadd.f32 0.0, %v3116
      %v3118 = vpop.f32.mrb[0].mxu0
      %v3119 = vpop.f32.mrb[0].mxu0
      %v3120 = vadd.f32 0.0, %v3119
      %v3121 = vpop.f32.mrb[0].mxu0
      %3122 = vmatprep.mubr.bf16.mxu0 %v1892
      %3123 = vmatmul.mubr.bf16.gmra.mrb[0].mxu0 %v1891
      %v3124 = vpop.f32.mrb[0].mxu0
      %v3125 = vadd.f32 0.0, %v3124
      %v3126 = vpop.f32.mrb[0].mxu0
      %v3127 = vpop.f32.mrb[0].mxu0
      %v3128 = vadd.f32 0.0, %v3127
      %v3129 = vpop.f32.mrb[0].mxu0
      %3130 = vmatprep.mubr.bf16.mxu0 %v1896
      %3131 = vmatmul.mubr.bf16.gmra.mrb[0].mxu0 %v1895
      %v3132 = vpop.f32.mrb[0].mxu0
      %v3133 = vadd.f32 0.0, %v3132
      %v3134 = vpop.f32.mrb[0].mxu0
      %v3135 = vpop.f32.mrb[0].mxu0
      %v3136 = vadd.f32 0.0, %v3135
      %v3137 = vpop.f32.mrb[0].mxu0
      %3138 = vmatprep.mubr.bf16.mxu0 %v1900
      %3139 = vmatmul.mubr.bf16.gmra.mrb[0].mxu0 %v1899
      %v3140 = vpop.f32.mrb[0].mxu0
      %v3141 = vadd.f32 0.0, %v3140
      %v3142 = vpop.f32.mrb[0].mxu0
      %v3143 = vpop.f32.mrb[0].mxu0
      %v3144 = vadd.f32 0.0, %v3143
      %v3145 = vpop.f32.mrb[0].mxu0
      %3146 = vmatprep.mubr.bf16.mxu0 %v1904
      %3147 = vmatmul.mubr.bf16.gmra.mrb[0].mxu0 %v1903
      %v3148 = vpop.f32.mrb[0].mxu0
      %v3149 = vadd.f32 0.0, %v3148
      %v3150 = vpop.f32.mrb[0].mxu0
      %v3151 = vpop.f32.mrb[0].mxu0
      %v3152 = vadd.f32 0.0, %v3151
      %v3153 = vpop.f32.mrb[0].mxu0
      %3154 = vmatprep.mubr.bf16.mxu0 %v1908
      %3155 = vmatmul.mubr.bf16.gmra.mrb[0].mxu0 %v1907
      %v3156 = vpop.f32.mrb[0].mxu0
      %v3157 = vadd.f32 0.0, %v3156
      %v3158 = vpop.f32.mrb[0].mxu0
      %v3159 = vpop.f32.mrb[0].mxu0
      %v3160 = vadd.f32 0.0, %v3159
      %v3161 = vpop.f32.mrb[0].mxu0
      %3162 = vmatprep.mubr.bf16.mxu0 %v1912
      %3163 = vmatmul.mubr.bf16.gmra.mrb[0].mxu0 %v1911
      %v3164 = vpop.f32.mrb[0].mxu0
      %v3165 = vadd.f32 0.0, %v3164
      %v3166 = vpop.f32.mrb[0].mxu0
      %v3167 = vpop.f32.mrb[0].mxu0
      %v3168 = vadd.f32 0.0, %v3167
      %v3169 = vpop.f32.mrb[0].mxu0
      %3170 = vmatprep.mubr.bf16.mxu0 %v1916
      %3171 = vmatmul.mubr.bf16.gmra.mrb[0].mxu0 %v1915
      %v3172 = vpop.f32.mrb[0].mxu0
      %v3173 = vadd.f32 0.0, %v3172
      %v3174 = vpop.f32.mrb[0].mxu0
      %v3175 = vpop.f32.mrb[0].mxu0
      %v3176 = vadd.f32 0.0, %v3175
      %v3177 = vpop.f32.mrb[0].mxu0
      %3178 = vmatprep.mubr.bf16.mxu0 %v1920
      %3179 = vmatmul.mubr.bf16.gmra.mrb[0].mxu0 %v1919
      %v3180 = vpop.f32.mrb[0].mxu0
      %v3181 = vadd.f32 0.0, %v3180
      %v3182 = vpop.f32.mrb[0].mxu0
      %v3183 = vpop.f32.mrb[0].mxu0
      %v3184 = vadd.f32 0.0, %v3183
      %v3185 = vpop.f32.mrb[0].mxu0
      %3186 = vmatprep.mubr.bf16.mxu0 %v1924
      %3187 = vmatmul.mubr.bf16.gmra.mrb[0].mxu0 %v1923
      %v3188 = vpop.f32.mrb[0].mxu0
      %v3189 = vadd.f32 0.0, %v3188
      %v3190 = vpop.f32.mrb[0].mxu0
      %v3191 = vpop.f32.mrb[0].mxu0
      %v3192 = vadd.f32 0.0, %v3191
      %v3193 = vpop.f32.mrb[0].mxu0
      %3194 = vmatprep.mubr.bf16.mxu0 %v1928
      %3195 = vmatmul.mubr.bf16.gmra.mrb[0].mxu0 %v1927
      %v3196 = vpop.f32.mrb[0].mxu0
      %v3197 = vadd.f32 0.0, %v3196
      %v3198 = vpop.f32.mrb[0].mxu0
      %v3199 = vpop.f32.mrb[0].mxu0
      %v3200 = vadd.f32 0.0, %v3199
      %v3201 = vpop.f32.mrb[0].mxu0
      %3202 = vmatprep.mubr.bf16.mxu0 %v1932
      %3203 = vmatmul.mubr.bf16.gmra.mrb[0].mxu0 %v1931
      %v3204 = vpop.f32.mrb[0].mxu0
      %v3205 = vadd.f32 0.0, %v3204
      %v3206 = vpop.f32.mrb[0].mxu0
      %v3207 = vpop.f32.mrb[0].mxu0
      %v3208 = vadd.f32 0.0, %v3207
      %v3209 = vpop.f32.mrb[0].mxu0
      %3210 = vmatprep.mubr.bf16.mxu0 %v1936
      %3211 = vmatmul.mubr.bf16.gmra.mrb[0].mxu0 %v1935
      %v3212 = vpop.f32.mrb[0].mxu0
      %v3213 = vadd.f32 0.0, %v3212
      %v3214 = vpop.f32.mrb[0].mxu0
      %v3215 = vpop.f32.mrb[0].mxu0
      %v3216 = vadd.f32 0.0, %v3215
      %v3217 = vpop.f32.mrb[0].mxu0
      %3218 = vmatprep.mubr.bf16.mxu0 %v1940
      %3219 = vmatmul.mubr.bf16.gmra.mrb[0].mxu0 %v1939
      %v3220 = vpop.f32.mrb[0].mxu0
      %v3221 = vadd.f32 0.0, %v3220
      %v3222 = vpop.f32.mrb[0].mxu0
      %v3223 = vpop.f32.mrb[0].mxu0
      %v3224 = vadd.f32 0.0, %v3223
      %v3225 = vpop.f32.mrb[0].mxu0
      %3226 = vmatprep.mubr.bf16.mxu0 %v1944
      %3227 = vmatmul.mubr.bf16.gmra.mrb[0].mxu0 %v1943
      %v3228 = vpop.f32.mrb[0].mxu0
      %v3229 = vadd.f32 0.0, %v3228
      %v3230 = vpop.f32.mrb[0].mxu0
      %v3231 = vpop.f32.mrb[0].mxu0
      %v3232 = vadd.f32 0.0, %v3231
      %v3233 = vpop.f32.mrb[0].mxu0
      %3234 = vmatprep.mubr.bf16.mxu0 %v1948
      %3235 = vmatmul.mubr.bf16.gmra.mrb[0].mxu0 %v1947
      %v3236 = vpop.f32.mrb[0].mxu0
      %v3237 = vadd.f32 0.0, %v3236
      %v3238 = vpop.f32.mrb[0].mxu0
      %v3239 = vpop.f32.mrb[0].mxu0
      %v3240 = vadd.f32 0.0, %v3239
      %v3241 = vpop.f32.mrb[0].mxu0
      %3242 = vmatprep.mubr.bf16.mxu0 %v1952
      %3243 = vmatmul.mubr.bf16.gmra.mrb[0].mxu0 %v1951
      %v3244 = vpop.f32.mrb[0].mxu0
      %v3245 = vadd.f32 0.0, %v3244
      %v3246 = vpop.f32.mrb[0].mxu0
      %v3247 = vpop.f32.mrb[0].mxu0
      %v3248 = vadd.f32 0.0, %v3247
      %v3249 = vpop.f32.mrb[0].mxu0
      %3250 = vmatprep.mubr.bf16.mxu0 %v1956
      %3251 = vmatmul.mubr.bf16.gmra.mrb[0].mxu0 %v1955
      %v3252 = vpop.f32.mrb[0].mxu0
      %v3253 = vadd.f32 0.0, %v3252
      %v3254 = vpop.f32.mrb[0].mxu0
      %v3255 = vpop.f32.mrb[0].mxu0
      %v3256 = vadd.f32 0.0, %v3255
      %v3257 = vpop.f32.mrb[0].mxu0
      %3258 = vmatprep.mubr.bf16.mxu0 %v1960
      %3259 = vmatmul.mubr.bf16.gmra.mrb[0].mxu0 %v1959
      %v3260 = vpop.f32.mrb[0].mxu0
      %v3261 = vadd.f32 0.0, %v3260
      %v3262 = vpop.f32.mrb[0].mxu0
      %v3263 = vpop.f32.mrb[0].mxu0
      %v3264 = vadd.f32 0.0, %v3263
      %v3265 = vpop.f32.mrb[0].mxu0
      %3266 = vmatprep.mubr.bf16.mxu0 %v1964
      %3267 = vmatmul.mubr.bf16.gmra.mrb[0].mxu0 %v1963
      %v3268 = vpop.f32.mrb[0].mxu0
      %v3269 = vadd.f32 0.0, %v3268
      %v3270 = vpop.f32.mrb[0].mxu0
      %v3271 = vpop.f32.mrb[0].mxu0
      %v3272 = vadd.f32 0.0, %v3271
      %v3273 = vpop.f32.mrb[0].mxu0
      %3274 = vmatprep.mubr.bf16.mxu0 %v1968
      %3275 = vmatmul.mubr.bf16.gmra.mrb[0].mxu0 %v1967
      %v3276 = vpop.f32.mrb[0].mxu0
      %v3277 = vadd.f32 0.0, %v3276
      %v3278 = vpop.f32.mrb[0].mxu0
      %v3279 = vpop.f32.mrb[0].mxu0
      %v3280 = vadd.f32 0.0, %v3279
      %v3281 = vpop.f32.mrb[0].mxu0
      %3282 = vmatprep.mubr.bf16.mxu0 %v1972
      %3283 = vmatmul.mubr.bf16.gmra.mrb[0].mxu0 %v1971
      %v3284 = vpop.f32.mrb[0].mxu0
      %v3285 = vadd.f32 0.0, %v3284
      %v3286 = vpop.f32.mrb[0].mxu0
      %v3287 = vpop.f32.mrb[0].mxu0
      %v3288 = vadd.f32 0.0, %v3287
      %v3289 = vpop.f32.mrb[0].mxu0
      %3290 = vmatprep.mubr.bf16.mxu0 %v1976
      %3291 = vmatmul.mubr.bf16.gmra.mrb[0].mxu0 %v1975
      %v3292 = vpop.f32.mrb[0].mxu0
      %v3293 = vadd.f32 0.0, %v3292
      %v3294 = vpop.f32.mrb[0].mxu0
      %v3295 = vpop.f32.mrb[0].mxu0
      %v3296 = vadd.f32 0.0, %v3295
      %v3297 = vpop.f32.mrb[0].mxu0
      %3298 = vmatprep.mubr.bf16.mxu0 %v1980
      %3299 = vmatmul.mubr.bf16.gmra.mrb[0].mxu0 %v1979
      %v3300 = vpop.f32.mrb[0].mxu0
      %v3301 = vadd.f32 0.0, %v3300
      %v3302 = vpop.f32.mrb[0].mxu0
      %v3303 = vpop.f32.mrb[0].mxu0
      %v3304 = vadd.f32 0.0, %v3303
      %v3305 = vpop.f32.mrb[0].mxu0
      %3306 = vmatprep.mubr.bf16.mxu0 %v1984
      %3307 = vmatmul.mubr.bf16.gmra.mrb[0].mxu0 %v1983
      %v3308 = vpop.f32.mrb[0].mxu0
      %v3309 = vadd.f32 0.0, %v3308
      %v3310 = vpop.f32.mrb[0].mxu0
      %v3311 = vpop.f32.mrb[0].mxu0
      %v3312 = vadd.f32 0.0, %v3311
      %v3313 = vpop.f32.mrb[0].mxu0
      %3314 = vmatprep.mubr.bf16.mxu0 %v1988
      %3315 = vmatmul.mubr.bf16.gmra.mrb[0].mxu0 %v1987
      %v3316 = vpop.f32.mrb[0].mxu0
      %v3317 = vadd.f32 0.0, %v3316
      %v3318 = vpop.f32.mrb[0].mxu0
      %v3319 = vpop.f32.mrb[0].mxu0
      %v3320 = vadd.f32 0.0, %v3319
      %v3321 = vpop.f32.mrb[0].mxu0
      %3322 = vmatprep.mubr.bf16.mxu0 %v1992
      %3323 = vmatmul.mubr.bf16.gmra.mrb[0].mxu0 %v1991
      %v3324 = vpop.f32.mrb[0].mxu0
      %v3325 = vadd.f32 0.0, %v3324
      %v3326 = vpop.f32.mrb[0].mxu0
      %v3327 = vpop.f32.mrb[0].mxu0
      %v3328 = vadd.f32 0.0, %v3327
      %v3329 = vpop.f32.mrb[0].mxu0
      %3330 = vmatprep.mubr.bf16.mxu0 %v1996
      %3331 = vmatmul.mubr.bf16.gmra.mrb[0].mxu0 %v1995
      %v3332 = vpop.f32.mrb[0].mxu0
      %v3333 = vadd.f32 0.0, %v3332
      %v3334 = vpop.f32.mrb[0].mxu0
      %v3335 = vpop.f32.mrb[0].mxu0
      %v3336 = vadd.f32 0.0, %v3335
      %v3337 = vpop.f32.mrb[0].mxu0
      %3338 = vmatprep.mubr.bf16.mxu0 %v2000
      %3339 = vmatmul.mubr.bf16.gmra.mrb[0].mxu0 %v1999
      %v3340 = vpop.f32.mrb[0].mxu0
      %v3341 = vadd.f32 0.0, %v3340
      %v3342 = vpop.f32.mrb[0].mxu0
      %v3343 = vpop.f32.mrb[0].mxu0
      %v3344 = vadd.f32 0.0, %v3343
      %v3345 = vpop.f32.mrb[0].mxu0
      %3346 = vmatprep.mubr.bf16.mxu0 %v2004
      %3347 = vmatmul.mubr.bf16.gmra.mrb[0].mxu0 %v2003
      %v3348 = vpop.f32.mrb[0].mxu0
      %v3349 = vadd.f32 0.0, %v3348
      %v3350 = vpop.f32.mrb[0].mxu0
      %v3351 = vpop.f32.mrb[0].mxu0
      %v3352 = vadd.f32 0.0, %v3351
      %v3353 = vpop.f32.mrb[0].mxu0
      %3354 = vmatprep.mubr.bf16.mxu0 %v2008
      %3355 = vmatmul.mubr.bf16.gmra.mrb[0].mxu0 %v2007
      %v3356 = vpop.f32.mrb[0].mxu0
      %v3357 = vadd.f32 0.0, %v3356
      %v3358 = vpop.f32.mrb[0].mxu0
      %v3359 = vpop.f32.mrb[0].mxu0
      %v3360 = vadd.f32 0.0, %v3359
      %v3361 = vpop.f32.mrb[0].mxu0
      %3362 = vmatprep.mubr.bf16.mxu0 %v2012
      %3363 = vmatmul.mubr.bf16.gmra.mrb[0].mxu0 %v2011
      %v3364 = vpop.f32.mrb[0].mxu0
      %v3365 = vadd.f32 0.0, %v3364
      %v3366 = vpop.f32.mrb[0].mxu0
      %v3367 = vpop.f32.mrb[0].mxu0
      %v3368 = vadd.f32 0.0, %v3367
      %v3369 = vpop.f32.mrb[0].mxu0
      %3370 = vmatprep.mubr.bf16.mxu0 %v2016
      %3371 = vmatmul.mubr.bf16.gmra.mrb[0].mxu0 %v2015
      %v3372 = vpop.f32.mrb[0].mxu0
      %v3373 = vadd.f32 0.0, %v3372
      %v3374 = vpop.f32.mrb[0].mxu0
      %v3375 = vpop.f32.mrb[0].mxu0
      %v3376 = vadd.f32 0.0, %v3375
      %v3377 = vpop.f32.mrb[0].mxu0
      %3378 = vmatprep.mubr.bf16.mxu0 %v2020
      %3379 = vmatmul.mubr.bf16.gmra.mrb[0].mxu0 %v2019
      %v3380 = vpop.f32.mrb[0].mxu0
      %v3381 = vadd.f32 0.0, %v3380
      %v3382 = vpop.f32.mrb[0].mxu0
      %v3383 = vpop.f32.mrb[0].mxu0
      %v3384 = vadd.f32 0.0, %v3383
      %v3385 = vpop.f32.mrb[0].mxu0
      %3386 = vmatprep.mubr.bf16.mxu0 %v2024
      %3387 = vmatmul.mubr.bf16.gmra.mrb[0].mxu0 %v2023
      %v3388 = vpop.f32.mrb[0].mxu0
      %v3389 = vadd.f32 0.0, %v3388
      %v3390 = vpop.f32.mrb[0].mxu0
      %v3391 = vpop.f32.mrb[0].mxu0
      %v3392 = vadd.f32 0.0, %v3391
      %v3393 = vpop.f32.mrb[0].mxu0
      %3394 = vmatprep.mubr.bf16.mxu0 %v2028
      %3395 = vmatmul.mubr.bf16.gmra.mrb[0].mxu0 %v2027
      %v3396 = vpop.f32.mrb[0].mxu0
      %v3397 = vadd.f32 0.0, %v3396
      %v3398 = vpop.f32.mrb[0].mxu0
      %v3399 = vpop.f32.mrb[0].mxu0
      %v3400 = vadd.f32 0.0, %v3399
      %v3401 = vpop.f32.mrb[0].mxu0
      %3402 = vmatprep.mubr.bf16.mxu0 %v2032
      %3403 = vmatmul.mubr.bf16.gmra.mrb[0].mxu0 %v2031
      %v3404 = vpop.f32.mrb[0].mxu0
      %v3405 = vadd.f32 0.0, %v3404
      %v3406 = vpop.f32.mrb[0].mxu0
      %v3407 = vpop.f32.mrb[0].mxu0
      %v3408 = vadd.f32 0.0, %v3407
      %v3409 = vpop.f32.mrb[0].mxu0
      %3410 = vmatprep.mubr.bf16.mxu0 %v2036
      %3411 = vmatmul.mubr.bf16.gmra.mrb[0].mxu0 %v2035
      %v3412 = vpop.f32.mrb[0].mxu0
      %v3413 = vadd.f32 0.0, %v3412
      %v3414 = vpop.f32.mrb[0].mxu0
      %v3415 = vpop.f32.mrb[0].mxu0
      %v3416 = vadd.f32 0.0, %v3415
      %v3417 = vpop.f32.mrb[0].mxu0
      %3418 = vmatprep.mubr.bf16.mxu0 %v2040
      %3419 = vmatmul.mubr.bf16.gmra.mrb[0].mxu0 %v2039
      %v3420 = vpop.f32.mrb[0].mxu0
      %v3421 = vadd.f32 0.0, %v3420
      %v3422 = vpop.f32.mrb[0].mxu0
      %v3423 = vpop.f32.mrb[0].mxu0
      %v3424 = vadd.f32 0.0, %v3423
      %v3425 = vpop.f32.mrb[0].mxu0
      %3426 = vmatprep.mubr.bf16.mxu0 %v2044
      %3427 = vmatmul.mubr.bf16.gmra.mrb[0].mxu0 %v2043
      %v3428 = vpop.f32.mrb[0].mxu0
      %v3429 = vadd.f32 0.0, %v3428
      %v3430 = vpop.f32.mrb[0].mxu0
      %v3431 = vpop.f32.mrb[0].mxu0
      %v3432 = vadd.f32 0.0, %v3431
      %v3433 = vpop.f32.mrb[0].mxu0
      %3434 = vmatprep.mubr.bf16.mxu0 %v2048
      %3435 = vmatmul.mubr.bf16.gmra.mrb[0].mxu0 %v2047
      %v3436 = vpop.f32.mrb[0].mxu0
      %v3437 = vadd.f32 0.0, %v3436
      %v3438 = vpop.f32.mrb[0].mxu0
      %v3439 = vpop.f32.mrb[0].mxu0
      %v3440 = vadd.f32 0.0, %v3439
      %v3441 = vpop.f32.mrb[0].mxu0
      %3442 = vmatprep.mubr.bf16.mxu0 %v2052
      %3443 = vmatmul.mubr.bf16.gmra.mrb[0].mxu0 %v2051
      %v3444 = vpop.f32.mrb[0].mxu0
      %v3445 = vadd.f32 0.0, %v3444
      %v3446 = vpop.f32.mrb[0].mxu0
      %v3447 = vpop.f32.mrb[0].mxu0
      %v3448 = vadd.f32 0.0, %v3447
      %v3449 = vpop.f32.mrb[0].mxu0
      %3450 = vmatprep.mubr.bf16.mxu0 %v2056
      %3451 = vmatmul.mubr.bf16.gmra.mrb[0].mxu0 %v2055
      %v3452 = vpop.f32.mrb[0].mxu0
      %v3453 = vadd.f32 0.0, %v3452
      %v3454 = vpop.f32.mrb[0].mxu0
      %v3455 = vpop.f32.mrb[0].mxu0
      %v3456 = vadd.f32 0.0, %v3455
      %v3457 = vpop.f32.mrb[0].mxu0
      %3458 = vmatprep.mubr.bf16.mxu0 %v2060
      %3459 = vmatmul.mubr.bf16.gmra.mrb[0].mxu0 %v2059
      %v3460 = vpop.f32.mrb[0].mxu0
      %v3461 = vadd.f32 0.0, %v3460
      %v3462 = vpop.f32.mrb[0].mxu0
      %v3463 = vpop.f32.mrb[0].mxu0
      %v3464 = vadd.f32 0.0, %v3463
      %v3465 = vpop.f32.mrb[0].mxu0
      %3466 = vmatprep.mubr.bf16.mxu0 %v2064
      %3467 = vmatmul.mubr.bf16.gmra.mrb[0].mxu0 %v2063
      %v3468 = vpop.f32.mrb[0].mxu0
      %v3469 = vadd.f32 0.0, %v3468
      %v3470 = vpop.f32.mrb[0].mxu0
      %v3471 = vpop.f32.mrb[0].mxu0
      %v3472 = vadd.f32 0.0, %v3471
      %v3473 = vpop.f32.mrb[0].mxu0
      %3474 = vmatprep.mubr.bf16.mxu0 %v2068
      %3475 = vmatmul.mubr.bf16.gmra.mrb[0].mxu0 %v2067
      %v3476 = vpop.f32.mrb[0].mxu0
      %v3477 = vadd.f32 0.0, %v3476
      %v3478 = vpop.f32.mrb[0].mxu0
      %v3479 = vpop.f32.mrb[0].mxu0
      %v3480 = vadd.f32 0.0, %v3479
      %v3481 = vpop.f32.mrb[0].mxu0
      %3482 = vmatprep.mubr.bf16.mxu0 %v2072
      %3483 = vmatmul.mubr.bf16.gmra.mrb[0].mxu0 %v2071
      %v3484 = vpop.f32.mrb[0].mxu0
      %v3485 = vadd.f32 0.0, %v3484
      %v3486 = vpop.f32.mrb[0].mxu0
      %v3487 = vpop.f32.mrb[0].mxu0
      %v3488 = vadd.f32 0.0, %v3487
      %v3489 = vpop.f32.mrb[0].mxu0
      %3490 = vmatprep.mubr.bf16.mxu0 %v2076
      %3491 = vmatmul.mubr.bf16.gmra.mrb[0].mxu0 %v2075
      %v3492 = vpop.f32.mrb[0].mxu0
      %v3493 = vadd.f32 0.0, %v3492
      %v3494 = vpop.f32.mrb[0].mxu0
      %v3495 = vpop.f32.mrb[0].mxu0
      %v3496 = vadd.f32 0.0, %v3495
      %v3497 = vpop.f32.mrb[0].mxu0
      %3498 = vmatprep.mubr.bf16.mxu0 %v2080
      %3499 = vmatmul.mubr.bf16.gmra.mrb[0].mxu0 %v2079
      %v3500 = vpop.f32.mrb[0].mxu0
      %v3501 = vadd.f32 0.0, %v3500
      %v3502 = vpop.f32.mrb[0].mxu0
      %v3503 = vpop.f32.mrb[0].mxu0
      %v3504 = vadd.f32 0.0, %v3503
      %v3505 = vpop.f32.mrb[0].mxu0
      %3506 = vmatprep.mubr.bf16.mxu0 %v2084
      %3507 = vmatmul.mubr.bf16.gmra.mrb[0].mxu0 %v2083
      %v3508 = vpop.f32.mrb[0].mxu0
      %v3509 = vadd.f32 0.0, %v3508
      %v3510 = vpop.f32.mrb[0].mxu0
      %v3511 = vpop.f32.mrb[0].mxu0
      %v3512 = vadd.f32 0.0, %v3511
      %v3513 = vpop.f32.mrb[0].mxu0
      %3514 = vmatprep.mubr.bf16.mxu0 %v2088
      %3515 = vmatmul.mubr.bf16.gmra.mrb[0].mxu0 %v2087
      %v3516 = vpop.f32.mrb[0].mxu0
      %v3517 = vadd.f32 0.0, %v3516
      %v3518 = vpop.f32.mrb[0].mxu0
      %v3519 = vpop.f32.mrb[0].mxu0
      %v3520 = vadd.f32 0.0, %v3519
      %v3521 = vpop.f32.mrb[0].mxu0
      %3522 = vmatprep.mubr.bf16.mxu0 %v2092
      %3523 = vmatmul.mubr.bf16.gmra.mrb[0].mxu0 %v2091
      %v3524 = vpop.f32.mrb[0].mxu0
      %v3525 = vadd.f32 0.0, %v3524
      %v3526 = vpop.f32.mrb[0].mxu0
      %v3527 = vpop.f32.mrb[0].mxu0
      %v3528 = vadd.f32 0.0, %v3527
      %v3529 = vpop.f32.mrb[0].mxu0
      %3530 = vmatprep.mubr.bf16.mxu0 %v2096
      %3531 = vmatmul.mubr.bf16.gmra.mrb[0].mxu0 %v2095
      %v3532 = vpop.f32.mrb[0].mxu0
      %v3533 = vadd.f32 0.0, %v3532
      %v3534 = vpop.f32.mrb[0].mxu0
      %v3535 = vpop.f32.mrb[0].mxu0
      %v3536 = vadd.f32 0.0, %v3535
      %v3537 = vpop.f32.mrb[0].mxu0
      %3538 = vmatprep.mubr.bf16.mxu0 %v2100
      %3539 = vmatmul.mubr.bf16.gmra.mrb[0].mxu0 %v2099
      %v3540 = vpop.f32.mrb[0].mxu0
      %v3541 = vadd.f32 0.0, %v3540
      %v3542 = vpop.f32.mrb[0].mxu0
      %v3543 = vpop.f32.mrb[0].mxu0
      %v3544 = vadd.f32 0.0, %v3543
      %v3545 = vpop.f32.mrb[0].mxu0
      %3546 = vmatprep.mubr.bf16.mxu0 %v2104
      %3547 = vmatmul.mubr.bf16.gmra.mrb[0].mxu0 %v2103
      %v3548 = vpop.f32.mrb[0].mxu0
      %v3549 = vadd.f32 0.0, %v3548
      %v3550 = vpop.f32.mrb[0].mxu0
      %v3551 = vpop.f32.mrb[0].mxu0
      %v3552 = vadd.f32 0.0, %v3551
      %v3553 = vpop.f32.mrb[0].mxu0
      %3554 = vmatprep.mubr.bf16.mxu0 %v2108
      %3555 = vmatmul.mubr.bf16.gmra.mrb[0].mxu0 %v2107
      %v3556 = vpop.f32.mrb[0].mxu0
      %v3557 = vadd.f32 0.0, %v3556
      %v3558 = vpop.f32.mrb[0].mxu0
      %v3559 = vpop.f32.mrb[0].mxu0
      %v3560 = vadd.f32 0.0, %v3559
      %v3561 = vpop.f32.mrb[0].mxu0
      %3562 = vmatprep.mubr.bf16.mxu0 %v2112
      %3563 = vmatmul.mubr.bf16.gmra.mrb[0].mxu0 %v2111
      %v3564 = vpop.f32.mrb[0].mxu0
      %v3565 = vadd.f32 0.0, %v3564
      %v3566 = vpop.f32.mrb[0].mxu0
      %v3567 = vpop.f32.mrb[0].mxu0
      %v3568 = vadd.f32 0.0, %v3567
      %v3569 = vpop.f32.mrb[0].mxu0
      %3570 = vmatprep.mubr.bf16.mxu0 %v2116
      %3571 = vmatmul.mubr.bf16.gmra.mrb[0].mxu0 %v2115
      %v3572 = vpop.f32.mrb[0].mxu0
      %v3573 = vadd.f32 0.0, %v3572
      %v3574 = vpop.f32.mrb[0].mxu0
      %v3575 = vpop.f32.mrb[0].mxu0
      %v3576 = vadd.f32 0.0, %v3575
      %v3577 = vpop.f32.mrb[0].mxu0
      %3578 = vmatprep.mubr.bf16.mxu0 %v2120
      %3579 = vmatmul.mubr.bf16.gmra.mrb[0].mxu0 %v2119
      %v3580 = vpop.f32.mrb[0].mxu0
      %v3581 = vadd.f32 0.0, %v3580
      %v3582 = vpop.f32.mrb[0].mxu0
      %v3583 = vpop.f32.mrb[0].mxu0
      %v3584 = vadd.f32 0.0, %v3583
      %v3585 = vpop.f32.mrb[0].mxu0
      %3586 = vmatprep.mubr.bf16.mxu0 %v2124
      %3587 = vmatmul.mubr.bf16.gmra.mrb[0].mxu0 %v2123
      %v3588 = vpop.f32.mrb[0].mxu0
      %v3589 = vadd.f32 0.0, %v3588
      %v3590 = vpop.f32.mrb[0].mxu0
      %v3591 = vpop.f32.mrb[0].mxu0
      %v3592 = vadd.f32 0.0, %v3591
      %v3593 = vpop.f32.mrb[0].mxu0
      %3594 = vmatprep.mubr.bf16.mxu0 %v2128
      %3595 = vmatmul.mubr.bf16.gmra.mrb[0].mxu0 %v2127
      %v3596 = vpop.f32.mrb[0].mxu0
      %v3597 = vadd.f32 0.0, %v3596
      %v3598 = vpop.f32.mrb[0].mxu0
      %v3599 = vpop.f32.mrb[0].mxu0
      %v3600 = vadd.f32 0.0, %v3599
      %v3601 = vpop.f32.mrb[0].mxu0
      %3602 = vmatprep.mubr.bf16.mxu0 %v2132
      %3603 = vmatmul.mubr.bf16.gmra.mrb[0].mxu0 %v2131
      %v3604 = vpop.f32.mrb[0].mxu0
      %v3605 = vadd.f32 0.0, %v3604
      %v3606 = vpop.f32.mrb[0].mxu0
      %v3607 = vpop.f32.mrb[0].mxu0
      %v3608 = vadd.f32 0.0, %v3607
      %v3609 = vpop.f32.mrb[0].mxu0
      %3610 = vmatprep.mubr.bf16.mxu0 %v2136
      %3611 = vmatmul.mubr.bf16.gmra.mrb[0].mxu0 %v2135
      %v3612 = vpop.f32.mrb[0].mxu0
      %v3613 = vadd.f32 0.0, %v3612
      %v3614 = vpop.f32.mrb[0].mxu0
      %v3615 = vpop.f32.mrb[0].mxu0
      %v3616 = vadd.f32 0.0, %v3615
      %v3617 = vpop.f32.mrb[0].mxu0
      %3618 = vmatprep.mubr.bf16.mxu0 %v2140
      %3619 = vmatmul.mubr.bf16.gmra.mrb[0].mxu0 %v2139
      %v3620 = vpop.f32.mrb[0].mxu0
      %v3621 = vadd.f32 0.0, %v3620
      %v3622 = vpop.f32.mrb[0].mxu0
      %v3623 = vpop.f32.mrb[0].mxu0
      %v3624 = vadd.f32 0.0, %v3623
      %v3625 = vpop.f32.mrb[0].mxu0
      %3626 = vmatprep.mubr.bf16.mxu0 %v2144
      %3627 = vmatmul.mubr.bf16.gmra.mrb[0].mxu0 %v2143
      %v3628 = vpop.f32.mrb[0].mxu0
      %v3629 = vadd.f32 0.0, %v3628
      %v3630 = vpop.f32.mrb[0].mxu0
      %v3631 = vpop.f32.mrb[0].mxu0
      %v3632 = vadd.f32 0.0, %v3631
      %v3633 = vpop.f32.mrb[0].mxu0
      %3634 = vmatprep.mubr.bf16.mxu0 %v2148
      %3635 = vmatmul.mubr.bf16.gmra.mrb[0].mxu0 %v2147
      %v3636 = vpop.f32.mrb[0].mxu0
      %v3637 = vadd.f32 0.0, %v3636
      %v3638 = vpop.f32.mrb[0].mxu0
      %v3639 = vpop.f32.mrb[0].mxu0
      %v3640 = vadd.f32 0.0, %v3639
      %v3641 = vpop.f32.mrb[0].mxu0
      %3642 = vmatprep.mubr.bf16.mxu0 %v2152
      %3643 = vmatmul.mubr.bf16.gmra.mrb[0].mxu0 %v2151
      %v3644 = vpop.f32.mrb[0].mxu0
      %v3645 = vadd.f32 0.0, %v3644
      %v3646 = vpop.f32.mrb[0].mxu0
      %v3647 = vpop.f32.mrb[0].mxu0
      %v3648 = vadd.f32 0.0, %v3647
      %v3649 = vpop.f32.mrb[0].mxu0
      %3650 = vmatprep.mubr.bf16.mxu0 %v2156
      %3651 = vmatmul.mubr.bf16.gmra.mrb[0].mxu0 %v2155
      %v3652 = vpop.f32.mrb[0].mxu0
      %v3653 = vadd.f32 0.0, %v3652
      %v3654 = vpop.f32.mrb[0].mxu0
      %v3655 = vpop.f32.mrb[0].mxu0
      %v3656 = vadd.f32 0.0, %v3655
      %v3657 = vpop.f32.mrb[0].mxu0
      %3658 = vmatprep.mubr.bf16.mxu0 %v2160
      %3659 = vmatmul.mubr.bf16.gmra.mrb[0].mxu0 %v2159
      %v3660 = vpop.f32.mrb[0].mxu0
      %v3661 = vadd.f32 0.0, %v3660
      %v3662 = vpop.f32.mrb[0].mxu0
      %v3663 = vpop.f32.mrb[0].mxu0
      %v3664 = vadd.f32 0.0, %v3663
      %v3665 = vpop.f32.mrb[0].mxu0
      %3666 = vmatprep.mubr.bf16.mxu0 %v2164
      %3667 = vmatmul.mubr.bf16.gmra.mrb[0].mxu0 %v2163
      %v3668 = vpop.f32.mrb[0].mxu0
      %v3669 = vadd.f32 0.0, %v3668
      %v3670 = vpop.f32.mrb[0].mxu0
      %v3671 = vpop.f32.mrb[0].mxu0
      %v3672 = vadd.f32 0.0, %v3671
      %v3673 = vpop.f32.mrb[0].mxu0
      %3674 = vmatprep.mubr.bf16.mxu0 %v2168
      %3675 = vmatmul.mubr.bf16.gmra.mrb[0].mxu0 %v2167
      %v3676 = vpop.f32.mrb[0].mxu0
      %v3677 = vadd.f32 0.0, %v3676
      %v3678 = vpop.f32.mrb[0].mxu0
      %v3679 = vpop.f32.mrb[0].mxu0
      %v3680 = vadd.f32 0.0, %v3679
      %v3681 = vpop.f32.mrb[0].mxu0
      %3682 = vmatprep.mubr.bf16.mxu0 %v2172
      %3683 = vmatmul.mubr.bf16.gmra.mrb[0].mxu0 %v2171
      %v3684 = vpop.f32.mrb[0].mxu0
      %v3685 = vadd.f32 0.0, %v3684
      %v3686 = vpop.f32.mrb[0].mxu0
      %v3687 = vpop.f32.mrb[0].mxu0
      %v3688 = vadd.f32 0.0, %v3687
      %v3689 = vpop.f32.mrb[0].mxu0
      %3690 = vmatprep.mubr.bf16.mxu0 %v2176
      %3691 = vmatmul.mubr.bf16.gmra.mrb[0].mxu0 %v2175
      %v3692 = vpop.f32.mrb[0].mxu0
      %v3693 = vadd.f32 0.0, %v3692
      %v3694 = vpop.f32.mrb[0].mxu0
      %v3695 = vpop.f32.mrb[0].mxu0
      %v3696 = vadd.f32 0.0, %v3695
      %v3697 = vpop.f32.mrb[0].mxu0
      %3698 = vmatprep.mubr.bf16.mxu0 %v2180
      %3699 = vmatmul.mubr.bf16.gmra.mrb[0].mxu0 %v2179
      %v3700 = vpop.f32.mrb[0].mxu0
      %v3701 = vadd.f32 0.0, %v3700
      %v3702 = vpop.f32.mrb[0].mxu0
      %v3703 = vpop.f32.mrb[0].mxu0
      %v3704 = vadd.f32 0.0, %v3703
      %v3705 = vpop.f32.mrb[0].mxu0
      %3706 = vmatprep.mubr.bf16.mxu0 %v2184
      %3707 = vmatmul.mubr.bf16.gmra.mrb[0].mxu0 %v2183
      %v3708 = vpop.f32.mrb[0].mxu0
      %v3709 = vadd.f32 0.0, %v3708
      %v3710 = vpop.f32.mrb[0].mxu0
      %v3711 = vpop.f32.mrb[0].mxu0
      %v3712 = vadd.f32 0.0, %v3711
      %v3713 = vpop.f32.mrb[0].mxu0
      %3714 = vmatprep.mubr.bf16.mxu0 %v2188
      %3715 = vmatmul.mubr.bf16.gmra.mrb[0].mxu0 %v2187
      %v3716 = vpop.f32.mrb[0].mxu0
      %v3717 = vadd.f32 0.0, %v3716
      %v3718 = vpop.f32.mrb[0].mxu0
      %v3719 = vpop.f32.mrb[0].mxu0
      %v3720 = vadd.f32 0.0, %v3719
      %v3721 = vpop.f32.mrb[0].mxu0
      %3722 = vmatprep.mubr.bf16.mxu0 %v2192
      %3723 = vmatmul.mubr.bf16.gmra.mrb[0].mxu0 %v2191
      %v3724 = vpop.f32.mrb[0].mxu0
      %v3725 = vadd.f32 0.0, %v3724
      %v3726 = vpop.f32.mrb[0].mxu0
      %v3727 = vpop.f32.mrb[0].mxu0
      %v3728 = vadd.f32 0.0, %v3727
      %v3729 = vpop.f32.mrb[0].mxu0
      %3730 = vmatprep.mubr.bf16.mxu0 %v2196
      %3731 = vmatmul.mubr.bf16.gmra.mrb[0].mxu0 %v2195
      %v3732 = vpop.f32.mrb[0].mxu0
      %v3733 = vadd.f32 0.0, %v3732
      %v3734 = vpop.f32.mrb[0].mxu0
      %v3735 = vpop.f32.mrb[0].mxu0
      %v3736 = vadd.f32 0.0, %v3735
      %v3737 = vpop.f32.mrb[0].mxu0
      %3738 = vmatprep.mubr.bf16.mxu0 %v2200
      %3739 = vmatmul.mubr.bf16.gmra.mrb[0].mxu0 %v2199
      %v3740 = vpop.f32.mrb[0].mxu0
      %v3741 = vadd.f32 0.0, %v3740
      %v3742 = vpop.f32.mrb[0].mxu0
      %v3743 = vpop.f32.mrb[0].mxu0
      %v3744 = vadd.f32 0.0, %v3743
      %v3745 = vpop.f32.mrb[0].mxu0
      %3746 = vmatprep.mubr.bf16.mxu0 %v2204
      %3747 = vmatmul.mubr.bf16.gmra.mrb[0].mxu0 %v2203
      %v3748 = vpop.f32.mrb[0].mxu0
      %v3749 = vadd.f32 0.0, %v3748
      %v3750 = vpop.f32.mrb[0].mxu0
      %v3751 = vpop.f32.mrb[0].mxu0
      %v3752 = vadd.f32 0.0, %v3751
      %v3753 = vpop.f32.mrb[0].mxu0
      %3754 = vmatprep.mubr.bf16.mxu0 %v2208
      %3755 = vmatmul.mubr.bf16.gmra.mrb[0].mxu0 %v2207
      %v3756 = vpop.f32.mrb[0].mxu0
      %v3757 = vadd.f32 0.0, %v3756
      %v3758 = vpop.f32.mrb[0].mxu0
      %v3759 = vpop.f32.mrb[0].mxu0
      %v3760 = vadd.f32 0.0, %v3759
      %v3761 = vpop.f32.mrb[0].mxu0
      %3762 = vmatprep.mubr.bf16.mxu0 %v2212
      %3763 = vmatmul.mubr.bf16.gmra.mrb[0].mxu0 %v2211
      %v3764 = vpop.f32.mrb[0].mxu0
      %v3765 = vadd.f32 0.0, %v3764
      %v3766 = vpop.f32.mrb[0].mxu0
      %v3767 = vpop.f32.mrb[0].mxu0
      %v3768 = vadd.f32 0.0, %v3767
      %v3769 = vpop.f32.mrb[0].mxu0
      %3770 = vdwg.mxu0
      %3771 = vmatprep.subr.bf16.mxu0 0
      %3772 = vmatpush1.bf16.msra.mxu0 %v2625
      %3773 = vmatprep.subr.bf16.mxu0 0
      %3774 = vmatpush1.bf16.msra.mxu0 %v2626
      %3775 = vmatprep.subr.bf16.mxu0 0
      %3776 = vmatpush1.bf16.msra.mxu0 %v2627
      %3777 = vmatprep.subr.bf16.mxu0 0
      %3778 = vmatpush1.bf16.msra.mxu0 %v2628
      %3779 = vmatprep.subr.bf16.mxu0 0
      %3780 = vmatpush1.bf16.msra.mxu0 %v2629
      %3781 = vmatprep.subr.bf16.mxu0 0
      %3782 = vmatpush1.bf16.msra.mxu0 %v2630
      %3783 = vmatprep.subr.bf16.mxu0 0
      %3784 = vmatpush1.bf16.msra.mxu0 %v2631
      %3785 = vmatprep.subr.bf16.mxu0 0
      %3786 = vmatpush1.bf16.msra.mxu0 %v2632
      %3787 = vmatprep.subr.bf16.mxu0 0
      %3788 = vmatpush1.bf16.msra.mxu0 %v2633
      %3789 = vmatprep.subr.bf16.mxu0 0
      %3790 = vmatpush1.bf16.msra.mxu0 0
      %3791 = vmatprep.subr.bf16.mxu0 0
      %3792 = vmatpush1.bf16.msra.mxu0 0
      %3793 = vmatprep.subr.bf16.mxu0 0
      %3794 = vmatpush1.bf16.msra.mxu0 0
      %3795 = vmatprep.subr.bf16.mxu0 0
      %3796 = vmatpush1.bf16.msra.mxu0 0
      %3797 = vmatprep.subr.bf16.mxu0 0
      %3798 = vmatpush1.bf16.msra.mxu0 0
      %3799 = vmatprep.subr.bf16.mxu0 0
      %3800 = vmatpush1.bf16.msra.mxu0 0
      %3801 = vmatprep.subr.bf16.mxu0 0
      %3802 = vmatpush1.bf16.msra.mxu0 0
      %3803 = vmatprep.mubr.bf16.mxu0 %v2661
      %3804 = vmatmul.mubr.bf16.gmra.mrb[0].mxu0 %v1825
      %v3805 = vpop.f32.mrb[0].mxu0
      %v3806 = vadd.f32 %v2989, %v3805
      %v3807 = vpop.f32.mrb[0].mxu0
      %v3808 = vpop.f32.mrb[0].mxu0
      %v3809 = vadd.f32 %v2992, %v3808
      %v3810 = vpop.f32.mrb[0].mxu0
      %3811 = vmatprep.mubr.bf16.mxu0 %v2664
      %3812 = vmatmul.mubr.bf16.gmra.mrb[0].mxu0 %v1829
      %v3813 = vpop.f32.mrb[0].mxu0
      %v3814 = vadd.f32 %v2997, %v3813
      %v3815 = vpop.f32.mrb[0].mxu0
      %v3816 = vpop.f32.mrb[0].mxu0
      %v3817 = vadd.f32 %v3000, %v3816
      %v3818 = vpop.f32.mrb[0].mxu0
      %3819 = vmatprep.mubr.bf16.mxu0 %v2667
      %3820 = vmatmul.mubr.bf16.gmra.mrb[0].mxu0 %v1833
      %v3821 = vpop.f32.mrb[0].mxu0
      %v3822 = vadd.f32 %v3005, %v3821
      %v3823 = vpop.f32.mrb[0].mxu0
      %v3824 = vpop.f32.mrb[0].mxu0
      %v3825 = vadd.f32 %v3008, %v3824
      %v3826 = vpop.f32.mrb[0].mxu0
      %3827 = vmatprep.mubr.bf16.mxu0 %v2670
      %3828 = vmatmul.mubr.bf16.gmra.mrb[0].mxu0 %v1837
      %v3829 = vpop.f32.mrb[0].mxu0
      %v3830 = vadd.f32 %v3013, %v3829
      %v3831 = vpop.f32.mrb[0].mxu0
      %v3832 = vpop.f32.mrb[0].mxu0
      %v3833 = vadd.f32 %v3016, %v3832
      %v3834 = vpop.f32.mrb[0].mxu0
      %3835 = vmatprep.mubr.bf16.mxu0 %v2673
      %3836 = vmatmul.mubr.bf16.gmra.mrb[0].mxu0 %v1841
      %v3837 = vpop.f32.mrb[0].mxu0
      %v3838 = vadd.f32 %v3021, %v3837
      %v3839 = vpop.f32.mrb[0].mxu0
      %v3840 = vpop.f32.mrb[0].mxu0
      %v3841 = vadd.f32 %v3024, %v3840
      %v3842 = vpop.f32.mrb[0].mxu0
      %3843 = vmatprep.mubr.bf16.mxu0 %v2676
      %3844 = vmatmul.mubr.bf16.gmra.mrb[0].mxu0 %v1845
      %v3845 = vpop.f32.mrb[0].mxu0
      %v3846 = vadd.f32 %v3029, %v3845
      %v3847 = vpop.f32.mrb[0].mxu0
      %v3848 = vpop.f32.mrb[0].mxu0
      %v3849 = vadd.f32 %v3032, %v3848
      %v3850 = vpop.f32.mrb[0].mxu0
      %3851 = vmatprep.mubr.bf16.mxu0 %v2679
      %3852 = vmatmul.mubr.bf16.gmra.mrb[0].mxu0 %v1849
      %v3853 = vpop.f32.mrb[0].mxu0
      %v3854 = vadd.f32 %v3037, %v3853
      %v3855 = vpop.f32.mrb[0].mxu0
      %v3856 = vpop.f32.mrb[0].mxu0
      %v3857 = vadd.f32 %v3040, %v3856
      %v3858 = vpop.f32.mrb[0].mxu0
      %3859 = vmatprep.mubr.bf16.mxu0 %v2682
      %3860 = vmatmul.mubr.bf16.gmra.mrb[0].mxu0 %v1853
      %v3861 = vpop.f32.mrb[0].mxu0
      %v3862 = vadd.f32 %v3045, %v3861
      %v3863 = vpop.f32.mrb[0].mxu0
      %v3864 = vpop.f32.mrb[0].mxu0
      %v3865 = vadd.f32 %v3048, %v3864
      %v3866 = vpop.f32.mrb[0].mxu0
      %3867 = vmatprep.mubr.bf16.mxu0 %v2685
      %3868 = vmatmul.mubr.bf16.gmra.mrb[0].mxu0 %v1857
      %v3869 = vpop.f32.mrb[0].mxu0
      %v3870 = vadd.f32 %v3053, %v3869
      %v3871 = vpop.f32.mrb[0].mxu0
      %v3872 = vpop.f32.mrb[0].mxu0
      %v3873 = vadd.f32 %v3056, %v3872
      %v3874 = vpop.f32.mrb[0].mxu0
      %3875 = vmatprep.mubr.bf16.mxu0 %v2688
      %3876 = vmatmul.mubr.bf16.gmra.mrb[0].mxu0 %v1861
      %v3877 = vpop.f32.mrb[0].mxu0
      %v3878 = vadd.f32 %v3061, %v3877
      %v3879 = vpop.f32.mrb[0].mxu0
      %v3880 = vpop.f32.mrb[0].mxu0
      %v3881 = vadd.f32 %v3064, %v3880
      %v3882 = vpop.f32.mrb[0].mxu0
      %3883 = vmatprep.mubr.bf16.mxu0 %v2691
      %3884 = vmatmul.mubr.bf16.gmra.mrb[0].mxu0 %v1865
      %v3885 = vpop.f32.mrb[0].mxu0
      %v3886 = vadd.f32 %v3069, %v3885
      %v3887 = vpop.f32.mrb[0].mxu0
      %v3888 = vpop.f32.mrb[0].mxu0
      %v3889 = vadd.f32 %v3072, %v3888
      %v3890 = vpop.f32.mrb[0].mxu0
      %3891 = vmatprep.mubr.bf16.mxu0 %v2694
      %3892 = vmatmul.mubr.bf16.gmra.mrb[0].mxu0 %v1869
      %v3893 = vpop.f32.mrb[0].mxu0
      %v3894 = vadd.f32 %v3077, %v3893
      %v3895 = vpop.f32.mrb[0].mxu0
      %v3896 = vpop.f32.mrb[0].mxu0
      %v3897 = vadd.f32 %v3080, %v3896
      %v3898 = vpop.f32.mrb[0].mxu0
      %3899 = vmatprep.mubr.bf16.mxu0 %v2697
      %3900 = vmatmul.mubr.bf16.gmra.mrb[0].mxu0 %v1873
      %v3901 = vpop.f32.mrb[0].mxu0
      %v3902 = vadd.f32 %v3085, %v3901
      %v3903 = vpop.f32.mrb[0].mxu0
      %v3904 = vpop.f32.mrb[0].mxu0
      %v3905 = vadd.f32 %v3088, %v3904
      %v3906 = vpop.f32.mrb[0].mxu0
      %3907 = vmatprep.mubr.bf16.mxu0 %v2700
      %3908 = vmatmul.mubr.bf16.gmra.mrb[0].mxu0 %v1877
      %v3909 = vpop.f32.mrb[0].mxu0
      %v3910 = vadd.f32 %v3093, %v3909
      %v3911 = vpop.f32.mrb[0].mxu0
      %v3912 = vpop.f32.mrb[0].mxu0
      %v3913 = vadd.f32 %v3096, %v3912
      %v3914 = vpop.f32.mrb[0].mxu0
      %3915 = vmatprep.mubr.bf16.mxu0 %v2703
      %3916 = vmatmul.mubr.bf16.gmra.mrb[0].mxu0 %v1881
      %v3917 = vpop.f32.mrb[0].mxu0
      %v3918 = vadd.f32 %v3101, %v3917
      %v3919 = vpop.f32.mrb[0].mxu0
      %v3920 = vpop.f32.mrb[0].mxu0
      %v3921 = vadd.f32 %v3104, %v3920
      %v3922 = vpop.f32.mrb[0].mxu0
      %3923 = vmatprep.mubr.bf16.mxu0 %v2706
      %3924 = vmatmul.mubr.bf16.gmra.mrb[0].mxu0 %v1885
      %v3925 = vpop.f32.mrb[0].mxu0
      %v3926 = vadd.f32 %v3109, %v3925
      %v3927 = vpop.f32.mrb[0].mxu0
      %v3928 = vpop.f32.mrb[0].mxu0
      %v3929 = vadd.f32 %v3112, %v3928
      %v3930 = vpop.f32.mrb[0].mxu0
      %3931 = vmatprep.mubr.bf16.mxu0 %v2709
      %3932 = vmatmul.mubr.bf16.gmra.mrb[0].mxu0 %v1889
      %v3933 = vpop.f32.mrb[0].mxu0
      %v3934 = vadd.f32 %v3117, %v3933
      %v3935 = vpop.f32.mrb[0].mxu0
      %v3936 = vpop.f32.mrb[0].mxu0
      %v3937 = vadd.f32 %v3120, %v3936
      %v3938 = vpop.f32.mrb[0].mxu0
      %3939 = vmatprep.mubr.bf16.mxu0 %v2712
      %3940 = vmatmul.mubr.bf16.gmra.mrb[0].mxu0 %v1893
      %v3941 = vpop.f32.mrb[0].mxu0
      %v3942 = vadd.f32 %v3125, %v3941
      %v3943 = vpop.f32.mrb[0].mxu0
      %v3944 = vpop.f32.mrb[0].mxu0
      %v3945 = vadd.f32 %v3128, %v3944
      %v3946 = vpop.f32.mrb[0].mxu0
      %3947 = vmatprep.mubr.bf16.mxu0 %v2715
      %3948 = vmatmul.mubr.bf16.gmra.mrb[0].mxu0 %v1897
      %v3949 = vpop.f32.mrb[0].mxu0
      %v3950 = vadd.f32 %v3133, %v3949
      %v3951 = vpop.f32.mrb[0].mxu0
      %v3952 = vpop.f32.mrb[0].mxu0
      %v3953 = vadd.f32 %v3136, %v3952
      %v3954 = vpop.f32.mrb[0].mxu0
      %3955 = vmatprep.mubr.bf16.mxu0 %v2718
      %3956 = vmatmul.mubr.bf16.gmra.mrb[0].mxu0 %v1901
      %v3957 = vpop.f32.mrb[0].mxu0
      %v3958 = vadd.f32 %v3141, %v3957
      %v3959 = vpop.f32.mrb[0].mxu0
      %v3960 = vpop.f32.mrb[0].mxu0
      %v3961 = vadd.f32 %v3144, %v3960
      %v3962 = vpop.f32.mrb[0].mxu0
      %3963 = vmatprep.mubr.bf16.mxu0 %v2721
      %3964 = vmatmul.mubr.bf16.gmra.mrb[0].mxu0 %v1905
      %v3965 = vpop.f32.mrb[0].mxu0
      %v3966 = vadd.f32 %v3149, %v3965
      %v3967 = vpop.f32.mrb[0].mxu0
      %v3968 = vpop.f32.mrb[0].mxu0
      %v3969 = vadd.f32 %v3152, %v3968
      %v3970 = vpop.f32.mrb[0].mxu0
      %3971 = vmatprep.mubr.bf16.mxu0 %v2724
      %3972 = vmatmul.mubr.bf16.gmra.mrb[0].mxu0 %v1909
      %v3973 = vpop.f32.mrb[0].mxu0
      %v3974 = vadd.f32 %v3157, %v3973
      %v3975 = vpop.f32.mrb[0].mxu0
      %v3976 = vpop.f32.mrb[0].mxu0
      %v3977 = vadd.f32 %v3160, %v3976
      %v3978 = vpop.f32.mrb[0].mxu0
      %3979 = vmatprep.mubr.bf16.mxu0 %v2727
      %3980 = vmatmul.mubr.bf16.gmra.mrb[0].mxu0 %v1913
      %v3981 = vpop.f32.mrb[0].mxu0
      %v3982 = vadd.f32 %v3165, %v3981
      %v3983 = vpop.f32.mrb[0].mxu0
      %v3984 = vpop.f32.mrb[0].mxu0
      %v3985 = vadd.f32 %v3168, %v3984
      %v3986 = vpop.f32.mrb[0].mxu0
      %3987 = vmatprep.mubr.bf16.mxu0 %v2730
      %3988 = vmatmul.mubr.bf16.gmra.mrb[0].mxu0 %v1917
      %v3989 = vpop.f32.mrb[0].mxu0
      %v3990 = vadd.f32 %v3173, %v3989
      %v3991 = vpop.f32.mrb[0].mxu0
      %v3992 = vpop.f32.mrb[0].mxu0
      %v3993 = vadd.f32 %v3176, %v3992
      %v3994 = vpop.f32.mrb[0].mxu0
      %3995 = vmatprep.mubr.bf16.mxu0 %v2733
      %3996 = vmatmul.mubr.bf16.gmra.mrb[0].mxu0 %v1921
      %v3997 = vpop.f32.mrb[0].mxu0
      %v3998 = vadd.f32 %v3181, %v3997
      %v3999 = vpop.f32.mrb[0].mxu0
      %v4000 = vpop.f32.mrb[0].mxu0
      %v4001 = vadd.f32 %v3184, %v4000
      %v4002 = vpop.f32.mrb[0].mxu0
      %4003 = vmatprep.mubr.bf16.mxu0 %v2736
      %4004 = vmatmul.mubr.bf16.gmra.mrb[0].mxu0 %v1925
      %v4005 = vpop.f32.mrb[0].mxu0
      %v4006 = vadd.f32 %v3189, %v4005
      %v4007 = vpop.f32.mrb[0].mxu0
      %v4008 = vpop.f32.mrb[0].mxu0
      %v4009 = vadd.f32 %v3192, %v4008
      %v4010 = vpop.f32.mrb[0].mxu0
      %4011 = vmatprep.mubr.bf16.mxu0 %v2739
      %4012 = vmatmul.mubr.bf16.gmra.mrb[0].mxu0 %v1929
      %v4013 = vpop.f32.mrb[0].mxu0
      %v4014 = vadd.f32 %v3197, %v4013
      %v4015 = vpop.f32.mrb[0].mxu0
      %v4016 = vpop.f32.mrb[0].mxu0
      %v4017 = vadd.f32 %v3200, %v4016
      %v4018 = vpop.f32.mrb[0].mxu0
      %4019 = vmatprep.mubr.bf16.mxu0 %v2742
      %4020 = vmatmul.mubr.bf16.gmra.mrb[0].mxu0 %v1933
      %v4021 = vpop.f32.mrb[0].mxu0
      %v4022 = vadd.f32 %v3205, %v4021
      %v4023 = vpop.f32.mrb[0].mxu0
      %v4024 = vpop.f32.mrb[0].mxu0
      %v4025 = vadd.f32 %v3208, %v4024
      %v4026 = vpop.f32.mrb[0].mxu0
      %4027 = vmatprep.mubr.bf16.mxu0 %v2745
      %4028 = vmatmul.mubr.bf16.gmra.mrb[0].mxu0 %v1937
      %v4029 = vpop.f32.mrb[0].mxu0
      %v4030 = vadd.f32 %v3213, %v4029
      %v4031 = vpop.f32.mrb[0].mxu0
      %v4032 = vpop.f32.mrb[0].mxu0
      %v4033 = vadd.f32 %v3216, %v4032
      %v4034 = vpop.f32.mrb[0].mxu0
      %4035 = vmatprep.mubr.bf16.mxu0 %v2748
      %4036 = vmatmul.mubr.bf16.gmra.mrb[0].mxu0 %v1941
      %v4037 = vpop.f32.mrb[0].mxu0
      %v4038 = vadd.f32 %v3221, %v4037
      %v4039 = vpop.f32.mrb[0].mxu0
      %v4040 = vpop.f32.mrb[0].mxu0
      %v4041 = vadd.f32 %v3224, %v4040
      %v4042 = vpop.f32.mrb[0].mxu0
      %4043 = vmatprep.mubr.bf16.mxu0 %v2751
      %4044 = vmatmul.mubr.bf16.gmra.mrb[0].mxu0 %v1945
      %v4045 = vpop.f32.mrb[0].mxu0
      %v4046 = vadd.f32 %v3229, %v4045
      %v4047 = vpop.f32.mrb[0].mxu0
      %v4048 = vpop.f32.mrb[0].mxu0
      %v4049 = vadd.f32 %v3232, %v4048
      %v4050 = vpop.f32.mrb[0].mxu0
      %4051 = vmatprep.mubr.bf16.mxu0 %v2754
      %4052 = vmatmul.mubr.bf16.gmra.mrb[0].mxu0 %v1949
      %v4053 = vpop.f32.mrb[0].mxu0
      %v4054 = vadd.f32 %v3237, %v4053
      %v4055 = vpop.f32.mrb[0].mxu0
      %v4056 = vpop.f32.mrb[0].mxu0
      %v4057 = vadd.f32 %v3240, %v4056
      %v4058 = vpop.f32.mrb[0].mxu0
      %4059 = vmatprep.mubr.bf16.mxu0 %v2757
      %4060 = vmatmul.mubr.bf16.gmra.mrb[0].mxu0 %v1953
      %v4061 = vpop.f32.mrb[0].mxu0
      %v4062 = vadd.f32 %v3245, %v4061
      %v4063 = vpop.f32.mrb[0].mxu0
      %v4064 = vpop.f32.mrb[0].mxu0
      %v4065 = vadd.f32 %v3248, %v4064
      %v4066 = vpop.f32.mrb[0].mxu0
      %4067 = vmatprep.mubr.bf16.mxu0 %v2760
      %4068 = vmatmul.mubr.bf16.gmra.mrb[0].mxu0 %v1957
      %v4069 = vpop.f32.mrb[0].mxu0
      %v4070 = vadd.f32 %v3253, %v4069
      %v4071 = vpop.f32.mrb[0].mxu0
      %v4072 = vpop.f32.mrb[0].mxu0
      %v4073 = vadd.f32 %v3256, %v4072
      %v4074 = vpop.f32.mrb[0].mxu0
      %4075 = vmatprep.mubr.bf16.mxu0 %v2763
      %4076 = vmatmul.mubr.bf16.gmra.mrb[0].mxu0 %v1961
      %v4077 = vpop.f32.mrb[0].mxu0
      %v4078 = vadd.f32 %v3261, %v4077
      %v4079 = vpop.f32.mrb[0].mxu0
      %v4080 = vpop.f32.mrb[0].mxu0
      %v4081 = vadd.f32 %v3264, %v4080
      %v4082 = vpop.f32.mrb[0].mxu0
      %4083 = vmatprep.mubr.bf16.mxu0 %v2766
      %4084 = vmatmul.mubr.bf16.gmra.mrb[0].mxu0 %v1965
      %v4085 = vpop.f32.mrb[0].mxu0
      %v4086 = vadd.f32 %v3269, %v4085
      %v4087 = vpop.f32.mrb[0].mxu0
      %v4088 = vpop.f32.mrb[0].mxu0
      %v4089 = vadd.f32 %v3272, %v4088
      %v4090 = vpop.f32.mrb[0].mxu0
      %4091 = vmatprep.mubr.bf16.mxu0 %v2769
      %4092 = vmatmul.mubr.bf16.gmra.mrb[0].mxu0 %v1969
      %v4093 = vpop.f32.mrb[0].mxu0
      %v4094 = vadd.f32 %v3277, %v4093
      %v4095 = vpop.f32.mrb[0].mxu0
      %v4096 = vpop.f32.mrb[0].mxu0
      %v4097 = vadd.f32 %v3280, %v4096
      %v4098 = vpop.f32.mrb[0].mxu0
      %4099 = vmatprep.mubr.bf16.mxu0 %v2772
      %4100 = vmatmul.mubr.bf16.gmra.mrb[0].mxu0 %v1973
      %v4101 = vpop.f32.mrb[0].mxu0
      %v4102 = vadd.f32 %v3285, %v4101
      %v4103 = vpop.f32.mrb[0].mxu0
      %v4104 = vpop.f32.mrb[0].mxu0
      %v4105 = vadd.f32 %v3288, %v4104
      %v4106 = vpop.f32.mrb[0].mxu0
      %4107 = vmatprep.mubr.bf16.mxu0 %v2775
      %4108 = vmatmul.mubr.bf16.gmra.mrb[0].mxu0 %v1977
      %v4109 = vpop.f32.mrb[0].mxu0
      %v4110 = vadd.f32 %v3293, %v4109
      %v4111 = vpop.f32.mrb[0].mxu0
      %v4112 = vpop.f32.mrb[0].mxu0
      %v4113 = vadd.f32 %v3296, %v4112
      %v4114 = vpop.f32.mrb[0].mxu0
      %4115 = vmatprep.mubr.bf16.mxu0 %v2778
      %4116 = vmatmul.mubr.bf16.gmra.mrb[0].mxu0 %v1981
      %v4117 = vpop.f32.mrb[0].mxu0
      %v4118 = vadd.f32 %v3301, %v4117
      %v4119 = vpop.f32.mrb[0].mxu0
      %v4120 = vpop.f32.mrb[0].mxu0
      %v4121 = vadd.f32 %v3304, %v4120
      %v4122 = vpop.f32.mrb[0].mxu0
      %4123 = vmatprep.mubr.bf16.mxu0 %v2781
      %4124 = vmatmul.mubr.bf16.gmra.mrb[0].mxu0 %v1985
      %v4125 = vpop.f32.mrb[0].mxu0
      %v4126 = vadd.f32 %v3309, %v4125
      %v4127 = vpop.f32.mrb[0].mxu0
      %v4128 = vpop.f32.mrb[0].mxu0
      %v4129 = vadd.f32 %v3312, %v4128
      %v4130 = vpop.f32.mrb[0].mxu0
      %4131 = vmatprep.mubr.bf16.mxu0 %v2784
      %4132 = vmatmul.mubr.bf16.gmra.mrb[0].mxu0 %v1989
      %v4133 = vpop.f32.mrb[0].mxu0
      %v4134 = vadd.f32 %v3317, %v4133
      %v4135 = vpop.f32.mrb[0].mxu0
      %v4136 = vpop.f32.mrb[0].mxu0
      %v4137 = vadd.f32 %v3320, %v4136
      %v4138 = vpop.f32.mrb[0].mxu0
      %4139 = vmatprep.mubr.bf16.mxu0 %v2787
      %4140 = vmatmul.mubr.bf16.gmra.mrb[0].mxu0 %v1993
      %v4141 = vpop.f32.mrb[0].mxu0
      %v4142 = vadd.f32 %v3325, %v4141
      %v4143 = vpop.f32.mrb[0].mxu0
      %v4144 = vpop.f32.mrb[0].mxu0
      %v4145 = vadd.f32 %v3328, %v4144
      %v4146 = vpop.f32.mrb[0].mxu0
      %4147 = vmatprep.mubr.bf16.mxu0 %v2790
      %4148 = vmatmul.mubr.bf16.gmra.mrb[0].mxu0 %v1997
      %v4149 = vpop.f32.mrb[0].mxu0
      %v4150 = vadd.f32 %v3333, %v4149
      %v4151 = vpop.f32.mrb[0].mxu0
      %v4152 = vpop.f32.mrb[0].mxu0
      %v4153 = vadd.f32 %v3336, %v4152
      %v4154 = vpop.f32.mrb[0].mxu0
      %4155 = vmatprep.mubr.bf16.mxu0 %v2793
      %4156 = vmatmul.mubr.bf16.gmra.mrb[0].mxu0 %v2001
      %v4157 = vpop.f32.mrb[0].mxu0
      %v4158 = vadd.f32 %v3341, %v4157
      %v4159 = vpop.f32.mrb[0].mxu0
      %v4160 = vpop.f32.mrb[0].mxu0
      %v4161 = vadd.f32 %v3344, %v4160
      %v4162 = vpop.f32.mrb[0].mxu0
      %4163 = vmatprep.mubr.bf16.mxu0 %v2796
      %4164 = vmatmul.mubr.bf16.gmra.mrb[0].mxu0 %v2005
      %v4165 = vpop.f32.mrb[0].mxu0
      %v4166 = vadd.f32 %v3349, %v4165
      %v4167 = vpop.f32.mrb[0].mxu0
      %v4168 = vpop.f32.mrb[0].mxu0
      %v4169 = vadd.f32 %v3352, %v4168
      %v4170 = vpop.f32.mrb[0].mxu0
      %4171 = vmatprep.mubr.bf16.mxu0 %v2799
      %4172 = vmatmul.mubr.bf16.gmra.mrb[0].mxu0 %v2009
      %v4173 = vpop.f32.mrb[0].mxu0
      %v4174 = vadd.f32 %v3357, %v4173
      %v4175 = vpop.f32.mrb[0].mxu0
      %v4176 = vpop.f32.mrb[0].mxu0
      %v4177 = vadd.f32 %v3360, %v4176
      %v4178 = vpop.f32.mrb[0].mxu0
      %4179 = vmatprep.mubr.bf16.mxu0 %v2802
      %4180 = vmatmul.mubr.bf16.gmra.mrb[0].mxu0 %v2013
      %v4181 = vpop.f32.mrb[0].mxu0
      %v4182 = vadd.f32 %v3365, %v4181
      %v4183 = vpop.f32.mrb[0].mxu0
      %v4184 = vpop.f32.mrb[0].mxu0
      %v4185 = vadd.f32 %v3368, %v4184
      %v4186 = vpop.f32.mrb[0].mxu0
      %4187 = vmatprep.mubr.bf16.mxu0 %v2805
      %4188 = vmatmul.mubr.bf16.gmra.mrb[0].mxu0 %v2017
      %v4189 = vpop.f32.mrb[0].mxu0
      %v4190 = vadd.f32 %v3373, %v4189
      %v4191 = vpop.f32.mrb[0].mxu0
      %v4192 = vpop.f32.mrb[0].mxu0
      %v4193 = vadd.f32 %v3376, %v4192
      %v4194 = vpop.f32.mrb[0].mxu0
      %4195 = vmatprep.mubr.bf16.mxu0 %v2808
      %4196 = vmatmul.mubr.bf16.gmra.mrb[0].mxu0 %v2021
      %v4197 = vpop.f32.mrb[0].mxu0
      %v4198 = vadd.f32 %v3381, %v4197
      %v4199 = vpop.f32.mrb[0].mxu0
      %v4200 = vpop.f32.mrb[0].mxu0
      %v4201 = vadd.f32 %v3384, %v4200
      %v4202 = vpop.f32.mrb[0].mxu0
      %4203 = vmatprep.mubr.bf16.mxu0 %v2811
      %4204 = vmatmul.mubr.bf16.gmra.mrb[0].mxu0 %v2025
      %v4205 = vpop.f32.mrb[0].mxu0
      %v4206 = vadd.f32 %v3389, %v4205
      %v4207 = vpop.f32.mrb[0].mxu0
      %v4208 = vpop.f32.mrb[0].mxu0
      %v4209 = vadd.f32 %v3392, %v4208
      %v4210 = vpop.f32.mrb[0].mxu0
      %4211 = vmatprep.mubr.bf16.mxu0 %v2814
      %4212 = vmatmul.mubr.bf16.gmra.mrb[0].mxu0 %v2029
      %v4213 = vpop.f32.mrb[0].mxu0
      %v4214 = vadd.f32 %v3397, %v4213
      %v4215 = vpop.f32.mrb[0].mxu0
      %v4216 = vpop.f32.mrb[0].mxu0
      %v4217 = vadd.f32 %v3400, %v4216
      %v4218 = vpop.f32.mrb[0].mxu0
      %4219 = vmatprep.mubr.bf16.mxu0 %v2817
      %4220 = vmatmul.mubr.bf16.gmra.mrb[0].mxu0 %v2033
      %v4221 = vpop.f32.mrb[0].mxu0
      %v4222 = vadd.f32 %v3405, %v4221
      %v4223 = vpop.f32.mrb[0].mxu0
      %v4224 = vpop.f32.mrb[0].mxu0
      %v4225 = vadd.f32 %v3408, %v4224
      %v4226 = vpop.f32.mrb[0].mxu0
      %4227 = vmatprep.mubr.bf16.mxu0 %v2820
      %4228 = vmatmul.mubr.bf16.gmra.mrb[0].mxu0 %v2037
      %v4229 = vpop.f32.mrb[0].mxu0
      %v4230 = vadd.f32 %v3413, %v4229
      %v4231 = vpop.f32.mrb[0].mxu0
      %v4232 = vpop.f32.mrb[0].mxu0
      %v4233 = vadd.f32 %v3416, %v4232
      %v4234 = vpop.f32.mrb[0].mxu0
      %4235 = vmatprep.mubr.bf16.mxu0 %v2823
      %4236 = vmatmul.mubr.bf16.gmra.mrb[0].mxu0 %v2041
      %v4237 = vpop.f32.mrb[0].mxu0
      %v4238 = vadd.f32 %v3421, %v4237
      %v4239 = vpop.f32.mrb[0].mxu0
      %v4240 = vpop.f32.mrb[0].mxu0
      %v4241 = vadd.f32 %v3424, %v4240
      %v4242 = vpop.f32.mrb[0].mxu0
      %4243 = vmatprep.mubr.bf16.mxu0 %v2826
      %4244 = vmatmul.mubr.bf16.gmra.mrb[0].mxu0 %v2045
      %v4245 = vpop.f32.mrb[0].mxu0
      %v4246 = vadd.f32 %v3429, %v4245
      %v4247 = vpop.f32.mrb[0].mxu0
      %v4248 = vpop.f32.mrb[0].mxu0
      %v4249 = vadd.f32 %v3432, %v4248
      %v4250 = vpop.f32.mrb[0].mxu0
      %4251 = vmatprep.mubr.bf16.mxu0 %v2829
      %4252 = vmatmul.mubr.bf16.gmra.mrb[0].mxu0 %v2049
      %v4253 = vpop.f32.mrb[0].mxu0
      %v4254 = vadd.f32 %v3437, %v4253
      %v4255 = vpop.f32.mrb[0].mxu0
      %v4256 = vpop.f32.mrb[0].mxu0
      %v4257 = vadd.f32 %v3440, %v4256
      %v4258 = vpop.f32.mrb[0].mxu0
      %4259 = vmatprep.mubr.bf16.mxu0 %v2832
      %4260 = vmatmul.mubr.bf16.gmra.mrb[0].mxu0 %v2053
      %v4261 = vpop.f32.mrb[0].mxu0
      %v4262 = vadd.f32 %v3445, %v4261
      %v4263 = vpop.f32.mrb[0].mxu0
      %v4264 = vpop.f32.mrb[0].mxu0
      %v4265 = vadd.f32 %v3448, %v4264
      %v4266 = vpop.f32.mrb[0].mxu0
      %4267 = vmatprep.mubr.bf16.mxu0 %v2835
      %4268 = vmatmul.mubr.bf16.gmra.mrb[0].mxu0 %v2057
      %v4269 = vpop.f32.mrb[0].mxu0
      %v4270 = vadd.f32 %v3453, %v4269
      %v4271 = vpop.f32.mrb[0].mxu0
      %v4272 = vpop.f32.mrb[0].mxu0
      %v4273 = vadd.f32 %v3456, %v4272
      %v4274 = vpop.f32.mrb[0].mxu0
      %4275 = vmatprep.mubr.bf16.mxu0 %v2838
      %4276 = vmatmul.mubr.bf16.gmra.mrb[0].mxu0 %v2061
      %v4277 = vpop.f32.mrb[0].mxu0
      %v4278 = vadd.f32 %v3461, %v4277
      %v4279 = vpop.f32.mrb[0].mxu0
      %v4280 = vpop.f32.mrb[0].mxu0
      %v4281 = vadd.f32 %v3464, %v4280
      %v4282 = vpop.f32.mrb[0].mxu0
      %4283 = vmatprep.mubr.bf16.mxu0 %v2841
      %4284 = vmatmul.mubr.bf16.gmra.mrb[0].mxu0 %v2065
      %v4285 = vpop.f32.mrb[0].mxu0
      %v4286 = vadd.f32 %v3469, %v4285
      %v4287 = vpop.f32.mrb[0].mxu0
      %v4288 = vpop.f32.mrb[0].mxu0
      %v4289 = vadd.f32 %v3472, %v4288
      %v4290 = vpop.f32.mrb[0].mxu0
      %4291 = vmatprep.mubr.bf16.mxu0 %v2844
      %4292 = vmatmul.mubr.bf16.gmra.mrb[0].mxu0 %v2069
      %v4293 = vpop.f32.mrb[0].mxu0
      %v4294 = vadd.f32 %v3477, %v4293
      %v4295 = vpop.f32.mrb[0].mxu0
      %v4296 = vpop.f32.mrb[0].mxu0
      %v4297 = vadd.f32 %v3480, %v4296
      %v4298 = vpop.f32.mrb[0].mxu0
      %4299 = vmatprep.mubr.bf16.mxu0 %v2847
      %4300 = vmatmul.mubr.bf16.gmra.mrb[0].mxu0 %v2073
      %v4301 = vpop.f32.mrb[0].mxu0
      %v4302 = vadd.f32 %v3485, %v4301
      %v4303 = vpop.f32.mrb[0].mxu0
      %v4304 = vpop.f32.mrb[0].mxu0
      %v4305 = vadd.f32 %v3488, %v4304
      %v4306 = vpop.f32.mrb[0].mxu0
      %4307 = vmatprep.mubr.bf16.mxu0 %v2850
      %4308 = vmatmul.mubr.bf16.gmra.mrb[0].mxu0 %v2077
      %v4309 = vpop.f32.mrb[0].mxu0
      %v4310 = vadd.f32 %v3493, %v4309
      %v4311 = vpop.f32.mrb[0].mxu0
      %v4312 = vpop.f32.mrb[0].mxu0
      %v4313 = vadd.f32 %v3496, %v4312
      %v4314 = vpop.f32.mrb[0].mxu0
      %4315 = vmatprep.mubr.bf16.mxu0 %v2853
      %4316 = vmatmul.mubr.bf16.gmra.mrb[0].mxu0 %v2081
      %v4317 = vpop.f32.mrb[0].mxu0
      %v4318 = vadd.f32 %v3501, %v4317
      %v4319 = vpop.f32.mrb[0].mxu0
      %v4320 = vpop.f32.mrb[0].mxu0
      %v4321 = vadd.f32 %v3504, %v4320
      %v4322 = vpop.f32.mrb[0].mxu0
      %4323 = vmatprep.mubr.bf16.mxu0 %v2856
      %4324 = vmatmul.mubr.bf16.gmra.mrb[0].mxu0 %v2085
      %v4325 = vpop.f32.mrb[0].mxu0
      %v4326 = vadd.f32 %v3509, %v4325
      %v4327 = vpop.f32.mrb[0].mxu0
      %v4328 = vpop.f32.mrb[0].mxu0
      %v4329 = vadd.f32 %v3512, %v4328
      %v4330 = vpop.f32.mrb[0].mxu0
      %4331 = vmatprep.mubr.bf16.mxu0 %v2859
      %4332 = vmatmul.mubr.bf16.gmra.mrb[0].mxu0 %v2089
      %v4333 = vpop.f32.mrb[0].mxu0
      %v4334 = vadd.f32 %v3517, %v4333
      %v4335 = vpop.f32.mrb[0].mxu0
      %v4336 = vpop.f32.mrb[0].mxu0
      %v4337 = vadd.f32 %v3520, %v4336
      %v4338 = vpop.f32.mrb[0].mxu0
      %4339 = vmatprep.mubr.bf16.mxu0 %v2862
      %4340 = vmatmul.mubr.bf16.gmra.mrb[0].mxu0 %v2093
      %v4341 = vpop.f32.mrb[0].mxu0
      %v4342 = vadd.f32 %v3525, %v4341
      %v4343 = vpop.f32.mrb[0].mxu0
      %v4344 = vpop.f32.mrb[0].mxu0
      %v4345 = vadd.f32 %v3528, %v4344
      %v4346 = vpop.f32.mrb[0].mxu0
      %4347 = vmatprep.mubr.bf16.mxu0 %v2865
      %4348 = vmatmul.mubr.bf16.gmra.mrb[0].mxu0 %v2097
      %v4349 = vpop.f32.mrb[0].mxu0
      %v4350 = vadd.f32 %v3533, %v4349
      %v4351 = vpop.f32.mrb[0].mxu0
      %v4352 = vpop.f32.mrb[0].mxu0
      %v4353 = vadd.f32 %v3536, %v4352
      %v4354 = vpop.f32.mrb[0].mxu0
      %4355 = vmatprep.mubr.bf16.mxu0 %v2868
      %4356 = vmatmul.mubr.bf16.gmra.mrb[0].mxu0 %v2101
      %v4357 = vpop.f32.mrb[0].mxu0
      %v4358 = vadd.f32 %v3541, %v4357
      %v4359 = vpop.f32.mrb[0].mxu0
      %v4360 = vpop.f32.mrb[0].mxu0
      %v4361 = vadd.f32 %v3544, %v4360
      %v4362 = vpop.f32.mrb[0].mxu0
      %4363 = vmatprep.mubr.bf16.mxu0 %v2871
      %4364 = vmatmul.mubr.bf16.gmra.mrb[0].mxu0 %v2105
      %v4365 = vpop.f32.mrb[0].mxu0
      %v4366 = vadd.f32 %v3549, %v4365
      %v4367 = vpop.f32.mrb[0].mxu0
      %v4368 = vpop.f32.mrb[0].mxu0
      %v4369 = vadd.f32 %v3552, %v4368
      %v4370 = vpop.f32.mrb[0].mxu0
      %4371 = vmatprep.mubr.bf16.mxu0 %v2874
      %4372 = vmatmul.mubr.bf16.gmra.mrb[0].mxu0 %v2109
      %v4373 = vpop.f32.mrb[0].mxu0
      %v4374 = vadd.f32 %v3557, %v4373
      %v4375 = vpop.f32.mrb[0].mxu0
      %v4376 = vpop.f32.mrb[0].mxu0
      %v4377 = vadd.f32 %v3560, %v4376
      %v4378 = vpop.f32.mrb[0].mxu0
      %4379 = vmatprep.mubr.bf16.mxu0 %v2877
      %4380 = vmatmul.mubr.bf16.gmra.mrb[0].mxu0 %v2113
      %v4381 = vpop.f32.mrb[0].mxu0
      %v4382 = vadd.f32 %v3565, %v4381
      %v4383 = vpop.f32.mrb[0].mxu0
      %v4384 = vpop.f32.mrb[0].mxu0
      %v4385 = vadd.f32 %v3568, %v4384
      %v4386 = vpop.f32.mrb[0].mxu0
      %4387 = vmatprep.mubr.bf16.mxu0 %v2880
      %4388 = vmatmul.mubr.bf16.gmra.mrb[0].mxu0 %v2117
      %v4389 = vpop.f32.mrb[0].mxu0
      %v4390 = vadd.f32 %v3573, %v4389
      %v4391 = vpop.f32.mrb[0].mxu0
      %v4392 = vpop.f32.mrb[0].mxu0
      %v4393 = vadd.f32 %v3576, %v4392
      %v4394 = vpop.f32.mrb[0].mxu0
      %4395 = vmatprep.mubr.bf16.mxu0 %v2883
      %4396 = vmatmul.mubr.bf16.gmra.mrb[0].mxu0 %v2121
      %v4397 = vpop.f32.mrb[0].mxu0
      %v4398 = vadd.f32 %v3581, %v4397
      %v4399 = vpop.f32.mrb[0].mxu0
      %v4400 = vpop.f32.mrb[0].mxu0
      %v4401 = vadd.f32 %v3584, %v4400
      %v4402 = vpop.f32.mrb[0].mxu0
      %4403 = vmatprep.mubr.bf16.mxu0 %v2886
      %4404 = vmatmul.mubr.bf16.gmra.mrb[0].mxu0 %v2125
      %v4405 = vpop.f32.mrb[0].mxu0
      %v4406 = vadd.f32 %v3589, %v4405
      %v4407 = vpop.f32.mrb[0].mxu0
      %v4408 = vpop.f32.mrb[0].mxu0
      %v4409 = vadd.f32 %v3592, %v4408
      %v4410 = vpop.f32.mrb[0].mxu0
      %4411 = vmatprep.mubr.bf16.mxu0 %v2889
      %4412 = vmatmul.mubr.bf16.gmra.mrb[0].mxu0 %v2129
      %v4413 = vpop.f32.mrb[0].mxu0
      %v4414 = vadd.f32 %v3597, %v4413
      %v4415 = vpop.f32.mrb[0].mxu0
      %v4416 = vpop.f32.mrb[0].mxu0
      %v4417 = vadd.f32 %v3600, %v4416
      %v4418 = vpop.f32.mrb[0].mxu0
      %4419 = vmatprep.mubr.bf16.mxu0 %v2892
      %4420 = vmatmul.mubr.bf16.gmra.mrb[0].mxu0 %v2133
      %v4421 = vpop.f32.mrb[0].mxu0
      %v4422 = vadd.f32 %v3605, %v4421
      %v4423 = vpop.f32.mrb[0].mxu0
      %v4424 = vpop.f32.mrb[0].mxu0
      %v4425 = vadd.f32 %v3608, %v4424
      %v4426 = vpop.f32.mrb[0].mxu0
      %4427 = vmatprep.mubr.bf16.mxu0 %v2895
      %4428 = vmatmul.mubr.bf16.gmra.mrb[0].mxu0 %v2137
      %v4429 = vpop.f32.mrb[0].mxu0
      %v4430 = vadd.f32 %v3613, %v4429
      %v4431 = vpop.f32.mrb[0].mxu0
      %v4432 = vpop.f32.mrb[0].mxu0
      %v4433 = vadd.f32 %v3616, %v4432
      %v4434 = vpop.f32.mrb[0].mxu0
      %4435 = vmatprep.mubr.bf16.mxu0 %v2898
      %4436 = vmatmul.mubr.bf16.gmra.mrb[0].mxu0 %v2141
      %v4437 = vpop.f32.mrb[0].mxu0
      %v4438 = vadd.f32 %v3621, %v4437
      %v4439 = vpop.f32.mrb[0].mxu0
      %v4440 = vpop.f32.mrb[0].mxu0
      %v4441 = vadd.f32 %v3624, %v4440
      %v4442 = vpop.f32.mrb[0].mxu0
      %4443 = vmatprep.mubr.bf16.mxu0 %v2901
      %4444 = vmatmul.mubr.bf16.gmra.mrb[0].mxu0 %v2145
      %v4445 = vpop.f32.mrb[0].mxu0
      %v4446 = vadd.f32 %v3629, %v4445
      %v4447 = vpop.f32.mrb[0].mxu0
      %v4448 = vpop.f32.mrb[0].mxu0
      %v4449 = vadd.f32 %v3632, %v4448
      %v4450 = vpop.f32.mrb[0].mxu0
      %4451 = vmatprep.mubr.bf16.mxu0 %v2904
      %4452 = vmatmul.mubr.bf16.gmra.mrb[0].mxu0 %v2149
      %v4453 = vpop.f32.mrb[0].mxu0
      %v4454 = vadd.f32 %v3637, %v4453
      %v4455 = vpop.f32.mrb[0].mxu0
      %v4456 = vpop.f32.mrb[0].mxu0
      %v4457 = vadd.f32 %v3640, %v4456
      %v4458 = vpop.f32.mrb[0].mxu0
      %4459 = vmatprep.mubr.bf16.mxu0 %v2907
      %4460 = vmatmul.mubr.bf16.gmra.mrb[0].mxu0 %v2153
      %v4461 = vpop.f32.mrb[0].mxu0
      %v4462 = vadd.f32 %v3645, %v4461
      %v4463 = vpop.f32.mrb[0].mxu0
      %v4464 = vpop.f32.mrb[0].mxu0
      %v4465 = vadd.f32 %v3648, %v4464
      %v4466 = vpop.f32.mrb[0].mxu0
      %4467 = vmatprep.mubr.bf16.mxu0 %v2910
      %4468 = vmatmul.mubr.bf16.gmra.mrb[0].mxu0 %v2157
      %v4469 = vpop.f32.mrb[0].mxu0
      %v4470 = vadd.f32 %v3653, %v4469
      %v4471 = vpop.f32.mrb[0].mxu0
      %v4472 = vpop.f32.mrb[0].mxu0
      %v4473 = vadd.f32 %v3656, %v4472
      %v4474 = vpop.f32.mrb[0].mxu0
      %4475 = vmatprep.mubr.bf16.mxu0 %v2913
      %4476 = vmatmul.mubr.bf16.gmra.mrb[0].mxu0 %v2161
      %v4477 = vpop.f32.mrb[0].mxu0
      %v4478 = vadd.f32 %v3661, %v4477
      %v4479 = vpop.f32.mrb[0].mxu0
      %v4480 = vpop.f32.mrb[0].mxu0
      %v4481 = vadd.f32 %v3664, %v4480
      %v4482 = vpop.f32.mrb[0].mxu0
      %4483 = vmatprep.mubr.bf16.mxu0 %v2916
      %4484 = vmatmul.mubr.bf16.gmra.mrb[0].mxu0 %v2165
      %v4485 = vpop.f32.mrb[0].mxu0
      %v4486 = vadd.f32 %v3669, %v4485
      %v4487 = vpop.f32.mrb[0].mxu0
      %v4488 = vpop.f32.mrb[0].mxu0
      %v4489 = vadd.f32 %v3672, %v4488
      %v4490 = vpop.f32.mrb[0].mxu0
      %4491 = vmatprep.mubr.bf16.mxu0 %v2919
      %4492 = vmatmul.mubr.bf16.gmra.mrb[0].mxu0 %v2169
      %v4493 = vpop.f32.mrb[0].mxu0
      %v4494 = vadd.f32 %v3677, %v4493
      %v4495 = vpop.f32.mrb[0].mxu0
      %v4496 = vpop.f32.mrb[0].mxu0
      %v4497 = vadd.f32 %v3680, %v4496
      %v4498 = vpop.f32.mrb[0].mxu0
      %4499 = vmatprep.mubr.bf16.mxu0 %v2922
      %4500 = vmatmul.mubr.bf16.gmra.mrb[0].mxu0 %v2173
      %v4501 = vpop.f32.mrb[0].mxu0
      %v4502 = vadd.f32 %v3685, %v4501
      %v4503 = vpop.f32.mrb[0].mxu0
      %v4504 = vpop.f32.mrb[0].mxu0
      %v4505 = vadd.f32 %v3688, %v4504
      %v4506 = vpop.f32.mrb[0].mxu0
      %4507 = vmatprep.mubr.bf16.mxu0 %v2925
      %4508 = vmatmul.mubr.bf16.gmra.mrb[0].mxu0 %v2177
      %v4509 = vpop.f32.mrb[0].mxu0
      %v4510 = vadd.f32 %v3693, %v4509
      %v4511 = vpop.f32.mrb[0].mxu0
      %v4512 = vpop.f32.mrb[0].mxu0
      %v4513 = vadd.f32 %v3696, %v4512
      %v4514 = vpop.f32.mrb[0].mxu0
      %4515 = vmatprep.mubr.bf16.mxu0 %v2928
      %4516 = vmatmul.mubr.bf16.gmra.mrb[0].mxu0 %v2181
      %v4517 = vpop.f32.mrb[0].mxu0
      %v4518 = vadd.f32 %v3701, %v4517
      %v4519 = vpop.f32.mrb[0].mxu0
      %v4520 = vpop.f32.mrb[0].mxu0
      %v4521 = vadd.f32 %v3704, %v4520
      %v4522 = vpop.f32.mrb[0].mxu0
      %4523 = vmatprep.mubr.bf16.mxu0 %v2931
      %4524 = vmatmul.mubr.bf16.gmra.mrb[0].mxu0 %v2185
      %v4525 = vpop.f32.mrb[0].mxu0
      %v4526 = vadd.f32 %v3709, %v4525
      %v4527 = vpop.f32.mrb[0].mxu0
      %v4528 = vpop.f32.mrb[0].mxu0
      %v4529 = vadd.f32 %v3712, %v4528
      %v4530 = vpop.f32.mrb[0].mxu0
      %4531 = vmatprep.mubr.bf16.mxu0 %v2934
      %4532 = vmatmul.mubr.bf16.gmra.mrb[0].mxu0 %v2189
      %v4533 = vpop.f32.mrb[0].mxu0
      %v4534 = vadd.f32 %v3717, %v4533
      %v4535 = vpop.f32.mrb[0].mxu0
      %v4536 = vpop.f32.mrb[0].mxu0
      %v4537 = vadd.f32 %v3720, %v4536
      %v4538 = vpop.f32.mrb[0].mxu0
      %4539 = vmatprep.mubr.bf16.mxu0 %v2937
      %4540 = vmatmul.mubr.bf16.gmra.mrb[0].mxu0 %v2193
      %v4541 = vpop.f32.mrb[0].mxu0
      %v4542 = vadd.f32 %v3725, %v4541
      %v4543 = vpop.f32.mrb[0].mxu0
      %v4544 = vpop.f32.mrb[0].mxu0
      %v4545 = vadd.f32 %v3728, %v4544
      %v4546 = vpop.f32.mrb[0].mxu0
      %4547 = vmatprep.mubr.bf16.mxu0 %v2940
      %4548 = vmatmul.mubr.bf16.gmra.mrb[0].mxu0 %v2197
      %v4549 = vpop.f32.mrb[0].mxu0
      %v4550 = vadd.f32 %v3733, %v4549
      %v4551 = vpop.f32.mrb[0].mxu0
      %v4552 = vpop.f32.mrb[0].mxu0
      %v4553 = vadd.f32 %v3736, %v4552
      %v4554 = vpop.f32.mrb[0].mxu0
      %4555 = vmatprep.mubr.bf16.mxu0 %v2943
      %4556 = vmatmul.mubr.bf16.gmra.mrb[0].mxu0 %v2201
      %v4557 = vpop.f32.mrb[0].mxu0
      %v4558 = vadd.f32 %v3741, %v4557
      %v4559 = vpop.f32.mrb[0].mxu0
      %v4560 = vpop.f32.mrb[0].mxu0
      %v4561 = vadd.f32 %v3744, %v4560
      %v4562 = vpop.f32.mrb[0].mxu0
      %4563 = vmatprep.mubr.bf16.mxu0 %v2946
      %4564 = vmatmul.mubr.bf16.gmra.mrb[0].mxu0 %v2205
      %v4565 = vpop.f32.mrb[0].mxu0
      %v4566 = vadd.f32 %v3749, %v4565
      %v4567 = vpop.f32.mrb[0].mxu0
      %v4568 = vpop.f32.mrb[0].mxu0
      %v4569 = vadd.f32 %v3752, %v4568
      %v4570 = vpop.f32.mrb[0].mxu0
      %4571 = vmatprep.mubr.bf16.mxu0 %v2949
      %4572 = vmatmul.mubr.bf16.gmra.mrb[0].mxu0 %v2209
      %v4573 = vpop.f32.mrb[0].mxu0
      %v4574 = vadd.f32 %v3757, %v4573
      %v4575 = vpop.f32.mrb[0].mxu0
      %v4576 = vpop.f32.mrb[0].mxu0
      %v4577 = vadd.f32 %v3760, %v4576
      %v4578 = vpop.f32.mrb[0].mxu0
      %4579 = vmatprep.mubr.bf16.mxu0 %v2952
      %4580 = vmatmul.mubr.bf16.gmra.mrb[0].mxu0 %v2213
      %v4581 = vpop.f32.mrb[0].mxu0
      %v4582 = vadd.f32 %v3765, %v4581
      %v4583 = vpop.f32.mrb[0].mxu0
      %v4584 = vpop.f32.mrb[0].mxu0
      %v4585 = vadd.f32 %v3768, %v4584
      %v4586 = vpop.f32.mrb[0].mxu0
      %4587 = vdwg.mxu0
      %v4588 = vld [vmem:[%s2] sm:$0x1]
      %v4590 = vlaneseq
      %v4591 = vshrl.u32 %v4590, 7
      %v4592 = vsub.s32 0, %v4591
      %v4593 = vrot.slane %v4588, %v4592
      %v4595 = vmul.f32 %v3806, %v4593
      %v4596 = vmul.f32 %v3809, %v4593
      %v4597 = vmul.f32 %v3814, %v4593
      %v4598 = vmul.f32 %v3817, %v4593
      %v4599 = vmul.f32 %v3822, %v4593
      %v4600 = vmul.f32 %v3825, %v4593
      %v4601 = vmul.f32 %v3830, %v4593
      %v4602 = vmul.f32 %v3833, %v4593
      %v4603 = vmul.f32 %v3838, %v4593
      %v4604 = vmul.f32 %v3841, %v4593
      %v4605 = vmul.f32 %v3846, %v4593
      %v4606 = vmul.f32 %v3849, %v4593
      %v4607 = vmul.f32 %v3854, %v4593
      %v4608 = vmul.f32 %v3857, %v4593
      %v4609 = vmul.f32 %v3862, %v4593
      %v4610 = vmul.f32 %v3865, %v4593
      %v4611 = vmul.f32 %v3870, %v4593
      %v4612 = vmul.f32 %v3873, %v4593
      %v4613 = vmul.f32 %v3878, %v4593
      %v4614 = vmul.f32 %v3881, %v4593
      %v4615 = vmul.f32 %v3886, %v4593
      %v4616 = vmul.f32 %v3889, %v4593
      %v4617 = vmul.f32 %v3894, %v4593
      %v4618 = vmul.f32 %v3897, %v4593
      %v4619 = vmul.f32 %v3902, %v4593
      %v4620 = vmul.f32 %v3905, %v4593
      %v4621 = vmul.f32 %v3910, %v4593
      %v4622 = vmul.f32 %v3913, %v4593
      %v4623 = vmul.f32 %v3918, %v4593
      %v4624 = vmul.f32 %v3921, %v4593
      %v4625 = vmul.f32 %v3926, %v4593
      %v4626 = vmul.f32 %v3929, %v4593
      %v4627 = vmul.f32 %v3934, %v4593
      %v4628 = vmul.f32 %v3937, %v4593
      %v4629 = vmul.f32 %v3942, %v4593
      %v4630 = vmul.f32 %v3945, %v4593
      %v4631 = vmul.f32 %v3950, %v4593
      %v4632 = vmul.f32 %v3953, %v4593
      %v4633 = vmul.f32 %v3958, %v4593
      %v4634 = vmul.f32 %v3961, %v4593
      %v4635 = vmul.f32 %v3966, %v4593
      %v4636 = vmul.f32 %v3969, %v4593
      %v4637 = vmul.f32 %v3974, %v4593
      %v4638 = vmul.f32 %v3977, %v4593
      %v4639 = vmul.f32 %v3982, %v4593
      %v4640 = vmul.f32 %v3985, %v4593
      %v4641 = vmul.f32 %v3990, %v4593
      %v4642 = vmul.f32 %v3993, %v4593
      %v4643 = vmul.f32 %v3998, %v4593
      %v4644 = vmul.f32 %v4001, %v4593
      %v4645 = vmul.f32 %v4006, %v4593
      %v4646 = vmul.f32 %v4009, %v4593
      %v4647 = vmul.f32 %v4014, %v4593
      %v4648 = vmul.f32 %v4017, %v4593
      %v4649 = vmul.f32 %v4022, %v4593
      %v4650 = vmul.f32 %v4025, %v4593
      %v4651 = vmul.f32 %v4030, %v4593
      %v4652 = vmul.f32 %v4033, %v4593
      %v4653 = vmul.f32 %v4038, %v4593
      %v4654 = vmul.f32 %v4041, %v4593
      %v4655 = vmul.f32 %v4046, %v4593
      %v4656 = vmul.f32 %v4049, %v4593
      %v4657 = vmul.f32 %v4054, %v4593
      %v4658 = vmul.f32 %v4057, %v4593
      %v4659 = vmul.f32 %v4062, %v4593
      %v4660 = vmul.f32 %v4065, %v4593
      %v4661 = vmul.f32 %v4070, %v4593
      %v4662 = vmul.f32 %v4073, %v4593
      %v4663 = vmul.f32 %v4078, %v4593
      %v4664 = vmul.f32 %v4081, %v4593
      %v4665 = vmul.f32 %v4086, %v4593
      %v4666 = vmul.f32 %v4089, %v4593
      %v4667 = vmul.f32 %v4094, %v4593
      %v4668 = vmul.f32 %v4097, %v4593
      %v4669 = vmul.f32 %v4102, %v4593
      %v4670 = vmul.f32 %v4105, %v4593
      %v4671 = vmul.f32 %v4110, %v4593
      %v4672 = vmul.f32 %v4113, %v4593
      %v4673 = vmul.f32 %v4118, %v4593
      %v4674 = vmul.f32 %v4121, %v4593
      %v4675 = vmul.f32 %v4126, %v4593
      %v4676 = vmul.f32 %v4129, %v4593
      %v4677 = vmul.f32 %v4134, %v4593
      %v4678 = vmul.f32 %v4137, %v4593
      %v4679 = vmul.f32 %v4142, %v4593
      %v4680 = vmul.f32 %v4145, %v4593
      %v4681 = vmul.f32 %v4150, %v4593
      %v4682 = vmul.f32 %v4153, %v4593
      %v4683 = vmul.f32 %v4158, %v4593
      %v4684 = vmul.f32 %v4161, %v4593
      %v4685 = vmul.f32 %v4166, %v4593
      %v4686 = vmul.f32 %v4169, %v4593
      %v4687 = vmul.f32 %v4174, %v4593
      %v4688 = vmul.f32 %v4177, %v4593
      %v4689 = vmul.f32 %v4182, %v4593
      %v4690 = vmul.f32 %v4185, %v4593
      %v4691 = vmul.f32 %v4190, %v4593
      %v4692 = vmul.f32 %v4193, %v4593
      %v4693 = vmul.f32 %v4198, %v4593
      %v4694 = vmul.f32 %v4201, %v4593
      %v4695 = vmul.f32 %v4206, %v4593
      %v4696 = vmul.f32 %v4209, %v4593
      %v4697 = vmul.f32 %v4214, %v4593
      %v4698 = vmul.f32 %v4217, %v4593
      %v4699 = vmul.f32 %v4222, %v4593
      %v4700 = vmul.f32 %v4225, %v4593
      %v4701 = vmul.f32 %v4230, %v4593
      %v4702 = vmul.f32 %v4233, %v4593
      %v4703 = vmul.f32 %v4238, %v4593
      %v4704 = vmul.f32 %v4241, %v4593
      %v4705 = vmul.f32 %v4246, %v4593
      %v4706 = vmul.f32 %v4249, %v4593
      %v4707 = vmul.f32 %v4254, %v4593
      %v4708 = vmul.f32 %v4257, %v4593
      %v4709 = vmul.f32 %v4262, %v4593
      %v4710 = vmul.f32 %v4265, %v4593
      %v4711 = vmul.f32 %v4270, %v4593
      %v4712 = vmul.f32 %v4273, %v4593
      %v4713 = vmul.f32 %v4278, %v4593
      %v4714 = vmul.f32 %v4281, %v4593
      %v4715 = vmul.f32 %v4286, %v4593
      %v4716 = vmul.f32 %v4289, %v4593
      %v4717 = vmul.f32 %v4294, %v4593
      %v4718 = vmul.f32 %v4297, %v4593
      %v4719 = vmul.f32 %v4302, %v4593
      %v4720 = vmul.f32 %v4305, %v4593
      %v4721 = vmul.f32 %v4310, %v4593
      %v4722 = vmul.f32 %v4313, %v4593
      %v4723 = vmul.f32 %v4318, %v4593
      %v4724 = vmul.f32 %v4321, %v4593
      %v4725 = vmul.f32 %v4326, %v4593
      %v4726 = vmul.f32 %v4329, %v4593
      %v4727 = vmul.f32 %v4334, %v4593
      %v4728 = vmul.f32 %v4337, %v4593
      %v4729 = vmul.f32 %v4342, %v4593
      %v4730 = vmul.f32 %v4345, %v4593
      %v4731 = vmul.f32 %v4350, %v4593
      %v4732 = vmul.f32 %v4353, %v4593
      %v4733 = vmul.f32 %v4358, %v4593
      %v4734 = vmul.f32 %v4361, %v4593
      %v4735 = vmul.f32 %v4366, %v4593
      %v4736 = vmul.f32 %v4369, %v4593
      %v4737 = vmul.f32 %v4374, %v4593
      %v4738 = vmul.f32 %v4377, %v4593
      %v4739 = vmul.f32 %v4382, %v4593
      %v4740 = vmul.f32 %v4385, %v4593
      %v4741 = vmul.f32 %v4390, %v4593
      %v4742 = vmul.f32 %v4393, %v4593
      %v4743 = vmul.f32 %v4398, %v4593
      %v4744 = vmul.f32 %v4401, %v4593
      %v4745 = vmul.f32 %v4406, %v4593
      %v4746 = vmul.f32 %v4409, %v4593
      %v4747 = vmul.f32 %v4414, %v4593
      %v4748 = vmul.f32 %v4417, %v4593
      %v4749 = vmul.f32 %v4422, %v4593
      %v4750 = vmul.f32 %v4425, %v4593
      %v4751 = vmul.f32 %v4430, %v4593
      %v4752 = vmul.f32 %v4433, %v4593
      %v4753 = vmul.f32 %v4438, %v4593
      %v4754 = vmul.f32 %v4441, %v4593
      %v4755 = vmul.f32 %v4446, %v4593
      %v4756 = vmul.f32 %v4449, %v4593
      %v4757 = vmul.f32 %v4454, %v4593
      %v4758 = vmul.f32 %v4457, %v4593
      %v4759 = vmul.f32 %v4462, %v4593
      %v4760 = vmul.f32 %v4465, %v4593
      %v4761 = vmul.f32 %v4470, %v4593
      %v4762 = vmul.f32 %v4473, %v4593
      %v4763 = vmul.f32 %v4478, %v4593
      %v4764 = vmul.f32 %v4481, %v4593
      %v4765 = vmul.f32 %v4486, %v4593
      %v4766 = vmul.f32 %v4489, %v4593
      %v4767 = vmul.f32 %v4494, %v4593
      %v4768 = vmul.f32 %v4497, %v4593
      %v4769 = vmul.f32 %v4502, %v4593
      %v4770 = vmul.f32 %v4505, %v4593
      %v4771 = vmul.f32 %v4510, %v4593
      %v4772 = vmul.f32 %v4513, %v4593
      %v4773 = vmul.f32 %v4518, %v4593
      %v4774 = vmul.f32 %v4521, %v4593
      %v4775 = vmul.f32 %v4526, %v4593
      %v4776 = vmul.f32 %v4529, %v4593
      %v4777 = vmul.f32 %v4534, %v4593
      %v4778 = vmul.f32 %v4537, %v4593
      %v4779 = vmul.f32 %v4542, %v4593
      %v4780 = vmul.f32 %v4545, %v4593
      %v4781 = vmul.f32 %v4550, %v4593
      %v4782 = vmul.f32 %v4553, %v4593
      %v4783 = vmul.f32 %v4558, %v4593
      %v4784 = vmul.f32 %v4561, %v4593
      %v4785 = vmul.f32 %v4566, %v4593
      %v4786 = vmul.f32 %v4569, %v4593
      %v4787 = vmul.f32 %v4574, %v4593
      %v4788 = vmul.f32 %v4577, %v4593
      %v4789 = vmul.f32 %v4582, %v4593
      %v4790 = vmul.f32 %v4585, %v4593
      %v4791 = vld [vmem:[%s3] sm:$0x1]
      %v4793 = vlaneseq
      %v4794 = vshrl.u32 %v4793, 7
      %v4795 = vsub.s32 0, %v4794
      %v4796 = vrot.slane %v4791, %v4795
      %v4798 = vadd.f32 %v4595, %v4796
      %v4799 = vadd.f32 %v4596, %v4796
      %v4800 = vadd.f32 %v4597, %v4796
      %v4801 = vadd.f32 %v4598, %v4796
      %v4802 = vadd.f32 %v4599, %v4796
      %v4803 = vadd.f32 %v4600, %v4796
      %v4804 = vadd.f32 %v4601, %v4796
      %v4805 = vadd.f32 %v4602, %v4796
      %v4806 = vadd.f32 %v4603, %v4796
      %v4807 = vadd.f32 %v4604, %v4796
      %v4808 = vadd.f32 %v4605, %v4796
      %v4809 = vadd.f32 %v4606, %v4796
      %v4810 = vadd.f32 %v4607, %v4796
      %v4811 = vadd.f32 %v4608, %v4796
      %v4812 = vadd.f32 %v4609, %v4796
      %v4813 = vadd.f32 %v4610, %v4796
      %v4814 = vadd.f32 %v4611, %v4796
      %v4815 = vadd.f32 %v4612, %v4796
      %v4816 = vadd.f32 %v4613, %v4796
      %v4817 = vadd.f32 %v4614, %v4796
      %v4818 = vadd.f32 %v4615, %v4796
      %v4819 = vadd.f32 %v4616, %v4796
      %v4820 = vadd.f32 %v4617, %v4796
      %v4821 = vadd.f32 %v4618, %v4796
      %v4822 = vadd.f32 %v4619, %v4796
      %v4823 = vadd.f32 %v4620, %v4796
      %v4824 = vadd.f32 %v4621, %v4796
      %v4825 = vadd.f32 %v4622, %v4796
      %v4826 = vadd.f32 %v4623, %v4796
      %v4827 = vadd.f32 %v4624, %v4796
      %v4828 = vadd.f32 %v4625, %v4796
      %v4829 = vadd.f32 %v4626, %v4796
      %v4830 = vadd.f32 %v4627, %v4796
      %v4831 = vadd.f32 %v4628, %v4796
      %v4832 = vadd.f32 %v4629, %v4796
      %v4833 = vadd.f32 %v4630, %v4796
      %v4834 = vadd.f32 %v4631, %v4796
      %v4835 = vadd.f32 %v4632, %v4796
      %v4836 = vadd.f32 %v4633, %v4796
      %v4837 = vadd.f32 %v4634, %v4796
      %v4838 = vadd.f32 %v4635, %v4796
      %v4839 = vadd.f32 %v4636, %v4796
      %v4840 = vadd.f32 %v4637, %v4796
      %v4841 = vadd.f32 %v4638, %v4796
      %v4842 = vadd.f32 %v4639, %v4796
      %v4843 = vadd.f32 %v4640, %v4796
      %v4844 = vadd.f32 %v4641, %v4796
      %v4845 = vadd.f32 %v4642, %v4796
      %v4846 = vadd.f32 %v4643, %v4796
      %v4847 = vadd.f32 %v4644, %v4796
      %v4848 = vadd.f32 %v4645, %v4796
      %v4849 = vadd.f32 %v4646, %v4796
      %v4850 = vadd.f32 %v4647, %v4796
      %v4851 = vadd.f32 %v4648, %v4796
      %v4852 = vadd.f32 %v4649, %v4796
      %v4853 = vadd.f32 %v4650, %v4796
      %v4854 = vadd.f32 %v4651, %v4796
      %v4855 = vadd.f32 %v4652, %v4796
      %v4856 = vadd.f32 %v4653, %v4796
      %v4857 = vadd.f32 %v4654, %v4796
      %v4858 = vadd.f32 %v4655, %v4796
      %v4859 = vadd.f32 %v4656, %v4796
      %v4860 = vadd.f32 %v4657, %v4796
      %v4861 = vadd.f32 %v4658, %v4796
      %v4862 = vadd.f32 %v4659, %v4796
      %v4863 = vadd.f32 %v4660, %v4796
      %v4864 = vadd.f32 %v4661, %v4796
      %v4865 = vadd.f32 %v4662, %v4796
      %v4866 = vadd.f32 %v4663, %v4796
      %v4867 = vadd.f32 %v4664, %v4796
      %v4868 = vadd.f32 %v4665, %v4796
      %v4869 = vadd.f32 %v4666, %v4796
      %v4870 = vadd.f32 %v4667, %v4796
      %v4871 = vadd.f32 %v4668, %v4796
      %v4872 = vadd.f32 %v4669, %v4796
      %v4873 = vadd.f32 %v4670, %v4796
      %v4874 = vadd.f32 %v4671, %v4796
      %v4875 = vadd.f32 %v4672, %v4796
      %v4876 = vadd.f32 %v4673, %v4796
      %v4877 = vadd.f32 %v4674, %v4796
      %v4878 = vadd.f32 %v4675, %v4796
      %v4879 = vadd.f32 %v4676, %v4796
      %v4880 = vadd.f32 %v4677, %v4796
      %v4881 = vadd.f32 %v4678, %v4796
      %v4882 = vadd.f32 %v4679, %v4796
      %v4883 = vadd.f32 %v4680, %v4796
      %v4884 = vadd.f32 %v4681, %v4796
      %v4885 = vadd.f32 %v4682, %v4796
      %v4886 = vadd.f32 %v4683, %v4796
      %v4887 = vadd.f32 %v4684, %v4796
      %v4888 = vadd.f32 %v4685, %v4796
      %v4889 = vadd.f32 %v4686, %v4796
      %v4890 = vadd.f32 %v4687, %v4796
      %v4891 = vadd.f32 %v4688, %v4796
      %v4892 = vadd.f32 %v4689, %v4796
      %v4893 = vadd.f32 %v4690, %v4796
      %v4894 = vadd.f32 %v4691, %v4796
      %v4895 = vadd.f32 %v4692, %v4796
      %v4896 = vadd.f32 %v4693, %v4796
      %v4897 = vadd.f32 %v4694, %v4796
      %v4898 = vadd.f32 %v4695, %v4796
      %v4899 = vadd.f32 %v4696, %v4796
      %v4900 = vadd.f32 %v4697, %v4796
      %v4901 = vadd.f32 %v4698, %v4796
      %v4902 = vadd.f32 %v4699, %v4796
      %v4903 = vadd.f32 %v4700, %v4796
      %v4904 = vadd.f32 %v4701, %v4796
      %v4905 = vadd.f32 %v4702, %v4796
      %v4906 = vadd.f32 %v4703, %v4796
      %v4907 = vadd.f32 %v4704, %v4796
      %v4908 = vadd.f32 %v4705, %v4796
      %v4909 = vadd.f32 %v4706, %v4796
      %v4910 = vadd.f32 %v4707, %v4796
      %v4911 = vadd.f32 %v4708, %v4796
      %v4912 = vadd.f32 %v4709, %v4796
      %v4913 = vadd.f32 %v4710, %v4796
      %v4914 = vadd.f32 %v4711, %v4796
      %v4915 = vadd.f32 %v4712, %v4796
      %v4916 = vadd.f32 %v4713, %v4796
      %v4917 = vadd.f32 %v4714, %v4796
      %v4918 = vadd.f32 %v4715, %v4796
      %v4919 = vadd.f32 %v4716, %v4796
      %v4920 = vadd.f32 %v4717, %v4796
      %v4921 = vadd.f32 %v4718, %v4796
      %v4922 = vadd.f32 %v4719, %v4796
      %v4923 = vadd.f32 %v4720, %v4796
      %v4924 = vadd.f32 %v4721, %v4796
      %v4925 = vadd.f32 %v4722, %v4796
      %v4926 = vadd.f32 %v4723, %v4796
      %v4927 = vadd.f32 %v4724, %v4796
      %v4928 = vadd.f32 %v4725, %v4796
      %v4929 = vadd.f32 %v4726, %v4796
      %v4930 = vadd.f32 %v4727, %v4796
      %v4931 = vadd.f32 %v4728, %v4796
      %v4932 = vadd.f32 %v4729, %v4796
      %v4933 = vadd.f32 %v4730, %v4796
      %v4934 = vadd.f32 %v4731, %v4796
      %v4935 = vadd.f32 %v4732, %v4796
      %v4936 = vadd.f32 %v4733, %v4796
      %v4937 = vadd.f32 %v4734, %v4796
      %v4938 = vadd.f32 %v4735, %v4796
      %v4939 = vadd.f32 %v4736, %v4796
      %v4940 = vadd.f32 %v4737, %v4796
      %v4941 = vadd.f32 %v4738, %v4796
      %v4942 = vadd.f32 %v4739, %v4796
      %v4943 = vadd.f32 %v4740, %v4796
      %v4944 = vadd.f32 %v4741, %v4796
      %v4945 = vadd.f32 %v4742, %v4796
      %v4946 = vadd.f32 %v4743, %v4796
      %v4947 = vadd.f32 %v4744, %v4796
      %v4948 = vadd.f32 %v4745, %v4796
      %v4949 = vadd.f32 %v4746, %v4796
      %v4950 = vadd.f32 %v4747, %v4796
      %v4951 = vadd.f32 %v4748, %v4796
      %v4952 = vadd.f32 %v4749, %v4796
      %v4953 = vadd.f32 %v4750, %v4796
      %v4954 = vadd.f32 %v4751, %v4796
      %v4955 = vadd.f32 %v4752, %v4796
      %v4956 = vadd.f32 %v4753, %v4796
      %v4957 = vadd.f32 %v4754, %v4796
      %v4958 = vadd.f32 %v4755, %v4796
      %v4959 = vadd.f32 %v4756, %v4796
      %v4960 = vadd.f32 %v4757, %v4796
      %v4961 = vadd.f32 %v4758, %v4796
      %v4962 = vadd.f32 %v4759, %v4796
      %v4963 = vadd.f32 %v4760, %v4796
      %v4964 = vadd.f32 %v4761, %v4796
      %v4965 = vadd.f32 %v4762, %v4796
      %v4966 = vadd.f32 %v4763, %v4796
      %v4967 = vadd.f32 %v4764, %v4796
      %v4968 = vadd.f32 %v4765, %v4796
      %v4969 = vadd.f32 %v4766, %v4796
      %v4970 = vadd.f32 %v4767, %v4796
      %v4971 = vadd.f32 %v4768, %v4796
      %v4972 = vadd.f32 %v4769, %v4796
      %v4973 = vadd.f32 %v4770, %v4796
      %v4974 = vadd.f32 %v4771, %v4796
      %v4975 = vadd.f32 %v4772, %v4796
      %v4976 = vadd.f32 %v4773, %v4796
      %v4977 = vadd.f32 %v4774, %v4796
      %v4978 = vadd.f32 %v4775, %v4796
      %v4979 = vadd.f32 %v4776, %v4796
      %v4980 = vadd.f32 %v4777, %v4796
      %v4981 = vadd.f32 %v4778, %v4796
      %v4982 = vadd.f32 %v4779, %v4796
      %v4983 = vadd.f32 %v4780, %v4796
      %v4984 = vadd.f32 %v4781, %v4796
      %v4985 = vadd.f32 %v4782, %v4796
      %v4986 = vadd.f32 %v4783, %v4796
      %v4987 = vadd.f32 %v4784, %v4796
      %v4988 = vadd.f32 %v4785, %v4796
      %v4989 = vadd.f32 %v4786, %v4796
      %v4990 = vadd.f32 %v4787, %v4796
      %v4991 = vadd.f32 %v4788, %v4796
      %v4992 = vadd.f32 %v4789, %v4796
      %v4993 = vadd.f32 %v4790, %v4796
      %v4994 = vmax.f32 %v4798, %v4847
      %v4995 = vmax.f32 %v4799, %v4848
      %v4996 = vmax.f32 %v4800, %v4849
      %v4997 = vmax.f32 %v4801, %v4850
      %v4998 = vmax.f32 %v4802, %v4851
      %v4999 = vmax.f32 %v4803, %v4852
      %v5000 = vmax.f32 %v4804, %v4853
      %v5001 = vmax.f32 %v4805, %v4854
      %v5002 = vmax.f32 %v4806, %v4855
      %v5003 = vmax.f32 %v4807, %v4856
      %v5004 = vmax.f32 %v4808, %v4857
      %v5005 = vmax.f32 %v4809, %v4858
      %v5006 = vmax.f32 %v4810, %v4859
      %v5007 = vmax.f32 %v4811, %v4860
      %v5008 = vmax.f32 %v4812, %v4861
      %v5009 = vmax.f32 %v4813, %v4862
      %v5010 = vmax.f32 %v4814, %v4863
      %v5011 = vmax.f32 %v4815, %v4864
      %v5012 = vmax.f32 %v4816, %v4865
      %v5013 = vmax.f32 %v4817, %v4866
      %v5014 = vmax.f32 %v4818, %v4867
      %v5015 = vmax.f32 %v4819, %v4868
      %v5016 = vmax.f32 %v4820, %v4869
      %v5017 = vmax.f32 %v4821, %v4870
      %v5018 = vmax.f32 %v4822, %v4871
      %v5019 = vmax.f32 %v4823, %v4872
      %v5020 = vmax.f32 %v4824, %v4873
      %v5021 = vmax.f32 %v4825, %v4874
      %v5022 = vmax.f32 %v4826, %v4875
      %v5023 = vmax.f32 %v4827, %v4876
      %v5024 = vmax.f32 %v4828, %v4877
      %v5025 = vmax.f32 %v4829, %v4878
      %v5026 = vmax.f32 %v4830, %v4879
      %v5027 = vmax.f32 %v4831, %v4880
      %v5028 = vmax.f32 %v4832, %v4881
      %v5029 = vmax.f32 %v4833, %v4882
      %v5030 = vmax.f32 %v4834, %v4883
      %v5031 = vmax.f32 %v4835, %v4884
      %v5032 = vmax.f32 %v4836, %v4885
      %v5033 = vmax.f32 %v4837, %v4886
      %v5034 = vmax.f32 %v4838, %v4887
      %v5035 = vmax.f32 %v4839, %v4888
      %v5036 = vmax.f32 %v4840, %v4889
      %v5037 = vmax.f32 %v4841, %v4890
      %v5038 = vmax.f32 %v4842, %v4891
      %v5039 = vmax.f32 %v4843, %v4892
      %v5040 = vmax.f32 %v4844, %v4893
      %v5041 = vmax.f32 %v4845, %v4894
      %v5042 = vmax.f32 %v4846, %v4895
      %v5043 = vmax.f32 %v4896, %v4945
      %v5044 = vmax.f32 %v4897, %v4946
      %v5045 = vmax.f32 %v4898, %v4947
      %v5046 = vmax.f32 %v4899, %v4948
      %v5047 = vmax.f32 %v4900, %v4949
      %v5048 = vmax.f32 %v4901, %v4950
      %v5049 = vmax.f32 %v4902, %v4951
      %v5050 = vmax.f32 %v4903, %v4952
      %v5051 = vmax.f32 %v4904, %v4953
      %v5052 = vmax.f32 %v4905, %v4954
      %v5053 = vmax.f32 %v4906, %v4955
      %v5054 = vmax.f32 %v4907, %v4956
      %v5055 = vmax.f32 %v4908, %v4957
      %v5056 = vmax.f32 %v4909, %v4958
      %v5057 = vmax.f32 %v4910, %v4959
      %v5058 = vmax.f32 %v4911, %v4960
      %v5059 = vmax.f32 %v4912, %v4961
      %v5060 = vmax.f32 %v4913, %v4962
      %v5061 = vmax.f32 %v4914, %v4963
      %v5062 = vmax.f32 %v4915, %v4964
      %v5063 = vmax.f32 %v4916, %v4965
      %v5064 = vmax.f32 %v4917, %v4966
      %v5065 = vmax.f32 %v4918, %v4967
      %v5066 = vmax.f32 %v4919, %v4968
      %v5067 = vmax.f32 %v4920, %v4969
      %v5068 = vmax.f32 %v4921, %v4970
      %v5069 = vmax.f32 %v4922, %v4971
      %v5070 = vmax.f32 %v4923, %v4972
      %v5071 = vmax.f32 %v4924, %v4973
      %v5072 = vmax.f32 %v4925, %v4974
      %v5073 = vmax.f32 %v4926, %v4975
      %v5074 = vmax.f32 %v4927, %v4976
      %v5075 = vmax.f32 %v4928, %v4977
      %v5076 = vmax.f32 %v4929, %v4978
      %v5077 = vmax.f32 %v4930, %v4979
      %v5078 = vmax.f32 %v4931, %v4980
      %v5079 = vmax.f32 %v4932, %v4981
      %v5080 = vmax.f32 %v4933, %v4982
      %v5081 = vmax.f32 %v4934, %v4983
      %v5082 = vmax.f32 %v4935, %v4984
      %v5083 = vmax.f32 %v4936, %v4985
      %v5084 = vmax.f32 %v4937, %v4986
      %v5085 = vmax.f32 %v4938, %v4987
      %v5086 = vmax.f32 %v4939, %v4988
      %v5087 = vmax.f32 %v4940, %v4989
      %v5088 = vmax.f32 %v4941, %v4990
      %v5089 = vmax.f32 %v4942, %v4991
      %v5090 = vmax.f32 %v4943, %v4992
      %v5091 = vmax.f32 %v4944, %v4993
      %v5092 = vmax.f32 %v4994, %v5043
      %v5093 = vmax.f32 %v4995, %v5044
      %v5094 = vmax.f32 %v4996, %v5045
      %v5095 = vmax.f32 %v4997, %v5046
      %v5096 = vmax.f32 %v4998, %v5047
      %v5097 = vmax.f32 %v4999, %v5048
      %v5098 = vmax.f32 %v5000, %v5049
      %v5099 = vmax.f32 %v5001, %v5050
      %v5100 = vmax.f32 %v5002, %v5051
      %v5101 = vmax.f32 %v5003, %v5052
      %v5102 = vmax.f32 %v5004, %v5053
      %v5103 = vmax.f32 %v5005, %v5054
      %v5104 = vmax.f32 %v5006, %v5055
      %v5105 = vmax.f32 %v5007, %v5056
      %v5106 = vmax.f32 %v5008, %v5057
      %v5107 = vmax.f32 %v5009, %v5058
      %v5108 = vmax.f32 %v5010, %v5059
      %v5109 = vmax.f32 %v5011, %v5060
      %v5110 = vmax.f32 %v5012, %v5061
      %v5111 = vmax.f32 %v5013, %v5062
      %v5112 = vmax.f32 %v5014, %v5063
      %v5113 = vmax.f32 %v5015, %v5064
      %v5114 = vmax.f32 %v5016, %v5065
      %v5115 = vmax.f32 %v5017, %v5066
      %v5116 = vmax.f32 %v5018, %v5067
      %v5117 = vmax.f32 %v5019, %v5068
      %v5118 = vmax.f32 %v5020, %v5069
      %v5119 = vmax.f32 %v5021, %v5070
      %v5120 = vmax.f32 %v5022, %v5071
      %v5121 = vmax.f32 %v5023, %v5072
      %v5122 = vmax.f32 %v5024, %v5073
      %v5123 = vmax.f32 %v5025, %v5074
      %v5124 = vmax.f32 %v5026, %v5075
      %v5125 = vmax.f32 %v5027, %v5076
      %v5126 = vmax.f32 %v5028, %v5077
      %v5127 = vmax.f32 %v5029, %v5078
      %v5128 = vmax.f32 %v5030, %v5079
      %v5129 = vmax.f32 %v5031, %v5080
      %v5130 = vmax.f32 %v5032, %v5081
      %v5131 = vmax.f32 %v5033, %v5082
      %v5132 = vmax.f32 %v5034, %v5083
      %v5133 = vmax.f32 %v5035, %v5084
      %v5134 = vmax.f32 %v5036, %v5085
      %v5135 = vmax.f32 %v5037, %v5086
      %v5136 = vmax.f32 %v5038, %v5087
      %v5137 = vmax.f32 %v5039, %v5088
      %v5138 = vmax.f32 %v5040, %v5089
      %v5139 = vmax.f32 %v5041, %v5090
      %v5140 = vmax.f32 %v5042, %v5091
      %v5141 = vmax.f32 %v5092, 0.0
      %v5142 = vmax.f32 %v5093, 0.0
      %v5143 = vmax.f32 %v5094, 0.0
      %v5144 = vmax.f32 %v5095, 0.0
      %v5145 = vmax.f32 %v5096, 0.0
      %v5146 = vmax.f32 %v5097, 0.0
      %v5147 = vmax.f32 %v5098, 0.0
      %v5148 = vmax.f32 %v5099, 0.0
      %v5149 = vmax.f32 %v5100, 0.0
      %v5150 = vmax.f32 %v5101, 0.0
      %v5151 = vmax.f32 %v5102, 0.0
      %v5152 = vmax.f32 %v5103, 0.0
      %v5153 = vmax.f32 %v5104, 0.0
      %v5154 = vmax.f32 %v5105, 0.0
      %v5155 = vmax.f32 %v5106, 0.0
      %v5156 = vmax.f32 %v5107, 0.0
      %v5157 = vmax.f32 %v5108, 0.0
      %v5158 = vmax.f32 %v5109, 0.0
      %v5159 = vmax.f32 %v5110, 0.0
      %v5160 = vmax.f32 %v5111, 0.0
      %v5161 = vmax.f32 %v5112, 0.0
      %v5162 = vmax.f32 %v5113, 0.0
      %v5163 = vmax.f32 %v5114, 0.0
      %v5164 = vmax.f32 %v5115, 0.0
      %v5165 = vmax.f32 %v5116, 0.0
      %v5166 = vmax.f32 %v5117, 0.0
      %v5167 = vmax.f32 %v5118, 0.0
      %v5168 = vmax.f32 %v5119, 0.0
      %v5169 = vmax.f32 %v5120, 0.0
      %v5170 = vmax.f32 %v5121, 0.0
      %v5171 = vmax.f32 %v5122, 0.0
      %v5172 = vmax.f32 %v5123, 0.0
      %v5173 = vmax.f32 %v5124, 0.0
      %v5174 = vmax.f32 %v5125, 0.0
      %v5175 = vmax.f32 %v5126, 0.0
      %v5176 = vmax.f32 %v5127, 0.0
      %v5177 = vmax.f32 %v5128, 0.0
      %v5178 = vmax.f32 %v5129, 0.0
      %v5179 = vmax.f32 %v5130, 0.0
      %v5180 = vmax.f32 %v5131, 0.0
      %v5181 = vmax.f32 %v5132, 0.0
      %v5182 = vmax.f32 %v5133, 0.0
      %v5183 = vmax.f32 %v5134, 0.0
      %v5184 = vmax.f32 %v5135, 0.0
      %v5185 = vmax.f32 %v5136, 0.0
      %v5186 = vmax.f32 %v5137, 0.0
      %v5187 = vmax.f32 %v5138, 0.0
      %v5188 = vmax.f32 %v5139, 0.0
      %v5189 = vmax.f32 %v5140, 0.0
      %vm5190 = vcmask 261120
      %5191 = vst.msk [vmem:[%s202] sm:$0xff] %vm5190, %v5141
      %5192 = vst.msk [vmem:[%s202 + $0x8] sm:$0xff] %vm5190, %v5142
      %5193 = vst.msk [vmem:[%s202 + $0x10] sm:$0xff] %vm5190, %v5143
      %5194 = vst.msk [vmem:[%s202 + $0x18] sm:$0xff] %vm5190, %v5144
      %5195 = vst.msk [vmem:[%s202 + $0x20] sm:$0xff] %vm5190, %v5145
      %5196 = vst.msk [vmem:[%s202 + $0x28] sm:$0xff] %vm5190, %v5146
      %5197 = vst.msk [vmem:[%s202 + $0x30] sm:$0xff] %vm5190, %v5147
      %5198 = vst.msk [vmem:[%s202 + $0x38] sm:$0xff] %vm5190, %v5148
      %5199 = vst.msk [vmem:[%s202 + $0x40] sm:$0xff] %vm5190, %v5149
      %5200 = vst.msk [vmem:[%s202 + $0x48] sm:$0xff] %vm5190, %v5150
      %5201 = vst.msk [vmem:[%s202 + $0x50] sm:$0xff] %vm5190, %v5151
      %5202 = vst.msk [vmem:[%s202 + $0x58] sm:$0xff] %vm5190, %v5152
      %5203 = vst.msk [vmem:[%s202 + $0x60] sm:$0xff] %vm5190, %v5153
      %5204 = vst.msk [vmem:[%s202 + $0x68] sm:$0xff] %vm5190, %v5154
      %5205 = vst.msk [vmem:[%s202 + $0x70] sm:$0xff] %vm5190, %v5155
      %5206 = vst.msk [vmem:[%s202 + $0x78] sm:$0xff] %vm5190, %v5156
      %5207 = vst.msk [vmem:[%s202 + $0x80] sm:$0xff] %vm5190, %v5157
      %5208 = vst.msk [vmem:[%s202 + $0x88] sm:$0xff] %vm5190, %v5158
      %5209 = vst.msk [vmem:[%s202 + $0x90] sm:$0xff] %vm5190, %v5159
      %5210 = vst.msk [vmem:[%s202 + $0x98] sm:$0xff] %vm5190, %v5160
      %5211 = vst.msk [vmem:[%s202 + $0xa0] sm:$0xff] %vm5190, %v5161
      %5212 = vst.msk [vmem:[%s202 + $0xa8] sm:$0xff] %vm5190, %v5162
      %5213 = vst.msk [vmem:[%s202 + $0xb0] sm:$0xff] %vm5190, %v5163
      %5214 = vst.msk [vmem:[%s202 + $0xb8] sm:$0xff] %vm5190, %v5164
      %5215 = vst.msk [vmem:[%s202 + $0xc0] sm:$0xff] %vm5190, %v5165
      %5216 = vst.msk [vmem:[%s202 + $0xc8] sm:$0xff] %vm5190, %v5166
      %5217 = vst.msk [vmem:[%s202 + $0xd0] sm:$0xff] %vm5190, %v5167
      %5218 = vst.msk [vmem:[%s202 + $0xd8] sm:$0xff] %vm5190, %v5168
      %5219 = vst.msk [vmem:[%s202 + $0xe0] sm:$0xff] %vm5190, %v5169
      %5220 = vst.msk [vmem:[%s202 + $0xe8] sm:$0xff] %vm5190, %v5170
      %5221 = vst.msk [vmem:[%s202 + $0xf0] sm:$0xff] %vm5190, %v5171
      %5222 = vst.msk [vmem:[%s202 + $0xf8] sm:$0xff] %vm5190, %v5172
      %5223 = vst.msk [vmem:[%s202 + $0x100] sm:$0xff] %vm5190, %v5173
      %5224 = vst.msk [vmem:[%s202 + $0x108] sm:$0xff] %vm5190, %v5174
      %5225 = vst.msk [vmem:[%s202 + $0x110] sm:$0xff] %vm5190, %v5175
      %5226 = vst.msk [vmem:[%s202 + $0x118] sm:$0xff] %vm5190, %v5176
      %5227 = vst.msk [vmem:[%s202 + $0x120] sm:$0xff] %vm5190, %v5177
      %5228 = vst.msk [vmem:[%s202 + $0x128] sm:$0xff] %vm5190, %v5178
      %5229 = vst.msk [vmem:[%s202 + $0x130] sm:$0xff] %vm5190, %v5179
      %5230 = vst.msk [vmem:[%s202 + $0x138] sm:$0xff] %vm5190, %v5180
      %5231 = vst.msk [vmem:[%s202 + $0x140] sm:$0xff] %vm5190, %v5181
      %5232 = vst.msk [vmem:[%s202 + $0x148] sm:$0xff] %vm5190, %v5182
      %5233 = vst.msk [vmem:[%s202 + $0x150] sm:$0xff] %vm5190, %v5183
      %5234 = vst.msk [vmem:[%s202 + $0x158] sm:$0xff] %vm5190, %v5184
      %5235 = vst.msk [vmem:[%s202 + $0x160] sm:$0xff] %vm5190, %v5185
      %5236 = vst.msk [vmem:[%s202 + $0x168] sm:$0xff] %vm5190, %v5186
      %5237 = vst.msk [vmem:[%s202 + $0x170] sm:$0xff] %vm5190, %v5187
      %5238 = vst.msk [vmem:[%s202 + $0x178] sm:$0xff] %vm5190, %v5188
      %5239 = vst.msk [vmem:[%s202 + $0x180] sm:$0xff] %vm5190, %v5189
      %s5240 = smul.u32 49, %s15
      %p5241 = scmp.lt.s32.totalorder %s5240, 97
      %s5242 = scalar_select %p5241, %s5240, 97
      %s5243 = smul.addr %s5242, 8
      %s5244 = scalar_lea.vmem %s4, %s5243
      // Predicated region
      $region37: #{cnn_mnist_forward.4} parent=35 // pred_check
        %p5245 = pneg %p122
      $region38: #{cnn_mnist_forward.4} parent=35 // pred_check_branch
        %5247 = sbr.rel (%p5245) target = $region40
      $region39: #{cnn_mnist_forward.4} parent=35 // pred_region
        %s5248 = smul.u32 49, %s15
      $region40: #{cnn_mnist_forward.4} parent=35 // pred_fallthru
        _
    $region36: #{cnn_mnist_forward.4} parent=5 // pred_fallthru
      _
    %p5249 = scmp.le.s32.totalorder 2, %s10
    // Predicated region
    $region41: #{cnn_mnist_forward.4} parent=5 // pred_check
      %p5250 = pneg %p5249
    $region42: #{cnn_mnist_forward.4} parent=5 // pred_check_branch
      %5252 = sbr.rel (%p5250) target = $region44
    $region43: #{cnn_mnist_forward.4} parent=5 // pred_region
      %s5253 = ssub.s32 %s10, 2
      // Predicated region
      $region45: #{cnn_mnist_forward.4} parent=43 // pred_check
        %p5254 = pneg %p128
      $region46: #{cnn_mnist_forward.4} parent=43 // pred_check_branch
        %5256 = sbr.rel (%p5254) target = $region48
      $region47: #{cnn_mnist_forward.4} parent=43 // pred_region
        %s5257 = smul.u32 49, %s16
        %p5258 = scmp.lt.s32.totalorder %s5257, 97
        %s5259 = scalar_select %p5258, %s5257, 97
        %s5260 = smul.addr %s5259, 8
        %s5261 = scalar_lea.vmem %s4, %s5260
      $region48: #{cnn_mnist_forward.4} parent=43 // pred_fallthru
        _
    $region44: #{cnn_mnist_forward.4} parent=5 // pred_fallthru
      _
  $region6: #{cnn_mnist_forward.4} parent=0 // loop_footer
    %s14 = sadd.s32 1, %s10
  $region7: #{cnn_mnist_forward.4} parent=0 // loop_footer_branch
    %9 = sbr.rel target = $region3
  $region8: #{cnn_mnist_forward.4} parent=0 // loop_exit
    _

// kernel: cnn_mnist_forward.5
$region0: #{cnn_mnist_forward.5}
  #allocation0 [shape = 'u32[]', space=smem, size = 0x4, offset = 0x4, fixed_abs, tag = 'smem constant byte address 0x4 - core index']
  #allocation1 [shape = 'u32[144,128]{1,0:T(1,128)}', space=vmem, size = 0x12000, scoped, tag = 'internal scratch']
  %s0 = inlined_call_operand.vmem [shape: f32[16,1568], index: 0, kind: input, shape index: {}]
  %s1 = inlined_call_operand.vmem [shape: f32[1568,128], index: 1, kind: input, shape index: {}]
  %s2 = inlined_call_operand.vmem [shape: f32[1,128], index: 2, kind: input, shape index: {}]
  %s3 = inlined_call_operand.hbm [shape: f32[16,128], index: 3, kind: output, shape index: {}]
  %s4 = sld [smem:[#allocation0]]
  $region22: #{cnn_mnist_forward.5} parent=0
    _
  %s6 = ssub.s32 1, %s4
  %s7 = scalar_select 0, %s6, %s4
  $region1: #{cnn_mnist_forward.5} parent=0
    #allocation2 [shape = 'u8[8192]{0}', space=vmem, size = 0x2000, scoped, tag = 'output window, operand 0, single buffered']
    #allocation3 [shape = 's32[1]{0}', space=sflag, size = 0x4, scoped, tag = 'scoped memory for cnn_mnist_forward.5']
    %8 = vsyncpa [#allocation3], 0
    // Predicated region
    $region2: #{cnn_mnist_forward.5} parent=1 // pred_check
      _
    $region3: #{cnn_mnist_forward.5} parent=1 // pred_check_branch
      %10 = sbr.rel (0) target = $region5
    $region4: #{cnn_mnist_forward.5} parent=1 // pred_region
      _
    $region5: #{cnn_mnist_forward.5} parent=1 // pred_fallthru
      _
    // Predicated region
    $region6: #{cnn_mnist_forward.5} parent=1 // pred_check
      _
    $region7: #{cnn_mnist_forward.5} parent=1 // pred_check_branch
      %12 = sbr.rel (0) target = $region9
    $region8: #{cnn_mnist_forward.5} parent=1 // pred_region
      _
    $region9: #{cnn_mnist_forward.5} parent=1 // pred_fallthru
      _
    // Predicated region
    $region10: #{cnn_mnist_forward.5} parent=1 // pred_check
      _
    $region11: #{cnn_mnist_forward.5} parent=1 // pred_check_branch
      %14 = sbr.rel (0) target = $region13
    $region12: #{cnn_mnist_forward.5} parent=1 // pred_region
      _
    $region13: #{cnn_mnist_forward.5} parent=1 // pred_fallthru
      _
    %v15 = vld [vmem:[%s0] sm:$0xff]
    %v16 = vld [vmem:[%s0 + $0x8] sm:$0xff]
    %v17 = vld [vmem:[%s0 + $0x10] sm:$0xff]
    %v18 = vld [vmem:[%s0 + $0x18] sm:$0xff]
    %v19 = vld [vmem:[%s0 + $0x20] sm:$0xff]
    %v20 = vld [vmem:[%s0 + $0x28] sm:$0xff]
    %v21 = vld [vmem:[%s0 + $0x30] sm:$0xff]
    %v22 = vld [vmem:[%s0 + $0x38] sm:$0xff]
    %v23 = vld [vmem:[%s0 + $0x40] sm:$0xff]
    %v24 = vld [vmem:[%s0 + $0x48] sm:$0xff]
    %v25 = vld [vmem:[%s0 + $0x50] sm:$0xff]
    %v26 = vld [vmem:[%s0 + $0x58] sm:$0xff]
    %v27 = vld [vmem:[%s0 + $0x60] sm:$0xff]
    %v28 = vld [vmem:[%s0 + $0x68] sm:$0xff]
    %v29 = vld [vmem:[%s0 + $0x70] sm:$0xff]
    %v30 = vld [vmem:[%s0 + $0x78] sm:$0xff]
    %v31 = vld [vmem:[%s0 + $0x80] sm:$0xff]
    %v32 = vld [vmem:[%s0 + $0x88] sm:$0xff]
    %v33 = vld [vmem:[%s0 + $0x90] sm:$0xff]
    %v34 = vld [vmem:[%s0 + $0x98] sm:$0xff]
    %v35 = vld [vmem:[%s0 + $0xa0] sm:$0xff]
    %v36 = vld [vmem:[%s0 + $0xa8] sm:$0xff]
    %v37 = vld [vmem:[%s0 + $0xb0] sm:$0xff]
    %v38 = vld [vmem:[%s0 + $0xb8] sm:$0xff]
    %v39 = vld [vmem:[%s0 + $0xc0] sm:$0xff]
    %v40 = vld [vmem:[%s0 + $0xc8] sm:$0xff]
    %v41 = vld [vmem:[%s1] sm:$0xff]
    %v42 = vld [vmem:[%s1 + $0x8] sm:$0xff]
    %v43 = vld [vmem:[%s1 + $0x10] sm:$0xff]
    %v44 = vld [vmem:[%s1 + $0x18] sm:$0xff]
    %v45 = vld [vmem:[%s1 + $0x20] sm:$0xff]
    %v46 = vld [vmem:[%s1 + $0x28] sm:$0xff]
    %v47 = vld [vmem:[%s1 + $0x30] sm:$0xff]
    %v48 = vld [vmem:[%s1 + $0x38] sm:$0xff]
    %v49 = vld [vmem:[%s1 + $0x40] sm:$0xff]
    %v50 = vld [vmem:[%s1 + $0x48] sm:$0xff]
    %v51 = vld [vmem:[%s1 + $0x50] sm:$0xff]
    %v52 = vld [vmem:[%s1 + $0x58] sm:$0xff]
    %v53 = vld [vmem:[%s1 + $0x60] sm:$0xff]
    %v54 = vld [vmem:[%s1 + $0x68] sm:$0xff]
    %v55 = vld [vmem:[%s1 + $0x70] sm:$0xff]
    %v56 = vld [vmem:[%s1 + $0x78] sm:$0xff]
    %v57 = vld [vmem:[%s1 + $0x80] sm:$0xff]
    %v58 = vld [vmem:[%s1 + $0x88] sm:$0xff]
    %v59 = vld [vmem:[%s1 + $0x90] sm:$0xff]
    %v60 = vld [vmem:[%s1 + $0x98] sm:$0xff]
    %v61 = vld [vmem:[%s1 + $0xa0] sm:$0xff]
    %v62 = vld [vmem:[%s1 + $0xa8] sm:$0xff]
    %v63 = vld [vmem:[%s1 + $0xb0] sm:$0xff]
    %v64 = vld [vmem:[%s1 + $0xb8] sm:$0xff]
    %v65 = vld [vmem:[%s1 + $0xc0] sm:$0xff]
    %v66 = vld [vmem:[%s1 + $0xc8] sm:$0xff]
    %v67 = vld [vmem:[%s1 + $0xd0] sm:$0xff]
    %v68 = vld [vmem:[%s1 + $0xd8] sm:$0xff]
    %v69 = vld [vmem:[%s1 + $0xe0] sm:$0xff]
    %v70 = vld [vmem:[%s1 + $0xe8] sm:$0xff]
    %v71 = vld [vmem:[%s1 + $0xf0] sm:$0xff]
    %v72 = vld [vmem:[%s1 + $0xf8] sm:$0xff]
    %v73 = vld [vmem:[%s1 + $0x100] sm:$0xff]
    %v74 = vld [vmem:[%s1 + $0x108] sm:$0xff]
    %v75 = vld [vmem:[%s1 + $0x110] sm:$0xff]
    %v76 = vld [vmem:[%s1 + $0x118] sm:$0xff]
    %v77 = vld [vmem:[%s1 + $0x120] sm:$0xff]
    %v78 = vld [vmem:[%s1 + $0x128] sm:$0xff]
    %v79 = vld [vmem:[%s1 + $0x130] sm:$0xff]
    %v80 = vld [vmem:[%s1 + $0x138] sm:$0xff]
    %v81 = vld [vmem:[%s1 + $0x140] sm:$0xff]
    %v82 = vld [vmem:[%s1 + $0x148] sm:$0xff]
    %v83 = vld [vmem:[%s1 + $0x150] sm:$0xff]
    %v84 = vld [vmem:[%s1 + $0x158] sm:$0xff]
    %v85 = vld [vmem:[%s1 + $0x160] sm:$0xff]
    %v86 = vld [vmem:[%s1 + $0x168] sm:$0xff]
    %v87 = vld [vmem:[%s1 + $0x170] sm:$0xff]
    %v88 = vld [vmem:[%s1 + $0x178] sm:$0xff]
    %v89 = vld [vmem:[%s1 + $0x180] sm:$0xff]
    %v90 = vld [vmem:[%s1 + $0x188] sm:$0xff]
    %v91 = vld [vmem:[%s1 + $0x190] sm:$0xff]
    %v92 = vld [vmem:[%s1 + $0x198] sm:$0xff]
    %v93 = vld [vmem:[%s1 + $0x1a0] sm:$0xff]
    %v94 = vld [vmem:[%s1 + $0x1a8] sm:$0xff]
    %v95 = vld [vmem:[%s1 + $0x1b0] sm:$0xff]
    %v96 = vld [vmem:[%s1 + $0x1b8] sm:$0xff]
    %v97 = vld [vmem:[%s1 + $0x1c0] sm:$0xff]
    %v98 = vld [vmem:[%s1 + $0x1c8] sm:$0xff]
    %v99 = vld [vmem:[%s1 + $0x1d0] sm:$0xff]
    %v100 = vld [vmem:[%s1 + $0x1d8] sm:$0xff]
    %v101 = vld [vmem:[%s1 + $0x1e0] sm:$0xff]
    %v102 = vld [vmem:[%s1 + $0x1e8] sm:$0xff]
    %v103 = vld [vmem:[%s1 + $0x1f0] sm:$0xff]
    %v104 = vld [vmem:[%s1 + $0x1f8] sm:$0xff]
    %v105 = vld [vmem:[%s1 + $0x200] sm:$0xff]
    %v106 = vld [vmem:[%s1 + $0x208] sm:$0xff]
    %v107 = vld [vmem:[%s1 + $0x210] sm:$0xff]
    %v108 = vld [vmem:[%s1 + $0x218] sm:$0xff]
    %v109 = vld [vmem:[%s1 + $0x220] sm:$0xff]
    %v110 = vld [vmem:[%s1 + $0x228] sm:$0xff]
    %v111 = vld [vmem:[%s1 + $0x230] sm:$0xff]
    %v112 = vld [vmem:[%s1 + $0x238] sm:$0xff]
    %v113 = vld [vmem:[%s1 + $0x240] sm:$0xff]
    %v114 = vld [vmem:[%s1 + $0x248] sm:$0xff]
    %v115 = vld [vmem:[%s1 + $0x250] sm:$0xff]
    %v116 = vld [vmem:[%s1 + $0x258] sm:$0xff]
    %v117 = vld [vmem:[%s1 + $0x260] sm:$0xff]
    %v118 = vld [vmem:[%s1 + $0x268] sm:$0xff]
    %v119 = vld [vmem:[%s1 + $0x270] sm:$0xff]
    %v120 = vld [vmem:[%s1 + $0x278] sm:$0xff]
    %v121 = vld [vmem:[%s1 + $0x280] sm:$0xff]
    %v122 = vld [vmem:[%s1 + $0x288] sm:$0xff]
    %v123 = vld [vmem:[%s1 + $0x290] sm:$0xff]
    %v124 = vld [vmem:[%s1 + $0x298] sm:$0xff]
    %v125 = vld [vmem:[%s1 + $0x2a0] sm:$0xff]
    %v126 = vld [vmem:[%s1 + $0x2a8] sm:$0xff]
    %v127 = vld [vmem:[%s1 + $0x2b0] sm:$0xff]
    %v128 = vld [vmem:[%s1 + $0x2b8] sm:$0xff]
    %v129 = vld [vmem:[%s1 + $0x2c0] sm:$0xff]
    %v130 = vld [vmem:[%s1 + $0x2c8] sm:$0xff]
    %v131 = vld [vmem:[%s1 + $0x2d0] sm:$0xff]
    %v132 = vld [vmem:[%s1 + $0x2d8] sm:$0xff]
    %v133 = vld [vmem:[%s1 + $0x2e0] sm:$0xff]
    %v134 = vld [vmem:[%s1 + $0x2e8] sm:$0xff]
    %v135 = vld [vmem:[%s1 + $0x2f0] sm:$0xff]
    %v136 = vld [vmem:[%s1 + $0x2f8] sm:$0xff]
    %v137 = vld [vmem:[%s1 + $0x300] sm:$0xff]
    %v138 = vld [vmem:[%s1 + $0x308] sm:$0xff]
    %v139 = vld [vmem:[%s1 + $0x310] sm:$0xff]
    %v140 = vld [vmem:[%s1 + $0x318] sm:$0xff]
    %v141 = vld [vmem:[%s1 + $0x320] sm:$0xff]
    %v142 = vld [vmem:[%s1 + $0x328] sm:$0xff]
    %v143 = vld [vmem:[%s1 + $0x330] sm:$0xff]
    %v144 = vld [vmem:[%s1 + $0x338] sm:$0xff]
    %v145 = vld [vmem:[%s1 + $0x340] sm:$0xff]
    %v146 = vld [vmem:[%s1 + $0x348] sm:$0xff]
    %v147 = vld [vmem:[%s1 + $0x350] sm:$0xff]
    %v148 = vld [vmem:[%s1 + $0x358] sm:$0xff]
    %v149 = vld [vmem:[%s1 + $0x360] sm:$0xff]
    %v150 = vld [vmem:[%s1 + $0x368] sm:$0xff]
    %v151 = vld [vmem:[%s1 + $0x370] sm:$0xff]
    %v152 = vld [vmem:[%s1 + $0x378] sm:$0xff]
    %v153 = vld [vmem:[%s1 + $0x380] sm:$0xff]
    %v154 = vld [vmem:[%s1 + $0x388] sm:$0xff]
    %v155 = vld [vmem:[%s1 + $0x390] sm:$0xff]
    %v156 = vld [vmem:[%s1 + $0x398] sm:$0xff]
    %v157 = vld [vmem:[%s1 + $0x3a0] sm:$0xff]
    %v158 = vld [vmem:[%s1 + $0x3a8] sm:$0xff]
    %v159 = vld [vmem:[%s1 + $0x3b0] sm:$0xff]
    %v160 = vld [vmem:[%s1 + $0x3b8] sm:$0xff]
    %v161 = vld [vmem:[%s1 + $0x3c0] sm:$0xff]
    %v162 = vld [vmem:[%s1 + $0x3c8] sm:$0xff]
    %v163 = vld [vmem:[%s1 + $0x3d0] sm:$0xff]
    %v164 = vld [vmem:[%s1 + $0x3d8] sm:$0xff]
    %v165 = vld [vmem:[%s1 + $0x3e0] sm:$0xff]
    %v166 = vld [vmem:[%s1 + $0x3e8] sm:$0xff]
    %v167 = vld [vmem:[%s1 + $0x3f0] sm:$0xff]
    %v168 = vld [vmem:[%s1 + $0x3f8] sm:$0xff]
    %v169 = vld [vmem:[%s1 + $0x400] sm:$0xff]
    %v170 = vld [vmem:[%s1 + $0x408] sm:$0xff]
    %v171 = vld [vmem:[%s1 + $0x410] sm:$0xff]
    %v172 = vld [vmem:[%s1 + $0x418] sm:$0xff]
    %v173 = vld [vmem:[%s1 + $0x420] sm:$0xff]
    %v174 = vld [vmem:[%s1 + $0x428] sm:$0xff]
    %v175 = vld [vmem:[%s1 + $0x430] sm:$0xff]
    %v176 = vld [vmem:[%s1 + $0x438] sm:$0xff]
    %v177 = vld [vmem:[%s1 + $0x440] sm:$0xff]
    %v178 = vld [vmem:[%s1 + $0x448] sm:$0xff]
    %v179 = vld [vmem:[%s1 + $0x450] sm:$0xff]
    %v180 = vld [vmem:[%s1 + $0x458] sm:$0xff]
    %v181 = vld [vmem:[%s1 + $0x460] sm:$0xff]
    %v182 = vld [vmem:[%s1 + $0x468] sm:$0xff]
    %v183 = vld [vmem:[%s1 + $0x470] sm:$0xff]
    %v184 = vld [vmem:[%s1 + $0x478] sm:$0xff]
    %v185 = vld [vmem:[%s1 + $0x480] sm:$0xff]
    %v186 = vld [vmem:[%s1 + $0x488] sm:$0xff]
    %v187 = vld [vmem:[%s1 + $0x490] sm:$0xff]
    %v188 = vld [vmem:[%s1 + $0x498] sm:$0xff]
    %v189 = vld [vmem:[%s1 + $0x4a0] sm:$0xff]
    %v190 = vld [vmem:[%s1 + $0x4a8] sm:$0xff]
    %v191 = vld [vmem:[%s1 + $0x4b0] sm:$0xff]
    %v192 = vld [vmem:[%s1 + $0x4b8] sm:$0xff]
    %v193 = vld [vmem:[%s1 + $0x4c0] sm:$0xff]
    %v194 = vld [vmem:[%s1 + $0x4c8] sm:$0xff]
    %v195 = vld [vmem:[%s1 + $0x4d0] sm:$0xff]
    %v196 = vld [vmem:[%s1 + $0x4d8] sm:$0xff]
    %v197 = vld [vmem:[%s1 + $0x4e0] sm:$0xff]
    %v198 = vld [vmem:[%s1 + $0x4e8] sm:$0xff]
    %v199 = vld [vmem:[%s1 + $0x4f0] sm:$0xff]
    %v200 = vld [vmem:[%s1 + $0x4f8] sm:$0xff]
    %v201 = vld [vmem:[%s1 + $0x500] sm:$0xff]
    %v202 = vld [vmem:[%s1 + $0x508] sm:$0xff]
    %v203 = vld [vmem:[%s1 + $0x510] sm:$0xff]
    %v204 = vld [vmem:[%s1 + $0x518] sm:$0xff]
    %v205 = vld [vmem:[%s1 + $0x520] sm:$0xff]
    %v206 = vld [vmem:[%s1 + $0x528] sm:$0xff]
    %v207 = vld [vmem:[%s1 + $0x530] sm:$0xff]
    %v208 = vld [vmem:[%s1 + $0x538] sm:$0xff]
    %v209 = vld [vmem:[%s1 + $0x540] sm:$0xff]
    %v210 = vld [vmem:[%s1 + $0x548] sm:$0xff]
    %v211 = vld [vmem:[%s1 + $0x550] sm:$0xff]
    %v212 = vld [vmem:[%s1 + $0x558] sm:$0xff]
    %v213 = vld [vmem:[%s1 + $0x560] sm:$0xff]
    %v214 = vld [vmem:[%s1 + $0x568] sm:$0xff]
    %v215 = vld [vmem:[%s1 + $0x570] sm:$0xff]
    %v216 = vld [vmem:[%s1 + $0x578] sm:$0xff]
    %v217 = vld [vmem:[%s1 + $0x580] sm:$0xff]
    %v218 = vld [vmem:[%s1 + $0x588] sm:$0xff]
    %v219 = vld [vmem:[%s1 + $0x590] sm:$0xff]
    %v220 = vld [vmem:[%s1 + $0x598] sm:$0xff]
    %v221 = vld [vmem:[%s1 + $0x5a0] sm:$0xff]
    %v222 = vld [vmem:[%s1 + $0x5a8] sm:$0xff]
    %v223 = vld [vmem:[%s1 + $0x5b0] sm:$0xff]
    %v224 = vld [vmem:[%s1 + $0x5b8] sm:$0xff]
    %v225 = vld [vmem:[%s1 + $0x5c0] sm:$0xff]
    %v226 = vld [vmem:[%s1 + $0x5c8] sm:$0xff]
    %v227 = vld [vmem:[%s1 + $0x5d0] sm:$0xff]
    %v228 = vld [vmem:[%s1 + $0x5d8] sm:$0xff]
    %v229 = vld [vmem:[%s1 + $0x5e0] sm:$0xff]
    %v230 = vld [vmem:[%s1 + $0x5e8] sm:$0xff]
    %v231 = vld [vmem:[%s1 + $0x5f0] sm:$0xff]
    %v232 = vld [vmem:[%s1 + $0x5f8] sm:$0xff]
    %v233 = vld [vmem:[%s1 + $0x600] sm:$0xff]
    %v234 = vld [vmem:[%s1 + $0x608] sm:$0xff]
    %v235 = vld [vmem:[%s1 + $0x610] sm:$0xff]
    %v236 = vld [vmem:[%s1 + $0x618] sm:$0xff]
    %v237 = vld [vmem:[%s2] sm:$0x1]
    %v239 = vlaneseq
    %v240 = vshrl.u32 %v239, 7
    %v241 = vsub.s32 0, %v240
    %v242 = vrot.slane %v237, %v241
    %vm244 = vcmask 261120
    %v246 = vsel %vm244, %v27, 0
    %v249 = vsel %vm244, %v40, 0
    %251 = vmatprep.subr.mxu0 0.0
    %252 = vmatpush1.msra.mxu0 %v41
    %253 = vmatprep.subr.mxu0 0.0
    %254 = vmatpush1.msra.mxu0 %v42
    %255 = vmatprep.subr.mxu0 0.0
    %256 = vmatpush1.msra.mxu0 %v43
    %257 = vmatprep.subr.mxu0 0.0
    %258 = vmatpush1.msra.mxu0 %v44
    %259 = vmatprep.subr.mxu0 0.0
    %260 = vmatpush1.msra.mxu0 %v45
    %261 = vmatprep.subr.mxu0 0.0
    %262 = vmatpush1.msra.mxu0 %v46
    %263 = vmatprep.subr.mxu0 0.0
    %264 = vmatpush1.msra.mxu0 %v47
    %265 = vmatprep.subr.mxu0 0.0
    %266 = vmatpush1.msra.mxu0 %v48
    %267 = vmatprep.subr.mxu0 0.0
    %268 = vmatpush1.msra.mxu0 %v49
    %269 = vmatprep.subr.mxu0 0.0
    %270 = vmatpush1.msra.mxu0 %v50
    %271 = vmatprep.subr.mxu0 0.0
    %272 = vmatpush1.msra.mxu0 %v51
    %273 = vmatprep.subr.mxu0 0.0
    %274 = vmatpush1.msra.mxu0 %v52
    %275 = vmatprep.subr.mxu0 0.0
    %276 = vmatpush1.msra.mxu0 %v53
    %277 = vmatprep.subr.mxu0 0.0
    %278 = vmatpush1.msra.mxu0 %v54
    %279 = vmatprep.subr.mxu0 0.0
    %280 = vmatpush1.msra.mxu0 %v55
    %281 = vmatprep.subr.mxu0 0.0
    %282 = vmatpush1.msra.mxu0 %v56
    %283 = vmatprep.subr.mxu0 0.0
    %284 = vmatpush1.msra.mxu0 %v57
    %285 = vmatprep.subr.mxu0 0.0
    %286 = vmatpush1.msra.mxu0 %v58
    %287 = vmatprep.subr.mxu0 0.0
    %288 = vmatpush1.msra.mxu0 %v59
    %289 = vmatprep.subr.mxu0 0.0
    %290 = vmatpush1.msra.mxu0 %v60
    %291 = vmatprep.subr.mxu0 0.0
    %292 = vmatpush1.msra.mxu0 %v61
    %293 = vmatprep.subr.mxu0 0.0
    %294 = vmatpush1.msra.mxu0 %v62
    %295 = vmatprep.subr.mxu0 0.0
    %296 = vmatpush1.msra.mxu0 %v63
    %297 = vmatprep.subr.mxu0 0.0
    %298 = vmatpush1.msra.mxu0 %v64
    %299 = vmatprep.subr.mxu0 0.0
    %300 = vmatpush1.msra.mxu0 %v65
    %301 = vmatprep.subr.mxu0 0.0
    %302 = vmatpush1.msra.mxu0 %v66
    %303 = vmatprep.subr.mxu0 0.0
    %304 = vmatpush1.msra.mxu0 %v67
    %305 = vmatprep.subr.mxu0 0.0
    %306 = vmatpush1.msra.mxu0 %v68
    %307 = vmatprep.subr.mxu0 0.0
    %308 = vmatpush1.msra.mxu0 %v69
    %309 = vmatprep.subr.mxu0 0.0
    %310 = vmatpush1.msra.mxu0 %v70
    %311 = vmatprep.subr.mxu0 0.0
    %312 = vmatpush1.msra.mxu0 %v71
    %313 = vmatprep.subr.mxu0 0.0
    %314 = vmatpush1.msra.mxu0 %v72
    %315 = vmatprep.mubr.f32.mxu0 %v16
    %316 = vmatmul.mubr.f32.gmra.mrb[0].mxu0 %v15
    %v317 = vpop.f32.mrb[0].mxu0
    %v318 = vadd.f32 %v242, %v317
    %v319 = vpop.f32.mrb[0].mxu0
    %320 = vmatprep.mubr.f32.mxu0 %v29
    %321 = vmatmul.mubr.f32.gmra.mrb[0].mxu0 %v28
    %v322 = vpop.f32.mrb[0].mxu0
    %v323 = vadd.f32 %v242, %v322
    %v324 = vpop.f32.mrb[0].mxu0
    %325 = vdwg.mxu0
    %326 = vmatprep.subr.mxu0 0.0
    %327 = vmatpush1.msra.mxu0 %v73
    %328 = vmatprep.subr.mxu0 0.0
    %329 = vmatpush1.msra.mxu0 %v74
    %330 = vmatprep.subr.mxu0 0.0
    %331 = vmatpush1.msra.mxu0 %v75
    %332 = vmatprep.subr.mxu0 0.0
    %333 = vmatpush1.msra.mxu0 %v76
    %334 = vmatprep.subr.mxu0 0.0
    %335 = vmatpush1.msra.mxu0 %v77
    %336 = vmatprep.subr.mxu0 0.0
    %337 = vmatpush1.msra.mxu0 %v78
    %338 = vmatprep.subr.mxu0 0.0
    %339 = vmatpush1.msra.mxu0 %v79
    %340 = vmatprep.subr.mxu0 0.0
    %341 = vmatpush1.msra.mxu0 %v80
    %342 = vmatprep.subr.mxu0 0.0
    %343 = vmatpush1.msra.mxu0 %v81
    %344 = vmatprep.subr.mxu0 0.0
    %345 = vmatpush1.msra.mxu0 %v82
    %346 = vmatprep.subr.mxu0 0.0
    %347 = vmatpush1.msra.mxu0 %v83
    %348 = vmatprep.subr.mxu0 0.0
    %349 = vmatpush1.msra.mxu0 %v84
    %350 = vmatprep.subr.mxu0 0.0
    %351 = vmatpush1.msra.mxu0 %v85
    %352 = vmatprep.subr.mxu0 0.0
    %353 = vmatpush1.msra.mxu0 %v86
    %354 = vmatprep.subr.mxu0 0.0
    %355 = vmatpush1.msra.mxu0 %v87
    %356 = vmatprep.subr.mxu0 0.0
    %357 = vmatpush1.msra.mxu0 %v88
    %358 = vmatprep.subr.mxu0 0.0
    %359 = vmatpush1.msra.mxu0 %v89
    %360 = vmatprep.subr.mxu0 0.0
    %361 = vmatpush1.msra.mxu0 %v90
    %362 = vmatprep.subr.mxu0 0.0
    %363 = vmatpush1.msra.mxu0 %v91
    %364 = vmatprep.subr.mxu0 0.0
    %365 = vmatpush1.msra.mxu0 %v92
    %366 = vmatprep.subr.mxu0 0.0
    %367 = vmatpush1.msra.mxu0 %v93
    %368 = vmatprep.subr.mxu0 0.0
    %369 = vmatpush1.msra.mxu0 %v94
    %370 = vmatprep.subr.mxu0 0.0
    %371 = vmatpush1.msra.mxu0 %v95
    %372 = vmatprep.subr.mxu0 0.0
    %373 = vmatpush1.msra.mxu0 %v96
    %374 = vmatprep.subr.mxu0 0.0
    %375 = vmatpush1.msra.mxu0 %v97
    %376 = vmatprep.subr.mxu0 0.0
    %377 = vmatpush1.msra.mxu0 %v98
    %378 = vmatprep.subr.mxu0 0.0
    %379 = vmatpush1.msra.mxu0 %v99
    %380 = vmatprep.subr.mxu0 0.0
    %381 = vmatpush1.msra.mxu0 %v100
    %382 = vmatprep.subr.mxu0 0.0
    %383 = vmatpush1.msra.mxu0 %v101
    %384 = vmatprep.subr.mxu0 0.0
    %385 = vmatpush1.msra.mxu0 %v102
    %386 = vmatprep.subr.mxu0 0.0
    %387 = vmatpush1.msra.mxu0 %v103
    %388 = vmatprep.subr.mxu0 0.0
    %389 = vmatpush1.msra.mxu0 %v104
    %390 = vmatprep.mubr.f32.mxu0 %v18
    %391 = vmatmul.mubr.f32.gmra.mrb[0].mxu0 %v17
    %v392 = vpop.f32.mrb[0].mxu0
    %v393 = vadd.f32 %v318, %v392
    %v394 = vpop.f32.mrb[0].mxu0
    %395 = vmatprep.mubr.f32.mxu0 %v31
    %396 = vmatmul.mubr.f32.gmra.mrb[0].mxu0 %v30
    %v397 = vpop.f32.mrb[0].mxu0
    %v398 = vadd.f32 %v323, %v397
    %v399 = vpop.f32.mrb[0].mxu0
    %400 = vdwg.mxu0
    %401 = vmatprep.subr.mxu0 0.0
    %402 = vmatpush1.msra.mxu0 %v105
    %403 = vmatprep.subr.mxu0 0.0
    %404 = vmatpush1.msra.mxu0 %v106
    %405 = vmatprep.subr.mxu0 0.0
    %406 = vmatpush1.msra.mxu0 %v107
    %407 = vmatprep.subr.mxu0 0.0
    %408 = vmatpush1.msra.mxu0 %v108
    %409 = vmatprep.subr.mxu0 0.0
    %410 = vmatpush1.msra.mxu0 %v109
    %411 = vmatprep.subr.mxu0 0.0
    %412 = vmatpush1.msra.mxu0 %v110
    %413 = vmatprep.subr.mxu0 0.0
    %414 = vmatpush1.msra.mxu0 %v111
    %415 = vmatprep.subr.mxu0 0.0
    %416 = vmatpush1.msra.mxu0 %v112
    %417 = vmatprep.subr.mxu0 0.0
    %418 = vmatpush1.msra.mxu0 %v113
    %419 = vmatprep.subr.mxu0 0.0
    %420 = vmatpush1.msra.mxu0 %v114
    %421 = vmatprep.subr.mxu0 0.0
    %422 = vmatpush1.msra.mxu0 %v115
    %423 = vmatprep.subr.mxu0 0.0
    %424 = vmatpush1.msra.mxu0 %v116
    %425 = vmatprep.subr.mxu0 0.0
    %426 = vmatpush1.msra.mxu0 %v117
    %427 = vmatprep.subr.mxu0 0.0
    %428 = vmatpush1.msra.mxu0 %v118
    %429 = vmatprep.subr.mxu0 0.0
    %430 = vmatpush1.msra.mxu0 %v119
    %431 = vmatprep.subr.mxu0 0.0
    %432 = vmatpush1.msra.mxu0 %v120
    %433 = vmatprep.subr.mxu0 0.0
    %434 = vmatpush1.msra.mxu0 %v121
    %435 = vmatprep.subr.mxu0 0.0
    %436 = vmatpush1.msra.mxu0 %v122
    %437 = vmatprep.subr.mxu0 0.0
    %438 = vmatpush1.msra.mxu0 %v123
    %439 = vmatprep.subr.mxu0 0.0
    %440 = vmatpush1.msra.mxu0 %v124
    %441 = vmatprep.subr.mxu0 0.0
    %442 = vmatpush1.msra.mxu0 %v125
    %443 = vmatprep.subr.mxu0 0.0
    %444 = vmatpush1.msra.mxu0 %v126
    %445 = vmatprep.subr.mxu0 0.0
    %446 = vmatpush1.msra.mxu0 %v127
    %447 = vmatprep.subr.mxu0 0.0
    %448 = vmatpush1.msra.mxu0 %v128
    %449 = vmatprep.subr.mxu0 0.0
    %450 = vmatpush1.msra.mxu0 %v129
    %451 = vmatprep.subr.mxu0 0.0
    %452 = vmatpush1.msra.mxu0 %v130
    %453 = vmatprep.subr.mxu0 0.0
    %454 = vmatpush1.msra.mxu0 %v131
    %455 = vmatprep.subr.mxu0 0.0
    %456 = vmatpush1.msra.mxu0 %v132
    %457 = vmatprep.subr.mxu0 0.0
    %458 = vmatpush1.msra.mxu0 %v133
    %459 = vmatprep.subr.mxu0 0.0
    %460 = vmatpush1.msra.mxu0 %v134
    %461 = vmatprep.subr.mxu0 0.0
    %462 = vmatpush1.msra.mxu0 %v135
    %463 = vmatprep.subr.mxu0 0.0
    %464 = vmatpush1.msra.mxu0 %v136
    %465 = vmatprep.mubr.f32.mxu0 %v20
    %466 = vmatmul.mubr.f32.gmra.mrb[0].mxu0 %v19
    %v467 = vpop.f32.mrb[0].mxu0
    %v468 = vadd.f32 %v393, %v467
    %v469 = vpop.f32.mrb[0].mxu0
    %470 = vmatprep.mubr.f32.mxu0 %v33
    %471 = vmatmul.mubr.f32.gmra.mrb[0].mxu0 %v32
    %v472 = vpop.f32.mrb[0].mxu0
    %v473 = vadd.f32 %v398, %v472
    %v474 = vpop.f32.mrb[0].mxu0
    %475 = vdwg.mxu0
    %476 = vmatprep.subr.mxu0 0.0
    %477 = vmatpush1.msra.mxu0 %v137
    %478 = vmatprep.subr.mxu0 0.0
    %479 = vmatpush1.msra.mxu0 %v138
    %480 = vmatprep.subr.mxu0 0.0
    %481 = vmatpush1.msra.mxu0 %v139
    %482 = vmatprep.subr.mxu0 0.0
    %483 = vmatpush1.msra.mxu0 %v140
    %484 = vmatprep.subr.mxu0 0.0
    %485 = vmatpush1.msra.mxu0 %v141
    %486 = vmatprep.subr.mxu0 0.0
    %487 = vmatpush1.msra.mxu0 %v142
    %488 = vmatprep.subr.mxu0 0.0
    %489 = vmatpush1.msra.mxu0 %v143
    %490 = vmatprep.subr.mxu0 0.0
    %491 = vmatpush1.msra.mxu0 %v144
    %492 = vmatprep.subr.mxu0 0.0
    %493 = vmatpush1.msra.mxu0 %v145
    %494 = vmatprep.subr.mxu0 0.0
    %495 = vmatpush1.msra.mxu0 %v146
    %496 = vmatprep.subr.mxu0 0.0
    %497 = vmatpush1.msra.mxu0 %v147
    %498 = vmatprep.subr.mxu0 0.0
    %499 = vmatpush1.msra.mxu0 %v148
    %500 = vmatprep.subr.mxu0 0.0
    %501 = vmatpush1.msra.mxu0 %v149
    %502 = vmatprep.subr.mxu0 0.0
    %503 = vmatpush1.msra.mxu0 %v150
    %504 = vmatprep.subr.mxu0 0.0
    %505 = vmatpush1.msra.mxu0 %v151
    %506 = vmatprep.subr.mxu0 0.0
    %507 = vmatpush1.msra.mxu0 %v152
    %508 = vmatprep.subr.mxu0 0.0
    %509 = vmatpush1.msra.mxu0 %v153
    %510 = vmatprep.subr.mxu0 0.0
    %511 = vmatpush1.msra.mxu0 %v154
    %512 = vmatprep.subr.mxu0 0.0
    %513 = vmatpush1.msra.mxu0 %v155
    %514 = vmatprep.subr.mxu0 0.0
    %515 = vmatpush1.msra.mxu0 %v156
    %516 = vmatprep.subr.mxu0 0.0
    %517 = vmatpush1.msra.mxu0 %v157
    %518 = vmatprep.subr.mxu0 0.0
    %519 = vmatpush1.msra.mxu0 %v158
    %520 = vmatprep.subr.mxu0 0.0
    %521 = vmatpush1.msra.mxu0 %v159
    %522 = vmatprep.subr.mxu0 0.0
    %523 = vmatpush1.msra.mxu0 %v160
    %524 = vmatprep.subr.mxu0 0.0
    %525 = vmatpush1.msra.mxu0 %v161
    %526 = vmatprep.subr.mxu0 0.0
    %527 = vmatpush1.msra.mxu0 %v162
    %528 = vmatprep.subr.mxu0 0.0
    %529 = vmatpush1.msra.mxu0 %v163
    %530 = vmatprep.subr.mxu0 0.0
    %531 = vmatpush1.msra.mxu0 %v164
    %532 = vmatprep.subr.mxu0 0.0
    %533 = vmatpush1.msra.mxu0 %v165
    %534 = vmatprep.subr.mxu0 0.0
    %535 = vmatpush1.msra.mxu0 %v166
    %536 = vmatprep.subr.mxu0 0.0
    %537 = vmatpush1.msra.mxu0 %v167
    %538 = vmatprep.subr.mxu0 0.0
    %539 = vmatpush1.msra.mxu0 %v168
    %540 = vmatprep.mubr.f32.mxu0 %v22
    %541 = vmatmul.mubr.f32.gmra.mrb[0].mxu0 %v21
    %v542 = vpop.f32.mrb[0].mxu0
    %v543 = vadd.f32 %v468, %v542
    %v544 = vpop.f32.mrb[0].mxu0
    %545 = vmatprep.mubr.f32.mxu0 %v35
    %546 = vmatmul.mubr.f32.gmra.mrb[0].mxu0 %v34
    %v547 = vpop.f32.mrb[0].mxu0
    %v548 = vadd.f32 %v473, %v547
    %v549 = vpop.f32.mrb[0].mxu0
    %550 = vdwg.mxu0
    %551 = vmatprep.subr.mxu0 0.0
    %552 = vmatpush1.msra.mxu0 %v169
    %553 = vmatprep.subr.mxu0 0.0
    %554 = vmatpush1.msra.mxu0 %v170
    %555 = vmatprep.subr.mxu0 0.0
    %556 = vmatpush1.msra.mxu0 %v171
    %557 = vmatprep.subr.mxu0 0.0
    %558 = vmatpush1.msra.mxu0 %v172
    %559 = vmatprep.subr.mxu0 0.0
    %560 = vmatpush1.msra.mxu0 %v173
    %561 = vmatprep.subr.mxu0 0.0
    %562 = vmatpush1.msra.mxu0 %v174
    %563 = vmatprep.subr.mxu0 0.0
    %564 = vmatpush1.msra.mxu0 %v175
    %565 = vmatprep.subr.mxu0 0.0
    %566 = vmatpush1.msra.mxu0 %v176
    %567 = vmatprep.subr.mxu0 0.0
    %568 = vmatpush1.msra.mxu0 %v177
    %569 = vmatprep.subr.mxu0 0.0
    %570 = vmatpush1.msra.mxu0 %v178
    %571 = vmatprep.subr.mxu0 0.0
    %572 = vmatpush1.msra.mxu0 %v179
    %573 = vmatprep.subr.mxu0 0.0
    %574 = vmatpush1.msra.mxu0 %v180
    %575 = vmatprep.subr.mxu0 0.0
    %576 = vmatpush1.msra.mxu0 %v181
    %577 = vmatprep.subr.mxu0 0.0
    %578 = vmatpush1.msra.mxu0 %v182
    %579 = vmatprep.subr.mxu0 0.0
    %580 = vmatpush1.msra.mxu0 %v183
    %581 = vmatprep.subr.mxu0 0.0
    %582 = vmatpush1.msra.mxu0 %v184
    %583 = vmatprep.subr.mxu0 0.0
    %584 = vmatpush1.msra.mxu0 %v185
    %585 = vmatprep.subr.mxu0 0.0
    %586 = vmatpush1.msra.mxu0 %v186
    %587 = vmatprep.subr.mxu0 0.0
    %588 = vmatpush1.msra.mxu0 %v187
    %589 = vmatprep.subr.mxu0 0.0
    %590 = vmatpush1.msra.mxu0 %v188
    %591 = vmatprep.subr.mxu0 0.0
    %592 = vmatpush1.msra.mxu0 %v189
    %593 = vmatprep.subr.mxu0 0.0
    %594 = vmatpush1.msra.mxu0 %v190
    %595 = vmatprep.subr.mxu0 0.0
    %596 = vmatpush1.msra.mxu0 %v191
    %597 = vmatprep.subr.mxu0 0.0
    %598 = vmatpush1.msra.mxu0 %v192
    %599 = vmatprep.subr.mxu0 0.0
    %600 = vmatpush1.msra.mxu0 %v193
    %601 = vmatprep.subr.mxu0 0.0
    %602 = vmatpush1.msra.mxu0 %v194
    %603 = vmatprep.subr.mxu0 0.0
    %604 = vmatpush1.msra.mxu0 %v195
    %605 = vmatprep.subr.mxu0 0.0
    %606 = vmatpush1.msra.mxu0 %v196
    %607 = vmatprep.subr.mxu0 0.0
    %608 = vmatpush1.msra.mxu0 %v197
    %609 = vmatprep.subr.mxu0 0.0
    %610 = vmatpush1.msra.mxu0 %v198
    %611 = vmatprep.subr.mxu0 0.0
    %612 = vmatpush1.msra.mxu0 %v199
    %613 = vmatprep.subr.mxu0 0.0
    %614 = vmatpush1.msra.mxu0 %v200
    %615 = vmatprep.mubr.f32.mxu0 %v24
    %616 = vmatmul.mubr.f32.gmra.mrb[0].mxu0 %v23
    %v617 = vpop.f32.mrb[0].mxu0
    %v618 = vadd.f32 %v543, %v617
    %v619 = vpop.f32.mrb[0].mxu0
    %620 = vmatprep.mubr.f32.mxu0 %v37
    %621 = vmatmul.mubr.f32.gmra.mrb[0].mxu0 %v36
    %v622 = vpop.f32.mrb[0].mxu0
    %v623 = vadd.f32 %v548, %v622
    %v624 = vpop.f32.mrb[0].mxu0
    %625 = vdwg.mxu0
    %626 = vmatprep.subr.mxu0 0.0
    %627 = vmatpush1.msra.mxu0 %v201
    %628 = vmatprep.subr.mxu0 0.0
    %629 = vmatpush1.msra.mxu0 %v202
    %630 = vmatprep.subr.mxu0 0.0
    %631 = vmatpush1.msra.mxu0 %v203
    %632 = vmatprep.subr.mxu0 0.0
    %633 = vmatpush1.msra.mxu0 %v204
    %634 = vmatprep.subr.mxu0 0.0
    %635 = vmatpush1.msra.mxu0 %v205
    %636 = vmatprep.subr.mxu0 0.0
    %637 = vmatpush1.msra.mxu0 %v206
    %638 = vmatprep.subr.mxu0 0.0
    %639 = vmatpush1.msra.mxu0 %v207
    %640 = vmatprep.subr.mxu0 0.0
    %641 = vmatpush1.msra.mxu0 %v208
    %642 = vmatprep.subr.mxu0 0.0
    %643 = vmatpush1.msra.mxu0 %v209
    %644 = vmatprep.subr.mxu0 0.0
    %645 = vmatpush1.msra.mxu0 %v210
    %646 = vmatprep.subr.mxu0 0.0
    %647 = vmatpush1.msra.mxu0 %v211
    %648 = vmatprep.subr.mxu0 0.0
    %649 = vmatpush1.msra.mxu0 %v212
    %650 = vmatprep.subr.mxu0 0.0
    %651 = vmatpush1.msra.mxu0 %v213
    %652 = vmatprep.subr.mxu0 0.0
    %653 = vmatpush1.msra.mxu0 %v214
    %654 = vmatprep.subr.mxu0 0.0
    %655 = vmatpush1.msra.mxu0 %v215
    %656 = vmatprep.subr.mxu0 0.0
    %657 = vmatpush1.msra.mxu0 %v216
    %658 = vmatprep.subr.mxu0 0.0
    %659 = vmatpush1.msra.mxu0 %v217
    %660 = vmatprep.subr.mxu0 0.0
    %661 = vmatpush1.msra.mxu0 %v218
    %662 = vmatprep.subr.mxu0 0.0
    %663 = vmatpush1.msra.mxu0 %v219
    %664 = vmatprep.subr.mxu0 0.0
    %665 = vmatpush1.msra.mxu0 %v220
    %666 = vmatprep.subr.mxu0 0.0
    %667 = vmatpush1.msra.mxu0 %v221
    %668 = vmatprep.subr.mxu0 0.0
    %669 = vmatpush1.msra.mxu0 %v222
    %670 = vmatprep.subr.mxu0 0.0
    %671 = vmatpush1.msra.mxu0 %v223
    %672 = vmatprep.subr.mxu0 0.0
    %673 = vmatpush1.msra.mxu0 %v224
    %674 = vmatprep.subr.mxu0 0.0
    %675 = vmatpush1.msra.mxu0 %v225
    %676 = vmatprep.subr.mxu0 0.0
    %677 = vmatpush1.msra.mxu0 %v226
    %678 = vmatprep.subr.mxu0 0.0
    %679 = vmatpush1.msra.mxu0 %v227
    %680 = vmatprep.subr.mxu0 0.0
    %681 = vmatpush1.msra.mxu0 %v228
    %682 = vmatprep.subr.mxu0 0.0
    %683 = vmatpush1.msra.mxu0 %v229
    %684 = vmatprep.subr.mxu0 0.0
    %685 = vmatpush1.msra.mxu0 %v230
    %686 = vmatprep.subr.mxu0 0.0
    %687 = vmatpush1.msra.mxu0 %v231
    %688 = vmatprep.subr.mxu0 0.0
    %689 = vmatpush1.msra.mxu0 %v232
    %690 = vmatprep.mubr.f32.mxu0 %v26
    %691 = vmatmul.mubr.f32.gmra.mrb[0].mxu0 %v25
    %v692 = vpop.f32.mrb[0].mxu0
    %v693 = vadd.f32 %v618, %v692
    %v694 = vpop.f32.mrb[0].mxu0
    %695 = vmatprep.mubr.f32.mxu0 %v39
    %696 = vmatmul.mubr.f32.gmra.mrb[0].mxu0 %v38
    %v697 = vpop.f32.mrb[0].mxu0
    %v698 = vadd.f32 %v623, %v697
    %v699 = vpop.f32.mrb[0].mxu0
    %700 = vdwg.mxu0
    %701 = vmatprep.subr.mxu0 0.0
    %702 = vmatpush1.msra.mxu0 %v233
    %703 = vmatprep.subr.mxu0 0.0
    %704 = vmatpush1.msra.mxu0 %v234
    %705 = vmatprep.subr.mxu0 0.0
    %706 = vmatpush1.msra.mxu0 %v235
    %707 = vmatprep.subr.mxu0 0.0
    %708 = vmatpush1.msra.mxu0 %v236
    %709 = vmatprep.subr.mxu0 0.0
    %710 = vmatpush1.msra.mxu0 0.0
    %711 = vmatprep.subr.mxu0 0.0
    %712 = vmatpush1.msra.mxu0 0.0
    %713 = vmatprep.subr.mxu0 0.0
    %714 = vmatpush1.msra.mxu0 0.0
    %715 = vmatprep.subr.mxu0 0.0
    %716 = vmatpush1.msra.mxu0 0.0
    %717 = vmatprep.subr.mxu0 0.0
    %718 = vmatpush1.msra.mxu0 0.0
    %719 = vmatprep.subr.mxu0 0.0
    %720 = vmatpush1.msra.mxu0 0.0
    %721 = vmatprep.subr.mxu0 0.0
    %722 = vmatpush1.msra.mxu0 0.0
    %723 = vmatprep.subr.mxu0 0.0
    %724 = vmatpush1.msra.mxu0 0.0
    %725 = vmatprep.subr.mxu0 0.0
    %726 = vmatpush1.msra.mxu0 0.0
    %727 = vmatprep.subr.mxu0 0.0
    %728 = vmatpush1.msra.mxu0 0.0
    %729 = vmatprep.subr.mxu0 0.0
    %730 = vmatpush1.msra.mxu0 0.0
    %731 = vmatprep.subr.mxu0 0.0
    %732 = vmatpush1.msra.mxu0 0.0
    %733 = vmatprep.subr.mxu0 0.0
    %734 = vmatpush1.msra.mxu0 0.0
    %735 = vmatprep.subr.mxu0 0.0
    %736 = vmatpush1.msra.mxu0 0.0
    %737 = vmatprep.subr.mxu0 0.0
    %738 = vmatpush1.msra.mxu0 0.0
    %739 = vmatprep.subr.mxu0 0.0
    %740 = vmatpush1.msra.mxu0 0.0
    %741 = vmatprep.subr.mxu0 0.0
    %742 = vmatpush1.msra.mxu0 0.0
    %743 = vmatprep.subr.mxu0 0.0
    %744 = vmatpush1.msra.mxu0 0.0
    %745 = vmatprep.subr.mxu0 0.0
    %746 = vmatpush1.msra.mxu0 0.0
    %747 = vmatprep.subr.mxu0 0.0
    %748 = vmatpush1.msra.mxu0 0.0
    %749 = vmatprep.subr.mxu0 0.0
    %750 = vmatpush1.msra.mxu0 0.0
    %751 = vmatprep.subr.mxu0 0.0
    %752 = vmatpush1.msra.mxu0 0.0
    %753 = vmatprep.subr.mxu0 0.0
    %754 = vmatpush1.msra.mxu0 0.0
    %755 = vmatprep.subr.mxu0 0.0
    %756 = vmatpush1.msra.mxu0 0.0
    %757 = vmatprep.subr.mxu0 0.0
    %758 = vmatpush1.msra.mxu0 0.0
    %759 = vmatprep.subr.mxu0 0.0
    %760 = vmatpush1.msra.mxu0 0.0
    %761 = vmatprep.subr.mxu0 0.0
    %762 = vmatpush1.msra.mxu0 0.0
    %763 = vmatprep.subr.mxu0 0.0
    %764 = vmatpush1.msra.mxu0 0.0
    %765 = vmatprep.mubr.f32.mxu0 0.0
    %766 = vmatmul.mubr.f32.gmra.mrb[0].mxu0 %v246
    %v767 = vpop.f32.mrb[0].mxu0
    %v768 = vadd.f32 %v693, %v767
    %v769 = vpop.f32.mrb[0].mxu0
    %770 = vmatprep.mubr.f32.mxu0 0.0
    %771 = vmatmul.mubr.f32.gmra.mrb[0].mxu0 %v249
    %v772 = vpop.f32.mrb[0].mxu0
    %v773 = vadd.f32 %v698, %v772
    %v774 = vpop.f32.mrb[0].mxu0
    %775 = vdwg.mxu0
    %776 = vmax.xlane.f32.xlu0 %v768
    %v777 = vpop.xlane.xlu0 %776
    %778 = vmax.xlane.f32.xlu0 %v773
    %v779 = vpop.xlane.xlu0 %778
    %v780 = vsub.f32 %v768, %v777
    %v781 = vsub.f32 %v773, %v779
    %v782 = vmul.f32 %v780, 1.442695
    %v783 = vpow.pop %v782
    %v784 = vmul.f32 %v781, 1.442695
    %v785 = vpow.pop %v784
    %786 = vadd.xlane.f32.xlu0 %v783
    %v787 = vpop.xlane.xlu0 %786
    %788 = vadd.xlane.f32.xlu0 %v785
    %v789 = vpop.xlane.xlu0 %788
    %v790 = vlog2.pop %v787
    %v791 = vmul.f32 %v790, 0.6931472
    %v792 = vlog2.pop %v789
    %v793 = vmul.f32 %v792, 0.6931472
    %v794 = vsub.f32 %v780, %v791
    %v795 = vsub.f32 %v781, %v793
    %796 = vst [vmem:[#allocation2] sm:$0xff] %v794
    %797 = vst [vmem:[#allocation2 + $0x8] sm:$0xff] %v795
    // Predicated region
    $region14: #{cnn_mnist_forward.5} parent=1 // pred_check
      _
    $region15: #{cnn_mnist_forward.5} parent=1 // pred_check_branch
      %799 = sbr.rel (0) target = $region17
    $region16: #{cnn_mnist_forward.5} parent=1 // pred_region
      %s801 = ssub.s32 256, 256
      %802 = vsyncadd [#allocation3], %s801
      %s803 = sshll.u32 [#allocation2], 4
      %s804 = int_to_ptr.vmem [resolvable:$true] %s803
      %809 = dma.vmem_to_hbm [thread:$0]  %s804, 256, %s3, [#allocation3], 128, 128, 8
    $region17: #{cnn_mnist_forward.5} parent=1 // pred_fallthru
      _
    // Predicated region
    $region18: #{cnn_mnist_forward.5} parent=1 // pred_check
      _
    $region19: #{cnn_mnist_forward.5} parent=1 // pred_check_branch
      %811 = sbr.rel (0) target = $region21
    $region20: #{cnn_mnist_forward.5} parent=1 // pred_region
      %812 = dma.done [#allocation3], 256
    $region21: #{cnn_mnist_forward.5} parent=1 // pred_fallthru
      _
    %813 = vsyncpa [#allocation3], 1

</llo_original>
